<compile_context>
chip_gen: v6e
topology: v6e:2x2x1
jax: 0.10.0
libtpu: 0.0.40
codegen_flags: <defaults>
</compile_context>

<pallas_src>
import functools
import math

import jax
import jax.numpy as jnp
import numpy as np
from jax.experimental import pallas as pl
from jax.experimental.pallas import tpu as pltpu

LEAKY_SLOPE = 0.2
IN_EPS = 1e-5


def _conv_block_body(act, pad_ref, w_ref, sel_ref, stride):
    """One ConvBlock (3x3 'same' conv -> InstanceNorm -> LeakyReLU), one sample.

    act:     (H, W, Cin) f32 value.
    pad_ref: VMEM scratch (H+2, W+2, Cin) used for in-kernel zero padding.
    w_ref:   (3, 3, Cin, Cout) HWIO conv weight ref.
    sel_ref: (Ho*Wo, Ho*W) 0/1 column-decimation matrix ref (stride == 2 only).
    Returns the normalized/activated output as a (Ho*Wo, Cout) f32 value.
    """
    H, W, Cin = act.shape
    Cout = w_ref.shape[-1]
    Ho = H // stride
    rows = Ho * W

    # In-kernel 'same' zero padding (no HBM round trip for a padded copy).
    pad_ref[...] = jnp.zeros(pad_ref.shape, pad_ref.dtype)
    pad_ref[1:H + 1, 1:W + 1, :] = act
    xp = pad_ref[...]                                    # (H+2, W+2, Cin)

    # 3x3 conv as 9 shifted-patch matmuls on the MXU (default precision, f32
    # accumulate).  For stride 2, rows are decimated *before* the matmul (keep
    # the even rows of each shifted slab), halving the MXU work.
    acc = jnp.zeros((rows, Cout), jnp.float32)
    for dy in range(3):
        for dx in range(3):
            slab = xp[dy:dy + H, dx:dx + W, :]           # (H, W, Cin)
            if stride == 2:
                slab = slab.reshape(Ho, 2, W, Cin)[:, 0:1].reshape(Ho, W, Cin)
            acc = acc + jnp.dot(slab.reshape(rows, Cin), w_ref[dy, dx],
                                preferred_element_type=jnp.float32)

    if stride == 2:
        # Decimate columns to the stride-2 output positions with a tiny 0/1
        # selection matmul (numpy constant built once at init).
        acc = jnp.dot(sel_ref[...], acc, preferred_element_type=jnp.float32)

    # InstanceNorm2d(affine=False): per-sample, per-channel stats over spatial.
    # (The conv bias is omitted: it is exactly cancelled by the mean subtraction.)
    mean = jnp.mean(acc, axis=0, keepdims=True)
    cen = acc - mean
    var = jnp.mean(cen * cen, axis=0, keepdims=True)
    y = cen * jax.lax.rsqrt(var + IN_EPS)
    return jnp.where(y >= 0.0, y, LEAKY_SLOPE * y)       # (Ho*Wo, Cout)


def _struct_disc_kernel(*refs, strides):
    """Fused forward: 4 ConvBlocks + Linear for one batch element (grid = batch)."""
    nb = len(strides)
    ns = sum(1 for s in strides if s == 2)
    x_ref = refs[0]
    w_refs = refs[1:1 + nb]
    sel_refs = refs[1 + nb:1 + nb + ns]
    wlin_ref = refs[1 + nb + ns]
    blin_ref = refs[2 + nb + ns]
    o_ref = refs[3 + nb + ns]
    pad_refs = refs[4 + nb + ns:4 + 2 * nb + ns]

    act = x_ref[0]                                       # (H, W, 3)
    si = 0
    y = None
    for b, stride in enumerate(strides):
        H, W, _ = act.shape
        Cout = w_refs[b].shape[-1]
        sel_ref = None
        if stride == 2:
            sel_ref = sel_refs[si]
            si += 1
        y = _conv_block_body(act, pad_refs[b], w_refs[b], sel_ref, stride)
        if b + 1 < nb:
            act = y.reshape(H // stride, W // stride, Cout)

    # Final Linear folded into the kernel.  Its weight rows were pre-permuted
    # to the kernel's (H*W, C) activation order, so it is a multiply + reduce.
    s = jnp.sum(y * wlin_ref[...], axis=1, keepdims=True)   # (Ho*Wo, 1)
    s = jnp.sum(s, axis=0, keepdims=True)                    # (1, 1)
    out = s + blin_ref[...]
    # Lane-dense (1, 1, 128) output block; the wrapper slices lane 0.
    o_ref[...] = jnp.broadcast_to(out, o_ref.shape).astype(o_ref.dtype)


def _full_spec(shape):
    nd = len(shape)
    return pl.BlockSpec(shape, lambda n, _nd=nd: (0,) * _nd)


def struct_discriminator_forward(x_nchw, conv_ws, strides, sels, w_lin_pc, b_lin):
    """Run the fused Pallas forward pass. x_nchw: (N, 3, H, W) -> (N, 1)."""
    x = jnp.transpose(x_nchw, (0, 2, 3, 1)).astype(jnp.float32)  # NCHW -> NHWC
    N, H, W, Cin = x.shape

    in_specs = [pl.BlockSpec((1, H, W, Cin), lambda n: (n, 0, 0, 0))]
    args = [x]
    for wconv in conv_ws:
        in_specs.append(_full_spec(wconv.shape))
        args.append(wconv)
    for sel in sels:
        in_specs.append(_full_spec(sel.shape))
        args.append(sel)
    in_specs.append(_full_spec(w_lin_pc.shape))
    args.append(w_lin_pc)
    in_specs.append(_full_spec(b_lin.shape))
    args.append(b_lin)

    # One small VMEM scratch per block for the in-kernel zero padding.
    scratch = []
    h, w_ = H, W
    for wconv, s in zip(conv_ws, strides):
        cin = wconv.shape[2]
        scratch.append(pltpu.VMEM((h + 2, w_ + 2, cin), jnp.float32))
        h, w_ = h // s, w_ // s

    out = pl.pallas_call(
        functools.partial(_struct_disc_kernel, strides=tuple(strides)),
        out_shape=jax.ShapeDtypeStruct((N, 1, 128), jnp.float32),
        grid=(N,),
        in_specs=in_specs,
        out_specs=pl.BlockSpec((1, 1, 128), lambda n: (n, 0, 0)),
        scratch_shapes=scratch,
        compiler_params=pltpu.CompilerParams(
            dimension_semantics=("parallel",)),
    )(*args)
    return out[:, 0, :1]                                  # (N, 1)


class StructDiscriminatorPallas:
    """Pallas port of StructDiscriminator (dim=32: 4 ConvBlocks + Linear)."""

    def __init__(self, size, key):
        dim = 32
        chans = [3, dim, 2 * dim, 4 * dim, 8 * dim]
        self.strides = [1, 2, 2, 2]
        H, W = size
        keys = jax.random.split(key, len(self.strides) + 2)

        self.conv_ws = []
        self.sels = []
        h, w_ = H, W
        for i, (cin, cout, s) in enumerate(
                zip(chans[:-1], chans[1:], self.strides)):
            wconv = (jax.random.normal(keys[i], (3, 3, cin, cout), jnp.float32)
                     * (1.0 / math.sqrt(9.0 * cin)))
            self.conv_ws.append(wconv)
            if s == 2:
                ho, wo = h // 2, w_ // 2
                sel = np.zeros((ho * wo, ho * w_), np.float32)
                oy, ox = np.divmod(np.arange(ho * wo), wo)
                sel[np.arange(ho * wo), oy * w_ + 2 * ox] = 1.0
                self.sels.append(jnp.asarray(sel))
            h, w_ = h // s, w_ // s

        self.Ho, self.Wo, self.Cl = h, w_, chans[-1]
        # Equivalent to running the `prob` buffer (1, 3, H, W) through the blocks:
        self.DIM = self.Cl * self.Ho * self.Wo
        self.w_lin = (jax.random.normal(keys[-2], (self.DIM, 1), jnp.float32)
                      * (1.0 / math.sqrt(self.DIM)))
        self.b_lin = jax.random.normal(keys[-1], (1, 1), jnp.float32) * 0.01
        # Pre-permute the Linear weight rows from PyTorch's (C, H, W) flatten
        # order to the kernel's (H*W, C) activation order (done once at init).
        self.w_lin_pc = jnp.transpose(
            self.w_lin.reshape(self.Cl, self.Ho, self.Wo),
            (1, 2, 0)).reshape(self.Ho * self.Wo, self.Cl)

    def __call__(self, x_nchw):
        return struct_discriminator_forward(
            x_nchw, self.conv_ws, self.strides, self.sels,
            self.w_lin_pc, self.b_lin)


def ref_forward(model, x_nchw):
    """Pure-JAX (XLA) reference of the same forward pass, for verification."""
    x = x_nchw.astype(jnp.float32)
    for wconv, s in zip(model.conv_ws, model.strides):
        w_oihw = jnp.transpose(wconv, (3, 2, 0, 1))
        x = jax.lax.conv_general_dilated(
            x, w_oihw, (s, s), ((1, 1), (1, 1)),
            dimension_numbers=('NCHW', 'OIHW', 'NCHW'))
        mean = x.mean(axis=(2, 3), keepdims=True)
        var = ((x - mean) ** 2).mean(axis=(2, 3), keepdims=True)
        x = (x - mean) * jax.lax.rsqrt(var + IN_EPS)
        x = jnp.where(x >= 0.0, x, LEAKY_SLOPE * x)
    x = x.reshape(x.shape[0], -1)             # NCHW flatten, like x.view(-1, DIM)
    return x @ model.w_lin + model.b_lin


if __name__ == "__main__":
    key = jax.random.PRNGKey(0)
    k_param, k_x = jax.random.split(key)

    size = (16, 16)                                    # spatial size given to __init__
    model = StructDiscriminatorPallas(size, k_param)

    x = jax.random.normal(k_x, (2, 3, *size), jnp.float32)   # NCHW, like PyTorch

    out = jax.block_until_ready(model(x))
    assert out.shape == (2, 1)

    ref = jax.block_until_ready(ref_forward(model, x))
    # Both paths use default (bf16-on-MXU) matmul precision; the tolerance
    # covers the resulting few-1e-3-level numerical differences with margin.
    np.testing.assert_allclose(np.asarray(out), np.asarray(ref),
                               rtol=5e-2, atol=5e-2)

    print("KERNEL_OK")
</pallas_src>

<mosaic_0001>
module attributes {stable_mosaic.version = 11 : i64} {
  func.func @_struct_disc_kernel(%arg0: i32, %arg1: memref<1x16x16x3xf32, #tpu.memory_space<vmem>>, %arg2: memref<3x3x3x32xf32, #tpu.memory_space<vmem>>, %arg3: memref<3x3x32x64xf32, #tpu.memory_space<vmem>>, %arg4: memref<3x3x64x128xf32, #tpu.memory_space<vmem>>, %arg5: memref<3x3x128x256xf32, #tpu.memory_space<vmem>>, %arg6: memref<64x128xf32, #tpu.memory_space<vmem>>, %arg7: memref<16x32xf32, #tpu.memory_space<vmem>>, %arg8: memref<4x8xf32, #tpu.memory_space<vmem>>, %arg9: memref<4x256xf32, #tpu.memory_space<vmem>>, %arg10: memref<1x1xf32, #tpu.memory_space<vmem>>, %arg11: memref<1x1x128xf32, #tpu.memory_space<vmem>>, %arg12: memref<18x18x3xf32, #tpu.memory_space<vmem>>, %arg13: memref<18x18x32xf32, #tpu.memory_space<vmem>>, %arg14: memref<10x10x64xf32, #tpu.memory_space<vmem>>, %arg15: memref<6x6x128xf32, #tpu.memory_space<vmem>>) attributes {dimension_semantics = [#tpu.dimension_semantics<parallel>], iteration_bounds = array<i64: 2>, scalar_prefetch = 0 : i64, scratch_operands = 4 : i64, tpu.core_type = #tpu.core_type<tc>, window_params = [{transform_indices = @transform_0, window_bounds = array<i64: 1, 16, 16, 3>}, {pipeline_mode = #tpu.pipeline_mode<synchronous>, transform_indices = @transform_1, window_bounds = array<i64: 3, 3, 3, 32>}, {pipeline_mode = #tpu.pipeline_mode<synchronous>, transform_indices = @transform_2, window_bounds = array<i64: 3, 3, 32, 64>}, {pipeline_mode = #tpu.pipeline_mode<synchronous>, transform_indices = @transform_3, window_bounds = array<i64: 3, 3, 64, 128>}, {pipeline_mode = #tpu.pipeline_mode<synchronous>, transform_indices = @transform_4, window_bounds = array<i64: 3, 3, 128, 256>}, {pipeline_mode = #tpu.pipeline_mode<synchronous>, transform_indices = @transform_5, window_bounds = array<i64: 64, 128>}, {pipeline_mode = #tpu.pipeline_mode<synchronous>, transform_indices = @transform_6, window_bounds = array<i64: 16, 32>}, {pipeline_mode = #tpu.pipeline_mode<synchronous>, transform_indices = @transform_7, window_bounds = array<i64: 4, 8>}, {pipeline_mode = #tpu.pipeline_mode<synchronous>, transform_indices = @transform_8, window_bounds = array<i64: 4, 256>}, {pipeline_mode = #tpu.pipeline_mode<synchronous>, transform_indices = @transform_9, window_bounds = array<i64: 1, 1>}, {transform_indices = @transform_10, window_bounds = array<i64: 1, 1, 128>}]} {
    %c0 = arith.constant 0 : index
    %c0_0 = arith.constant 0 : index
    %c0_1 = arith.constant 0 : index
    %c0_2 = arith.constant 0 : index
    %0 = vector.load %arg1[%c0, %c0_0, %c0_1, %c0_2] : memref<1x16x16x3xf32, #tpu.memory_space<vmem>>, vector<1x16x16x3xf32>
    %1 = vector.shape_cast %0 : vector<1x16x16x3xf32> to vector<16x16x3xf32>
    %cst = arith.constant 0.000000e+00 : f32
    %2 = vector.broadcast %cst : f32 to vector<18x18x3xf32>
    %c0_3 = arith.constant 0 : index
    %c0_4 = arith.constant 0 : index
    %c0_5 = arith.constant 0 : index
    %3 = vector.load %arg12[%c0_3, %c0_4, %c0_5] : memref<18x18x3xf32, #tpu.memory_space<vmem>>, vector<18x18x3xf32>
    tpu.vector_store %arg12[%c0_3, %c0_4, %c0_5], %2 {strides = array<i32>} : memref<18x18x3xf32, #tpu.memory_space<vmem>>, vector<18x18x3xf32>,
    %c1 = arith.constant 1 : index
    %c1_6 = arith.constant 1 : index
    %c0_7 = arith.constant 0 : index
    %4 = vector.load %arg12[%c1, %c1_6, %c0_7] : memref<18x18x3xf32, #tpu.memory_space<vmem>>, vector<16x16x3xf32>
    tpu.vector_store %arg12[%c1, %c1_6, %c0_7], %1 {strides = array<i32>} : memref<18x18x3xf32, #tpu.memory_space<vmem>>, vector<16x16x3xf32>,
    %c0_8 = arith.constant 0 : index
    %c0_9 = arith.constant 0 : index
    %c0_10 = arith.constant 0 : index
    %5 = vector.load %arg12[%c0_8, %c0_9, %c0_10] : memref<18x18x3xf32, #tpu.memory_space<vmem>>, vector<18x18x3xf32>
    %cst_11 = arith.constant 0.000000e+00 : f32
    %6 = vector.broadcast %cst_11 : f32 to vector<256x32xf32>
    %7 = vector.extract_strided_slice %5 {offsets = [0, 0, 0], sizes = [16, 16, 3], strides = [1, 1, 1]} : vector<18x18x3xf32> to vector<16x16x3xf32>
    %8 = vector.shape_cast %7 : vector<16x16x3xf32> to vector<256x3xf32>
    %c0_12 = arith.constant 0 : index
    %c0_13 = arith.constant 0 : index
    %c0_14 = arith.constant 0 : index
    %c0_15 = arith.constant 0 : index
    %9 = vector.load %arg2[%c0_12, %c0_13, %c0_14, %c0_15] : memref<3x3x3x32xf32, #tpu.memory_space<vmem>>, vector<1x1x3x32xf32>
    %10 = vector.shape_cast %9 : vector<1x1x3x32xf32> to vector<3x32xf32>
    %cst_16 = arith.constant dense<0.000000e+00> : vector<256x32xf32>
    %11 = tpu.matmul %8, %10, %cst_16 {dimension_numbers = #tpu.dot_dimension_numbers<[1], [0], [0], [1], [0, 0, 1, 1], [], []>} : vector<256x3xf32>, vector<3x32xf32>, vector<256x32xf32> -> vector<256x32xf32>
    %12 = arith.addf %6, %11 : vector<256x32xf32>
    %13 = vector.extract_strided_slice %5 {offsets = [0, 1, 0], sizes = [16, 16, 3], strides = [1, 1, 1]} : vector<18x18x3xf32> to vector<16x16x3xf32>
    %14 = vector.shape_cast %13 : vector<16x16x3xf32> to vector<256x3xf32>
    %c0_17 = arith.constant 0 : index
    %c1_18 = arith.constant 1 : index
    %c0_19 = arith.constant 0 : index
    %c0_20 = arith.constant 0 : index
    %15 = vector.load %arg2[%c0_17, %c1_18, %c0_19, %c0_20] : memref<3x3x3x32xf32, #tpu.memory_space<vmem>>, vector<1x1x3x32xf32>
    %16 = vector.shape_cast %15 : vector<1x1x3x32xf32> to vector<3x32xf32>
    %cst_21 = arith.constant dense<0.000000e+00> : vector<256x32xf32>
    %17 = tpu.matmul %14, %16, %cst_21 {dimension_numbers = #tpu.dot_dimension_numbers<[1], [0], [0], [1], [0, 0, 1, 1], [], []>} : vector<256x3xf32>, vector<3x32xf32>, vector<256x32xf32> -> vector<256x32xf32>
    %18 = arith.addf %12, %17 : vector<256x32xf32>
    %19 = vector.extract_strided_slice %5 {offsets = [0, 2, 0], sizes = [16, 16, 3], strides = [1, 1, 1]} : vector<18x18x3xf32> to vector<16x16x3xf32>
    %20 = vector.shape_cast %19 : vector<16x16x3xf32> to vector<256x3xf32>
    %c0_22 = arith.constant 0 : index
    %c2 = arith.constant 2 : index
    %c0_23 = arith.constant 0 : index
    %c0_24 = arith.constant 0 : index
    %21 = vector.load %arg2[%c0_22, %c2, %c0_23, %c0_24] : memref<3x3x3x32xf32, #tpu.memory_space<vmem>>, vector<1x1x3x32xf32>
    %22 = vector.shape_cast %21 : vector<1x1x3x32xf32> to vector<3x32xf32>
    %cst_25 = arith.constant dense<0.000000e+00> : vector<256x32xf32>
    %23 = tpu.matmul %20, %22, %cst_25 {dimension_numbers = #tpu.dot_dimension_numbers<[1], [0], [0], [1], [0, 0, 1, 1], [], []>} : vector<256x3xf32>, vector<3x32xf32>, vector<256x32xf32> -> vector<256x32xf32>
    %24 = arith.addf %18, %23 : vector<256x32xf32>
    %25 = vector.extract_strided_slice %5 {offsets = [1, 0, 0], sizes = [16, 16, 3], strides = [1, 1, 1]} : vector<18x18x3xf32> to vector<16x16x3xf32>
    %26 = vector.shape_cast %25 : vector<16x16x3xf32> to vector<256x3xf32>
    %c1_26 = arith.constant 1 : index
    %c0_27 = arith.constant 0 : index
    %c0_28 = arith.constant 0 : index
    %c0_29 = arith.constant 0 : index
    %27 = vector.load %arg2[%c1_26, %c0_27, %c0_28, %c0_29] : memref<3x3x3x32xf32, #tpu.memory_space<vmem>>, vector<1x1x3x32xf32>
    %28 = vector.shape_cast %27 : vector<1x1x3x32xf32> to vector<3x32xf32>
    %cst_30 = arith.constant dense<0.000000e+00> : vector<256x32xf32>
    %29 = tpu.matmul %26, %28, %cst_30 {dimension_numbers = #tpu.dot_dimension_numbers<[1], [0], [0], [1], [0, 0, 1, 1], [], []>} : vector<256x3xf32>, vector<3x32xf32>, vector<256x32xf32> -> vector<256x32xf32>
    %30 = arith.addf %24, %29 : vector<256x32xf32>
    %31 = vector.extract_strided_slice %5 {offsets = [1, 1, 0], sizes = [16, 16, 3], strides = [1, 1, 1]} : vector<18x18x3xf32> to vector<16x16x3xf32>
    %32 = vector.shape_cast %31 : vector<16x16x3xf32> to vector<256x3xf32>
    %c1_31 = arith.constant 1 : index
    %c1_32 = arith.constant 1 : index
    %c0_33 = arith.constant 0 : index
    %c0_34 = arith.constant 0 : index
    %33 = vector.load %arg2[%c1_31, %c1_32, %c0_33, %c0_34] : memref<3x3x3x32xf32, #tpu.memory_space<vmem>>, vector<1x1x3x32xf32>
    %34 = vector.shape_cast %33 : vector<1x1x3x32xf32> to vector<3x32xf32>
    %cst_35 = arith.constant dense<0.000000e+00> : vector<256x32xf32>
    %35 = tpu.matmul %32, %34, %cst_35 {dimension_numbers = #tpu.dot_dimension_numbers<[1], [0], [0], [1], [0, 0, 1, 1], [], []>} : vector<256x3xf32>, vector<3x32xf32>, vector<256x32xf32> -> vector<256x32xf32>
    %36 = arith.addf %30, %35 : vector<256x32xf32>
    %37 = vector.extract_strided_slice %5 {offsets = [1, 2, 0], sizes = [16, 16, 3], strides = [1, 1, 1]} : vector<18x18x3xf32> to vector<16x16x3xf32>
    %38 = vector.shape_cast %37 : vector<16x16x3xf32> to vector<256x3xf32>
    %c1_36 = arith.constant 1 : index
    %c2_37 = arith.constant 2 : index
    %c0_38 = arith.constant 0 : index
    %c0_39 = arith.constant 0 : index
    %39 = vector.load %arg2[%c1_36, %c2_37, %c0_38, %c0_39] : memref<3x3x3x32xf32, #tpu.memory_space<vmem>>, vector<1x1x3x32xf32>
    %40 = vector.shape_cast %39 : vector<1x1x3x32xf32> to vector<3x32xf32>
    %cst_40 = arith.constant dense<0.000000e+00> : vector<256x32xf32>
    %41 = tpu.matmul %38, %40, %cst_40 {dimension_numbers = #tpu.dot_dimension_numbers<[1], [0], [0], [1], [0, 0, 1, 1], [], []>} : vector<256x3xf32>, vector<3x32xf32>, vector<256x32xf32> -> vector<256x32xf32>
    %42 = arith.addf %36, %41 : vector<256x32xf32>
    %43 = vector.extract_strided_slice %5 {offsets = [2, 0, 0], sizes = [16, 16, 3], strides = [1, 1, 1]} : vector<18x18x3xf32> to vector<16x16x3xf32>
    %44 = vector.shape_cast %43 : vector<16x16x3xf32> to vector<256x3xf32>
    %c2_41 = arith.constant 2 : index
    %c0_42 = arith.constant 0 : index
    %c0_43 = arith.constant 0 : index
    %c0_44 = arith.constant 0 : index
    %45 = vector.load %arg2[%c2_41, %c0_42, %c0_43, %c0_44] : memref<3x3x3x32xf32, #tpu.memory_space<vmem>>, vector<1x1x3x32xf32>
    %46 = vector.shape_cast %45 : vector<1x1x3x32xf32> to vector<3x32xf32>
    %cst_45 = arith.constant dense<0.000000e+00> : vector<256x32xf32>
    %47 = tpu.matmul %44, %46, %cst_45 {dimension_numbers = #tpu.dot_dimension_numbers<[1], [0], [0], [1], [0, 0, 1, 1], [], []>} : vector<256x3xf32>, vector<3x32xf32>, vector<256x32xf32> -> vector<256x32xf32>
    %48 = arith.addf %42, %47 : vector<256x32xf32>
    %49 = vector.extract_strided_slice %5 {offsets = [2, 1, 0], sizes = [16, 16, 3], strides = [1, 1, 1]} : vector<18x18x3xf32> to vector<16x16x3xf32>
    %50 = vector.shape_cast %49 : vector<16x16x3xf32> to vector<256x3xf32>
    %c2_46 = arith.constant 2 : index
    %c1_47 = arith.constant 1 : index
    %c0_48 = arith.constant 0 : index
    %c0_49 = arith.constant 0 : index
    %51 = vector.load %arg2[%c2_46, %c1_47, %c0_48, %c0_49] : memref<3x3x3x32xf32, #tpu.memory_space<vmem>>, vector<1x1x3x32xf32>
    %52 = vector.shape_cast %51 : vector<1x1x3x32xf32> to vector<3x32xf32>
    %cst_50 = arith.constant dense<0.000000e+00> : vector<256x32xf32>
    %53 = tpu.matmul %50, %52, %cst_50 {dimension_numbers = #tpu.dot_dimension_numbers<[1], [0], [0], [1], [0, 0, 1, 1], [], []>} : vector<256x3xf32>, vector<3x32xf32>, vector<256x32xf32> -> vector<256x32xf32>
    %54 = arith.addf %48, %53 : vector<256x32xf32>
    %55 = vector.extract_strided_slice %5 {offsets = [2, 2, 0], sizes = [16, 16, 3], strides = [1, 1, 1]} : vector<18x18x3xf32> to vector<16x16x3xf32>
    %56 = vector.shape_cast %55 : vector<16x16x3xf32> to vector<256x3xf32>
    %c2_51 = arith.constant 2 : index
    %c2_52 = arith.constant 2 : index
    %c0_53 = arith.constant 0 : index
    %c0_54 = arith.constant 0 : index
    %57 = vector.load %arg2[%c2_51, %c2_52, %c0_53, %c0_54] : memref<3x3x3x32xf32, #tpu.memory_space<vmem>>, vector<1x1x3x32xf32>
    %58 = vector.shape_cast %57 : vector<1x1x3x32xf32> to vector<3x32xf32>
    %cst_55 = arith.constant dense<0.000000e+00> : vector<256x32xf32>
    %59 = tpu.matmul %56, %58, %cst_55 {dimension_numbers = #tpu.dot_dimension_numbers<[1], [0], [0], [1], [0, 0, 1, 1], [], []>} : vector<256x3xf32>, vector<3x32xf32>, vector<256x32xf32> -> vector<256x32xf32>
    %60 = arith.addf %54, %59 : vector<256x32xf32>
    %cst_56 = arith.constant dense<0.000000e+00> : vector<32xf32>
    %61 = vector.multi_reduction <add>, %60, %cst_56 [0] : vector<256x32xf32> to vector<32xf32>
    %62 = vector.shape_cast %61 : vector<32xf32> to vector<1x32xf32>
    %cst_57 = arith.constant 2.560000e+02 : f32
    %63 = vector.broadcast %cst_57 : f32 to vector<1x32xf32>
    %64 = arith.divf %62, %63 : vector<1x32xf32>
    %65 = vector.broadcast %64 : vector<1x32xf32> to vector<256x32xf32>
    %66 = arith.subf %60, %65 : vector<256x32xf32>
    %67 = arith.mulf %66, %66 : vector<256x32xf32>
    %cst_58 = arith.constant dense<0.000000e+00> : vector<32xf32>
    %68 = vector.multi_reduction <add>, %67, %cst_58 [0] : vector<256x32xf32> to vector<32xf32>
    %69 = vector.shape_cast %68 : vector<32xf32> to vector<1x32xf32>
    %cst_59 = arith.constant 2.560000e+02 : f32
    %70 = vector.broadcast %cst_59 : f32 to vector<1x32xf32>
    %71 = arith.divf %69, %70 : vector<1x32xf32>
    %cst_60 = arith.constant 9.99999974E-6 : f32
    %72 = vector.broadcast %cst_60 : f32 to vector<1x32xf32>
    %73 = arith.addf %71, %72 : vector<1x32xf32>
    %74 = math.rsqrt %73 : vector<1x32xf32>
    %75 = vector.broadcast %74 : vector<1x32xf32> to vector<256x32xf32>
    %76 = arith.mulf %66, %75 : vector<256x32xf32>
    %cst_61 = arith.constant 0.000000e+00 : f32
    %77 = vector.broadcast %cst_61 : f32 to vector<256x32xf32>
    %78 = arith.cmpf oge, %76, %77 : vector<256x32xf32>
    %cst_62 = arith.constant 2.000000e-01 : f32
    %79 = vector.broadcast %cst_62 : f32 to vector<256x32xf32>
    %80 = arith.mulf %79, %76 : vector<256x32xf32>
    %81 = arith.select %78, %76, %80 : vector<256x32xi1>, vector<256x32xf32>
    %82 = vector.shape_cast %81 : vector<256x32xf32> to vector<16x16x32xf32>
    %cst_63 = arith.constant 0.000000e+00 : f32
    %83 = vector.broadcast %cst_63 : f32 to vector<18x18x32xf32>
    %c0_64 = arith.constant 0 : index
    %c0_65 = arith.constant 0 : index
    %c0_66 = arith.constant 0 : index
    %84 = vector.load %arg13[%c0_64, %c0_65, %c0_66] : memref<18x18x32xf32, #tpu.memory_space<vmem>>, vector<18x18x32xf32>
    tpu.vector_store %arg13[%c0_64, %c0_65, %c0_66], %83 {strides = array<i32>} : memref<18x18x32xf32, #tpu.memory_space<vmem>>, vector<18x18x32xf32>,
    %c1_67 = arith.constant 1 : index
    %c1_68 = arith.constant 1 : index
    %c0_69 = arith.constant 0 : index
    %85 = vector.load %arg13[%c1_67, %c1_68, %c0_69] : memref<18x18x32xf32, #tpu.memory_space<vmem>>, vector<16x16x32xf32>
    tpu.vector_store %arg13[%c1_67, %c1_68, %c0_69], %82 {strides = array<i32>} : memref<18x18x32xf32, #tpu.memory_space<vmem>>, vector<16x16x32xf32>,
    %c0_70 = arith.constant 0 : index
    %c0_71 = arith.constant 0 : index
    %c0_72 = arith.constant 0 : index
    %86 = vector.load %arg13[%c0_70, %c0_71, %c0_72] : memref<18x18x32xf32, #tpu.memory_space<vmem>>, vector<18x18x32xf32>
    %cst_73 = arith.constant 0.000000e+00 : f32
    %87 = vector.broadcast %cst_73 : f32 to vector<128x64xf32>
    %88 = vector.extract_strided_slice %86 {offsets = [0, 0, 0], sizes = [16, 16, 32], strides = [1, 1, 1]} : vector<18x18x32xf32> to vector<16x16x32xf32>
    %89 = vector.shape_cast %88 : vector<16x16x32xf32> to vector<8x2x16x32xf32>
    %90 = vector.extract_strided_slice %89 {offsets = [0, 0, 0, 0], sizes = [8, 1, 16, 32], strides = [1, 1, 1, 1]} : vector<8x2x16x32xf32> to vector<8x1x16x32xf32>
    %91 = vector.shape_cast %90 : vector<8x1x16x32xf32> to vector<8x16x32xf32>
    %92 = vector.shape_cast %91 : vector<8x16x32xf32> to vector<128x32xf32>
    %c0_74 = arith.constant 0 : index
    %c0_75 = arith.constant 0 : index
    %c0_76 = arith.constant 0 : index
    %c0_77 = arith.constant 0 : index
    %93 = vector.load %arg3[%c0_74, %c0_75, %c0_76, %c0_77] : memref<3x3x32x64xf32, #tpu.memory_space<vmem>>, vector<1x1x32x64xf32>
    %94 = vector.shape_cast %93 : vector<1x1x32x64xf32> to vector<32x64xf32>
    %cst_78 = arith.constant dense<0.000000e+00> : vector<128x64xf32>
    %95 = tpu.matmul %92, %94, %cst_78 {dimension_numbers = #tpu.dot_dimension_numbers<[1], [0], [0], [1], [0, 0, 1, 1], [], []>} : vector<128x32xf32>, vector<32x64xf32>, vector<128x64xf32> -> vector<128x64xf32>
    %96 = arith.addf %87, %95 : vector<128x64xf32>
    %97 = vector.extract_strided_slice %86 {offsets = [0, 1, 0], sizes = [16, 16, 32], strides = [1, 1, 1]} : vector<18x18x32xf32> to vector<16x16x32xf32>
    %98 = vector.shape_cast %97 : vector<16x16x32xf32> to vector<8x2x16x32xf32>
    %99 = vector.extract_strided_slice %98 {offsets = [0, 0, 0, 0], sizes = [8, 1, 16, 32], strides = [1, 1, 1, 1]} : vector<8x2x16x32xf32> to vector<8x1x16x32xf32>
    %100 = vector.shape_cast %99 : vector<8x1x16x32xf32> to vector<8x16x32xf32>
    %101 = vector.shape_cast %100 : vector<8x16x32xf32> to vector<128x32xf32>
    %c0_79 = arith.constant 0 : index
    %c1_80 = arith.constant 1 : index
    %c0_81 = arith.constant 0 : index
    %c0_82 = arith.constant 0 : index
    %102 = vector.load %arg3[%c0_79, %c1_80, %c0_81, %c0_82] : memref<3x3x32x64xf32, #tpu.memory_space<vmem>>, vector<1x1x32x64xf32>
    %103 = vector.shape_cast %102 : vector<1x1x32x64xf32> to vector<32x64xf32>
    %cst_83 = arith.constant dense<0.000000e+00> : vector<128x64xf32>
    %104 = tpu.matmul %101, %103, %cst_83 {dimension_numbers = #tpu.dot_dimension_numbers<[1], [0], [0], [1], [0, 0, 1, 1], [], []>} : vector<128x32xf32>, vector<32x64xf32>, vector<128x64xf32> -> vector<128x64xf32>
    %105 = arith.addf %96, %104 : vector<128x64xf32>
    %106 = vector.extract_strided_slice %86 {offsets = [0, 2, 0], sizes = [16, 16, 32], strides = [1, 1, 1]} : vector<18x18x32xf32> to vector<16x16x32xf32>
    %107 = vector.shape_cast %106 : vector<16x16x32xf32> to vector<8x2x16x32xf32>
    %108 = vector.extract_strided_slice %107 {offsets = [0, 0, 0, 0], sizes = [8, 1, 16, 32], strides = [1, 1, 1, 1]} : vector<8x2x16x32xf32> to vector<8x1x16x32xf32>
    %109 = vector.shape_cast %108 : vector<8x1x16x32xf32> to vector<8x16x32xf32>
    %110 = vector.shape_cast %109 : vector<8x16x32xf32> to vector<128x32xf32>
    %c0_84 = arith.constant 0 : index
    %c2_85 = arith.constant 2 : index
    %c0_86 = arith.constant 0 : index
    %c0_87 = arith.constant 0 : index
    %111 = vector.load %arg3[%c0_84, %c2_85, %c0_86, %c0_87] : memref<3x3x32x64xf32, #tpu.memory_space<vmem>>, vector<1x1x32x64xf32>
    %112 = vector.shape_cast %111 : vector<1x1x32x64xf32> to vector<32x64xf32>
    %cst_88 = arith.constant dense<0.000000e+00> : vector<128x64xf32>
    %113 = tpu.matmul %110, %112, %cst_88 {dimension_numbers = #tpu.dot_dimension_numbers<[1], [0], [0], [1], [0, 0, 1, 1], [], []>} : vector<128x32xf32>, vector<32x64xf32>, vector<128x64xf32> -> vector<128x64xf32>
    %114 = arith.addf %105, %113 : vector<128x64xf32>
    %115 = vector.extract_strided_slice %86 {offsets = [1, 0, 0], sizes = [16, 16, 32], strides = [1, 1, 1]} : vector<18x18x32xf32> to vector<16x16x32xf32>
    %116 = vector.shape_cast %115 : vector<16x16x32xf32> to vector<8x2x16x32xf32>
    %117 = vector.extract_strided_slice %116 {offsets = [0, 0, 0, 0], sizes = [8, 1, 16, 32], strides = [1, 1, 1, 1]} : vector<8x2x16x32xf32> to vector<8x1x16x32xf32>
    %118 = vector.shape_cast %117 : vector<8x1x16x32xf32> to vector<8x16x32xf32>
    %119 = vector.shape_cast %118 : vector<8x16x32xf32> to vector<128x32xf32>
    %c1_89 = arith.constant 1 : index
    %c0_90 = arith.constant 0 : index
    %c0_91 = arith.constant 0 : index
    %c0_92 = arith.constant 0 : index
    %120 = vector.load %arg3[%c1_89, %c0_90, %c0_91, %c0_92] : memref<3x3x32x64xf32, #tpu.memory_space<vmem>>, vector<1x1x32x64xf32>
    %121 = vector.shape_cast %120 : vector<1x1x32x64xf32> to vector<32x64xf32>
    %cst_93 = arith.constant dense<0.000000e+00> : vector<128x64xf32>
    %122 = tpu.matmul %119, %121, %cst_93 {dimension_numbers = #tpu.dot_dimension_numbers<[1], [0], [0], [1], [0, 0, 1, 1], [], []>} : vector<128x32xf32>, vector<32x64xf32>, vector<128x64xf32> -> vector<128x64xf32>
    %123 = arith.addf %114, %122 : vector<128x64xf32>
    %124 = vector.extract_strided_slice %86 {offsets = [1, 1, 0], sizes = [16, 16, 32], strides = [1, 1, 1]} : vector<18x18x32xf32> to vector<16x16x32xf32>
    %125 = vector.shape_cast %124 : vector<16x16x32xf32> to vector<8x2x16x32xf32>
    %126 = vector.extract_strided_slice %125 {offsets = [0, 0, 0, 0], sizes = [8, 1, 16, 32], strides = [1, 1, 1, 1]} : vector<8x2x16x32xf32> to vector<8x1x16x32xf32>
    %127 = vector.shape_cast %126 : vector<8x1x16x32xf32> to vector<8x16x32xf32>
    %128 = vector.shape_cast %127 : vector<8x16x32xf32> to vector<128x32xf32>
    %c1_94 = arith.constant 1 : index
    %c1_95 = arith.constant 1 : index
    %c0_96 = arith.constant 0 : index
    %c0_97 = arith.constant 0 : index
    %129 = vector.load %arg3[%c1_94, %c1_95, %c0_96, %c0_97] : memref<3x3x32x64xf32, #tpu.memory_space<vmem>>, vector<1x1x32x64xf32>
    %130 = vector.shape_cast %129 : vector<1x1x32x64xf32> to vector<32x64xf32>
    %cst_98 = arith.constant dense<0.000000e+00> : vector<128x64xf32>
    %131 = tpu.matmul %128, %130, %cst_98 {dimension_numbers = #tpu.dot_dimension_numbers<[1], [0], [0], [1], [0, 0, 1, 1], [], []>} : vector<128x32xf32>, vector<32x64xf32>, vector<128x64xf32> -> vector<128x64xf32>
    %132 = arith.addf %123, %131 : vector<128x64xf32>
    %133 = vector.extract_strided_slice %86 {offsets = [1, 2, 0], sizes = [16, 16, 32], strides = [1, 1, 1]} : vector<18x18x32xf32> to vector<16x16x32xf32>
    %134 = vector.shape_cast %133 : vector<16x16x32xf32> to vector<8x2x16x32xf32>
    %135 = vector.extract_strided_slice %134 {offsets = [0, 0, 0, 0], sizes = [8, 1, 16, 32], strides = [1, 1, 1, 1]} : vector<8x2x16x32xf32> to vector<8x1x16x32xf32>
    %136 = vector.shape_cast %135 : vector<8x1x16x32xf32> to vector<8x16x32xf32>
    %137 = vector.shape_cast %136 : vector<8x16x32xf32> to vector<128x32xf32>
    %c1_99 = arith.constant 1 : index
    %c2_100 = arith.constant 2 : index
    %c0_101 = arith.constant 0 : index
    %c0_102 = arith.constant 0 : index
    %138 = vector.load %arg3[%c1_99, %c2_100, %c0_101, %c0_102] : memref<3x3x32x64xf32, #tpu.memory_space<vmem>>, vector<1x1x32x64xf32>
    %139 = vector.shape_cast %138 : vector<1x1x32x64xf32> to vector<32x64xf32>
    %cst_103 = arith.constant dense<0.000000e+00> : vector<128x64xf32>
    %140 = tpu.matmul %137, %139, %cst_103 {dimension_numbers = #tpu.dot_dimension_numbers<[1], [0], [0], [1], [0, 0, 1, 1], [], []>} : vector<128x32xf32>, vector<32x64xf32>, vector<128x64xf32> -> vector<128x64xf32>
    %141 = arith.addf %132, %140 : vector<128x64xf32>
    %142 = vector.extract_strided_slice %86 {offsets = [2, 0, 0], sizes = [16, 16, 32], strides = [1, 1, 1]} : vector<18x18x32xf32> to vector<16x16x32xf32>
    %143 = vector.shape_cast %142 : vector<16x16x32xf32> to vector<8x2x16x32xf32>
    %144 = vector.extract_strided_slice %143 {offsets = [0, 0, 0, 0], sizes = [8, 1, 16, 32], strides = [1, 1, 1, 1]} : vector<8x2x16x32xf32> to vector<8x1x16x32xf32>
    %145 = vector.shape_cast %144 : vector<8x1x16x32xf32> to vector<8x16x32xf32>
    %146 = vector.shape_cast %145 : vector<8x16x32xf32> to vector<128x32xf32>
    %c2_104 = arith.constant 2 : index
    %c0_105 = arith.constant 0 : index
    %c0_106 = arith.constant 0 : index
    %c0_107 = arith.constant 0 : index
    %147 = vector.load %arg3[%c2_104, %c0_105, %c0_106, %c0_107] : memref<3x3x32x64xf32, #tpu.memory_space<vmem>>, vector<1x1x32x64xf32>
    %148 = vector.shape_cast %147 : vector<1x1x32x64xf32> to vector<32x64xf32>
    %cst_108 = arith.constant dense<0.000000e+00> : vector<128x64xf32>
    %149 = tpu.matmul %146, %148, %cst_108 {dimension_numbers = #tpu.dot_dimension_numbers<[1], [0], [0], [1], [0, 0, 1, 1], [], []>} : vector<128x32xf32>, vector<32x64xf32>, vector<128x64xf32> -> vector<128x64xf32>
    %150 = arith.addf %141, %149 : vector<128x64xf32>
    %151 = vector.extract_strided_slice %86 {offsets = [2, 1, 0], sizes = [16, 16, 32], strides = [1, 1, 1]} : vector<18x18x32xf32> to vector<16x16x32xf32>
    %152 = vector.shape_cast %151 : vector<16x16x32xf32> to vector<8x2x16x32xf32>
    %153 = vector.extract_strided_slice %152 {offsets = [0, 0, 0, 0], sizes = [8, 1, 16, 32], strides = [1, 1, 1, 1]} : vector<8x2x16x32xf32> to vector<8x1x16x32xf32>
    %154 = vector.shape_cast %153 : vector<8x1x16x32xf32> to vector<8x16x32xf32>
    %155 = vector.shape_cast %154 : vector<8x16x32xf32> to vector<128x32xf32>
    %c2_109 = arith.constant 2 : index
    %c1_110 = arith.constant 1 : index
    %c0_111 = arith.constant 0 : index
    %c0_112 = arith.constant 0 : index
    %156 = vector.load %arg3[%c2_109, %c1_110, %c0_111, %c0_112] : memref<3x3x32x64xf32, #tpu.memory_space<vmem>>, vector<1x1x32x64xf32>
    %157 = vector.shape_cast %156 : vector<1x1x32x64xf32> to vector<32x64xf32>
    %cst_113 = arith.constant dense<0.000000e+00> : vector<128x64xf32>
    %158 = tpu.matmul %155, %157, %cst_113 {dimension_numbers = #tpu.dot_dimension_numbers<[1], [0], [0], [1], [0, 0, 1, 1], [], []>} : vector<128x32xf32>, vector<32x64xf32>, vector<128x64xf32> -> vector<128x64xf32>
    %159 = arith.addf %150, %158 : vector<128x64xf32>
    %160 = vector.extract_strided_slice %86 {offsets = [2, 2, 0], sizes = [16, 16, 32], strides = [1, 1, 1]} : vector<18x18x32xf32> to vector<16x16x32xf32>
    %161 = vector.shape_cast %160 : vector<16x16x32xf32> to vector<8x2x16x32xf32>
    %162 = vector.extract_strided_slice %161 {offsets = [0, 0, 0, 0], sizes = [8, 1, 16, 32], strides = [1, 1, 1, 1]} : vector<8x2x16x32xf32> to vector<8x1x16x32xf32>
    %163 = vector.shape_cast %162 : vector<8x1x16x32xf32> to vector<8x16x32xf32>
    %164 = vector.shape_cast %163 : vector<8x16x32xf32> to vector<128x32xf32>
    %c2_114 = arith.constant 2 : index
    %c2_115 = arith.constant 2 : index
    %c0_116 = arith.constant 0 : index
    %c0_117 = arith.constant 0 : index
    %165 = vector.load %arg3[%c2_114, %c2_115, %c0_116, %c0_117] : memref<3x3x32x64xf32, #tpu.memory_space<vmem>>, vector<1x1x32x64xf32>
    %166 = vector.shape_cast %165 : vector<1x1x32x64xf32> to vector<32x64xf32>
    %cst_118 = arith.constant dense<0.000000e+00> : vector<128x64xf32>
    %167 = tpu.matmul %164, %166, %cst_118 {dimension_numbers = #tpu.dot_dimension_numbers<[1], [0], [0], [1], [0, 0, 1, 1], [], []>} : vector<128x32xf32>, vector<32x64xf32>, vector<128x64xf32> -> vector<128x64xf32>
    %168 = arith.addf %159, %167 : vector<128x64xf32>
    %c0_119 = arith.constant 0 : index
    %c0_120 = arith.constant 0 : index
    %169 = vector.load %arg6[%c0_119, %c0_120] : memref<64x128xf32, #tpu.memory_space<vmem>>, vector<64x128xf32>
    %cst_121 = arith.constant dense<0.000000e+00> : vector<64x64xf32>
    %170 = tpu.matmul %169, %168, %cst_121 {dimension_numbers = #tpu.dot_dimension_numbers<[1], [0], [0], [1], [0, 0, 1, 1], [], []>} : vector<64x128xf32>, vector<128x64xf32>, vector<64x64xf32> -> vector<64x64xf32>
    %cst_122 = arith.constant dense<0.000000e+00> : vector<64xf32>
    %171 = vector.multi_reduction <add>, %170, %cst_122 [0] : vector<64x64xf32> to vector<64xf32>
    %172 = vector.shape_cast %171 : vector<64xf32> to vector<1x64xf32>
    %cst_123 = arith.constant 6.400000e+01 : f32
    %173 = vector.broadcast %cst_123 : f32 to vector<1x64xf32>
    %174 = arith.divf %172, %173 : vector<1x64xf32>
    %175 = vector.broadcast %174 : vector<1x64xf32> to vector<64x64xf32>
    %176 = arith.subf %170, %175 : vector<64x64xf32>
    %177 = arith.mulf %176, %176 : vector<64x64xf32>
    %cst_124 = arith.constant dense<0.000000e+00> : vector<64xf32>
    %178 = vector.multi_reduction <add>, %177, %cst_124 [0] : vector<64x64xf32> to vector<64xf32>
    %179 = vector.shape_cast %178 : vector<64xf32> to vector<1x64xf32>
    %cst_125 = arith.constant 6.400000e+01 : f32
    %180 = vector.broadcast %cst_125 : f32 to vector<1x64xf32>
    %181 = arith.divf %179, %180 : vector<1x64xf32>
    %cst_126 = arith.constant 9.99999974E-6 : f32
    %182 = vector.broadcast %cst_126 : f32 to vector<1x64xf32>
    %183 = arith.addf %181, %182 : vector<1x64xf32>
    %184 = math.rsqrt %183 : vector<1x64xf32>
    %185 = vector.broadcast %184 : vector<1x64xf32> to vector<64x64xf32>
    %186 = arith.mulf %176, %185 : vector<64x64xf32>
    %cst_127 = arith.constant 0.000000e+00 : f32
    %187 = vector.broadcast %cst_127 : f32 to vector<64x64xf32>
    %188 = arith.cmpf oge, %186, %187 : vector<64x64xf32>
    %cst_128 = arith.constant 2.000000e-01 : f32
    %189 = vector.broadcast %cst_128 : f32 to vector<64x64xf32>
    %190 = arith.mulf %189, %186 : vector<64x64xf32>
    %191 = arith.select %188, %186, %190 : vector<64x64xi1>, vector<64x64xf32>
    %192 = vector.shape_cast %191 : vector<64x64xf32> to vector<8x8x64xf32>
    %cst_129 = arith.constant 0.000000e+00 : f32
    %193 = vector.broadcast %cst_129 : f32 to vector<10x10x64xf32>
    %c0_130 = arith.constant 0 : index
    %c0_131 = arith.constant 0 : index
    %c0_132 = arith.constant 0 : index
    %194 = vector.load %arg14[%c0_130, %c0_131, %c0_132] : memref<10x10x64xf32, #tpu.memory_space<vmem>>, vector<10x10x64xf32>
    tpu.vector_store %arg14[%c0_130, %c0_131, %c0_132], %193 {strides = array<i32>} : memref<10x10x64xf32, #tpu.memory_space<vmem>>, vector<10x10x64xf32>,
    %c1_133 = arith.constant 1 : index
    %c1_134 = arith.constant 1 : index
    %c0_135 = arith.constant 0 : index
    %195 = vector.load %arg14[%c1_133, %c1_134, %c0_135] : memref<10x10x64xf32, #tpu.memory_space<vmem>>, vector<8x8x64xf32>
    tpu.vector_store %arg14[%c1_133, %c1_134, %c0_135], %192 {strides = array<i32>} : memref<10x10x64xf32, #tpu.memory_space<vmem>>, vector<8x8x64xf32>,
    %c0_136 = arith.constant 0 : index
    %c0_137 = arith.constant 0 : index
    %c0_138 = arith.constant 0 : index
    %196 = vector.load %arg14[%c0_136, %c0_137, %c0_138] : memref<10x10x64xf32, #tpu.memory_space<vmem>>, vector<10x10x64xf32>
    %cst_139 = arith.constant 0.000000e+00 : f32
    %197 = vector.broadcast %cst_139 : f32 to vector<32x128xf32>
    %198 = vector.extract_strided_slice %196 {offsets = [0, 0, 0], sizes = [8, 8, 64], strides = [1, 1, 1]} : vector<10x10x64xf32> to vector<8x8x64xf32>
    %199 = vector.shape_cast %198 : vector<8x8x64xf32> to vector<4x2x8x64xf32>
    %200 = vector.extract_strided_slice %199 {offsets = [0, 0, 0, 0], sizes = [4, 1, 8, 64], strides = [1, 1, 1, 1]} : vector<4x2x8x64xf32> to vector<4x1x8x64xf32>
    %201 = vector.shape_cast %200 : vector<4x1x8x64xf32> to vector<4x8x64xf32>
    %202 = vector.shape_cast %201 : vector<4x8x64xf32> to vector<32x64xf32>
    %c0_140 = arith.constant 0 : index
    %c0_141 = arith.constant 0 : index
    %c0_142 = arith.constant 0 : index
    %c0_143 = arith.constant 0 : index
    %203 = vector.load %arg4[%c0_140, %c0_141, %c0_142, %c0_143] : memref<3x3x64x128xf32, #tpu.memory_space<vmem>>, vector<1x1x64x128xf32>
    %204 = vector.shape_cast %203 : vector<1x1x64x128xf32> to vector<64x128xf32>
    %cst_144 = arith.constant dense<0.000000e+00> : vector<32x128xf32>
    %205 = tpu.matmul %202, %204, %cst_144 {dimension_numbers = #tpu.dot_dimension_numbers<[1], [0], [0], [1], [0, 0, 1, 1], [], []>} : vector<32x64xf32>, vector<64x128xf32>, vector<32x128xf32> -> vector<32x128xf32>
    %206 = arith.addf %197, %205 : vector<32x128xf32>
    %207 = vector.extract_strided_slice %196 {offsets = [0, 1, 0], sizes = [8, 8, 64], strides = [1, 1, 1]} : vector<10x10x64xf32> to vector<8x8x64xf32>
    %208 = vector.shape_cast %207 : vector<8x8x64xf32> to vector<4x2x8x64xf32>
    %209 = vector.extract_strided_slice %208 {offsets = [0, 0, 0, 0], sizes = [4, 1, 8, 64], strides = [1, 1, 1, 1]} : vector<4x2x8x64xf32> to vector<4x1x8x64xf32>
    %210 = vector.shape_cast %209 : vector<4x1x8x64xf32> to vector<4x8x64xf32>
    %211 = vector.shape_cast %210 : vector<4x8x64xf32> to vector<32x64xf32>
    %c0_145 = arith.constant 0 : index
    %c1_146 = arith.constant 1 : index
    %c0_147 = arith.constant 0 : index
    %c0_148 = arith.constant 0 : index
    %212 = vector.load %arg4[%c0_145, %c1_146, %c0_147, %c0_148] : memref<3x3x64x128xf32, #tpu.memory_space<vmem>>, vector<1x1x64x128xf32>
    %213 = vector.shape_cast %212 : vector<1x1x64x128xf32> to vector<64x128xf32>
    %cst_149 = arith.constant dense<0.000000e+00> : vector<32x128xf32>
    %214 = tpu.matmul %211, %213, %cst_149 {dimension_numbers = #tpu.dot_dimension_numbers<[1], [0], [0], [1], [0, 0, 1, 1], [], []>} : vector<32x64xf32>, vector<64x128xf32>, vector<32x128xf32> -> vector<32x128xf32>
    %215 = arith.addf %206, %214 : vector<32x128xf32>
    %216 = vector.extract_strided_slice %196 {offsets = [0, 2, 0], sizes = [8, 8, 64], strides = [1, 1, 1]} : vector<10x10x64xf32> to vector<8x8x64xf32>
    %217 = vector.shape_cast %216 : vector<8x8x64xf32> to vector<4x2x8x64xf32>
    %218 = vector.extract_strided_slice %217 {offsets = [0, 0, 0, 0], sizes = [4, 1, 8, 64], strides = [1, 1, 1, 1]} : vector<4x2x8x64xf32> to vector<4x1x8x64xf32>
    %219 = vector.shape_cast %218 : vector<4x1x8x64xf32> to vector<4x8x64xf32>
    %220 = vector.shape_cast %219 : vector<4x8x64xf32> to vector<32x64xf32>
    %c0_150 = arith.constant 0 : index
    %c2_151 = arith.constant 2 : index
    %c0_152 = arith.constant 0 : index
    %c0_153 = arith.constant 0 : index
    %221 = vector.load %arg4[%c0_150, %c2_151, %c0_152, %c0_153] : memref<3x3x64x128xf32, #tpu.memory_space<vmem>>, vector<1x1x64x128xf32>
    %222 = vector.shape_cast %221 : vector<1x1x64x128xf32> to vector<64x128xf32>
    %cst_154 = arith.constant dense<0.000000e+00> : vector<32x128xf32>
    %223 = tpu.matmul %220, %222, %cst_154 {dimension_numbers = #tpu.dot_dimension_numbers<[1], [0], [0], [1], [0, 0, 1, 1], [], []>} : vector<32x64xf32>, vector<64x128xf32>, vector<32x128xf32> -> vector<32x128xf32>
    %224 = arith.addf %215, %223 : vector<32x128xf32>
    %225 = vector.extract_strided_slice %196 {offsets = [1, 0, 0], sizes = [8, 8, 64], strides = [1, 1, 1]} : vector<10x10x64xf32> to vector<8x8x64xf32>
    %226 = vector.shape_cast %225 : vector<8x8x64xf32> to vector<4x2x8x64xf32>
    %227 = vector.extract_strided_slice %226 {offsets = [0, 0, 0, 0], sizes = [4, 1, 8, 64], strides = [1, 1, 1, 1]} : vector<4x2x8x64xf32> to vector<4x1x8x64xf32>
    %228 = vector.shape_cast %227 : vector<4x1x8x64xf32> to vector<4x8x64xf32>
    %229 = vector.shape_cast %228 : vector<4x8x64xf32> to vector<32x64xf32>
    %c1_155 = arith.constant 1 : index
    %c0_156 = arith.constant 0 : index
    %c0_157 = arith.constant 0 : index
    %c0_158 = arith.constant 0 : index
    %230 = vector.load %arg4[%c1_155, %c0_156, %c0_157, %c0_158] : memref<3x3x64x128xf32, #tpu.memory_space<vmem>>, vector<1x1x64x128xf32>
    %231 = vector.shape_cast %230 : vector<1x1x64x128xf32> to vector<64x128xf32>
    %cst_159 = arith.constant dense<0.000000e+00> : vector<32x128xf32>
    %232 = tpu.matmul %229, %231, %cst_159 {dimension_numbers = #tpu.dot_dimension_numbers<[1], [0], [0], [1], [0, 0, 1, 1], [], []>} : vector<32x64xf32>, vector<64x128xf32>, vector<32x128xf32> -> vector<32x128xf32>
    %233 = arith.addf %224, %232 : vector<32x128xf32>
    %234 = vector.extract_strided_slice %196 {offsets = [1, 1, 0], sizes = [8, 8, 64], strides = [1, 1, 1]} : vector<10x10x64xf32> to vector<8x8x64xf32>
    %235 = vector.shape_cast %234 : vector<8x8x64xf32> to vector<4x2x8x64xf32>
    %236 = vector.extract_strided_slice %235 {offsets = [0, 0, 0, 0], sizes = [4, 1, 8, 64], strides = [1, 1, 1, 1]} : vector<4x2x8x64xf32> to vector<4x1x8x64xf32>
    %237 = vector.shape_cast %236 : vector<4x1x8x64xf32> to vector<4x8x64xf32>
    %238 = vector.shape_cast %237 : vector<4x8x64xf32> to vector<32x64xf32>
    %c1_160 = arith.constant 1 : index
    %c1_161 = arith.constant 1 : index
    %c0_162 = arith.constant 0 : index
    %c0_163 = arith.constant 0 : index
    %239 = vector.load %arg4[%c1_160, %c1_161, %c0_162, %c0_163] : memref<3x3x64x128xf32, #tpu.memory_space<vmem>>, vector<1x1x64x128xf32>
    %240 = vector.shape_cast %239 : vector<1x1x64x128xf32> to vector<64x128xf32>
    %cst_164 = arith.constant dense<0.000000e+00> : vector<32x128xf32>
    %241 = tpu.matmul %238, %240, %cst_164 {dimension_numbers = #tpu.dot_dimension_numbers<[1], [0], [0], [1], [0, 0, 1, 1], [], []>} : vector<32x64xf32>, vector<64x128xf32>, vector<32x128xf32> -> vector<32x128xf32>
    %242 = arith.addf %233, %241 : vector<32x128xf32>
    %243 = vector.extract_strided_slice %196 {offsets = [1, 2, 0], sizes = [8, 8, 64], strides = [1, 1, 1]} : vector<10x10x64xf32> to vector<8x8x64xf32>
    %244 = vector.shape_cast %243 : vector<8x8x64xf32> to vector<4x2x8x64xf32>
    %245 = vector.extract_strided_slice %244 {offsets = [0, 0, 0, 0], sizes = [4, 1, 8, 64], strides = [1, 1, 1, 1]} : vector<4x2x8x64xf32> to vector<4x1x8x64xf32>
    %246 = vector.shape_cast %245 : vector<4x1x8x64xf32> to vector<4x8x64xf32>
    %247 = vector.shape_cast %246 : vector<4x8x64xf32> to vector<32x64xf32>
    %c1_165 = arith.constant 1 : index
    %c2_166 = arith.constant 2 : index
    %c0_167 = arith.constant 0 : index
    %c0_168 = arith.constant 0 : index
    %248 = vector.load %arg4[%c1_165, %c2_166, %c0_167, %c0_168] : memref<3x3x64x128xf32, #tpu.memory_space<vmem>>, vector<1x1x64x128xf32>
    %249 = vector.shape_cast %248 : vector<1x1x64x128xf32> to vector<64x128xf32>
    %cst_169 = arith.constant dense<0.000000e+00> : vector<32x128xf32>
    %250 = tpu.matmul %247, %249, %cst_169 {dimension_numbers = #tpu.dot_dimension_numbers<[1], [0], [0], [1], [0, 0, 1, 1], [], []>} : vector<32x64xf32>, vector<64x128xf32>, vector<32x128xf32> -> vector<32x128xf32>
    %251 = arith.addf %242, %250 : vector<32x128xf32>
    %252 = vector.extract_strided_slice %196 {offsets = [2, 0, 0], sizes = [8, 8, 64], strides = [1, 1, 1]} : vector<10x10x64xf32> to vector<8x8x64xf32>
    %253 = vector.shape_cast %252 : vector<8x8x64xf32> to vector<4x2x8x64xf32>
    %254 = vector.extract_strided_slice %253 {offsets = [0, 0, 0, 0], sizes = [4, 1, 8, 64], strides = [1, 1, 1, 1]} : vector<4x2x8x64xf32> to vector<4x1x8x64xf32>
    %255 = vector.shape_cast %254 : vector<4x1x8x64xf32> to vector<4x8x64xf32>
    %256 = vector.shape_cast %255 : vector<4x8x64xf32> to vector<32x64xf32>
    %c2_170 = arith.constant 2 : index
    %c0_171 = arith.constant 0 : index
    %c0_172 = arith.constant 0 : index
    %c0_173 = arith.constant 0 : index
    %257 = vector.load %arg4[%c2_170, %c0_171, %c0_172, %c0_173] : memref<3x3x64x128xf32, #tpu.memory_space<vmem>>, vector<1x1x64x128xf32>
    %258 = vector.shape_cast %257 : vector<1x1x64x128xf32> to vector<64x128xf32>
    %cst_174 = arith.constant dense<0.000000e+00> : vector<32x128xf32>
    %259 = tpu.matmul %256, %258, %cst_174 {dimension_numbers = #tpu.dot_dimension_numbers<[1], [0], [0], [1], [0, 0, 1, 1], [], []>} : vector<32x64xf32>, vector<64x128xf32>, vector<32x128xf32> -> vector<32x128xf32>
    %260 = arith.addf %251, %259 : vector<32x128xf32>
    %261 = vector.extract_strided_slice %196 {offsets = [2, 1, 0], sizes = [8, 8, 64], strides = [1, 1, 1]} : vector<10x10x64xf32> to vector<8x8x64xf32>
    %262 = vector.shape_cast %261 : vector<8x8x64xf32> to vector<4x2x8x64xf32>
    %263 = vector.extract_strided_slice %262 {offsets = [0, 0, 0, 0], sizes = [4, 1, 8, 64], strides = [1, 1, 1, 1]} : vector<4x2x8x64xf32> to vector<4x1x8x64xf32>
    %264 = vector.shape_cast %263 : vector<4x1x8x64xf32> to vector<4x8x64xf32>
    %265 = vector.shape_cast %264 : vector<4x8x64xf32> to vector<32x64xf32>
    %c2_175 = arith.constant 2 : index
    %c1_176 = arith.constant 1 : index
    %c0_177 = arith.constant 0 : index
    %c0_178 = arith.constant 0 : index
    %266 = vector.load %arg4[%c2_175, %c1_176, %c0_177, %c0_178] : memref<3x3x64x128xf32, #tpu.memory_space<vmem>>, vector<1x1x64x128xf32>
    %267 = vector.shape_cast %266 : vector<1x1x64x128xf32> to vector<64x128xf32>
    %cst_179 = arith.constant dense<0.000000e+00> : vector<32x128xf32>
    %268 = tpu.matmul %265, %267, %cst_179 {dimension_numbers = #tpu.dot_dimension_numbers<[1], [0], [0], [1], [0, 0, 1, 1], [], []>} : vector<32x64xf32>, vector<64x128xf32>, vector<32x128xf32> -> vector<32x128xf32>
    %269 = arith.addf %260, %268 : vector<32x128xf32>
    %270 = vector.extract_strided_slice %196 {offsets = [2, 2, 0], sizes = [8, 8, 64], strides = [1, 1, 1]} : vector<10x10x64xf32> to vector<8x8x64xf32>
    %271 = vector.shape_cast %270 : vector<8x8x64xf32> to vector<4x2x8x64xf32>
    %272 = vector.extract_strided_slice %271 {offsets = [0, 0, 0, 0], sizes = [4, 1, 8, 64], strides = [1, 1, 1, 1]} : vector<4x2x8x64xf32> to vector<4x1x8x64xf32>
    %273 = vector.shape_cast %272 : vector<4x1x8x64xf32> to vector<4x8x64xf32>
    %274 = vector.shape_cast %273 : vector<4x8x64xf32> to vector<32x64xf32>
    %c2_180 = arith.constant 2 : index
    %c2_181 = arith.constant 2 : index
    %c0_182 = arith.constant 0 : index
    %c0_183 = arith.constant 0 : index
    %275 = vector.load %arg4[%c2_180, %c2_181, %c0_182, %c0_183] : memref<3x3x64x128xf32, #tpu.memory_space<vmem>>, vector<1x1x64x128xf32>
    %276 = vector.shape_cast %275 : vector<1x1x64x128xf32> to vector<64x128xf32>
    %cst_184 = arith.constant dense<0.000000e+00> : vector<32x128xf32>
    %277 = tpu.matmul %274, %276, %cst_184 {dimension_numbers = #tpu.dot_dimension_numbers<[1], [0], [0], [1], [0, 0, 1, 1], [], []>} : vector<32x64xf32>, vector<64x128xf32>, vector<32x128xf32> -> vector<32x128xf32>
    %278 = arith.addf %269, %277 : vector<32x128xf32>
    %c0_185 = arith.constant 0 : index
    %c0_186 = arith.constant 0 : index
    %279 = vector.load %arg7[%c0_185, %c0_186] : memref<16x32xf32, #tpu.memory_space<vmem>>, vector<16x32xf32>
    %cst_187 = arith.constant dense<0.000000e+00> : vector<16x128xf32>
    %280 = tpu.matmul %279, %278, %cst_187 {dimension_numbers = #tpu.dot_dimension_numbers<[1], [0], [0], [1], [0, 0, 1, 1], [], []>} : vector<16x32xf32>, vector<32x128xf32>, vector<16x128xf32> -> vector<16x128xf32>
    %cst_188 = arith.constant dense<0.000000e+00> : vector<128xf32>
    %281 = vector.multi_reduction <add>, %280, %cst_188 [0] : vector<16x128xf32> to vector<128xf32>
    %282 = vector.shape_cast %281 : vector<128xf32> to vector<1x128xf32>
    %cst_189 = arith.constant 1.600000e+01 : f32
    %283 = vector.broadcast %cst_189 : f32 to vector<1x128xf32>
    %284 = arith.divf %282, %283 : vector<1x128xf32>
    %285 = vector.broadcast %284 : vector<1x128xf32> to vector<16x128xf32>
    %286 = arith.subf %280, %285 : vector<16x128xf32>
    %287 = arith.mulf %286, %286 : vector<16x128xf32>
    %cst_190 = arith.constant dense<0.000000e+00> : vector<128xf32>
    %288 = vector.multi_reduction <add>, %287, %cst_190 [0] : vector<16x128xf32> to vector<128xf32>
    %289 = vector.shape_cast %288 : vector<128xf32> to vector<1x128xf32>
    %cst_191 = arith.constant 1.600000e+01 : f32
    %290 = vector.broadcast %cst_191 : f32 to vector<1x128xf32>
    %291 = arith.divf %289, %290 : vector<1x128xf32>
    %cst_192 = arith.constant 9.99999974E-6 : f32
    %292 = vector.broadcast %cst_192 : f32 to vector<1x128xf32>
    %293 = arith.addf %291, %292 : vector<1x128xf32>
    %294 = math.rsqrt %293 : vector<1x128xf32>
    %295 = vector.broadcast %294 : vector<1x128xf32> to vector<16x128xf32>
    %296 = arith.mulf %286, %295 : vector<16x128xf32>
    %cst_193 = arith.constant 0.000000e+00 : f32
    %297 = vector.broadcast %cst_193 : f32 to vector<16x128xf32>
    %298 = arith.cmpf oge, %296, %297 : vector<16x128xf32>
    %cst_194 = arith.constant 2.000000e-01 : f32
    %299 = vector.broadcast %cst_194 : f32 to vector<16x128xf32>
    %300 = arith.mulf %299, %296 : vector<16x128xf32>
    %301 = arith.select %298, %296, %300 : vector<16x128xi1>, vector<16x128xf32>
    %302 = vector.shape_cast %301 : vector<16x128xf32> to vector<4x4x128xf32>
    %cst_195 = arith.constant 0.000000e+00 : f32
    %303 = vector.broadcast %cst_195 : f32 to vector<6x6x128xf32>
    %c0_196 = arith.constant 0 : index
    %c0_197 = arith.constant 0 : index
    %c0_198 = arith.constant 0 : index
    %304 = vector.load %arg15[%c0_196, %c0_197, %c0_198] : memref<6x6x128xf32, #tpu.memory_space<vmem>>, vector<6x6x128xf32>
    tpu.vector_store %arg15[%c0_196, %c0_197, %c0_198], %303 {strides = array<i32>} : memref<6x6x128xf32, #tpu.memory_space<vmem>>, vector<6x6x128xf32>,
    %c1_199 = arith.constant 1 : index
    %c1_200 = arith.constant 1 : index
    %c0_201 = arith.constant 0 : index
    %305 = vector.load %arg15[%c1_199, %c1_200, %c0_201] : memref<6x6x128xf32, #tpu.memory_space<vmem>>, vector<4x4x128xf32>
    tpu.vector_store %arg15[%c1_199, %c1_200, %c0_201], %302 {strides = array<i32>} : memref<6x6x128xf32, #tpu.memory_space<vmem>>, vector<4x4x128xf32>,
    %c0_202 = arith.constant 0 : index
    %c0_203 = arith.constant 0 : index
    %c0_204 = arith.constant 0 : index
    %306 = vector.load %arg15[%c0_202, %c0_203, %c0_204] : memref<6x6x128xf32, #tpu.memory_space<vmem>>, vector<6x6x128xf32>
    %cst_205 = arith.constant 0.000000e+00 : f32
    %307 = vector.broadcast %cst_205 : f32 to vector<8x256xf32>
    %308 = vector.extract_strided_slice %306 {offsets = [0, 0, 0], sizes = [4, 4, 128], strides = [1, 1, 1]} : vector<6x6x128xf32> to vector<4x4x128xf32>
    %309 = vector.shape_cast %308 : vector<4x4x128xf32> to vector<2x2x4x128xf32>
    %310 = vector.extract_strided_slice %309 {offsets = [0, 0, 0, 0], sizes = [2, 1, 4, 128], strides = [1, 1, 1, 1]} : vector<2x2x4x128xf32> to vector<2x1x4x128xf32>
    %311 = vector.shape_cast %310 : vector<2x1x4x128xf32> to vector<2x4x128xf32>
    %312 = vector.shape_cast %311 : vector<2x4x128xf32> to vector<8x128xf32>
    %c0_206 = arith.constant 0 : index
    %c0_207 = arith.constant 0 : index
    %c0_208 = arith.constant 0 : index
    %c0_209 = arith.constant 0 : index
    %313 = vector.load %arg5[%c0_206, %c0_207, %c0_208, %c0_209] : memref<3x3x128x256xf32, #tpu.memory_space<vmem>>, vector<1x1x128x256xf32>
    %314 = vector.shape_cast %313 : vector<1x1x128x256xf32> to vector<128x256xf32>
    %cst_210 = arith.constant dense<0.000000e+00> : vector<8x256xf32>
    %315 = tpu.matmul %312, %314, %cst_210 {dimension_numbers = #tpu.dot_dimension_numbers<[1], [0], [0], [1], [0, 0, 1, 1], [], []>} : vector<8x128xf32>, vector<128x256xf32>, vector<8x256xf32> -> vector<8x256xf32>
    %316 = arith.addf %307, %315 : vector<8x256xf32>
    %317 = vector.extract_strided_slice %306 {offsets = [0, 1, 0], sizes = [4, 4, 128], strides = [1, 1, 1]} : vector<6x6x128xf32> to vector<4x4x128xf32>
    %318 = vector.shape_cast %317 : vector<4x4x128xf32> to vector<2x2x4x128xf32>
    %319 = vector.extract_strided_slice %318 {offsets = [0, 0, 0, 0], sizes = [2, 1, 4, 128], strides = [1, 1, 1, 1]} : vector<2x2x4x128xf32> to vector<2x1x4x128xf32>
    %320 = vector.shape_cast %319 : vector<2x1x4x128xf32> to vector<2x4x128xf32>
    %321 = vector.shape_cast %320 : vector<2x4x128xf32> to vector<8x128xf32>
    %c0_211 = arith.constant 0 : index
    %c1_212 = arith.constant 1 : index
    %c0_213 = arith.constant 0 : index
    %c0_214 = arith.constant 0 : index
    %322 = vector.load %arg5[%c0_211, %c1_212, %c0_213, %c0_214] : memref<3x3x128x256xf32, #tpu.memory_space<vmem>>, vector<1x1x128x256xf32>
    %323 = vector.shape_cast %322 : vector<1x1x128x256xf32> to vector<128x256xf32>
    %cst_215 = arith.constant dense<0.000000e+00> : vector<8x256xf32>
    %324 = tpu.matmul %321, %323, %cst_215 {dimension_numbers = #tpu.dot_dimension_numbers<[1], [0], [0], [1], [0, 0, 1, 1], [], []>} : vector<8x128xf32>, vector<128x256xf32>, vector<8x256xf32> -> vector<8x256xf32>
    %325 = arith.addf %316, %324 : vector<8x256xf32>
    %326 = vector.extract_strided_slice %306 {offsets = [0, 2, 0], sizes = [4, 4, 128], strides = [1, 1, 1]} : vector<6x6x128xf32> to vector<4x4x128xf32>
    %327 = vector.shape_cast %326 : vector<4x4x128xf32> to vector<2x2x4x128xf32>
    %328 = vector.extract_strided_slice %327 {offsets = [0, 0, 0, 0], sizes = [2, 1, 4, 128], strides = [1, 1, 1, 1]} : vector<2x2x4x128xf32> to vector<2x1x4x128xf32>
    %329 = vector.shape_cast %328 : vector<2x1x4x128xf32> to vector<2x4x128xf32>
    %330 = vector.shape_cast %329 : vector<2x4x128xf32> to vector<8x128xf32>
    %c0_216 = arith.constant 0 : index
    %c2_217 = arith.constant 2 : index
    %c0_218 = arith.constant 0 : index
    %c0_219 = arith.constant 0 : index
    %331 = vector.load %arg5[%c0_216, %c2_217, %c0_218, %c0_219] : memref<3x3x128x256xf32, #tpu.memory_space<vmem>>, vector<1x1x128x256xf32>
    %332 = vector.shape_cast %331 : vector<1x1x128x256xf32> to vector<128x256xf32>
    %cst_220 = arith.constant dense<0.000000e+00> : vector<8x256xf32>
    %333 = tpu.matmul %330, %332, %cst_220 {dimension_numbers = #tpu.dot_dimension_numbers<[1], [0], [0], [1], [0, 0, 1, 1], [], []>} : vector<8x128xf32>, vector<128x256xf32>, vector<8x256xf32> -> vector<8x256xf32>
    %334 = arith.addf %325, %333 : vector<8x256xf32>
    %335 = vector.extract_strided_slice %306 {offsets = [1, 0, 0], sizes = [4, 4, 128], strides = [1, 1, 1]} : vector<6x6x128xf32> to vector<4x4x128xf32>
    %336 = vector.shape_cast %335 : vector<4x4x128xf32> to vector<2x2x4x128xf32>
    %337 = vector.extract_strided_slice %336 {offsets = [0, 0, 0, 0], sizes = [2, 1, 4, 128], strides = [1, 1, 1, 1]} : vector<2x2x4x128xf32> to vector<2x1x4x128xf32>
    %338 = vector.shape_cast %337 : vector<2x1x4x128xf32> to vector<2x4x128xf32>
    %339 = vector.shape_cast %338 : vector<2x4x128xf32> to vector<8x128xf32>
    %c1_221 = arith.constant 1 : index
    %c0_222 = arith.constant 0 : index
    %c0_223 = arith.constant 0 : index
    %c0_224 = arith.constant 0 : index
    %340 = vector.load %arg5[%c1_221, %c0_222, %c0_223, %c0_224] : memref<3x3x128x256xf32, #tpu.memory_space<vmem>>, vector<1x1x128x256xf32>
    %341 = vector.shape_cast %340 : vector<1x1x128x256xf32> to vector<128x256xf32>
    %cst_225 = arith.constant dense<0.000000e+00> : vector<8x256xf32>
    %342 = tpu.matmul %339, %341, %cst_225 {dimension_numbers = #tpu.dot_dimension_numbers<[1], [0], [0], [1], [0, 0, 1, 1], [], []>} : vector<8x128xf32>, vector<128x256xf32>, vector<8x256xf32> -> vector<8x256xf32>
    %343 = arith.addf %334, %342 : vector<8x256xf32>
    %344 = vector.extract_strided_slice %306 {offsets = [1, 1, 0], sizes = [4, 4, 128], strides = [1, 1, 1]} : vector<6x6x128xf32> to vector<4x4x128xf32>
    %345 = vector.shape_cast %344 : vector<4x4x128xf32> to vector<2x2x4x128xf32>
    %346 = vector.extract_strided_slice %345 {offsets = [0, 0, 0, 0], sizes = [2, 1, 4, 128], strides = [1, 1, 1, 1]} : vector<2x2x4x128xf32> to vector<2x1x4x128xf32>
    %347 = vector.shape_cast %346 : vector<2x1x4x128xf32> to vector<2x4x128xf32>
    %348 = vector.shape_cast %347 : vector<2x4x128xf32> to vector<8x128xf32>
    %c1_226 = arith.constant 1 : index
    %c1_227 = arith.constant 1 : index
    %c0_228 = arith.constant 0 : index
    %c0_229 = arith.constant 0 : index
    %349 = vector.load %arg5[%c1_226, %c1_227, %c0_228, %c0_229] : memref<3x3x128x256xf32, #tpu.memory_space<vmem>>, vector<1x1x128x256xf32>
    %350 = vector.shape_cast %349 : vector<1x1x128x256xf32> to vector<128x256xf32>
    %cst_230 = arith.constant dense<0.000000e+00> : vector<8x256xf32>
    %351 = tpu.matmul %348, %350, %cst_230 {dimension_numbers = #tpu.dot_dimension_numbers<[1], [0], [0], [1], [0, 0, 1, 1], [], []>} : vector<8x128xf32>, vector<128x256xf32>, vector<8x256xf32> -> vector<8x256xf32>
    %352 = arith.addf %343, %351 : vector<8x256xf32>
    %353 = vector.extract_strided_slice %306 {offsets = [1, 2, 0], sizes = [4, 4, 128], strides = [1, 1, 1]} : vector<6x6x128xf32> to vector<4x4x128xf32>
    %354 = vector.shape_cast %353 : vector<4x4x128xf32> to vector<2x2x4x128xf32>
    %355 = vector.extract_strided_slice %354 {offsets = [0, 0, 0, 0], sizes = [2, 1, 4, 128], strides = [1, 1, 1, 1]} : vector<2x2x4x128xf32> to vector<2x1x4x128xf32>
    %356 = vector.shape_cast %355 : vector<2x1x4x128xf32> to vector<2x4x128xf32>
    %357 = vector.shape_cast %356 : vector<2x4x128xf32> to vector<8x128xf32>
    %c1_231 = arith.constant 1 : index
    %c2_232 = arith.constant 2 : index
    %c0_233 = arith.constant 0 : index
    %c0_234 = arith.constant 0 : index
    %358 = vector.load %arg5[%c1_231, %c2_232, %c0_233, %c0_234] : memref<3x3x128x256xf32, #tpu.memory_space<vmem>>, vector<1x1x128x256xf32>
    %359 = vector.shape_cast %358 : vector<1x1x128x256xf32> to vector<128x256xf32>
    %cst_235 = arith.constant dense<0.000000e+00> : vector<8x256xf32>
    %360 = tpu.matmul %357, %359, %cst_235 {dimension_numbers = #tpu.dot_dimension_numbers<[1], [0], [0], [1], [0, 0, 1, 1], [], []>} : vector<8x128xf32>, vector<128x256xf32>, vector<8x256xf32> -> vector<8x256xf32>
    %361 = arith.addf %352, %360 : vector<8x256xf32>
    %362 = vector.extract_strided_slice %306 {offsets = [2, 0, 0], sizes = [4, 4, 128], strides = [1, 1, 1]} : vector<6x6x128xf32> to vector<4x4x128xf32>
    %363 = vector.shape_cast %362 : vector<4x4x128xf32> to vector<2x2x4x128xf32>
    %364 = vector.extract_strided_slice %363 {offsets = [0, 0, 0, 0], sizes = [2, 1, 4, 128], strides = [1, 1, 1, 1]} : vector<2x2x4x128xf32> to vector<2x1x4x128xf32>
    %365 = vector.shape_cast %364 : vector<2x1x4x128xf32> to vector<2x4x128xf32>
    %366 = vector.shape_cast %365 : vector<2x4x128xf32> to vector<8x128xf32>
    %c2_236 = arith.constant 2 : index
    %c0_237 = arith.constant 0 : index
    %c0_238 = arith.constant 0 : index
    %c0_239 = arith.constant 0 : index
    %367 = vector.load %arg5[%c2_236, %c0_237, %c0_238, %c0_239] : memref<3x3x128x256xf32, #tpu.memory_space<vmem>>, vector<1x1x128x256xf32>
    %368 = vector.shape_cast %367 : vector<1x1x128x256xf32> to vector<128x256xf32>
    %cst_240 = arith.constant dense<0.000000e+00> : vector<8x256xf32>
    %369 = tpu.matmul %366, %368, %cst_240 {dimension_numbers = #tpu.dot_dimension_numbers<[1], [0], [0], [1], [0, 0, 1, 1], [], []>} : vector<8x128xf32>, vector<128x256xf32>, vector<8x256xf32> -> vector<8x256xf32>
    %370 = arith.addf %361, %369 : vector<8x256xf32>
    %371 = vector.extract_strided_slice %306 {offsets = [2, 1, 0], sizes = [4, 4, 128], strides = [1, 1, 1]} : vector<6x6x128xf32> to vector<4x4x128xf32>
    %372 = vector.shape_cast %371 : vector<4x4x128xf32> to vector<2x2x4x128xf32>
    %373 = vector.extract_strided_slice %372 {offsets = [0, 0, 0, 0], sizes = [2, 1, 4, 128], strides = [1, 1, 1, 1]} : vector<2x2x4x128xf32> to vector<2x1x4x128xf32>
    %374 = vector.shape_cast %373 : vector<2x1x4x128xf32> to vector<2x4x128xf32>
    %375 = vector.shape_cast %374 : vector<2x4x128xf32> to vector<8x128xf32>
    %c2_241 = arith.constant 2 : index
    %c1_242 = arith.constant 1 : index
    %c0_243 = arith.constant 0 : index
    %c0_244 = arith.constant 0 : index
    %376 = vector.load %arg5[%c2_241, %c1_242, %c0_243, %c0_244] : memref<3x3x128x256xf32, #tpu.memory_space<vmem>>, vector<1x1x128x256xf32>
    %377 = vector.shape_cast %376 : vector<1x1x128x256xf32> to vector<128x256xf32>
    %cst_245 = arith.constant dense<0.000000e+00> : vector<8x256xf32>
    %378 = tpu.matmul %375, %377, %cst_245 {dimension_numbers = #tpu.dot_dimension_numbers<[1], [0], [0], [1], [0, 0, 1, 1], [], []>} : vector<8x128xf32>, vector<128x256xf32>, vector<8x256xf32> -> vector<8x256xf32>
    %379 = arith.addf %370, %378 : vector<8x256xf32>
    %380 = vector.extract_strided_slice %306 {offsets = [2, 2, 0], sizes = [4, 4, 128], strides = [1, 1, 1]} : vector<6x6x128xf32> to vector<4x4x128xf32>
    %381 = vector.shape_cast %380 : vector<4x4x128xf32> to vector<2x2x4x128xf32>
    %382 = vector.extract_strided_slice %381 {offsets = [0, 0, 0, 0], sizes = [2, 1, 4, 128], strides = [1, 1, 1, 1]} : vector<2x2x4x128xf32> to vector<2x1x4x128xf32>
    %383 = vector.shape_cast %382 : vector<2x1x4x128xf32> to vector<2x4x128xf32>
    %384 = vector.shape_cast %383 : vector<2x4x128xf32> to vector<8x128xf32>
    %c2_246 = arith.constant 2 : index
    %c2_247 = arith.constant 2 : index
    %c0_248 = arith.constant 0 : index
    %c0_249 = arith.constant 0 : index
    %385 = vector.load %arg5[%c2_246, %c2_247, %c0_248, %c0_249] : memref<3x3x128x256xf32, #tpu.memory_space<vmem>>, vector<1x1x128x256xf32>
    %386 = vector.shape_cast %385 : vector<1x1x128x256xf32> to vector<128x256xf32>
    %cst_250 = arith.constant dense<0.000000e+00> : vector<8x256xf32>
    %387 = tpu.matmul %384, %386, %cst_250 {dimension_numbers = #tpu.dot_dimension_numbers<[1], [0], [0], [1], [0, 0, 1, 1], [], []>} : vector<8x128xf32>, vector<128x256xf32>, vector<8x256xf32> -> vector<8x256xf32>
    %388 = arith.addf %379, %387 : vector<8x256xf32>
    %c0_251 = arith.constant 0 : index
    %c0_252 = arith.constant 0 : index
    %389 = vector.load %arg8[%c0_251, %c0_252] : memref<4x8xf32, #tpu.memory_space<vmem>>, vector<4x8xf32>
    %cst_253 = arith.constant dense<0.000000e+00> : vector<4x256xf32>
    %390 = tpu.matmul %389, %388, %cst_253 {dimension_numbers = #tpu.dot_dimension_numbers<[1], [0], [0], [1], [0, 0, 1, 1], [], []>} : vector<4x8xf32>, vector<8x256xf32>, vector<4x256xf32> -> vector<4x256xf32>
    %cst_254 = arith.constant dense<0.000000e+00> : vector<256xf32>
    %391 = vector.multi_reduction <add>, %390, %cst_254 [0] : vector<4x256xf32> to vector<256xf32>
    %392 = vector.shape_cast %391 : vector<256xf32> to vector<1x256xf32>
    %cst_255 = arith.constant 4.000000e+00 : f32
    %393 = vector.broadcast %cst_255 : f32 to vector<1x256xf32>
    %394 = arith.divf %392, %393 : vector<1x256xf32>
    %395 = vector.broadcast %394 : vector<1x256xf32> to vector<4x256xf32>
    %396 = arith.subf %390, %395 : vector<4x256xf32>
    %397 = arith.mulf %396, %396 : vector<4x256xf32>
    %cst_256 = arith.constant dense<0.000000e+00> : vector<256xf32>
    %398 = vector.multi_reduction <add>, %397, %cst_256 [0] : vector<4x256xf32> to vector<256xf32>
    %399 = vector.shape_cast %398 : vector<256xf32> to vector<1x256xf32>
    %cst_257 = arith.constant 4.000000e+00 : f32
    %400 = vector.broadcast %cst_257 : f32 to vector<1x256xf32>
    %401 = arith.divf %399, %400 : vector<1x256xf32>
    %cst_258 = arith.constant 9.99999974E-6 : f32
    %402 = vector.broadcast %cst_258 : f32 to vector<1x256xf32>
    %403 = arith.addf %401, %402 : vector<1x256xf32>
    %404 = math.rsqrt %403 : vector<1x256xf32>
    %405 = vector.broadcast %404 : vector<1x256xf32> to vector<4x256xf32>
    %406 = arith.mulf %396, %405 : vector<4x256xf32>
    %cst_259 = arith.constant 0.000000e+00 : f32
    %407 = vector.broadcast %cst_259 : f32 to vector<4x256xf32>
    %408 = arith.cmpf oge, %406, %407 : vector<4x256xf32>
    %cst_260 = arith.constant 2.000000e-01 : f32
    %409 = vector.broadcast %cst_260 : f32 to vector<4x256xf32>
    %410 = arith.mulf %409, %406 : vector<4x256xf32>
    %411 = arith.select %408, %406, %410 : vector<4x256xi1>, vector<4x256xf32>
    %c0_261 = arith.constant 0 : index
    %c0_262 = arith.constant 0 : index
    %412 = vector.load %arg9[%c0_261, %c0_262] : memref<4x256xf32, #tpu.memory_space<vmem>>, vector<4x256xf32>
    %413 = arith.mulf %411, %412 : vector<4x256xf32>
    %cst_263 = arith.constant dense<0.000000e+00> : vector<4xf32>
    %414 = vector.multi_reduction <add>, %413, %cst_263 [1] : vector<4x256xf32> to vector<4xf32>
    %415 = vector.shape_cast %414 : vector<4xf32> to vector<4x1xf32>
    %cst_264 = arith.constant dense<0.000000e+00> : vector<1xf32>
    %416 = vector.multi_reduction <add>, %415, %cst_264 [0] : vector<4x1xf32> to vector<1xf32>
    %417 = vector.shape_cast %416 : vector<1xf32> to vector<1x1xf32>
    %c0_265 = arith.constant 0 : index
    %c0_266 = arith.constant 0 : index
    %418 = vector.load %arg10[%c0_265, %c0_266] : memref<1x1xf32, #tpu.memory_space<vmem>>, vector<1x1xf32>
    %419 = arith.addf %417, %418 : vector<1x1xf32>
    %420 = vector.shape_cast %419 : vector<1x1xf32> to vector<1x1x1xf32>
    %421 = vector.broadcast %420 : vector<1x1x1xf32> to vector<1x1x128xf32>
    %c0_267 = arith.constant 0 : index
    %c0_268 = arith.constant 0 : index
    %c0_269 = arith.constant 0 : index
    %422 = vector.load %arg11[%c0_267, %c0_268, %c0_269] : memref<1x1x128xf32, #tpu.memory_space<vmem>>, vector<1x1x128xf32>
    tpu.vector_store %arg11[%c0_267, %c0_268, %c0_269], %421 {strides = array<i32>} : memref<1x1x128xf32, #tpu.memory_space<vmem>>, vector<1x1x128xf32>,
    return
  }
  func.func @transform_0(%arg0: i32) -> (i32, i32, i32, i32) {
    %c0_i32 = arith.constant 0 : i32
    %c0_i32_0 = arith.constant 0 : i32
    %c0_i32_1 = arith.constant 0 : i32
    %c0_i32_2 = arith.constant 0 : i32
    return %arg0, %c0_i32, %c0_i32_0, %c0_i32_1 : i32, i32, i32, i32
  }
  func.func @transform_1(%arg0: i32) -> (i32, i32, i32, i32) {
    %c0_i32 = arith.constant 0 : i32
    %c0_i32_0 = arith.constant 0 : i32
    %c0_i32_1 = arith.constant 0 : i32
    %c0_i32_2 = arith.constant 0 : i32
    %c0_i32_3 = arith.constant 0 : i32
    return %c0_i32, %c0_i32_0, %c0_i32_1, %c0_i32_2 : i32, i32, i32, i32
  }
  func.func @transform_2(%arg0: i32) -> (i32, i32, i32, i32) {
    %c0_i32 = arith.constant 0 : i32
    %c0_i32_0 = arith.constant 0 : i32
    %c0_i32_1 = arith.constant 0 : i32
    %c0_i32_2 = arith.constant 0 : i32
    %c0_i32_3 = arith.constant 0 : i32
    return %c0_i32, %c0_i32_0, %c0_i32_1, %c0_i32_2 : i32, i32, i32, i32
  }
  func.func @transform_3(%arg0: i32) -> (i32, i32, i32, i32) {
    %c0_i32 = arith.constant 0 : i32
    %c0_i32_0 = arith.constant 0 : i32
    %c0_i32_1 = arith.constant 0 : i32
    %c0_i32_2 = arith.constant 0 : i32
    %c0_i32_3 = arith.constant 0 : i32
    return %c0_i32, %c0_i32_0, %c0_i32_1, %c0_i32_2 : i32, i32, i32, i32
  }
  func.func @transform_4(%arg0: i32) -> (i32, i32, i32, i32) {
    %c0_i32 = arith.constant 0 : i32
    %c0_i32_0 = arith.constant 0 : i32
    %c0_i32_1 = arith.constant 0 : i32
    %c0_i32_2 = arith.constant 0 : i32
    %c0_i32_3 = arith.constant 0 : i32
    return %c0_i32, %c0_i32_0, %c0_i32_1, %c0_i32_2 : i32, i32, i32, i32
  }
  func.func @transform_5(%arg0: i32) -> (i32, i32) {
    %c0_i32 = arith.constant 0 : i32
    %c0_i32_0 = arith.constant 0 : i32
    %c0_i32_1 = arith.constant 0 : i32
    return %c0_i32, %c0_i32_0 : i32, i32
  }
  func.func @transform_6(%arg0: i32) -> (i32, i32) {
    %c0_i32 = arith.constant 0 : i32
    %c0_i32_0 = arith.constant 0 : i32
    %c0_i32_1 = arith.constant 0 : i32
    return %c0_i32, %c0_i32_0 : i32, i32
  }
  func.func @transform_7(%arg0: i32) -> (i32, i32) {
    %c0_i32 = arith.constant 0 : i32
    %c0_i32_0 = arith.constant 0 : i32
    %c0_i32_1 = arith.constant 0 : i32
    return %c0_i32, %c0_i32_0 : i32, i32
  }
  func.func @transform_8(%arg0: i32) -> (i32, i32) {
    %c0_i32 = arith.constant 0 : i32
    %c0_i32_0 = arith.constant 0 : i32
    %c0_i32_1 = arith.constant 0 : i32
    return %c0_i32, %c0_i32_0 : i32, i32
  }
  func.func @transform_9(%arg0: i32) -> (i32, i32) {
    %c0_i32 = arith.constant 0 : i32
    %c0_i32_0 = arith.constant 0 : i32
    %c0_i32_1 = arith.constant 0 : i32
    return %c0_i32, %c0_i32_0 : i32, i32
  }
  func.func @transform_10(%arg0: i32) -> (i32, i32, i32) {
    %c0_i32 = arith.constant 0 : i32
    %c0_i32_0 = arith.constant 0 : i32
    %c0_i32_1 = arith.constant 0 : i32
    return %arg0, %c0_i32, %c0_i32_0 : i32, i32, i32
  }
}

</mosaic_0001>

<llo_original>
// kernel: tpu_custom_call.1
$region0: #{tpu_custom_call.1}
  #allocation0 [shape = 'u32[]', space=smem, size = 0x4, offset = 0x4, fixed_abs, tag = 'smem constant byte address 0x4 - core index']
  #allocation1 [shape = 'u32[144,128]{1,0:T(1,128)}', space=vmem, size = 0x12000, scoped, tag = 'internal scratch']
  #allocation2 [shape = 'f32[18,18,3]{2,1,0:T(8,128)}', space=vmem, size = 0x36000, scoped, tag = 'scratch operand']
  #allocation3 [shape = 'f32[18,18,32]{2,1,0:T(8,128)}', space=vmem, size = 0x36000, scoped, tag = 'scratch operand']
  #allocation4 [shape = 'f32[10,10,64]{2,1,0:T(8,128)}', space=vmem, size = 0x14000, scoped, tag = 'scratch operand']
  #allocation5 [shape = 'f32[6,6,128]{2,1,0:T(8,128)}', space=vmem, size = 0x6000, scoped, tag = 'scratch operand']
  #allocation6 [shape = 'f32[1,1]{1,0:T(1,128)S(1)}', space=vmem, size = 0x200, scoped, tag = 'scoped memory for tpu_custom_call.1']
  %s0 = inlined_call_operand.vmem [shape: f32[2,16,16,3], index: 0, kind: input, shape index: {}]
  %s1 = inlined_call_operand.hbm [shape: f32[3,3,3,32], index: 1, kind: input, shape index: {}]
  %s2 = inlined_call_operand.hbm [shape: f32[3,3,32,64], index: 2, kind: input, shape index: {}]
  %s3 = inlined_call_operand.hbm [shape: f32[3,3,64,128], index: 3, kind: input, shape index: {}]
  %s4 = inlined_call_operand.hbm [shape: f32[3,3,128,256], index: 4, kind: input, shape index: {}]
  %s5 = inlined_call_operand.hbm [shape: f32[64,128], index: 5, kind: input, shape index: {}]
  %s6 = inlined_call_operand.hbm [shape: f32[16,32], index: 6, kind: input, shape index: {}]
  %s7 = inlined_call_operand.hbm [shape: f32[4,8], index: 7, kind: input, shape index: {}]
  %s8 = inlined_call_operand.hbm [shape: f32[4,256], index: 8, kind: input, shape index: {}]
  %s9 = inlined_call_operand.<no memory space> [shape: f32[1,1], index: 9, kind: input, shape index: {}]
  %s10 = inlined_call_operand.hbm [shape: f32[2,1,128], index: 10, kind: output, shape index: {}]
  %s11 = sld [smem:[#allocation0]]
  $region105: #{tpu_custom_call.1} parent=0
    _
  %s13 = ssub.s32 1, %s11
  %s14 = scalar_select 0, %s13, %s11
  %v15 = vstv %s9
  %16 = vst [vmem:[#allocation6] sm:$0x1] %v15
  $region1: #{tpu_custom_call.1} parent=0
    #allocation7 [shape = 'u8[18432]{0}', space=vmem, size = 0x4800, scoped, tag = 'input window, operand 1, single buffered']
    #allocation8 [shape = 's32[2]{0}', space=sflag, size = 0x8, scoped, tag = 'scoped memory for tpu_custom_call.1']
    #allocation9 [shape = 's32[2]{0}', space=sflag, size = 0x8, scoped, tag = 'scoped memory for tpu_custom_call.1']
    #allocation10 [shape = 'u8[147456]{0}', space=vmem, size = 0x24000, scoped, tag = 'input window, operand 2, single buffered']
    #allocation11 [shape = 's32[1]{0}', space=sflag, size = 0x4, scoped, tag = 'scoped memory for tpu_custom_call.1']
    #allocation12 [shape = 'u8[294912]{0}', space=vmem, size = 0x48000, scoped, tag = 'input window, operand 3, single buffered']
    #allocation13 [shape = 'u8[1179648]{0}', space=vmem, size = 0x120000, scoped, tag = 'input window, operand 4, single buffered']
    #allocation14 [shape = 's32[1]{0}', space=sflag, size = 0x4, scoped, tag = 'scoped memory for tpu_custom_call.1']
    #allocation15 [shape = 'u8[32768]{0}', space=vmem, size = 0x8000, scoped, tag = 'input window, operand 5, single buffered']
    #allocation16 [shape = 'u8[8192]{0}', space=vmem, size = 0x2000, scoped, tag = 'input window, operand 6, single buffered']
    #allocation17 [shape = 's32[1]{0}', space=sflag, size = 0x4, scoped, tag = 'scoped memory for tpu_custom_call.1']
    #allocation18 [shape = 'u8[2048]{0}', space=vmem, size = 0x800, scoped, tag = 'input window, operand 7, single buffered']
    #allocation19 [shape = 'u8[4096]{0}', space=vmem, size = 0x1000, scoped, tag = 'input window, operand 8, single buffered']
    #allocation20 [shape = 's32[1]{0}', space=sflag, size = 0x4, scoped, tag = 'scoped memory for tpu_custom_call.1']
    #allocation21 [shape = 'u8[1024]{0}', space=vmem, size = 0x400, scoped, tag = 'output window, operand 0']
    %17 = vsyncpa [#allocation8], 0
    %18 = vsyncpa [#allocation11], 0
    %19 = vsyncpa [#allocation14], 0
    %20 = vsyncpa [#allocation17], 0
    %21 = vsyncpa [#allocation20], 0
    %22 = vsyncpa [#allocation9], 0
    %s23 = scalar_lea.sflag [#allocation9], 1
    %24 = vsyncpa %s23, 0
    loop: start=0, step=1, limit=4
    $region2: #{tpu_custom_call.1} parent=1 // loop_pre_header
      _
    $region3: #{tpu_custom_call.1} parent=1 // loop_header
      %s26 = sphi 0, %s30
      %p27 = scmp.ge.s32.totalorder %s26, 4
      %s36 = sphi 0, %s38
      %s39 = sphi 0, %s36
      %s40 = sphi 0, %s39
      %s56 = sphi 0, %s40
      %s60 = sphi 0, %s60
      %s62 = sphi 0, %s60
      %s63 = sphi 0, %s62
      %s77 = sphi 0, %s63
      %s81 = sphi 0, %s81
      %s83 = sphi 0, %s81
      %s84 = sphi 0, %s83
      %s98 = sphi 0, %s84
      %s102 = sphi 0, %s102
      %s104 = sphi 0, %s102
      %s105 = sphi 0, %s104
      %s119 = sphi 0, %s105
      %s123 = sphi 0, %s123
      %s125 = sphi 0, %s123
      %s126 = sphi 0, %s125
      %s140 = sphi 0, %s126
      %s144 = sphi 0, %s144
      %s146 = sphi 0, %s144
      %s147 = sphi 0, %s146
      %s161 = sphi 0, %s147
      %s165 = sphi 0, %s165
      %s167 = sphi 0, %s165
      %s168 = sphi 0, %s167
      %s182 = sphi 0, %s168
      %s186 = sphi 0, %s186
      %s188 = sphi 0, %s186
      %s189 = sphi 0, %s188
      %s203 = sphi 0, %s189
      %s207 = sphi 0, %s207
      %s209 = sphi 0, %s207
      %s210 = sphi 0, %s209
      %s224 = sphi 0, %s210
      %s228 = sphi 0, %s228
      %s230 = sphi 0, %s228
      %s231 = sphi 0, %s230
      %s245 = sphi 0, %s231
      %s251 = sphi 0, %s253
      %s254 = sphi 0, %s251
      %s255 = sphi 0, %s254
      %s271 = sphi 0, %s255
    $region4: #{tpu_custom_call.1} parent=1 // loop_header_branch
      %29 = sbr.rel (%p27) target = $region8
    $region5: #{tpu_custom_call.1} parent=1 // loop_body
      %s31 = ssub.s32 %s26, 1
      %s32 = ssub.s32 %s26, 2
      %s33 = sadd.s32 %s26, 1
      %s34 = ssub.s32 %s26, %s33
      %p35 = scmp.eq.s32.totalorder %s34, 0
      %s37 = sadd.s32 %s36, 1
      %s38 = scalar_select %p35, %s36, %s37
      %p41 = pneg %p35
      %p42 = scmp.eq.s32.totalorder %s26, 1
      %p43 = por %p41, %p42
      %p44 = scmp.ne.s32.totalorder %s36, %s39
      %p45 = scmp.eq.s32.totalorder %s26, 0
      %p46 = por %p44, %p45
      %p47 = scmp.ne.s32.totalorder %s36, %s39
      %p48 = scmp.eq.s32.totalorder %s31, 1
      %p49 = por %p47, %p48
      %p50 = scmp.ne.s32.totalorder %s39, %s40
      %p51 = scmp.eq.s32.totalorder %s31, 0
      %p52 = por %p50, %p51
      %p53 = scmp.ne.s32.totalorder %s39, %s40
      %p54 = scmp.eq.s32.totalorder %s32, 1
      %p55 = por %p53, %p54
      %p57 = scmp.ne.s32.totalorder %s40, %s56
      %p58 = scmp.eq.s32.totalorder %s32, 0
      %p59 = por %p57, %p58
      %s61 = sadd.s32 %s60, 1
      %p64 = scmp.eq.s32.totalorder %s26, 1
      %p65 = scmp.ne.s32.totalorder %s60, %s62
      %p66 = scmp.eq.s32.totalorder %s26, 0
      %p67 = por %p65, %p66
      %p68 = scmp.ne.s32.totalorder %s60, %s62
      %p69 = scmp.eq.s32.totalorder %s31, 1
      %p70 = por %p68, %p69
      %p71 = scmp.ne.s32.totalorder %s62, %s63
      %p72 = scmp.eq.s32.totalorder %s31, 0
      %p73 = por %p71, %p72
      %p74 = scmp.ne.s32.totalorder %s62, %s63
      %p75 = scmp.eq.s32.totalorder %s32, 1
      %p76 = por %p74, %p75
      %p78 = scmp.ne.s32.totalorder %s63, %s77
      %p79 = scmp.eq.s32.totalorder %s32, 0
      %p80 = por %p78, %p79
      %s82 = sadd.s32 %s81, 1
      %p85 = scmp.eq.s32.totalorder %s26, 1
      %p86 = scmp.ne.s32.totalorder %s81, %s83
      %p87 = scmp.eq.s32.totalorder %s26, 0
      %p88 = por %p86, %p87
      %p89 = scmp.ne.s32.totalorder %s81, %s83
      %p90 = scmp.eq.s32.totalorder %s31, 1
      %p91 = por %p89, %p90
      %p92 = scmp.ne.s32.totalorder %s83, %s84
      %p93 = scmp.eq.s32.totalorder %s31, 0
      %p94 = por %p92, %p93
      %p95 = scmp.ne.s32.totalorder %s83, %s84
      %p96 = scmp.eq.s32.totalorder %s32, 1
      %p97 = por %p95, %p96
      %p99 = scmp.ne.s32.totalorder %s84, %s98
      %p100 = scmp.eq.s32.totalorder %s32, 0
      %p101 = por %p99, %p100
      %s103 = sadd.s32 %s102, 1
      %p106 = scmp.eq.s32.totalorder %s26, 1
      %p107 = scmp.ne.s32.totalorder %s102, %s104
      %p108 = scmp.eq.s32.totalorder %s26, 0
      %p109 = por %p107, %p108
      %p110 = scmp.ne.s32.totalorder %s102, %s104
      %p111 = scmp.eq.s32.totalorder %s31, 1
      %p112 = por %p110, %p111
      %p113 = scmp.ne.s32.totalorder %s104, %s105
      %p114 = scmp.eq.s32.totalorder %s31, 0
      %p115 = por %p113, %p114
      %p116 = scmp.ne.s32.totalorder %s104, %s105
      %p117 = scmp.eq.s32.totalorder %s32, 1
      %p118 = por %p116, %p117
      %p120 = scmp.ne.s32.totalorder %s105, %s119
      %p121 = scmp.eq.s32.totalorder %s32, 0
      %p122 = por %p120, %p121
      %s124 = sadd.s32 %s123, 1
      %p127 = scmp.eq.s32.totalorder %s26, 1
      %p128 = scmp.ne.s32.totalorder %s123, %s125
      %p129 = scmp.eq.s32.totalorder %s26, 0
      %p130 = por %p128, %p129
      %p131 = scmp.ne.s32.totalorder %s123, %s125
      %p132 = scmp.eq.s32.totalorder %s31, 1
      %p133 = por %p131, %p132
      %p134 = scmp.ne.s32.totalorder %s125, %s126
      %p135 = scmp.eq.s32.totalorder %s31, 0
      %p136 = por %p134, %p135
      %p137 = scmp.ne.s32.totalorder %s125, %s126
      %p138 = scmp.eq.s32.totalorder %s32, 1
      %p139 = por %p137, %p138
      %p141 = scmp.ne.s32.totalorder %s126, %s140
      %p142 = scmp.eq.s32.totalorder %s32, 0
      %p143 = por %p141, %p142
      %s145 = sadd.s32 %s144, 1
      %p148 = scmp.eq.s32.totalorder %s26, 1
      %p149 = scmp.ne.s32.totalorder %s144, %s146
      %p150 = scmp.eq.s32.totalorder %s26, 0
      %p151 = por %p149, %p150
      %p152 = scmp.ne.s32.totalorder %s144, %s146
      %p153 = scmp.eq.s32.totalorder %s31, 1
      %p154 = por %p152, %p153
      %p155 = scmp.ne.s32.totalorder %s146, %s147
      %p156 = scmp.eq.s32.totalorder %s31, 0
      %p157 = por %p155, %p156
      %p158 = scmp.ne.s32.totalorder %s146, %s147
      %p159 = scmp.eq.s32.totalorder %s32, 1
      %p160 = por %p158, %p159
      %p162 = scmp.ne.s32.totalorder %s147, %s161
      %p163 = scmp.eq.s32.totalorder %s32, 0
      %p164 = por %p162, %p163
      %s166 = sadd.s32 %s165, 1
      %p169 = scmp.eq.s32.totalorder %s26, 1
      %p170 = scmp.ne.s32.totalorder %s165, %s167
      %p171 = scmp.eq.s32.totalorder %s26, 0
      %p172 = por %p170, %p171
      %p173 = scmp.ne.s32.totalorder %s165, %s167
      %p174 = scmp.eq.s32.totalorder %s31, 1
      %p175 = por %p173, %p174
      %p176 = scmp.ne.s32.totalorder %s167, %s168
      %p177 = scmp.eq.s32.totalorder %s31, 0
      %p178 = por %p176, %p177
      %p179 = scmp.ne.s32.totalorder %s167, %s168
      %p180 = scmp.eq.s32.totalorder %s32, 1
      %p181 = por %p179, %p180
      %p183 = scmp.ne.s32.totalorder %s168, %s182
      %p184 = scmp.eq.s32.totalorder %s32, 0
      %p185 = por %p183, %p184
      %s187 = sadd.s32 %s186, 1
      %p190 = scmp.eq.s32.totalorder %s26, 1
      %p191 = scmp.ne.s32.totalorder %s186, %s188
      %p192 = scmp.eq.s32.totalorder %s26, 0
      %p193 = por %p191, %p192
      %p194 = scmp.ne.s32.totalorder %s186, %s188
      %p195 = scmp.eq.s32.totalorder %s31, 1
      %p196 = por %p194, %p195
      %p197 = scmp.ne.s32.totalorder %s188, %s189
      %p198 = scmp.eq.s32.totalorder %s31, 0
      %p199 = por %p197, %p198
      %p200 = scmp.ne.s32.totalorder %s188, %s189
      %p201 = scmp.eq.s32.totalorder %s32, 1
      %p202 = por %p200, %p201
      %p204 = scmp.ne.s32.totalorder %s189, %s203
      %p205 = scmp.eq.s32.totalorder %s32, 0
      %p206 = por %p204, %p205
      %s208 = sadd.s32 %s207, 1
      %p211 = scmp.eq.s32.totalorder %s26, 1
      %p212 = scmp.ne.s32.totalorder %s207, %s209
      %p213 = scmp.eq.s32.totalorder %s26, 0
      %p214 = por %p212, %p213
      %p215 = scmp.ne.s32.totalorder %s207, %s209
      %p216 = scmp.eq.s32.totalorder %s31, 1
      %p217 = por %p215, %p216
      %p218 = scmp.ne.s32.totalorder %s209, %s210
      %p219 = scmp.eq.s32.totalorder %s31, 0
      %p220 = por %p218, %p219
      %p221 = scmp.ne.s32.totalorder %s209, %s210
      %p222 = scmp.eq.s32.totalorder %s32, 1
      %p223 = por %p221, %p222
      %p225 = scmp.ne.s32.totalorder %s210, %s224
      %p226 = scmp.eq.s32.totalorder %s32, 0
      %p227 = por %p225, %p226
      %s229 = sadd.s32 %s228, 1
      %p232 = scmp.eq.s32.totalorder %s26, 1
      %p233 = scmp.ne.s32.totalorder %s228, %s230
      %p234 = scmp.eq.s32.totalorder %s26, 0
      %p235 = por %p233, %p234
      %p236 = scmp.ne.s32.totalorder %s228, %s230
      %p237 = scmp.eq.s32.totalorder %s31, 1
      %p238 = por %p236, %p237
      %p239 = scmp.ne.s32.totalorder %s230, %s231
      %p240 = scmp.eq.s32.totalorder %s31, 0
      %p241 = por %p239, %p240
      %p242 = scmp.ne.s32.totalorder %s230, %s231
      %p243 = scmp.eq.s32.totalorder %s32, 1
      %p244 = por %p242, %p243
      %p246 = scmp.ne.s32.totalorder %s231, %s245
      %p247 = scmp.eq.s32.totalorder %s32, 0
      %p248 = por %p246, %p247
      %s249 = ssub.s32 %s26, %s33
      %p250 = scmp.eq.s32.totalorder %s249, 0
      %s252 = sadd.s32 %s251, 1
      %s253 = scalar_select %p250, %s251, %s252
      %p256 = pneg %p250
      %p257 = scmp.eq.s32.totalorder %s26, 1
      %p258 = por %p256, %p257
      %p259 = scmp.ne.s32.totalorder %s251, %s254
      %p260 = scmp.eq.s32.totalorder %s26, 0
      %p261 = por %p259, %p260
      %p262 = scmp.ne.s32.totalorder %s251, %s254
      %p263 = scmp.eq.s32.totalorder %s31, 1
      %p264 = por %p262, %p263
      %p265 = scmp.ne.s32.totalorder %s254, %s255
      %p266 = scmp.eq.s32.totalorder %s31, 0
      %p267 = por %p265, %p266
      %p268 = scmp.ne.s32.totalorder %s254, %s255
      %p269 = scmp.eq.s32.totalorder %s32, 1
      %p270 = por %p268, %p269
      %p272 = scmp.ne.s32.totalorder %s255, %s271
      %p273 = scmp.eq.s32.totalorder %s32, 0
      %p274 = por %p272, %p273
      %p275 = scmp.le.s32.totalorder 1, %s26
      %p276 = scmp.lt.s32.totalorder %s26, 3
      %p277 = pnand %p275, %p276
      %p278 = pneg %p277
      // Predicated region
      $region9: #{tpu_custom_call.1} parent=5 // pred_check
        _
      $region10: #{tpu_custom_call.1} parent=5 // pred_check_branch
        %280 = sbr.rel (%p277) target = $region12
      $region11: #{tpu_custom_call.1} parent=5 // pred_region
        %s281 = ssub.s32 %s26, 1
        // Predicated region
        $region13: #{tpu_custom_call.1} parent=11 // pred_check
          %p282 = pneg %p73
        $region14: #{tpu_custom_call.1} parent=11 // pred_check_branch
          %284 = sbr.rel (%p282) target = $region16
        $region15: #{tpu_custom_call.1} parent=11 // pred_region
          %s286 = ssub.s32 576, 576
          %287 = vsyncadd [#allocation8], %s286
          %s288 = sshll.u32 [#allocation7], 4
          %s289 = int_to_ptr.vmem [resolvable:$true] %s288
          %294 = dma.hbm_to_vmem [thread:$0]  %s1, 576, %s289, [#allocation8], 64, 64, 4
        $region16: #{tpu_custom_call.1} parent=11 // pred_fallthru
          _
        // Predicated region
        $region17: #{tpu_custom_call.1} parent=11 // pred_check
          %p295 = pneg %p94
        $region18: #{tpu_custom_call.1} parent=11 // pred_check_branch
          %297 = sbr.rel (%p295) target = $region20
        $region19: #{tpu_custom_call.1} parent=11 // pred_region
          %s299 = ssub.s32 4608, 4608
          %300 = vsyncadd [#allocation11], %s299
          %s301 = sshll.u32 [#allocation10], 4
          %s302 = int_to_ptr.vmem [resolvable:$true] %s301
          %307 = dma.hbm_to_vmem [thread:$0]  %s2, 4608, %s302, [#allocation11], 128, 128, 8
        $region20: #{tpu_custom_call.1} parent=11 // pred_fallthru
          _
        // Predicated region
        $region21: #{tpu_custom_call.1} parent=11 // pred_check
          %p308 = pneg %p115
        $region22: #{tpu_custom_call.1} parent=11 // pred_check_branch
          %310 = sbr.rel (%p308) target = $region24
        $region23: #{tpu_custom_call.1} parent=11 // pred_region
          %s312 = ssub.s32 9216, 9216
          %313 = vsyncadd [#allocation11], %s312
          %s314 = sshll.u32 [#allocation12], 4
          %s315 = int_to_ptr.vmem [resolvable:$true] %s314
          %320 = dma.hbm_to_vmem [thread:$0]  %s3, 9216, %s315, [#allocation11], 128, 128, 8
        $region24: #{tpu_custom_call.1} parent=11 // pred_fallthru
          _
        // Predicated region
        $region25: #{tpu_custom_call.1} parent=11 // pred_check
          %p321 = pneg %p136
        $region26: #{tpu_custom_call.1} parent=11 // pred_check_branch
          %323 = sbr.rel (%p321) target = $region28
        $region27: #{tpu_custom_call.1} parent=11 // pred_region
          %s325 = ssub.s32 36864, 36864
          %326 = vsyncadd [#allocation14], %s325
          %s327 = sshll.u32 [#allocation13], 4
          %s328 = int_to_ptr.vmem [resolvable:$true] %s327
          %333 = dma.hbm_to_vmem [thread:$0]  %s4, 36864, %s328, [#allocation14], 256, 256, 16
        $region28: #{tpu_custom_call.1} parent=11 // pred_fallthru
          _
        // Predicated region
        $region29: #{tpu_custom_call.1} parent=11 // pred_check
          %p334 = pneg %p157
        $region30: #{tpu_custom_call.1} parent=11 // pred_check_branch
          %336 = sbr.rel (%p334) target = $region32
        $region31: #{tpu_custom_call.1} parent=11 // pred_region
          %s338 = ssub.s32 1024, 1024
          %339 = vsyncadd [#allocation14], %s338
          %s340 = sshll.u32 [#allocation15], 4
          %s341 = int_to_ptr.vmem [resolvable:$true] %s340
          %346 = dma.hbm_to_vmem [thread:$0]  %s5, 1024, %s341, [#allocation14], 128, 128, 8
        $region32: #{tpu_custom_call.1} parent=11 // pred_fallthru
          _
        // Predicated region
        $region33: #{tpu_custom_call.1} parent=11 // pred_check
          %p347 = pneg %p178
        $region34: #{tpu_custom_call.1} parent=11 // pred_check_branch
          %349 = sbr.rel (%p347) target = $region36
        $region35: #{tpu_custom_call.1} parent=11 // pred_region
          %s351 = ssub.s32 256, 256
          %352 = vsyncadd [#allocation17], %s351
          %s353 = sshll.u32 [#allocation16], 4
          %s354 = int_to_ptr.vmem [resolvable:$true] %s353
          %359 = dma.hbm_to_vmem [thread:$0]  %s6, 256, %s354, [#allocation17], 128, 128, 8
        $region36: #{tpu_custom_call.1} parent=11 // pred_fallthru
          _
        // Predicated region
        $region37: #{tpu_custom_call.1} parent=11 // pred_check
          %p360 = pneg %p199
        $region38: #{tpu_custom_call.1} parent=11 // pred_check_branch
          %362 = sbr.rel (%p360) target = $region40
        $region39: #{tpu_custom_call.1} parent=11 // pred_region
          %s364 = ssub.s32 64, 64
          %365 = vsyncadd [#allocation17], %s364
          %s367 = sshll.u32 [#allocation18], 4
          %s368 = int_to_ptr.vmem [resolvable:$true] %s367
          %370 = dma.hbm_to_vmem [thread:$0]  %s7, 64, %s368, [#allocation17]
        $region40: #{tpu_custom_call.1} parent=11 // pred_fallthru
          _
        // Predicated region
        $region41: #{tpu_custom_call.1} parent=11 // pred_check
          %p371 = pneg %p220
        $region42: #{tpu_custom_call.1} parent=11 // pred_check_branch
          %373 = sbr.rel (%p371) target = $region44
        $region43: #{tpu_custom_call.1} parent=11 // pred_region
          %s375 = ssub.s32 128, 128
          %376 = vsyncadd [#allocation20], %s375
          %s378 = sshll.u32 [#allocation19], 4
          %s379 = int_to_ptr.vmem [resolvable:$true] %s378
          %381 = dma.hbm_to_vmem [thread:$0]  %s8, 128, %s379, [#allocation20]
        $region44: #{tpu_custom_call.1} parent=11 // pred_fallthru
          _
        // Predicated region
        $region45: #{tpu_custom_call.1} parent=11 // pred_check
          %p382 = pneg %p241
        $region46: #{tpu_custom_call.1} parent=11 // pred_check_branch
          %384 = sbr.rel (%p382) target = $region48
        $region47: #{tpu_custom_call.1} parent=11 // pred_region
          _
        $region48: #{tpu_custom_call.1} parent=11 // pred_fallthru
          _
      $region12: #{tpu_custom_call.1} parent=5 // pred_fallthru
        _
      %p385 = scmp.lt.s32.totalorder %s26, 2
      // Predicated region
      $region49: #{tpu_custom_call.1} parent=5 // pred_check
        %p386 = pneg %p385
      $region50: #{tpu_custom_call.1} parent=5 // pred_check_branch
        %388 = sbr.rel (%p386) target = $region52
      $region51: #{tpu_custom_call.1} parent=5 // pred_region
        // Predicated region
        $region53: #{tpu_custom_call.1} parent=51 // pred_check
          %p389 = pneg %p46
        $region54: #{tpu_custom_call.1} parent=51 // pred_check_branch
          %391 = sbr.rel (%p389) target = $region56
        $region55: #{tpu_custom_call.1} parent=51 // pred_region
          %p392 = scmp.lt.s32.totalorder %s26, 1
          %s393 = scalar_select %p392, %s26, 1
          %s394 = smul.addr %s393, 32
          %s395 = smul.addr %s394, 8
          %s396 = scalar_lea.vmem %s0, %s395
        $region56: #{tpu_custom_call.1} parent=51 // pred_fallthru
          _
      $region52: #{tpu_custom_call.1} parent=5 // pred_fallthru
        _
      %p397 = scmp.le.s32.totalorder 1, %s26
      %p398 = scmp.lt.s32.totalorder %s26, 3
      %p399 = pnand %p397, %p398
      %p400 = pneg %p399
      // Predicated region
      $region57: #{tpu_custom_call.1} parent=5 // pred_check
        _
      $region58: #{tpu_custom_call.1} parent=5 // pred_check_branch
        %402 = sbr.rel (%p399) target = $region60
      $region59: #{tpu_custom_call.1} parent=5 // pred_region
        %s403 = ssub.s32 %s26, 1
        // Predicated region
        $region61: #{tpu_custom_call.1} parent=59 // pred_check
          %p404 = pneg %p73
        $region62: #{tpu_custom_call.1} parent=59 // pred_check_branch
          %406 = sbr.rel (%p404) target = $region64
        $region63: #{tpu_custom_call.1} parent=59 // pred_region
          %407 = dma.done [#allocation8], 576
        $region64: #{tpu_custom_call.1} parent=59 // pred_fallthru
          _
        // Predicated region
        $region65: #{tpu_custom_call.1} parent=59 // pred_check
          %p408 = pneg %p94
        $region66: #{tpu_custom_call.1} parent=59 // pred_check_branch
          %410 = sbr.rel (%p408) target = $region68
        $region67: #{tpu_custom_call.1} parent=59 // pred_region
          %411 = dma.done [#allocation11], 4608
        $region68: #{tpu_custom_call.1} parent=59 // pred_fallthru
          _
        // Predicated region
        $region69: #{tpu_custom_call.1} parent=59 // pred_check
          %p412 = pneg %p115
        $region70: #{tpu_custom_call.1} parent=59 // pred_check_branch
          %414 = sbr.rel (%p412) target = $region72
        $region71: #{tpu_custom_call.1} parent=59 // pred_region
          %415 = dma.done [#allocation11], 9216
        $region72: #{tpu_custom_call.1} parent=59 // pred_fallthru
          _
        // Predicated region
        $region73: #{tpu_custom_call.1} parent=59 // pred_check
          %p416 = pneg %p136
        $region74: #{tpu_custom_call.1} parent=59 // pred_check_branch
          %418 = sbr.rel (%p416) target = $region76
        $region75: #{tpu_custom_call.1} parent=59 // pred_region
          %419 = dma.done [#allocation14], 36864
        $region76: #{tpu_custom_call.1} parent=59 // pred_fallthru
          _
        // Predicated region
        $region77: #{tpu_custom_call.1} parent=59 // pred_check
          %p420 = pneg %p157
        $region78: #{tpu_custom_call.1} parent=59 // pred_check_branch
          %422 = sbr.rel (%p420) target = $region80
        $region79: #{tpu_custom_call.1} parent=59 // pred_region
          %423 = dma.done [#allocation14], 1024
        $region80: #{tpu_custom_call.1} parent=59 // pred_fallthru
          _
        // Predicated region
        $region81: #{tpu_custom_call.1} parent=59 // pred_check
          %p424 = pneg %p178
        $region82: #{tpu_custom_call.1} parent=59 // pred_check_branch
          %426 = sbr.rel (%p424) target = $region84
        $region83: #{tpu_custom_call.1} parent=59 // pred_region
          %427 = dma.done [#allocation17], 256
        $region84: #{tpu_custom_call.1} parent=59 // pred_fallthru
          _
        // Predicated region
        $region85: #{tpu_custom_call.1} parent=59 // pred_check
          %p428 = pneg %p199
        $region86: #{tpu_custom_call.1} parent=59 // pred_check_branch
          %430 = sbr.rel (%p428) target = $region88
        $region87: #{tpu_custom_call.1} parent=59 // pred_region
          %431 = dma.done [#allocation17], 64
        $region88: #{tpu_custom_call.1} parent=59 // pred_fallthru
          _
        // Predicated region
        $region89: #{tpu_custom_call.1} parent=59 // pred_check
          %p432 = pneg %p220
        $region90: #{tpu_custom_call.1} parent=59 // pred_check_branch
          %434 = sbr.rel (%p432) target = $region92
        $region91: #{tpu_custom_call.1} parent=59 // pred_region
          %435 = dma.done [#allocation20], 128
        $region92: #{tpu_custom_call.1} parent=59 // pred_fallthru
          _
        %p436 = scmp.lt.s32.totalorder %s31, 1
        %s437 = scalar_select %p436, %s31, 1
        %s438 = smul.addr %s437, 32
        %s439 = smul.addr %s438, 8
        %s440 = scalar_lea.vmem %s0, %s439
        %p441 = pneg %p52
        %p442 = pneg %p49
        %p443 = pneg %p73
        %p444 = pneg %p70
        %p445 = pneg %p94
        %p446 = pneg %p91
        %p447 = pneg %p115
        %p448 = pneg %p112
        %p449 = pneg %p136
        %p450 = pneg %p133
        %p451 = pneg %p157
        %p452 = pneg %p154
        %p453 = pneg %p178
        %p454 = pneg %p175
        %p455 = pneg %p199
        %p456 = pneg %p196
        %p457 = pneg %p220
        %p458 = pneg %p217
        %p459 = pneg %p241
        %p460 = pneg %p238
        %p461 = pneg %p267
        %p462 = pneg %p264
        %s463 = sand.u32 %s254, 1
        %s464 = scalar_lea.sflag [#allocation9], %s463
        %s465 = sand.u32 %s254, 1
        %s466 = scalar_lea.vmem [#allocation21], %s465
        %p467 = scmp.lt.s32.totalorder %s31, 1
        %s468 = scalar_select %p467, %s31, 1
        %s469 = smul.addr %s468, 32
        %s470 = smul.addr %s469, 8
        %s471 = scalar_lea.vmem %s0, %s470
        %v472 = vld [vmem:[%s471] sm:$0xff]
        %v473 = vld [vmem:[%s471 + $0x8] sm:$0xff]
        %v474 = vld [vmem:[%s471 + $0x10] sm:$0xff]
        %v475 = vld [vmem:[%s471 + $0x18] sm:$0xff]
        %v476 = vld [vmem:[%s471 + $0x20] sm:$0xff]
        %v477 = vld [vmem:[%s471 + $0x28] sm:$0xff]
        %v478 = vld [vmem:[%s471 + $0x30] sm:$0xff]
        %v479 = vld [vmem:[%s471 + $0x38] sm:$0xff]
        %v480 = vld [vmem:[%s471 + $0x40] sm:$0xff]
        %v481 = vld [vmem:[%s471 + $0x48] sm:$0xff]
        %v482 = vld [vmem:[%s471 + $0x50] sm:$0xff]
        %v483 = vld [vmem:[%s471 + $0x58] sm:$0xff]
        %v484 = vld [vmem:[%s471 + $0x60] sm:$0xff]
        %v485 = vld [vmem:[%s471 + $0x68] sm:$0xff]
        %v486 = vld [vmem:[%s471 + $0x70] sm:$0xff]
        %v487 = vld [vmem:[%s471 + $0x78] sm:$0xff]
        %v488 = vld [vmem:[%s471 + $0x80] sm:$0xff]
        %v489 = vld [vmem:[%s471 + $0x88] sm:$0xff]
        %v490 = vld [vmem:[%s471 + $0x90] sm:$0xff]
        %v491 = vld [vmem:[%s471 + $0x98] sm:$0xff]
        %v492 = vld [vmem:[%s471 + $0xa0] sm:$0xff]
        %v493 = vld [vmem:[%s471 + $0xa8] sm:$0xff]
        %v494 = vld [vmem:[%s471 + $0xb0] sm:$0xff]
        %v495 = vld [vmem:[%s471 + $0xb8] sm:$0xff]
        %v496 = vld [vmem:[%s471 + $0xc0] sm:$0xff]
        %v497 = vld [vmem:[%s471 + $0xc8] sm:$0xff]
        %v498 = vld [vmem:[%s471 + $0xd0] sm:$0xff]
        %v499 = vld [vmem:[%s471 + $0xd8] sm:$0xff]
        %v500 = vld [vmem:[%s471 + $0xe0] sm:$0xff]
        %v501 = vld [vmem:[%s471 + $0xe8] sm:$0xff]
        %v502 = vld [vmem:[%s471 + $0xf0] sm:$0xff]
        %v503 = vld [vmem:[%s471 + $0xf8] sm:$0xff]
        %vm504 = vcmask 23552
        %505 = vst.msk [vmem:[#allocation2] sm:$0xff] %vm504, 0.0
        %506 = vst.msk [vmem:[#allocation2 + $0x8] sm:$0xff] %vm504, 0.0
        %vm507 = vcmask 17408
        %508 = vst.msk [vmem:[#allocation2 + $0x10] sm:$0x3] %vm507, 0.0
        %509 = vst.msk [vmem:[#allocation2 + $0x18] sm:$0xff] %vm504, 0.0
        %510 = vst.msk [vmem:[#allocation2 + $0x20] sm:$0xff] %vm504, 0.0
        %511 = vst.msk [vmem:[#allocation2 + $0x28] sm:$0x3] %vm507, 0.0
        %512 = vst.msk [vmem:[#allocation2 + $0x30] sm:$0xff] %vm504, 0.0
        %513 = vst.msk [vmem:[#allocation2 + $0x38] sm:$0xff] %vm504, 0.0
        %514 = vst.msk [vmem:[#allocation2 + $0x40] sm:$0x3] %vm507, 0.0
        %515 = vst.msk [vmem:[#allocation2 + $0x48] sm:$0xff] %vm504, 0.0
        %516 = vst.msk [vmem:[#allocation2 + $0x50] sm:$0xff] %vm504, 0.0
        %517 = vst.msk [vmem:[#allocation2 + $0x58] sm:$0x3] %vm507, 0.0
        %518 = vst.msk [vmem:[#allocation2 + $0x60] sm:$0xff] %vm504, 0.0
        %519 = vst.msk [vmem:[#allocation2 + $0x68] sm:$0xff] %vm504, 0.0
        %520 = vst.msk [vmem:[#allocation2 + $0x70] sm:$0x3] %vm507, 0.0
        %521 = vst.msk [vmem:[#allocation2 + $0x78] sm:$0xff] %vm504, 0.0
        %522 = vst.msk [vmem:[#allocation2 + $0x80] sm:$0xff] %vm504, 0.0
        %523 = vst.msk [vmem:[#allocation2 + $0x88] sm:$0x3] %vm507, 0.0
        %524 = vst.msk [vmem:[#allocation2 + $0x90] sm:$0xff] %vm504, 0.0
        %525 = vst.msk [vmem:[#allocation2 + $0x98] sm:$0xff] %vm504, 0.0
        %526 = vst.msk [vmem:[#allocation2 + $0xa0] sm:$0x3] %vm507, 0.0
        %527 = vst.msk [vmem:[#allocation2 + $0xa8] sm:$0xff] %vm504, 0.0
        %528 = vst.msk [vmem:[#allocation2 + $0xb0] sm:$0xff] %vm504, 0.0
        %529 = vst.msk [vmem:[#allocation2 + $0xb8] sm:$0x3] %vm507, 0.0
        %530 = vst.msk [vmem:[#allocation2 + $0xc0] sm:$0xff] %vm504, 0.0
        %531 = vst.msk [vmem:[#allocation2 + $0xc8] sm:$0xff] %vm504, 0.0
        %532 = vst.msk [vmem:[#allocation2 + $0xd0] sm:$0x3] %vm507, 0.0
        %533 = vst.msk [vmem:[#allocation2 + $0xd8] sm:$0xff] %vm504, 0.0
        %534 = vst.msk [vmem:[#allocation2 + $0xe0] sm:$0xff] %vm504, 0.0
        %535 = vst.msk [vmem:[#allocation2 + $0xe8] sm:$0x3] %vm507, 0.0
        %536 = vst.msk [vmem:[#allocation2 + $0xf0] sm:$0xff] %vm504, 0.0
        %537 = vst.msk [vmem:[#allocation2 + $0xf8] sm:$0xff] %vm504, 0.0
        %538 = vst.msk [vmem:[#allocation2 + $0x100] sm:$0x3] %vm507, 0.0
        %539 = vst.msk [vmem:[#allocation2 + $0x108] sm:$0xff] %vm504, 0.0
        %540 = vst.msk [vmem:[#allocation2 + $0x110] sm:$0xff] %vm504, 0.0
        %541 = vst.msk [vmem:[#allocation2 + $0x118] sm:$0x3] %vm507, 0.0
        %542 = vst.msk [vmem:[#allocation2 + $0x120] sm:$0xff] %vm504, 0.0
        %543 = vst.msk [vmem:[#allocation2 + $0x128] sm:$0xff] %vm504, 0.0
        %544 = vst.msk [vmem:[#allocation2 + $0x130] sm:$0x3] %vm507, 0.0
        %545 = vst.msk [vmem:[#allocation2 + $0x138] sm:$0xff] %vm504, 0.0
        %546 = vst.msk [vmem:[#allocation2 + $0x140] sm:$0xff] %vm504, 0.0
        %547 = vst.msk [vmem:[#allocation2 + $0x148] sm:$0x3] %vm507, 0.0
        %548 = vst.msk [vmem:[#allocation2 + $0x150] sm:$0xff] %vm504, 0.0
        %549 = vst.msk [vmem:[#allocation2 + $0x158] sm:$0xff] %vm504, 0.0
        %550 = vst.msk [vmem:[#allocation2 + $0x160] sm:$0x3] %vm507, 0.0
        %551 = vst.msk [vmem:[#allocation2 + $0x168] sm:$0xff] %vm504, 0.0
        %552 = vst.msk [vmem:[#allocation2 + $0x170] sm:$0xff] %vm504, 0.0
        %553 = vst.msk [vmem:[#allocation2 + $0x178] sm:$0x3] %vm507, 0.0
        %554 = vst.msk [vmem:[#allocation2 + $0x180] sm:$0xff] %vm504, 0.0
        %555 = vst.msk [vmem:[#allocation2 + $0x188] sm:$0xff] %vm504, 0.0
        %556 = vst.msk [vmem:[#allocation2 + $0x190] sm:$0x3] %vm507, 0.0
        %557 = vst.msk [vmem:[#allocation2 + $0x198] sm:$0xff] %vm504, 0.0
        %558 = vst.msk [vmem:[#allocation2 + $0x1a0] sm:$0xff] %vm504, 0.0
        %559 = vst.msk [vmem:[#allocation2 + $0x1a8] sm:$0x3] %vm507, 0.0
        %s560 = scalar_lea.vmem [#allocation2], 24
        %561 = vst.msk [vmem:[%s560 + $0x1] sm:$0xff] %vm504, %v472
        %562 = vst.msk [vmem:[%s560 + $0x9] sm:$0xff] %vm504, %v473
        %563 = vst.msk [vmem:[%s560 + $0x19] sm:$0xff] %vm504, %v474
        %564 = vst.msk [vmem:[%s560 + $0x21] sm:$0xff] %vm504, %v475
        %565 = vst.msk [vmem:[%s560 + $0x31] sm:$0xff] %vm504, %v476
        %566 = vst.msk [vmem:[%s560 + $0x39] sm:$0xff] %vm504, %v477
        %567 = vst.msk [vmem:[%s560 + $0x49] sm:$0xff] %vm504, %v478
        %568 = vst.msk [vmem:[%s560 + $0x51] sm:$0xff] %vm504, %v479
        %569 = vst.msk [vmem:[%s560 + $0x61] sm:$0xff] %vm504, %v480
        %570 = vst.msk [vmem:[%s560 + $0x69] sm:$0xff] %vm504, %v481
        %571 = vst.msk [vmem:[%s560 + $0x79] sm:$0xff] %vm504, %v482
        %572 = vst.msk [vmem:[%s560 + $0x81] sm:$0xff] %vm504, %v483
        %573 = vst.msk [vmem:[%s560 + $0x91] sm:$0xff] %vm504, %v484
        %574 = vst.msk [vmem:[%s560 + $0x99] sm:$0xff] %vm504, %v485
        %575 = vst.msk [vmem:[%s560 + $0xa9] sm:$0xff] %vm504, %v486
        %576 = vst.msk [vmem:[%s560 + $0xb1] sm:$0xff] %vm504, %v487
        %577 = vst.msk [vmem:[%s560 + $0xc1] sm:$0xff] %vm504, %v488
        %578 = vst.msk [vmem:[%s560 + $0xc9] sm:$0xff] %vm504, %v489
        %579 = vst.msk [vmem:[%s560 + $0xd9] sm:$0xff] %vm504, %v490
        %580 = vst.msk [vmem:[%s560 + $0xe1] sm:$0xff] %vm504, %v491
        %581 = vst.msk [vmem:[%s560 + $0xf1] sm:$0xff] %vm504, %v492
        %582 = vst.msk [vmem:[%s560 + $0xf9] sm:$0xff] %vm504, %v493
        %583 = vst.msk [vmem:[%s560 + $0x109] sm:$0xff] %vm504, %v494
        %584 = vst.msk [vmem:[%s560 + $0x111] sm:$0xff] %vm504, %v495
        %585 = vst.msk [vmem:[%s560 + $0x121] sm:$0xff] %vm504, %v496
        %586 = vst.msk [vmem:[%s560 + $0x129] sm:$0xff] %vm504, %v497
        %587 = vst.msk [vmem:[%s560 + $0x139] sm:$0xff] %vm504, %v498
        %588 = vst.msk [vmem:[%s560 + $0x141] sm:$0xff] %vm504, %v499
        %589 = vst.msk [vmem:[%s560 + $0x151] sm:$0xff] %vm504, %v500
        %590 = vst.msk [vmem:[%s560 + $0x159] sm:$0xff] %vm504, %v501
        %591 = vst.msk [vmem:[%s560 + $0x169] sm:$0xff] %vm504, %v502
        %592 = vst.msk [vmem:[%s560 + $0x171] sm:$0xff] %vm504, %v503
        %v593 = vld [vmem:[#allocation2] sm:$0xff]
        %v594 = vld [vmem:[#allocation2 + $0x8] sm:$0xff]
        %v595 = vld [vmem:[#allocation2 + $0x10] sm:$0x3]
        %v596 = vld [vmem:[#allocation2 + $0x18] sm:$0xff]
        %v597 = vld [vmem:[#allocation2 + $0x20] sm:$0xff]
        %v598 = vld [vmem:[#allocation2 + $0x28] sm:$0x3]
        %v599 = vld [vmem:[#allocation2 + $0x30] sm:$0xff]
        %v600 = vld [vmem:[#allocation2 + $0x38] sm:$0xff]
        %v601 = vld [vmem:[#allocation2 + $0x40] sm:$0x3]
        %v602 = vld [vmem:[#allocation2 + $0x48] sm:$0xff]
        %v603 = vld [vmem:[#allocation2 + $0x50] sm:$0xff]
        %v604 = vld [vmem:[#allocation2 + $0x58] sm:$0x3]
        %v605 = vld [vmem:[#allocation2 + $0x60] sm:$0xff]
        %v606 = vld [vmem:[#allocation2 + $0x68] sm:$0xff]
        %v607 = vld [vmem:[#allocation2 + $0x70] sm:$0x3]
        %v608 = vld [vmem:[#allocation2 + $0x78] sm:$0xff]
        %v609 = vld [vmem:[#allocation2 + $0x80] sm:$0xff]
        %v610 = vld [vmem:[#allocation2 + $0x88] sm:$0x3]
        %v611 = vld [vmem:[#allocation2 + $0x90] sm:$0xff]
        %v612 = vld [vmem:[#allocation2 + $0x98] sm:$0xff]
        %v613 = vld [vmem:[#allocation2 + $0xa0] sm:$0x3]
        %v614 = vld [vmem:[#allocation2 + $0xa8] sm:$0xff]
        %v615 = vld [vmem:[#allocation2 + $0xb0] sm:$0xff]
        %v616 = vld [vmem:[#allocation2 + $0xb8] sm:$0x3]
        %v617 = vld [vmem:[#allocation2 + $0xc0] sm:$0xff]
        %v618 = vld [vmem:[#allocation2 + $0xc8] sm:$0xff]
        %v619 = vld [vmem:[#allocation2 + $0xd0] sm:$0x3]
        %v620 = vld [vmem:[#allocation2 + $0xd8] sm:$0xff]
        %v621 = vld [vmem:[#allocation2 + $0xe0] sm:$0xff]
        %v622 = vld [vmem:[#allocation2 + $0xe8] sm:$0x3]
        %v623 = vld [vmem:[#allocation2 + $0xf0] sm:$0xff]
        %v624 = vld [vmem:[#allocation2 + $0xf8] sm:$0xff]
        %v625 = vld [vmem:[#allocation2 + $0x100] sm:$0x3]
        %v626 = vld [vmem:[#allocation2 + $0x108] sm:$0xff]
        %v627 = vld [vmem:[#allocation2 + $0x110] sm:$0xff]
        %v628 = vld [vmem:[#allocation2 + $0x118] sm:$0x3]
        %v629 = vld [vmem:[#allocation2 + $0x120] sm:$0xff]
        %v630 = vld [vmem:[#allocation2 + $0x128] sm:$0xff]
        %v631 = vld [vmem:[#allocation2 + $0x130] sm:$0x3]
        %v632 = vld [vmem:[#allocation2 + $0x138] sm:$0xff]
        %v633 = vld [vmem:[#allocation2 + $0x140] sm:$0xff]
        %v634 = vld [vmem:[#allocation2 + $0x148] sm:$0x3]
        %v635 = vld [vmem:[#allocation2 + $0x150] sm:$0xff]
        %v636 = vld [vmem:[#allocation2 + $0x158] sm:$0xff]
        %v637 = vld [vmem:[#allocation2 + $0x160] sm:$0x3]
        %v638 = vld [vmem:[#allocation2 + $0x168] sm:$0xff]
        %v639 = vld [vmem:[#allocation2 + $0x170] sm:$0xff]
        %v640 = vld [vmem:[#allocation2 + $0x178] sm:$0x3]
        %v641 = vld [vmem:[#allocation2 + $0x180] sm:$0xff]
        %v642 = vld [vmem:[#allocation2 + $0x188] sm:$0xff]
        %v643 = vld [vmem:[#allocation2 + $0x190] sm:$0x3]
        %v644 = vld [vmem:[#allocation2 + $0x198] sm:$0xff]
        %v645 = vld [vmem:[#allocation2 + $0x1a0] sm:$0xff]
        %v646 = vld [vmem:[#allocation2 + $0x1a8] sm:$0x3]
        %v647 = vld [vmem:[#allocation7] sm:$0x7]
        %vm696 = vcmask 1046528
        %v697 = vrot.slane %v593, 1
        %v698 = vrot.slane %v594, 1
        %v699 = vsel %vm696, %v697, %v698
        %v700 = vrot.slane %v595, 1
        %v701 = vsel %vm696, %v698, %v700
        %v702 = vrot.slane %v596, 1
        %v703 = vrot.slane %v597, 1
        %v704 = vsel %vm696, %v702, %v703
        %v705 = vrot.slane %v598, 1
        %v706 = vsel %vm696, %v703, %v705
        %v707 = vrot.slane %v599, 1
        %v708 = vrot.slane %v600, 1
        %v709 = vsel %vm696, %v707, %v708
        %v710 = vrot.slane %v601, 1
        %v711 = vsel %vm696, %v708, %v710
        %v712 = vrot.slane %v602, 1
        %v713 = vrot.slane %v603, 1
        %v714 = vsel %vm696, %v712, %v713
        %v715 = vrot.slane %v604, 1
        %v716 = vsel %vm696, %v713, %v715
        %v717 = vrot.slane %v605, 1
        %v718 = vrot.slane %v606, 1
        %v719 = vsel %vm696, %v717, %v718
        %v720 = vrot.slane %v607, 1
        %v721 = vsel %vm696, %v718, %v720
        %v722 = vrot.slane %v608, 1
        %v723 = vrot.slane %v609, 1
        %v724 = vsel %vm696, %v722, %v723
        %v725 = vrot.slane %v610, 1
        %v726 = vsel %vm696, %v723, %v725
        %v727 = vrot.slane %v611, 1
        %v728 = vrot.slane %v612, 1
        %v729 = vsel %vm696, %v727, %v728
        %v730 = vrot.slane %v613, 1
        %v731 = vsel %vm696, %v728, %v730
        %v732 = vrot.slane %v614, 1
        %v733 = vrot.slane %v615, 1
        %v734 = vsel %vm696, %v732, %v733
        %v735 = vrot.slane %v616, 1
        %v736 = vsel %vm696, %v733, %v735
        %v737 = vrot.slane %v617, 1
        %v738 = vrot.slane %v618, 1
        %v739 = vsel %vm696, %v737, %v738
        %v740 = vrot.slane %v619, 1
        %v741 = vsel %vm696, %v738, %v740
        %v742 = vrot.slane %v620, 1
        %v743 = vrot.slane %v621, 1
        %v744 = vsel %vm696, %v742, %v743
        %v745 = vrot.slane %v622, 1
        %v746 = vsel %vm696, %v743, %v745
        %v747 = vrot.slane %v623, 1
        %v748 = vrot.slane %v624, 1
        %v749 = vsel %vm696, %v747, %v748
        %v750 = vrot.slane %v625, 1
        %v751 = vsel %vm696, %v748, %v750
        %v752 = vrot.slane %v626, 1
        %v753 = vrot.slane %v627, 1
        %v754 = vsel %vm696, %v752, %v753
        %v755 = vrot.slane %v628, 1
        %v756 = vsel %vm696, %v753, %v755
        %v757 = vrot.slane %v629, 1
        %v758 = vrot.slane %v630, 1
        %v759 = vsel %vm696, %v757, %v758
        %v760 = vrot.slane %v631, 1
        %v761 = vsel %vm696, %v758, %v760
        %v762 = vrot.slane %v632, 1
        %v763 = vrot.slane %v633, 1
        %v764 = vsel %vm696, %v762, %v763
        %v765 = vrot.slane %v634, 1
        %v766 = vsel %vm696, %v763, %v765
        %v767 = vrot.slane %v635, 1
        %v768 = vrot.slane %v636, 1
        %v769 = vsel %vm696, %v767, %v768
        %v770 = vrot.slane %v637, 1
        %v771 = vsel %vm696, %v768, %v770
        %v772 = vrot.slane %v638, 1
        %v773 = vrot.slane %v639, 1
        %v774 = vsel %vm696, %v772, %v773
        %v775 = vrot.slane %v640, 1
        %v776 = vsel %vm696, %v773, %v775
        %s777 = scalar_lea.vmem [#allocation7], 4
        %v778 = vld [vmem:[%s777] sm:$0x7]
        %v779 = vsel %vm504, %v699, 0
        %v781 = vsel %vm504, %v701, 0
        %v783 = vsel %vm504, %v704, 0
        %v785 = vsel %vm504, %v706, 0
        %v787 = vsel %vm504, %v709, 0
        %v789 = vsel %vm504, %v711, 0
        %v791 = vsel %vm504, %v714, 0
        %v793 = vsel %vm504, %v716, 0
        %v795 = vsel %vm504, %v719, 0
        %v797 = vsel %vm504, %v721, 0
        %v799 = vsel %vm504, %v724, 0
        %v801 = vsel %vm504, %v726, 0
        %v803 = vsel %vm504, %v729, 0
        %v805 = vsel %vm504, %v731, 0
        %v807 = vsel %vm504, %v734, 0
        %v809 = vsel %vm504, %v736, 0
        %v811 = vsel %vm504, %v739, 0
        %v813 = vsel %vm504, %v741, 0
        %v815 = vsel %vm504, %v744, 0
        %v817 = vsel %vm504, %v746, 0
        %v819 = vsel %vm504, %v749, 0
        %v821 = vsel %vm504, %v751, 0
        %v823 = vsel %vm504, %v754, 0
        %v825 = vsel %vm504, %v756, 0
        %v827 = vsel %vm504, %v759, 0
        %v829 = vsel %vm504, %v761, 0
        %v831 = vsel %vm504, %v764, 0
        %v833 = vsel %vm504, %v766, 0
        %v835 = vsel %vm504, %v769, 0
        %v837 = vsel %vm504, %v771, 0
        %v839 = vsel %vm504, %v774, 0
        %v841 = vsel %vm504, %v776, 0
        %vm843 = vcmask 1042432
        %v845 = vsel %vm843, %v778, 0
        %847 = vmatprep.subr.mxu0 0.0
        %848 = vmatpush1.msra.mxu0 0.0
        %849 = vmatprep.subr.mxu0 0.0
        %850 = vmatpush1.msra.mxu0 0.0
        %851 = vmatprep.subr.mxu0 0.0
        %852 = vmatpush1.msra.mxu0 0.0
        %853 = vmatprep.subr.mxu0 0.0
        %854 = vmatpush1.msra.mxu0 0.0
        %855 = vmatprep.subr.mxu0 0.0
        %856 = vmatpush1.msra.mxu0 0.0
        %857 = vmatprep.subr.mxu0 0.0
        %858 = vmatpush1.msra.mxu0 0.0
        %859 = vmatprep.subr.mxu0 0.0
        %860 = vmatpush1.msra.mxu0 0.0
        %861 = vmatprep.subr.mxu0 0.0
        %862 = vmatpush1.msra.mxu0 0.0
        %863 = vmatprep.subr.mxu0 0.0
        %864 = vmatpush1.msra.mxu0 0.0
        %865 = vmatprep.subr.mxu0 0.0
        %866 = vmatpush1.msra.mxu0 0.0
        %867 = vmatprep.subr.mxu0 0.0
        %868 = vmatpush1.msra.mxu0 0.0
        %869 = vmatprep.subr.mxu0 0.0
        %870 = vmatpush1.msra.mxu0 0.0
        %871 = vmatprep.subr.mxu0 0.0
        %872 = vmatpush1.msra.mxu0 0.0
        %873 = vmatprep.subr.mxu0 0.0
        %874 = vmatpush1.msra.mxu0 0.0
        %875 = vmatprep.subr.mxu0 0.0
        %876 = vmatpush1.msra.mxu0 0.0
        %877 = vmatprep.subr.mxu0 0.0
        %878 = vmatpush1.msra.mxu0 %v845
        %879 = vmatprep.subr.mxu0 0.0
        %880 = vmatpush2.msra.mxu0 0.0
        %881 = vmatprep.subr.mxu0 0.0
        %882 = vmatpush2.msra.mxu0 0.0
        %883 = vmatprep.subr.mxu0 0.0
        %884 = vmatpush2.msra.mxu0 0.0
        %885 = vmatprep.subr.mxu0 0.0
        %886 = vmatpush2.msra.mxu0 0.0
        %887 = vmatprep.subr.mxu0 0.0
        %888 = vmatpush2.msra.mxu0 0.0
        %889 = vmatprep.subr.mxu0 0.0
        %890 = vmatpush2.msra.mxu0 0.0
        %891 = vmatprep.subr.mxu0 0.0
        %892 = vmatpush2.msra.mxu0 0.0
        %893 = vmatprep.subr.mxu0 0.0
        %894 = vmatpush2.msra.mxu0 0.0
        %895 = vmatprep.subr.mxu0 0.0
        %896 = vmatpush2.msra.mxu0 0.0
        %897 = vmatprep.subr.mxu0 0.0
        %898 = vmatpush2.msra.mxu0 0.0
        %899 = vmatprep.subr.mxu0 0.0
        %900 = vmatpush2.msra.mxu0 0.0
        %901 = vmatprep.subr.mxu0 0.0
        %902 = vmatpush2.msra.mxu0 0.0
        %903 = vmatprep.subr.mxu0 0.0
        %904 = vmatpush2.msra.mxu0 0.0
        %905 = vmatprep.subr.mxu0 0.0
        %906 = vmatpush2.msra.mxu0 0.0
        %907 = vmatprep.subr.mxu0 0.0
        %908 = vmatpush2.msra.mxu0 0.0
        %909 = vmatprep.subr.mxu0 0.0
        %910 = vmatpush2.msra.mxu0 0.0
        %911 = vmatprep.mubr.f32.mxu0 0.0
        %912 = vmatmul.mubr.f32.gmra.mxu0 %v779
        %v913 = vpop.f32.mrf.mxu0
        %v914 = vadd.f32 0.0, %v913
        %v915 = vpop.f32.mrf.mxu0
        %916 = vmatprep.mubr.f32.mxu0 0.0
        %917 = vmatmul.mubr.f32.gmra.mxu0 %v781
        %v918 = vpop.f32.mrf.mxu0
        %v919 = vadd.f32 0.0, %v918
        %v920 = vpop.f32.mrf.mxu0
        %921 = vmatprep.mubr.f32.mxu0 0.0
        %922 = vmatmul.mubr.f32.gmra.mxu0 %v783
        %v923 = vpop.f32.mrf.mxu0
        %v924 = vadd.f32 0.0, %v923
        %v925 = vpop.f32.mrf.mxu0
        %926 = vmatprep.mubr.f32.mxu0 0.0
        %927 = vmatmul.mubr.f32.gmra.mxu0 %v785
        %v928 = vpop.f32.mrf.mxu0
        %v929 = vadd.f32 0.0, %v928
        %v930 = vpop.f32.mrf.mxu0
        %931 = vmatprep.mubr.f32.mxu0 0.0
        %932 = vmatmul.mubr.f32.gmra.mxu0 %v787
        %v933 = vpop.f32.mrf.mxu0
        %v934 = vadd.f32 0.0, %v933
        %v935 = vpop.f32.mrf.mxu0
        %936 = vmatprep.mubr.f32.mxu0 0.0
        %937 = vmatmul.mubr.f32.gmra.mxu0 %v789
        %v938 = vpop.f32.mrf.mxu0
        %v939 = vadd.f32 0.0, %v938
        %v940 = vpop.f32.mrf.mxu0
        %941 = vmatprep.mubr.f32.mxu0 0.0
        %942 = vmatmul.mubr.f32.gmra.mxu0 %v791
        %v943 = vpop.f32.mrf.mxu0
        %v944 = vadd.f32 0.0, %v943
        %v945 = vpop.f32.mrf.mxu0
        %946 = vmatprep.mubr.f32.mxu0 0.0
        %947 = vmatmul.mubr.f32.gmra.mxu0 %v793
        %v948 = vpop.f32.mrf.mxu0
        %v949 = vadd.f32 0.0, %v948
        %v950 = vpop.f32.mrf.mxu0
        %951 = vmatprep.mubr.f32.mxu0 0.0
        %952 = vmatmul.mubr.f32.gmra.mxu0 %v795
        %v953 = vpop.f32.mrf.mxu0
        %v954 = vadd.f32 0.0, %v953
        %v955 = vpop.f32.mrf.mxu0
        %956 = vmatprep.mubr.f32.mxu0 0.0
        %957 = vmatmul.mubr.f32.gmra.mxu0 %v797
        %v958 = vpop.f32.mrf.mxu0
        %v959 = vadd.f32 0.0, %v958
        %v960 = vpop.f32.mrf.mxu0
        %961 = vmatprep.mubr.f32.mxu0 0.0
        %962 = vmatmul.mubr.f32.gmra.mxu0 %v799
        %v963 = vpop.f32.mrf.mxu0
        %v964 = vadd.f32 0.0, %v963
        %v965 = vpop.f32.mrf.mxu0
        %966 = vmatprep.mubr.f32.mxu0 0.0
        %967 = vmatmul.mubr.f32.gmra.mxu0 %v801
        %v968 = vpop.f32.mrf.mxu0
        %v969 = vadd.f32 0.0, %v968
        %v970 = vpop.f32.mrf.mxu0
        %971 = vmatprep.mubr.f32.mxu0 0.0
        %972 = vmatmul.mubr.f32.gmra.mxu0 %v803
        %v973 = vpop.f32.mrf.mxu0
        %v974 = vadd.f32 0.0, %v973
        %v975 = vpop.f32.mrf.mxu0
        %976 = vmatprep.mubr.f32.mxu0 0.0
        %977 = vmatmul.mubr.f32.gmra.mxu0 %v805
        %v978 = vpop.f32.mrf.mxu0
        %v979 = vadd.f32 0.0, %v978
        %v980 = vpop.f32.mrf.mxu0
        %981 = vmatprep.mubr.f32.mxu0 0.0
        %982 = vmatmul.mubr.f32.gmra.mxu0 %v807
        %v983 = vpop.f32.mrf.mxu0
        %v984 = vadd.f32 0.0, %v983
        %v985 = vpop.f32.mrf.mxu0
        %986 = vmatprep.mubr.f32.mxu0 0.0
        %987 = vmatmul.mubr.f32.gmra.mxu0 %v809
        %v988 = vpop.f32.mrf.mxu0
        %v989 = vadd.f32 0.0, %v988
        %v990 = vpop.f32.mrf.mxu0
        %991 = vmatprep.mubr.f32.mxu0 0.0
        %992 = vmatmul.mubr.f32.gmra.mxu0 %v811
        %v993 = vpop.f32.mrf.mxu0
        %v994 = vadd.f32 0.0, %v993
        %v995 = vpop.f32.mrf.mxu0
        %996 = vmatprep.mubr.f32.mxu0 0.0
        %997 = vmatmul.mubr.f32.gmra.mxu0 %v813
        %v998 = vpop.f32.mrf.mxu0
        %v999 = vadd.f32 0.0, %v998
        %v1000 = vpop.f32.mrf.mxu0
        %1001 = vmatprep.mubr.f32.mxu0 0.0
        %1002 = vmatmul.mubr.f32.gmra.mxu0 %v815
        %v1003 = vpop.f32.mrf.mxu0
        %v1004 = vadd.f32 0.0, %v1003
        %v1005 = vpop.f32.mrf.mxu0
        %1006 = vmatprep.mubr.f32.mxu0 0.0
        %1007 = vmatmul.mubr.f32.gmra.mxu0 %v817
        %v1008 = vpop.f32.mrf.mxu0
        %v1009 = vadd.f32 0.0, %v1008
        %v1010 = vpop.f32.mrf.mxu0
        %1011 = vmatprep.mubr.f32.mxu0 0.0
        %1012 = vmatmul.mubr.f32.gmra.mxu0 %v819
        %v1013 = vpop.f32.mrf.mxu0
        %v1014 = vadd.f32 0.0, %v1013
        %v1015 = vpop.f32.mrf.mxu0
        %1016 = vmatprep.mubr.f32.mxu0 0.0
        %1017 = vmatmul.mubr.f32.gmra.mxu0 %v821
        %v1018 = vpop.f32.mrf.mxu0
        %v1019 = vadd.f32 0.0, %v1018
        %v1020 = vpop.f32.mrf.mxu0
        %1021 = vmatprep.mubr.f32.mxu0 0.0
        %1022 = vmatmul.mubr.f32.gmra.mxu0 %v823
        %v1023 = vpop.f32.mrf.mxu0
        %v1024 = vadd.f32 0.0, %v1023
        %v1025 = vpop.f32.mrf.mxu0
        %1026 = vmatprep.mubr.f32.mxu0 0.0
        %1027 = vmatmul.mubr.f32.gmra.mxu0 %v825
        %v1028 = vpop.f32.mrf.mxu0
        %v1029 = vadd.f32 0.0, %v1028
        %v1030 = vpop.f32.mrf.mxu0
        %1031 = vmatprep.mubr.f32.mxu0 0.0
        %1032 = vmatmul.mubr.f32.gmra.mxu0 %v827
        %v1033 = vpop.f32.mrf.mxu0
        %v1034 = vadd.f32 0.0, %v1033
        %v1035 = vpop.f32.mrf.mxu0
        %1036 = vmatprep.mubr.f32.mxu0 0.0
        %1037 = vmatmul.mubr.f32.gmra.mxu0 %v829
        %v1038 = vpop.f32.mrf.mxu0
        %v1039 = vadd.f32 0.0, %v1038
        %v1040 = vpop.f32.mrf.mxu0
        %1041 = vmatprep.mubr.f32.mxu0 0.0
        %1042 = vmatmul.mubr.f32.gmra.mxu0 %v831
        %v1043 = vpop.f32.mrf.mxu0
        %v1044 = vadd.f32 0.0, %v1043
        %v1045 = vpop.f32.mrf.mxu0
        %1046 = vmatprep.mubr.f32.mxu0 0.0
        %1047 = vmatmul.mubr.f32.gmra.mxu0 %v833
        %v1048 = vpop.f32.mrf.mxu0
        %v1049 = vadd.f32 0.0, %v1048
        %v1050 = vpop.f32.mrf.mxu0
        %1051 = vmatprep.mubr.f32.mxu0 0.0
        %1052 = vmatmul.mubr.f32.gmra.mxu0 %v835
        %v1053 = vpop.f32.mrf.mxu0
        %v1054 = vadd.f32 0.0, %v1053
        %v1055 = vpop.f32.mrf.mxu0
        %1056 = vmatprep.mubr.f32.mxu0 0.0
        %1057 = vmatmul.mubr.f32.gmra.mxu0 %v837
        %v1058 = vpop.f32.mrf.mxu0
        %v1059 = vadd.f32 0.0, %v1058
        %v1060 = vpop.f32.mrf.mxu0
        %1061 = vmatprep.mubr.f32.mxu0 0.0
        %1062 = vmatmul.mubr.f32.gmra.mxu0 %v839
        %v1063 = vpop.f32.mrf.mxu0
        %v1064 = vadd.f32 0.0, %v1063
        %v1065 = vpop.f32.mrf.mxu0
        %1066 = vmatprep.mubr.f32.mxu0 0.0
        %1067 = vmatmul.mubr.f32.gmra.mxu0 %v841
        %v1068 = vpop.f32.mrf.mxu0
        %v1069 = vadd.f32 0.0, %v1068
        %v1070 = vpop.f32.mrf.mxu0
        %1071 = vdwg.mxu0
        %v1072 = vsel %vm504, %v593, 0
        %v1074 = vsel %vm504, %v594, 0
        %v1076 = vsel %vm504, %v596, 0
        %v1078 = vsel %vm504, %v597, 0
        %v1080 = vsel %vm504, %v599, 0
        %v1082 = vsel %vm504, %v600, 0
        %v1084 = vsel %vm504, %v602, 0
        %v1086 = vsel %vm504, %v603, 0
        %v1088 = vsel %vm504, %v605, 0
        %v1090 = vsel %vm504, %v606, 0
        %v1092 = vsel %vm504, %v608, 0
        %v1094 = vsel %vm504, %v609, 0
        %v1096 = vsel %vm504, %v611, 0
        %v1098 = vsel %vm504, %v612, 0
        %v1100 = vsel %vm504, %v614, 0
        %v1102 = vsel %vm504, %v615, 0
        %v1104 = vsel %vm504, %v617, 0
        %v1106 = vsel %vm504, %v618, 0
        %v1108 = vsel %vm504, %v620, 0
        %v1110 = vsel %vm504, %v621, 0
        %v1112 = vsel %vm504, %v623, 0
        %v1114 = vsel %vm504, %v624, 0
        %v1116 = vsel %vm504, %v626, 0
        %v1118 = vsel %vm504, %v627, 0
        %v1120 = vsel %vm504, %v629, 0
        %v1122 = vsel %vm504, %v630, 0
        %v1124 = vsel %vm504, %v632, 0
        %v1126 = vsel %vm504, %v633, 0
        %v1128 = vsel %vm504, %v635, 0
        %v1130 = vsel %vm504, %v636, 0
        %v1132 = vsel %vm504, %v638, 0
        %v1134 = vsel %vm504, %v639, 0
        %v1137 = vsel %vm843, %v647, 0
        %1139 = vmatprep.subr.mxu0 0.0
        %1140 = vmatpush1.msra.mxu0 0.0
        %1141 = vmatprep.subr.mxu0 0.0
        %1142 = vmatpush1.msra.mxu0 0.0
        %1143 = vmatprep.subr.mxu0 0.0
        %1144 = vmatpush1.msra.mxu0 0.0
        %1145 = vmatprep.subr.mxu0 0.0
        %1146 = vmatpush1.msra.mxu0 0.0
        %1147 = vmatprep.subr.mxu0 0.0
        %1148 = vmatpush1.msra.mxu0 0.0
        %1149 = vmatprep.subr.mxu0 0.0
        %1150 = vmatpush1.msra.mxu0 0.0
        %1151 = vmatprep.subr.mxu0 0.0
        %1152 = vmatpush1.msra.mxu0 0.0
        %1153 = vmatprep.subr.mxu0 0.0
        %1154 = vmatpush1.msra.mxu0 0.0
        %1155 = vmatprep.subr.mxu0 0.0
        %1156 = vmatpush1.msra.mxu0 0.0
        %1157 = vmatprep.subr.mxu0 0.0
        %1158 = vmatpush1.msra.mxu0 0.0
        %1159 = vmatprep.subr.mxu0 0.0
        %1160 = vmatpush1.msra.mxu0 0.0
        %1161 = vmatprep.subr.mxu0 0.0
        %1162 = vmatpush1.msra.mxu0 0.0
        %1163 = vmatprep.subr.mxu0 0.0
        %1164 = vmatpush1.msra.mxu0 0.0
        %1165 = vmatprep.subr.mxu0 0.0
        %1166 = vmatpush1.msra.mxu0 0.0
        %1167 = vmatprep.subr.mxu0 0.0
        %1168 = vmatpush1.msra.mxu0 0.0
        %1169 = vmatprep.subr.mxu0 0.0
        %1170 = vmatpush1.msra.mxu0 %v1137
        %1171 = vmatprep.subr.mxu0 0.0
        %1172 = vmatpush2.msra.mxu0 0.0
        %1173 = vmatprep.subr.mxu0 0.0
        %1174 = vmatpush2.msra.mxu0 0.0
        %1175 = vmatprep.subr.mxu0 0.0
        %1176 = vmatpush2.msra.mxu0 0.0
        %1177 = vmatprep.subr.mxu0 0.0
        %1178 = vmatpush2.msra.mxu0 0.0
        %1179 = vmatprep.subr.mxu0 0.0
        %1180 = vmatpush2.msra.mxu0 0.0
        %1181 = vmatprep.subr.mxu0 0.0
        %1182 = vmatpush2.msra.mxu0 0.0
        %1183 = vmatprep.subr.mxu0 0.0
        %1184 = vmatpush2.msra.mxu0 0.0
        %1185 = vmatprep.subr.mxu0 0.0
        %1186 = vmatpush2.msra.mxu0 0.0
        %1187 = vmatprep.subr.mxu0 0.0
        %1188 = vmatpush2.msra.mxu0 0.0
        %1189 = vmatprep.subr.mxu0 0.0
        %1190 = vmatpush2.msra.mxu0 0.0
        %1191 = vmatprep.subr.mxu0 0.0
        %1192 = vmatpush2.msra.mxu0 0.0
        %1193 = vmatprep.subr.mxu0 0.0
        %1194 = vmatpush2.msra.mxu0 0.0
        %1195 = vmatprep.subr.mxu0 0.0
        %1196 = vmatpush2.msra.mxu0 0.0
        %1197 = vmatprep.subr.mxu0 0.0
        %1198 = vmatpush2.msra.mxu0 0.0
        %1199 = vmatprep.subr.mxu0 0.0
        %1200 = vmatpush2.msra.mxu0 0.0
        %1201 = vmatprep.subr.mxu0 0.0
        %1202 = vmatpush2.msra.mxu0 0.0
        %1203 = vmatprep.mubr.f32.mxu0 0.0
        %1204 = vmatmul.mubr.f32.gmra.mxu0 %v1072
        %v1205 = vpop.f32.mrf.mxu0
        %v1206 = vadd.f32 %v914, %v1205
        %v1207 = vpop.f32.mrf.mxu0
        %1208 = vmatprep.mubr.f32.mxu0 0.0
        %1209 = vmatmul.mubr.f32.gmra.mxu0 %v1074
        %v1210 = vpop.f32.mrf.mxu0
        %v1211 = vadd.f32 %v919, %v1210
        %v1212 = vpop.f32.mrf.mxu0
        %1213 = vmatprep.mubr.f32.mxu0 0.0
        %1214 = vmatmul.mubr.f32.gmra.mxu0 %v1076
        %v1215 = vpop.f32.mrf.mxu0
        %v1216 = vadd.f32 %v924, %v1215
        %v1217 = vpop.f32.mrf.mxu0
        %1218 = vmatprep.mubr.f32.mxu0 0.0
        %1219 = vmatmul.mubr.f32.gmra.mxu0 %v1078
        %v1220 = vpop.f32.mrf.mxu0
        %v1221 = vadd.f32 %v929, %v1220
        %v1222 = vpop.f32.mrf.mxu0
        %1223 = vmatprep.mubr.f32.mxu0 0.0
        %1224 = vmatmul.mubr.f32.gmra.mxu0 %v1080
        %v1225 = vpop.f32.mrf.mxu0
        %v1226 = vadd.f32 %v934, %v1225
        %v1227 = vpop.f32.mrf.mxu0
        %1228 = vmatprep.mubr.f32.mxu0 0.0
        %1229 = vmatmul.mubr.f32.gmra.mxu0 %v1082
        %v1230 = vpop.f32.mrf.mxu0
        %v1231 = vadd.f32 %v939, %v1230
        %v1232 = vpop.f32.mrf.mxu0
        %1233 = vmatprep.mubr.f32.mxu0 0.0
        %1234 = vmatmul.mubr.f32.gmra.mxu0 %v1084
        %v1235 = vpop.f32.mrf.mxu0
        %v1236 = vadd.f32 %v944, %v1235
        %v1237 = vpop.f32.mrf.mxu0
        %1238 = vmatprep.mubr.f32.mxu0 0.0
        %1239 = vmatmul.mubr.f32.gmra.mxu0 %v1086
        %v1240 = vpop.f32.mrf.mxu0
        %v1241 = vadd.f32 %v949, %v1240
        %v1242 = vpop.f32.mrf.mxu0
        %1243 = vmatprep.mubr.f32.mxu0 0.0
        %1244 = vmatmul.mubr.f32.gmra.mxu0 %v1088
        %v1245 = vpop.f32.mrf.mxu0
        %v1246 = vadd.f32 %v954, %v1245
        %v1247 = vpop.f32.mrf.mxu0
        %1248 = vmatprep.mubr.f32.mxu0 0.0
        %1249 = vmatmul.mubr.f32.gmra.mxu0 %v1090
        %v1250 = vpop.f32.mrf.mxu0
        %v1251 = vadd.f32 %v959, %v1250
        %v1252 = vpop.f32.mrf.mxu0
        %1253 = vmatprep.mubr.f32.mxu0 0.0
        %1254 = vmatmul.mubr.f32.gmra.mxu0 %v1092
        %v1255 = vpop.f32.mrf.mxu0
        %v1256 = vadd.f32 %v964, %v1255
        %v1257 = vpop.f32.mrf.mxu0
        %1258 = vmatprep.mubr.f32.mxu0 0.0
        %1259 = vmatmul.mubr.f32.gmra.mxu0 %v1094
        %v1260 = vpop.f32.mrf.mxu0
        %v1261 = vadd.f32 %v969, %v1260
        %v1262 = vpop.f32.mrf.mxu0
        %1263 = vmatprep.mubr.f32.mxu0 0.0
        %1264 = vmatmul.mubr.f32.gmra.mxu0 %v1096
        %v1265 = vpop.f32.mrf.mxu0
        %v1266 = vadd.f32 %v974, %v1265
        %v1267 = vpop.f32.mrf.mxu0
        %1268 = vmatprep.mubr.f32.mxu0 0.0
        %1269 = vmatmul.mubr.f32.gmra.mxu0 %v1098
        %v1270 = vpop.f32.mrf.mxu0
        %v1271 = vadd.f32 %v979, %v1270
        %v1272 = vpop.f32.mrf.mxu0
        %1273 = vmatprep.mubr.f32.mxu0 0.0
        %1274 = vmatmul.mubr.f32.gmra.mxu0 %v1100
        %v1275 = vpop.f32.mrf.mxu0
        %v1276 = vadd.f32 %v984, %v1275
        %v1277 = vpop.f32.mrf.mxu0
        %1278 = vmatprep.mubr.f32.mxu0 0.0
        %1279 = vmatmul.mubr.f32.gmra.mxu0 %v1102
        %v1280 = vpop.f32.mrf.mxu0
        %v1281 = vadd.f32 %v989, %v1280
        %v1282 = vpop.f32.mrf.mxu0
        %1283 = vmatprep.mubr.f32.mxu0 0.0
        %1284 = vmatmul.mubr.f32.gmra.mxu0 %v1104
        %v1285 = vpop.f32.mrf.mxu0
        %v1286 = vadd.f32 %v994, %v1285
        %v1287 = vpop.f32.mrf.mxu0
        %1288 = vmatprep.mubr.f32.mxu0 0.0
        %1289 = vmatmul.mubr.f32.gmra.mxu0 %v1106
        %v1290 = vpop.f32.mrf.mxu0
        %v1291 = vadd.f32 %v999, %v1290
        %v1292 = vpop.f32.mrf.mxu0
        %1293 = vmatprep.mubr.f32.mxu0 0.0
        %1294 = vmatmul.mubr.f32.gmra.mxu0 %v1108
        %v1295 = vpop.f32.mrf.mxu0
        %v1296 = vadd.f32 %v1004, %v1295
        %v1297 = vpop.f32.mrf.mxu0
        %1298 = vmatprep.mubr.f32.mxu0 0.0
        %1299 = vmatmul.mubr.f32.gmra.mxu0 %v1110
        %v1300 = vpop.f32.mrf.mxu0
        %v1301 = vadd.f32 %v1009, %v1300
        %v1302 = vpop.f32.mrf.mxu0
        %1303 = vmatprep.mubr.f32.mxu0 0.0
        %1304 = vmatmul.mubr.f32.gmra.mxu0 %v1112
        %v1305 = vpop.f32.mrf.mxu0
        %v1306 = vadd.f32 %v1014, %v1305
        %v1307 = vpop.f32.mrf.mxu0
        %1308 = vmatprep.mubr.f32.mxu0 0.0
        %1309 = vmatmul.mubr.f32.gmra.mxu0 %v1114
        %v1310 = vpop.f32.mrf.mxu0
        %v1311 = vadd.f32 %v1019, %v1310
        %v1312 = vpop.f32.mrf.mxu0
        %1313 = vmatprep.mubr.f32.mxu0 0.0
        %1314 = vmatmul.mubr.f32.gmra.mxu0 %v1116
        %v1315 = vpop.f32.mrf.mxu0
        %v1316 = vadd.f32 %v1024, %v1315
        %v1317 = vpop.f32.mrf.mxu0
        %1318 = vmatprep.mubr.f32.mxu0 0.0
        %1319 = vmatmul.mubr.f32.gmra.mxu0 %v1118
        %v1320 = vpop.f32.mrf.mxu0
        %v1321 = vadd.f32 %v1029, %v1320
        %v1322 = vpop.f32.mrf.mxu0
        %1323 = vmatprep.mubr.f32.mxu0 0.0
        %1324 = vmatmul.mubr.f32.gmra.mxu0 %v1120
        %v1325 = vpop.f32.mrf.mxu0
        %v1326 = vadd.f32 %v1034, %v1325
        %v1327 = vpop.f32.mrf.mxu0
        %1328 = vmatprep.mubr.f32.mxu0 0.0
        %1329 = vmatmul.mubr.f32.gmra.mxu0 %v1122
        %v1330 = vpop.f32.mrf.mxu0
        %v1331 = vadd.f32 %v1039, %v1330
        %v1332 = vpop.f32.mrf.mxu0
        %1333 = vmatprep.mubr.f32.mxu0 0.0
        %1334 = vmatmul.mubr.f32.gmra.mxu0 %v1124
        %v1335 = vpop.f32.mrf.mxu0
        %v1336 = vadd.f32 %v1044, %v1335
        %v1337 = vpop.f32.mrf.mxu0
        %1338 = vmatprep.mubr.f32.mxu0 0.0
        %1339 = vmatmul.mubr.f32.gmra.mxu0 %v1126
        %v1340 = vpop.f32.mrf.mxu0
        %v1341 = vadd.f32 %v1049, %v1340
        %v1342 = vpop.f32.mrf.mxu0
        %1343 = vmatprep.mubr.f32.mxu0 0.0
        %1344 = vmatmul.mubr.f32.gmra.mxu0 %v1128
        %v1345 = vpop.f32.mrf.mxu0
        %v1346 = vadd.f32 %v1054, %v1345
        %v1347 = vpop.f32.mrf.mxu0
        %1348 = vmatprep.mubr.f32.mxu0 0.0
        %1349 = vmatmul.mubr.f32.gmra.mxu0 %v1130
        %v1350 = vpop.f32.mrf.mxu0
        %v1351 = vadd.f32 %v1059, %v1350
        %v1352 = vpop.f32.mrf.mxu0
        %1353 = vmatprep.mubr.f32.mxu0 0.0
        %1354 = vmatmul.mubr.f32.gmra.mxu0 %v1132
        %v1355 = vpop.f32.mrf.mxu0
        %v1356 = vadd.f32 %v1064, %v1355
        %v1357 = vpop.f32.mrf.mxu0
        %1358 = vmatprep.mubr.f32.mxu0 0.0
        %1359 = vmatmul.mubr.f32.gmra.mxu0 %v1134
        %v1360 = vpop.f32.mrf.mxu0
        %v1361 = vadd.f32 %v1069, %v1360
        %v1362 = vpop.f32.mrf.mxu0
        %1363 = vdwg.mxu0
        %vm1364 = vcmask 1045504
        %v1365 = vrot.slane %v593, 2
        %v1366 = vrot.slane %v594, 2
        %v1367 = vsel %vm1364, %v1365, %v1366
        %v1368 = vrot.slane %v595, 2
        %v1369 = vsel %vm1364, %v1366, %v1368
        %v1370 = vrot.slane %v596, 2
        %v1371 = vrot.slane %v597, 2
        %v1372 = vsel %vm1364, %v1370, %v1371
        %v1373 = vrot.slane %v598, 2
        %v1374 = vsel %vm1364, %v1371, %v1373
        %v1375 = vrot.slane %v599, 2
        %v1376 = vrot.slane %v600, 2
        %v1377 = vsel %vm1364, %v1375, %v1376
        %v1378 = vrot.slane %v601, 2
        %v1379 = vsel %vm1364, %v1376, %v1378
        %v1380 = vrot.slane %v602, 2
        %v1381 = vrot.slane %v603, 2
        %v1382 = vsel %vm1364, %v1380, %v1381
        %v1383 = vrot.slane %v604, 2
        %v1384 = vsel %vm1364, %v1381, %v1383
        %v1385 = vrot.slane %v605, 2
        %v1386 = vrot.slane %v606, 2
        %v1387 = vsel %vm1364, %v1385, %v1386
        %v1388 = vrot.slane %v607, 2
        %v1389 = vsel %vm1364, %v1386, %v1388
        %v1390 = vrot.slane %v608, 2
        %v1391 = vrot.slane %v609, 2
        %v1392 = vsel %vm1364, %v1390, %v1391
        %v1393 = vrot.slane %v610, 2
        %v1394 = vsel %vm1364, %v1391, %v1393
        %v1395 = vrot.slane %v611, 2
        %v1396 = vrot.slane %v612, 2
        %v1397 = vsel %vm1364, %v1395, %v1396
        %v1398 = vrot.slane %v613, 2
        %v1399 = vsel %vm1364, %v1396, %v1398
        %v1400 = vrot.slane %v614, 2
        %v1401 = vrot.slane %v615, 2
        %v1402 = vsel %vm1364, %v1400, %v1401
        %v1403 = vrot.slane %v616, 2
        %v1404 = vsel %vm1364, %v1401, %v1403
        %v1405 = vrot.slane %v617, 2
        %v1406 = vrot.slane %v618, 2
        %v1407 = vsel %vm1364, %v1405, %v1406
        %v1408 = vrot.slane %v619, 2
        %v1409 = vsel %vm1364, %v1406, %v1408
        %v1410 = vrot.slane %v620, 2
        %v1411 = vrot.slane %v621, 2
        %v1412 = vsel %vm1364, %v1410, %v1411
        %v1413 = vrot.slane %v622, 2
        %v1414 = vsel %vm1364, %v1411, %v1413
        %v1415 = vrot.slane %v623, 2
        %v1416 = vrot.slane %v624, 2
        %v1417 = vsel %vm1364, %v1415, %v1416
        %v1418 = vrot.slane %v625, 2
        %v1419 = vsel %vm1364, %v1416, %v1418
        %v1420 = vrot.slane %v626, 2
        %v1421 = vrot.slane %v627, 2
        %v1422 = vsel %vm1364, %v1420, %v1421
        %v1423 = vrot.slane %v628, 2
        %v1424 = vsel %vm1364, %v1421, %v1423
        %v1425 = vrot.slane %v629, 2
        %v1426 = vrot.slane %v630, 2
        %v1427 = vsel %vm1364, %v1425, %v1426
        %v1428 = vrot.slane %v631, 2
        %v1429 = vsel %vm1364, %v1426, %v1428
        %v1430 = vrot.slane %v632, 2
        %v1431 = vrot.slane %v633, 2
        %v1432 = vsel %vm1364, %v1430, %v1431
        %v1433 = vrot.slane %v634, 2
        %v1434 = vsel %vm1364, %v1431, %v1433
        %v1435 = vrot.slane %v635, 2
        %v1436 = vrot.slane %v636, 2
        %v1437 = vsel %vm1364, %v1435, %v1436
        %v1438 = vrot.slane %v637, 2
        %v1439 = vsel %vm1364, %v1436, %v1438
        %v1440 = vrot.slane %v638, 2
        %v1441 = vrot.slane %v639, 2
        %v1442 = vsel %vm1364, %v1440, %v1441
        %v1443 = vrot.slane %v640, 2
        %v1444 = vsel %vm1364, %v1441, %v1443
        %s1445 = scalar_lea.vmem [#allocation7], 8
        %v1446 = vld [vmem:[%s1445] sm:$0x7]
        %v1447 = vsel %vm504, %v1367, 0
        %v1449 = vsel %vm504, %v1369, 0
        %v1451 = vsel %vm504, %v1372, 0
        %v1453 = vsel %vm504, %v1374, 0
        %v1455 = vsel %vm504, %v1377, 0
        %v1457 = vsel %vm504, %v1379, 0
        %v1459 = vsel %vm504, %v1382, 0
        %v1461 = vsel %vm504, %v1384, 0
        %v1463 = vsel %vm504, %v1387, 0
        %v1465 = vsel %vm504, %v1389, 0
        %v1467 = vsel %vm504, %v1392, 0
        %v1469 = vsel %vm504, %v1394, 0
        %v1471 = vsel %vm504, %v1397, 0
        %v1473 = vsel %vm504, %v1399, 0
        %v1475 = vsel %vm504, %v1402, 0
        %v1477 = vsel %vm504, %v1404, 0
        %v1479 = vsel %vm504, %v1407, 0
        %v1481 = vsel %vm504, %v1409, 0
        %v1483 = vsel %vm504, %v1412, 0
        %v1485 = vsel %vm504, %v1414, 0
        %v1487 = vsel %vm504, %v1417, 0
        %v1489 = vsel %vm504, %v1419, 0
        %v1491 = vsel %vm504, %v1422, 0
        %v1493 = vsel %vm504, %v1424, 0
        %v1495 = vsel %vm504, %v1427, 0
        %v1497 = vsel %vm504, %v1429, 0
        %v1499 = vsel %vm504, %v1432, 0
        %v1501 = vsel %vm504, %v1434, 0
        %v1503 = vsel %vm504, %v1437, 0
        %v1505 = vsel %vm504, %v1439, 0
        %v1507 = vsel %vm504, %v1442, 0
        %v1509 = vsel %vm504, %v1444, 0
        %v1512 = vsel %vm843, %v1446, 0
        %1514 = vmatprep.subr.mxu0 0.0
        %1515 = vmatpush1.msra.mxu0 0.0
        %1516 = vmatprep.subr.mxu0 0.0
        %1517 = vmatpush1.msra.mxu0 0.0
        %1518 = vmatprep.subr.mxu0 0.0
        %1519 = vmatpush1.msra.mxu0 0.0
        %1520 = vmatprep.subr.mxu0 0.0
        %1521 = vmatpush1.msra.mxu0 0.0
        %1522 = vmatprep.subr.mxu0 0.0
        %1523 = vmatpush1.msra.mxu0 0.0
        %1524 = vmatprep.subr.mxu0 0.0
        %1525 = vmatpush1.msra.mxu0 0.0
        %1526 = vmatprep.subr.mxu0 0.0
        %1527 = vmatpush1.msra.mxu0 0.0
        %1528 = vmatprep.subr.mxu0 0.0
        %1529 = vmatpush1.msra.mxu0 0.0
        %1530 = vmatprep.subr.mxu0 0.0
        %1531 = vmatpush1.msra.mxu0 0.0
        %1532 = vmatprep.subr.mxu0 0.0
        %1533 = vmatpush1.msra.mxu0 0.0
        %1534 = vmatprep.subr.mxu0 0.0
        %1535 = vmatpush1.msra.mxu0 0.0
        %1536 = vmatprep.subr.mxu0 0.0
        %1537 = vmatpush1.msra.mxu0 0.0
        %1538 = vmatprep.subr.mxu0 0.0
        %1539 = vmatpush1.msra.mxu0 0.0
        %1540 = vmatprep.subr.mxu0 0.0
        %1541 = vmatpush1.msra.mxu0 0.0
        %1542 = vmatprep.subr.mxu0 0.0
        %1543 = vmatpush1.msra.mxu0 0.0
        %1544 = vmatprep.subr.mxu0 0.0
        %1545 = vmatpush1.msra.mxu0 %v1512
        %1546 = vmatprep.subr.mxu0 0.0
        %1547 = vmatpush2.msra.mxu0 0.0
        %1548 = vmatprep.subr.mxu0 0.0
        %1549 = vmatpush2.msra.mxu0 0.0
        %1550 = vmatprep.subr.mxu0 0.0
        %1551 = vmatpush2.msra.mxu0 0.0
        %1552 = vmatprep.subr.mxu0 0.0
        %1553 = vmatpush2.msra.mxu0 0.0
        %1554 = vmatprep.subr.mxu0 0.0
        %1555 = vmatpush2.msra.mxu0 0.0
        %1556 = vmatprep.subr.mxu0 0.0
        %1557 = vmatpush2.msra.mxu0 0.0
        %1558 = vmatprep.subr.mxu0 0.0
        %1559 = vmatpush2.msra.mxu0 0.0
        %1560 = vmatprep.subr.mxu0 0.0
        %1561 = vmatpush2.msra.mxu0 0.0
        %1562 = vmatprep.subr.mxu0 0.0
        %1563 = vmatpush2.msra.mxu0 0.0
        %1564 = vmatprep.subr.mxu0 0.0
        %1565 = vmatpush2.msra.mxu0 0.0
        %1566 = vmatprep.subr.mxu0 0.0
        %1567 = vmatpush2.msra.mxu0 0.0
        %1568 = vmatprep.subr.mxu0 0.0
        %1569 = vmatpush2.msra.mxu0 0.0
        %1570 = vmatprep.subr.mxu0 0.0
        %1571 = vmatpush2.msra.mxu0 0.0
        %1572 = vmatprep.subr.mxu0 0.0
        %1573 = vmatpush2.msra.mxu0 0.0
        %1574 = vmatprep.subr.mxu0 0.0
        %1575 = vmatpush2.msra.mxu0 0.0
        %1576 = vmatprep.subr.mxu0 0.0
        %1577 = vmatpush2.msra.mxu0 0.0
        %1578 = vmatprep.mubr.f32.mxu0 0.0
        %1579 = vmatmul.mubr.f32.gmra.mxu0 %v1447
        %v1580 = vpop.f32.mrf.mxu0
        %v1581 = vadd.f32 0.0, %v1580
        %v1582 = vpop.f32.mrf.mxu0
        %1583 = vmatprep.mubr.f32.mxu0 0.0
        %1584 = vmatmul.mubr.f32.gmra.mxu0 %v1449
        %v1585 = vpop.f32.mrf.mxu0
        %v1586 = vadd.f32 0.0, %v1585
        %v1587 = vpop.f32.mrf.mxu0
        %1588 = vmatprep.mubr.f32.mxu0 0.0
        %1589 = vmatmul.mubr.f32.gmra.mxu0 %v1451
        %v1590 = vpop.f32.mrf.mxu0
        %v1591 = vadd.f32 0.0, %v1590
        %v1592 = vpop.f32.mrf.mxu0
        %1593 = vmatprep.mubr.f32.mxu0 0.0
        %1594 = vmatmul.mubr.f32.gmra.mxu0 %v1453
        %v1595 = vpop.f32.mrf.mxu0
        %v1596 = vadd.f32 0.0, %v1595
        %v1597 = vpop.f32.mrf.mxu0
        %1598 = vmatprep.mubr.f32.mxu0 0.0
        %1599 = vmatmul.mubr.f32.gmra.mxu0 %v1455
        %v1600 = vpop.f32.mrf.mxu0
        %v1601 = vadd.f32 0.0, %v1600
        %v1602 = vpop.f32.mrf.mxu0
        %1603 = vmatprep.mubr.f32.mxu0 0.0
        %1604 = vmatmul.mubr.f32.gmra.mxu0 %v1457
        %v1605 = vpop.f32.mrf.mxu0
        %v1606 = vadd.f32 0.0, %v1605
        %v1607 = vpop.f32.mrf.mxu0
        %1608 = vmatprep.mubr.f32.mxu0 0.0
        %1609 = vmatmul.mubr.f32.gmra.mxu0 %v1459
        %v1610 = vpop.f32.mrf.mxu0
        %v1611 = vadd.f32 0.0, %v1610
        %v1612 = vpop.f32.mrf.mxu0
        %1613 = vmatprep.mubr.f32.mxu0 0.0
        %1614 = vmatmul.mubr.f32.gmra.mxu0 %v1461
        %v1615 = vpop.f32.mrf.mxu0
        %v1616 = vadd.f32 0.0, %v1615
        %v1617 = vpop.f32.mrf.mxu0
        %1618 = vmatprep.mubr.f32.mxu0 0.0
        %1619 = vmatmul.mubr.f32.gmra.mxu0 %v1463
        %v1620 = vpop.f32.mrf.mxu0
        %v1621 = vadd.f32 0.0, %v1620
        %v1622 = vpop.f32.mrf.mxu0
        %1623 = vmatprep.mubr.f32.mxu0 0.0
        %1624 = vmatmul.mubr.f32.gmra.mxu0 %v1465
        %v1625 = vpop.f32.mrf.mxu0
        %v1626 = vadd.f32 0.0, %v1625
        %v1627 = vpop.f32.mrf.mxu0
        %1628 = vmatprep.mubr.f32.mxu0 0.0
        %1629 = vmatmul.mubr.f32.gmra.mxu0 %v1467
        %v1630 = vpop.f32.mrf.mxu0
        %v1631 = vadd.f32 0.0, %v1630
        %v1632 = vpop.f32.mrf.mxu0
        %1633 = vmatprep.mubr.f32.mxu0 0.0
        %1634 = vmatmul.mubr.f32.gmra.mxu0 %v1469
        %v1635 = vpop.f32.mrf.mxu0
        %v1636 = vadd.f32 0.0, %v1635
        %v1637 = vpop.f32.mrf.mxu0
        %1638 = vmatprep.mubr.f32.mxu0 0.0
        %1639 = vmatmul.mubr.f32.gmra.mxu0 %v1471
        %v1640 = vpop.f32.mrf.mxu0
        %v1641 = vadd.f32 0.0, %v1640
        %v1642 = vpop.f32.mrf.mxu0
        %1643 = vmatprep.mubr.f32.mxu0 0.0
        %1644 = vmatmul.mubr.f32.gmra.mxu0 %v1473
        %v1645 = vpop.f32.mrf.mxu0
        %v1646 = vadd.f32 0.0, %v1645
        %v1647 = vpop.f32.mrf.mxu0
        %1648 = vmatprep.mubr.f32.mxu0 0.0
        %1649 = vmatmul.mubr.f32.gmra.mxu0 %v1475
        %v1650 = vpop.f32.mrf.mxu0
        %v1651 = vadd.f32 0.0, %v1650
        %v1652 = vpop.f32.mrf.mxu0
        %1653 = vmatprep.mubr.f32.mxu0 0.0
        %1654 = vmatmul.mubr.f32.gmra.mxu0 %v1477
        %v1655 = vpop.f32.mrf.mxu0
        %v1656 = vadd.f32 0.0, %v1655
        %v1657 = vpop.f32.mrf.mxu0
        %1658 = vmatprep.mubr.f32.mxu0 0.0
        %1659 = vmatmul.mubr.f32.gmra.mxu0 %v1479
        %v1660 = vpop.f32.mrf.mxu0
        %v1661 = vadd.f32 0.0, %v1660
        %v1662 = vpop.f32.mrf.mxu0
        %1663 = vmatprep.mubr.f32.mxu0 0.0
        %1664 = vmatmul.mubr.f32.gmra.mxu0 %v1481
        %v1665 = vpop.f32.mrf.mxu0
        %v1666 = vadd.f32 0.0, %v1665
        %v1667 = vpop.f32.mrf.mxu0
        %1668 = vmatprep.mubr.f32.mxu0 0.0
        %1669 = vmatmul.mubr.f32.gmra.mxu0 %v1483
        %v1670 = vpop.f32.mrf.mxu0
        %v1671 = vadd.f32 0.0, %v1670
        %v1672 = vpop.f32.mrf.mxu0
        %1673 = vmatprep.mubr.f32.mxu0 0.0
        %1674 = vmatmul.mubr.f32.gmra.mxu0 %v1485
        %v1675 = vpop.f32.mrf.mxu0
        %v1676 = vadd.f32 0.0, %v1675
        %v1677 = vpop.f32.mrf.mxu0
        %1678 = vmatprep.mubr.f32.mxu0 0.0
        %1679 = vmatmul.mubr.f32.gmra.mxu0 %v1487
        %v1680 = vpop.f32.mrf.mxu0
        %v1681 = vadd.f32 0.0, %v1680
        %v1682 = vpop.f32.mrf.mxu0
        %1683 = vmatprep.mubr.f32.mxu0 0.0
        %1684 = vmatmul.mubr.f32.gmra.mxu0 %v1489
        %v1685 = vpop.f32.mrf.mxu0
        %v1686 = vadd.f32 0.0, %v1685
        %v1687 = vpop.f32.mrf.mxu0
        %1688 = vmatprep.mubr.f32.mxu0 0.0
        %1689 = vmatmul.mubr.f32.gmra.mxu0 %v1491
        %v1690 = vpop.f32.mrf.mxu0
        %v1691 = vadd.f32 0.0, %v1690
        %v1692 = vpop.f32.mrf.mxu0
        %1693 = vmatprep.mubr.f32.mxu0 0.0
        %1694 = vmatmul.mubr.f32.gmra.mxu0 %v1493
        %v1695 = vpop.f32.mrf.mxu0
        %v1696 = vadd.f32 0.0, %v1695
        %v1697 = vpop.f32.mrf.mxu0
        %1698 = vmatprep.mubr.f32.mxu0 0.0
        %1699 = vmatmul.mubr.f32.gmra.mxu0 %v1495
        %v1700 = vpop.f32.mrf.mxu0
        %v1701 = vadd.f32 0.0, %v1700
        %v1702 = vpop.f32.mrf.mxu0
        %1703 = vmatprep.mubr.f32.mxu0 0.0
        %1704 = vmatmul.mubr.f32.gmra.mxu0 %v1497
        %v1705 = vpop.f32.mrf.mxu0
        %v1706 = vadd.f32 0.0, %v1705
        %v1707 = vpop.f32.mrf.mxu0
        %1708 = vmatprep.mubr.f32.mxu0 0.0
        %1709 = vmatmul.mubr.f32.gmra.mxu0 %v1499
        %v1710 = vpop.f32.mrf.mxu0
        %v1711 = vadd.f32 0.0, %v1710
        %v1712 = vpop.f32.mrf.mxu0
        %1713 = vmatprep.mubr.f32.mxu0 0.0
        %1714 = vmatmul.mubr.f32.gmra.mxu0 %v1501
        %v1715 = vpop.f32.mrf.mxu0
        %v1716 = vadd.f32 0.0, %v1715
        %v1717 = vpop.f32.mrf.mxu0
        %1718 = vmatprep.mubr.f32.mxu0 0.0
        %1719 = vmatmul.mubr.f32.gmra.mxu0 %v1503
        %v1720 = vpop.f32.mrf.mxu0
        %v1721 = vadd.f32 0.0, %v1720
        %v1722 = vpop.f32.mrf.mxu0
        %1723 = vmatprep.mubr.f32.mxu0 0.0
        %1724 = vmatmul.mubr.f32.gmra.mxu0 %v1505
        %v1725 = vpop.f32.mrf.mxu0
        %v1726 = vadd.f32 0.0, %v1725
        %v1727 = vpop.f32.mrf.mxu0
        %1728 = vmatprep.mubr.f32.mxu0 0.0
        %1729 = vmatmul.mubr.f32.gmra.mxu0 %v1507
        %v1730 = vpop.f32.mrf.mxu0
        %v1731 = vadd.f32 0.0, %v1730
        %v1732 = vpop.f32.mrf.mxu0
        %1733 = vmatprep.mubr.f32.mxu0 0.0
        %1734 = vmatmul.mubr.f32.gmra.mxu0 %v1509
        %v1735 = vpop.f32.mrf.mxu0
        %v1736 = vadd.f32 0.0, %v1735
        %v1737 = vpop.f32.mrf.mxu0
        %1738 = vdwg.mxu0
        %v1739 = vadd.f32 %v1206, %v1581
        %v1740 = vadd.f32 %v1211, %v1586
        %v1741 = vadd.f32 %v1216, %v1591
        %v1742 = vadd.f32 %v1221, %v1596
        %v1743 = vadd.f32 %v1226, %v1601
        %v1744 = vadd.f32 %v1231, %v1606
        %v1745 = vadd.f32 %v1236, %v1611
        %v1746 = vadd.f32 %v1241, %v1616
        %v1747 = vadd.f32 %v1246, %v1621
        %v1748 = vadd.f32 %v1251, %v1626
        %v1749 = vadd.f32 %v1256, %v1631
        %v1750 = vadd.f32 %v1261, %v1636
        %v1751 = vadd.f32 %v1266, %v1641
        %v1752 = vadd.f32 %v1271, %v1646
        %v1753 = vadd.f32 %v1276, %v1651
        %v1754 = vadd.f32 %v1281, %v1656
        %v1755 = vadd.f32 %v1286, %v1661
        %v1756 = vadd.f32 %v1291, %v1666
        %v1757 = vadd.f32 %v1296, %v1671
        %v1758 = vadd.f32 %v1301, %v1676
        %v1759 = vadd.f32 %v1306, %v1681
        %v1760 = vadd.f32 %v1311, %v1686
        %v1761 = vadd.f32 %v1316, %v1691
        %v1762 = vadd.f32 %v1321, %v1696
        %v1763 = vadd.f32 %v1326, %v1701
        %v1764 = vadd.f32 %v1331, %v1706
        %v1765 = vadd.f32 %v1336, %v1711
        %v1766 = vadd.f32 %v1341, %v1716
        %v1767 = vadd.f32 %v1346, %v1721
        %v1768 = vadd.f32 %v1351, %v1726
        %v1769 = vadd.f32 %v1356, %v1731
        %v1770 = vadd.f32 %v1361, %v1736
        %s1771 = scalar_lea.vmem [#allocation7], 12
        %v1772 = vld [vmem:[%s1771] sm:$0x7]
        %v1774 = vsel %vm504, %v641, 0
        %v1777 = vsel %vm504, %v642, 0
        %v1780 = vsel %vm843, %v1772, 0
        %1782 = vmatprep.subr.mxu0 0.0
        %1783 = vmatpush1.msra.mxu0 0.0
        %1784 = vmatprep.subr.mxu0 0.0
        %1785 = vmatpush1.msra.mxu0 0.0
        %1786 = vmatprep.subr.mxu0 0.0
        %1787 = vmatpush1.msra.mxu0 0.0
        %1788 = vmatprep.subr.mxu0 0.0
        %1789 = vmatpush1.msra.mxu0 0.0
        %1790 = vmatprep.subr.mxu0 0.0
        %1791 = vmatpush1.msra.mxu0 0.0
        %1792 = vmatprep.subr.mxu0 0.0
        %1793 = vmatpush1.msra.mxu0 0.0
        %1794 = vmatprep.subr.mxu0 0.0
        %1795 = vmatpush1.msra.mxu0 0.0
        %1796 = vmatprep.subr.mxu0 0.0
        %1797 = vmatpush1.msra.mxu0 0.0
        %1798 = vmatprep.subr.mxu0 0.0
        %1799 = vmatpush1.msra.mxu0 0.0
        %1800 = vmatprep.subr.mxu0 0.0
        %1801 = vmatpush1.msra.mxu0 0.0
        %1802 = vmatprep.subr.mxu0 0.0
        %1803 = vmatpush1.msra.mxu0 0.0
        %1804 = vmatprep.subr.mxu0 0.0
        %1805 = vmatpush1.msra.mxu0 0.0
        %1806 = vmatprep.subr.mxu0 0.0
        %1807 = vmatpush1.msra.mxu0 0.0
        %1808 = vmatprep.subr.mxu0 0.0
        %1809 = vmatpush1.msra.mxu0 0.0
        %1810 = vmatprep.subr.mxu0 0.0
        %1811 = vmatpush1.msra.mxu0 0.0
        %1812 = vmatprep.subr.mxu0 0.0
        %1813 = vmatpush1.msra.mxu0 %v1780
        %1814 = vmatprep.subr.mxu0 0.0
        %1815 = vmatpush2.msra.mxu0 0.0
        %1816 = vmatprep.subr.mxu0 0.0
        %1817 = vmatpush2.msra.mxu0 0.0
        %1818 = vmatprep.subr.mxu0 0.0
        %1819 = vmatpush2.msra.mxu0 0.0
        %1820 = vmatprep.subr.mxu0 0.0
        %1821 = vmatpush2.msra.mxu0 0.0
        %1822 = vmatprep.subr.mxu0 0.0
        %1823 = vmatpush2.msra.mxu0 0.0
        %1824 = vmatprep.subr.mxu0 0.0
        %1825 = vmatpush2.msra.mxu0 0.0
        %1826 = vmatprep.subr.mxu0 0.0
        %1827 = vmatpush2.msra.mxu0 0.0
        %1828 = vmatprep.subr.mxu0 0.0
        %1829 = vmatpush2.msra.mxu0 0.0
        %1830 = vmatprep.subr.mxu0 0.0
        %1831 = vmatpush2.msra.mxu0 0.0
        %1832 = vmatprep.subr.mxu0 0.0
        %1833 = vmatpush2.msra.mxu0 0.0
        %1834 = vmatprep.subr.mxu0 0.0
        %1835 = vmatpush2.msra.mxu0 0.0
        %1836 = vmatprep.subr.mxu0 0.0
        %1837 = vmatpush2.msra.mxu0 0.0
        %1838 = vmatprep.subr.mxu0 0.0
        %1839 = vmatpush2.msra.mxu0 0.0
        %1840 = vmatprep.subr.mxu0 0.0
        %1841 = vmatpush2.msra.mxu0 0.0
        %1842 = vmatprep.subr.mxu0 0.0
        %1843 = vmatpush2.msra.mxu0 0.0
        %1844 = vmatprep.subr.mxu0 0.0
        %1845 = vmatpush2.msra.mxu0 0.0
        %1846 = vmatprep.mubr.f32.mxu0 0.0
        %1847 = vmatmul.mubr.f32.gmra.mxu0 %v1076
        %v1848 = vpop.f32.mrf.mxu0
        %v1849 = vadd.f32 0.0, %v1848
        %v1850 = vpop.f32.mrf.mxu0
        %1851 = vmatprep.mubr.f32.mxu0 0.0
        %1852 = vmatmul.mubr.f32.gmra.mxu0 %v1078
        %v1853 = vpop.f32.mrf.mxu0
        %v1854 = vadd.f32 0.0, %v1853
        %v1855 = vpop.f32.mrf.mxu0
        %1856 = vmatprep.mubr.f32.mxu0 0.0
        %1857 = vmatmul.mubr.f32.gmra.mxu0 %v1080
        %v1858 = vpop.f32.mrf.mxu0
        %v1859 = vadd.f32 0.0, %v1858
        %v1860 = vpop.f32.mrf.mxu0
        %1861 = vmatprep.mubr.f32.mxu0 0.0
        %1862 = vmatmul.mubr.f32.gmra.mxu0 %v1082
        %v1863 = vpop.f32.mrf.mxu0
        %v1864 = vadd.f32 0.0, %v1863
        %v1865 = vpop.f32.mrf.mxu0
        %1866 = vmatprep.mubr.f32.mxu0 0.0
        %1867 = vmatmul.mubr.f32.gmra.mxu0 %v1084
        %v1868 = vpop.f32.mrf.mxu0
        %v1869 = vadd.f32 0.0, %v1868
        %v1870 = vpop.f32.mrf.mxu0
        %1871 = vmatprep.mubr.f32.mxu0 0.0
        %1872 = vmatmul.mubr.f32.gmra.mxu0 %v1086
        %v1873 = vpop.f32.mrf.mxu0
        %v1874 = vadd.f32 0.0, %v1873
        %v1875 = vpop.f32.mrf.mxu0
        %1876 = vmatprep.mubr.f32.mxu0 0.0
        %1877 = vmatmul.mubr.f32.gmra.mxu0 %v1088
        %v1878 = vpop.f32.mrf.mxu0
        %v1879 = vadd.f32 0.0, %v1878
        %v1880 = vpop.f32.mrf.mxu0
        %1881 = vmatprep.mubr.f32.mxu0 0.0
        %1882 = vmatmul.mubr.f32.gmra.mxu0 %v1090
        %v1883 = vpop.f32.mrf.mxu0
        %v1884 = vadd.f32 0.0, %v1883
        %v1885 = vpop.f32.mrf.mxu0
        %1886 = vmatprep.mubr.f32.mxu0 0.0
        %1887 = vmatmul.mubr.f32.gmra.mxu0 %v1092
        %v1888 = vpop.f32.mrf.mxu0
        %v1889 = vadd.f32 0.0, %v1888
        %v1890 = vpop.f32.mrf.mxu0
        %1891 = vmatprep.mubr.f32.mxu0 0.0
        %1892 = vmatmul.mubr.f32.gmra.mxu0 %v1094
        %v1893 = vpop.f32.mrf.mxu0
        %v1894 = vadd.f32 0.0, %v1893
        %v1895 = vpop.f32.mrf.mxu0
        %1896 = vmatprep.mubr.f32.mxu0 0.0
        %1897 = vmatmul.mubr.f32.gmra.mxu0 %v1096
        %v1898 = vpop.f32.mrf.mxu0
        %v1899 = vadd.f32 0.0, %v1898
        %v1900 = vpop.f32.mrf.mxu0
        %1901 = vmatprep.mubr.f32.mxu0 0.0
        %1902 = vmatmul.mubr.f32.gmra.mxu0 %v1098
        %v1903 = vpop.f32.mrf.mxu0
        %v1904 = vadd.f32 0.0, %v1903
        %v1905 = vpop.f32.mrf.mxu0
        %1906 = vmatprep.mubr.f32.mxu0 0.0
        %1907 = vmatmul.mubr.f32.gmra.mxu0 %v1100
        %v1908 = vpop.f32.mrf.mxu0
        %v1909 = vadd.f32 0.0, %v1908
        %v1910 = vpop.f32.mrf.mxu0
        %1911 = vmatprep.mubr.f32.mxu0 0.0
        %1912 = vmatmul.mubr.f32.gmra.mxu0 %v1102
        %v1913 = vpop.f32.mrf.mxu0
        %v1914 = vadd.f32 0.0, %v1913
        %v1915 = vpop.f32.mrf.mxu0
        %1916 = vmatprep.mubr.f32.mxu0 0.0
        %1917 = vmatmul.mubr.f32.gmra.mxu0 %v1104
        %v1918 = vpop.f32.mrf.mxu0
        %v1919 = vadd.f32 0.0, %v1918
        %v1920 = vpop.f32.mrf.mxu0
        %1921 = vmatprep.mubr.f32.mxu0 0.0
        %1922 = vmatmul.mubr.f32.gmra.mxu0 %v1106
        %v1923 = vpop.f32.mrf.mxu0
        %v1924 = vadd.f32 0.0, %v1923
        %v1925 = vpop.f32.mrf.mxu0
        %1926 = vmatprep.mubr.f32.mxu0 0.0
        %1927 = vmatmul.mubr.f32.gmra.mxu0 %v1108
        %v1928 = vpop.f32.mrf.mxu0
        %v1929 = vadd.f32 0.0, %v1928
        %v1930 = vpop.f32.mrf.mxu0
        %1931 = vmatprep.mubr.f32.mxu0 0.0
        %1932 = vmatmul.mubr.f32.gmra.mxu0 %v1110
        %v1933 = vpop.f32.mrf.mxu0
        %v1934 = vadd.f32 0.0, %v1933
        %v1935 = vpop.f32.mrf.mxu0
        %1936 = vmatprep.mubr.f32.mxu0 0.0
        %1937 = vmatmul.mubr.f32.gmra.mxu0 %v1112
        %v1938 = vpop.f32.mrf.mxu0
        %v1939 = vadd.f32 0.0, %v1938
        %v1940 = vpop.f32.mrf.mxu0
        %1941 = vmatprep.mubr.f32.mxu0 0.0
        %1942 = vmatmul.mubr.f32.gmra.mxu0 %v1114
        %v1943 = vpop.f32.mrf.mxu0
        %v1944 = vadd.f32 0.0, %v1943
        %v1945 = vpop.f32.mrf.mxu0
        %1946 = vmatprep.mubr.f32.mxu0 0.0
        %1947 = vmatmul.mubr.f32.gmra.mxu0 %v1116
        %v1948 = vpop.f32.mrf.mxu0
        %v1949 = vadd.f32 0.0, %v1948
        %v1950 = vpop.f32.mrf.mxu0
        %1951 = vmatprep.mubr.f32.mxu0 0.0
        %1952 = vmatmul.mubr.f32.gmra.mxu0 %v1118
        %v1953 = vpop.f32.mrf.mxu0
        %v1954 = vadd.f32 0.0, %v1953
        %v1955 = vpop.f32.mrf.mxu0
        %1956 = vmatprep.mubr.f32.mxu0 0.0
        %1957 = vmatmul.mubr.f32.gmra.mxu0 %v1120
        %v1958 = vpop.f32.mrf.mxu0
        %v1959 = vadd.f32 0.0, %v1958
        %v1960 = vpop.f32.mrf.mxu0
        %1961 = vmatprep.mubr.f32.mxu0 0.0
        %1962 = vmatmul.mubr.f32.gmra.mxu0 %v1122
        %v1963 = vpop.f32.mrf.mxu0
        %v1964 = vadd.f32 0.0, %v1963
        %v1965 = vpop.f32.mrf.mxu0
        %1966 = vmatprep.mubr.f32.mxu0 0.0
        %1967 = vmatmul.mubr.f32.gmra.mxu0 %v1124
        %v1968 = vpop.f32.mrf.mxu0
        %v1969 = vadd.f32 0.0, %v1968
        %v1970 = vpop.f32.mrf.mxu0
        %1971 = vmatprep.mubr.f32.mxu0 0.0
        %1972 = vmatmul.mubr.f32.gmra.mxu0 %v1126
        %v1973 = vpop.f32.mrf.mxu0
        %v1974 = vadd.f32 0.0, %v1973
        %v1975 = vpop.f32.mrf.mxu0
        %1976 = vmatprep.mubr.f32.mxu0 0.0
        %1977 = vmatmul.mubr.f32.gmra.mxu0 %v1128
        %v1978 = vpop.f32.mrf.mxu0
        %v1979 = vadd.f32 0.0, %v1978
        %v1980 = vpop.f32.mrf.mxu0
        %1981 = vmatprep.mubr.f32.mxu0 0.0
        %1982 = vmatmul.mubr.f32.gmra.mxu0 %v1130
        %v1983 = vpop.f32.mrf.mxu0
        %v1984 = vadd.f32 0.0, %v1983
        %v1985 = vpop.f32.mrf.mxu0
        %1986 = vmatprep.mubr.f32.mxu0 0.0
        %1987 = vmatmul.mubr.f32.gmra.mxu0 %v1132
        %v1988 = vpop.f32.mrf.mxu0
        %v1989 = vadd.f32 0.0, %v1988
        %v1990 = vpop.f32.mrf.mxu0
        %1991 = vmatprep.mubr.f32.mxu0 0.0
        %1992 = vmatmul.mubr.f32.gmra.mxu0 %v1134
        %v1993 = vpop.f32.mrf.mxu0
        %v1994 = vadd.f32 0.0, %v1993
        %v1995 = vpop.f32.mrf.mxu0
        %1996 = vmatprep.mubr.f32.mxu0 0.0
        %1997 = vmatmul.mubr.f32.gmra.mxu0 %v1774
        %v1998 = vpop.f32.mrf.mxu0
        %v1999 = vadd.f32 0.0, %v1998
        %v2000 = vpop.f32.mrf.mxu0
        %2001 = vmatprep.mubr.f32.mxu0 0.0
        %2002 = vmatmul.mubr.f32.gmra.mxu0 %v1777
        %v2003 = vpop.f32.mrf.mxu0
        %v2004 = vadd.f32 0.0, %v2003
        %v2005 = vpop.f32.mrf.mxu0
        %2006 = vdwg.mxu0
        %v2007 = vadd.f32 %v1739, %v1849
        %v2008 = vadd.f32 %v1740, %v1854
        %v2009 = vadd.f32 %v1741, %v1859
        %v2010 = vadd.f32 %v1742, %v1864
        %v2011 = vadd.f32 %v1743, %v1869
        %v2012 = vadd.f32 %v1744, %v1874
        %v2013 = vadd.f32 %v1745, %v1879
        %v2014 = vadd.f32 %v1746, %v1884
        %v2015 = vadd.f32 %v1747, %v1889
        %v2016 = vadd.f32 %v1748, %v1894
        %v2017 = vadd.f32 %v1749, %v1899
        %v2018 = vadd.f32 %v1750, %v1904
        %v2019 = vadd.f32 %v1751, %v1909
        %v2020 = vadd.f32 %v1752, %v1914
        %v2021 = vadd.f32 %v1753, %v1919
        %v2022 = vadd.f32 %v1754, %v1924
        %v2023 = vadd.f32 %v1755, %v1929
        %v2024 = vadd.f32 %v1756, %v1934
        %v2025 = vadd.f32 %v1757, %v1939
        %v2026 = vadd.f32 %v1758, %v1944
        %v2027 = vadd.f32 %v1759, %v1949
        %v2028 = vadd.f32 %v1760, %v1954
        %v2029 = vadd.f32 %v1761, %v1959
        %v2030 = vadd.f32 %v1762, %v1964
        %v2031 = vadd.f32 %v1763, %v1969
        %v2032 = vadd.f32 %v1764, %v1974
        %v2033 = vadd.f32 %v1765, %v1979
        %v2034 = vadd.f32 %v1766, %v1984
        %v2035 = vadd.f32 %v1767, %v1989
        %v2036 = vadd.f32 %v1768, %v1994
        %v2037 = vadd.f32 %v1769, %v1999
        %v2038 = vadd.f32 %v1770, %v2004
        %v2040 = vrot.slane %v641, 1
        %v2041 = vrot.slane %v642, 1
        %v2042 = vsel %vm696, %v2040, %v2041
        %v2043 = vrot.slane %v643, 1
        %v2044 = vsel %vm696, %v2041, %v2043
        %s2045 = scalar_lea.vmem [#allocation7], 16
        %v2046 = vld [vmem:[%s2045] sm:$0x7]
        %v2047 = vsel %vm504, %v2042, 0
        %v2049 = vsel %vm504, %v2044, 0
        %v2052 = vsel %vm843, %v2046, 0
        %2054 = vmatprep.subr.mxu0 0.0
        %2055 = vmatpush1.msra.mxu0 0.0
        %2056 = vmatprep.subr.mxu0 0.0
        %2057 = vmatpush1.msra.mxu0 0.0
        %2058 = vmatprep.subr.mxu0 0.0
        %2059 = vmatpush1.msra.mxu0 0.0
        %2060 = vmatprep.subr.mxu0 0.0
        %2061 = vmatpush1.msra.mxu0 0.0
        %2062 = vmatprep.subr.mxu0 0.0
        %2063 = vmatpush1.msra.mxu0 0.0
        %2064 = vmatprep.subr.mxu0 0.0
        %2065 = vmatpush1.msra.mxu0 0.0
        %2066 = vmatprep.subr.mxu0 0.0
        %2067 = vmatpush1.msra.mxu0 0.0
        %2068 = vmatprep.subr.mxu0 0.0
        %2069 = vmatpush1.msra.mxu0 0.0
        %2070 = vmatprep.subr.mxu0 0.0
        %2071 = vmatpush1.msra.mxu0 0.0
        %2072 = vmatprep.subr.mxu0 0.0
        %2073 = vmatpush1.msra.mxu0 0.0
        %2074 = vmatprep.subr.mxu0 0.0
        %2075 = vmatpush1.msra.mxu0 0.0
        %2076 = vmatprep.subr.mxu0 0.0
        %2077 = vmatpush1.msra.mxu0 0.0
        %2078 = vmatprep.subr.mxu0 0.0
        %2079 = vmatpush1.msra.mxu0 0.0
        %2080 = vmatprep.subr.mxu0 0.0
        %2081 = vmatpush1.msra.mxu0 0.0
        %2082 = vmatprep.subr.mxu0 0.0
        %2083 = vmatpush1.msra.mxu0 0.0
        %2084 = vmatprep.subr.mxu0 0.0
        %2085 = vmatpush1.msra.mxu0 %v2052
        %2086 = vmatprep.subr.mxu0 0.0
        %2087 = vmatpush2.msra.mxu0 0.0
        %2088 = vmatprep.subr.mxu0 0.0
        %2089 = vmatpush2.msra.mxu0 0.0
        %2090 = vmatprep.subr.mxu0 0.0
        %2091 = vmatpush2.msra.mxu0 0.0
        %2092 = vmatprep.subr.mxu0 0.0
        %2093 = vmatpush2.msra.mxu0 0.0
        %2094 = vmatprep.subr.mxu0 0.0
        %2095 = vmatpush2.msra.mxu0 0.0
        %2096 = vmatprep.subr.mxu0 0.0
        %2097 = vmatpush2.msra.mxu0 0.0
        %2098 = vmatprep.subr.mxu0 0.0
        %2099 = vmatpush2.msra.mxu0 0.0
        %2100 = vmatprep.subr.mxu0 0.0
        %2101 = vmatpush2.msra.mxu0 0.0
        %2102 = vmatprep.subr.mxu0 0.0
        %2103 = vmatpush2.msra.mxu0 0.0
        %2104 = vmatprep.subr.mxu0 0.0
        %2105 = vmatpush2.msra.mxu0 0.0
        %2106 = vmatprep.subr.mxu0 0.0
        %2107 = vmatpush2.msra.mxu0 0.0
        %2108 = vmatprep.subr.mxu0 0.0
        %2109 = vmatpush2.msra.mxu0 0.0
        %2110 = vmatprep.subr.mxu0 0.0
        %2111 = vmatpush2.msra.mxu0 0.0
        %2112 = vmatprep.subr.mxu0 0.0
        %2113 = vmatpush2.msra.mxu0 0.0
        %2114 = vmatprep.subr.mxu0 0.0
        %2115 = vmatpush2.msra.mxu0 0.0
        %2116 = vmatprep.subr.mxu0 0.0
        %2117 = vmatpush2.msra.mxu0 0.0
        %2118 = vmatprep.mubr.f32.mxu0 0.0
        %2119 = vmatmul.mubr.f32.gmra.mxu0 %v783
        %v2120 = vpop.f32.mrf.mxu0
        %v2121 = vadd.f32 0.0, %v2120
        %v2122 = vpop.f32.mrf.mxu0
        %2123 = vmatprep.mubr.f32.mxu0 0.0
        %2124 = vmatmul.mubr.f32.gmra.mxu0 %v785
        %v2125 = vpop.f32.mrf.mxu0
        %v2126 = vadd.f32 0.0, %v2125
        %v2127 = vpop.f32.mrf.mxu0
        %2128 = vmatprep.mubr.f32.mxu0 0.0
        %2129 = vmatmul.mubr.f32.gmra.mxu0 %v787
        %v2130 = vpop.f32.mrf.mxu0
        %v2131 = vadd.f32 0.0, %v2130
        %v2132 = vpop.f32.mrf.mxu0
        %2133 = vmatprep.mubr.f32.mxu0 0.0
        %2134 = vmatmul.mubr.f32.gmra.mxu0 %v789
        %v2135 = vpop.f32.mrf.mxu0
        %v2136 = vadd.f32 0.0, %v2135
        %v2137 = vpop.f32.mrf.mxu0
        %2138 = vmatprep.mubr.f32.mxu0 0.0
        %2139 = vmatmul.mubr.f32.gmra.mxu0 %v791
        %v2140 = vpop.f32.mrf.mxu0
        %v2141 = vadd.f32 0.0, %v2140
        %v2142 = vpop.f32.mrf.mxu0
        %2143 = vmatprep.mubr.f32.mxu0 0.0
        %2144 = vmatmul.mubr.f32.gmra.mxu0 %v793
        %v2145 = vpop.f32.mrf.mxu0
        %v2146 = vadd.f32 0.0, %v2145
        %v2147 = vpop.f32.mrf.mxu0
        %2148 = vmatprep.mubr.f32.mxu0 0.0
        %2149 = vmatmul.mubr.f32.gmra.mxu0 %v795
        %v2150 = vpop.f32.mrf.mxu0
        %v2151 = vadd.f32 0.0, %v2150
        %v2152 = vpop.f32.mrf.mxu0
        %2153 = vmatprep.mubr.f32.mxu0 0.0
        %2154 = vmatmul.mubr.f32.gmra.mxu0 %v797
        %v2155 = vpop.f32.mrf.mxu0
        %v2156 = vadd.f32 0.0, %v2155
        %v2157 = vpop.f32.mrf.mxu0
        %2158 = vmatprep.mubr.f32.mxu0 0.0
        %2159 = vmatmul.mubr.f32.gmra.mxu0 %v799
        %v2160 = vpop.f32.mrf.mxu0
        %v2161 = vadd.f32 0.0, %v2160
        %v2162 = vpop.f32.mrf.mxu0
        %2163 = vmatprep.mubr.f32.mxu0 0.0
        %2164 = vmatmul.mubr.f32.gmra.mxu0 %v801
        %v2165 = vpop.f32.mrf.mxu0
        %v2166 = vadd.f32 0.0, %v2165
        %v2167 = vpop.f32.mrf.mxu0
        %2168 = vmatprep.mubr.f32.mxu0 0.0
        %2169 = vmatmul.mubr.f32.gmra.mxu0 %v803
        %v2170 = vpop.f32.mrf.mxu0
        %v2171 = vadd.f32 0.0, %v2170
        %v2172 = vpop.f32.mrf.mxu0
        %2173 = vmatprep.mubr.f32.mxu0 0.0
        %2174 = vmatmul.mubr.f32.gmra.mxu0 %v805
        %v2175 = vpop.f32.mrf.mxu0
        %v2176 = vadd.f32 0.0, %v2175
        %v2177 = vpop.f32.mrf.mxu0
        %2178 = vmatprep.mubr.f32.mxu0 0.0
        %2179 = vmatmul.mubr.f32.gmra.mxu0 %v807
        %v2180 = vpop.f32.mrf.mxu0
        %v2181 = vadd.f32 0.0, %v2180
        %v2182 = vpop.f32.mrf.mxu0
        %2183 = vmatprep.mubr.f32.mxu0 0.0
        %2184 = vmatmul.mubr.f32.gmra.mxu0 %v809
        %v2185 = vpop.f32.mrf.mxu0
        %v2186 = vadd.f32 0.0, %v2185
        %v2187 = vpop.f32.mrf.mxu0
        %2188 = vmatprep.mubr.f32.mxu0 0.0
        %2189 = vmatmul.mubr.f32.gmra.mxu0 %v811
        %v2190 = vpop.f32.mrf.mxu0
        %v2191 = vadd.f32 0.0, %v2190
        %v2192 = vpop.f32.mrf.mxu0
        %2193 = vmatprep.mubr.f32.mxu0 0.0
        %2194 = vmatmul.mubr.f32.gmra.mxu0 %v813
        %v2195 = vpop.f32.mrf.mxu0
        %v2196 = vadd.f32 0.0, %v2195
        %v2197 = vpop.f32.mrf.mxu0
        %2198 = vmatprep.mubr.f32.mxu0 0.0
        %2199 = vmatmul.mubr.f32.gmra.mxu0 %v815
        %v2200 = vpop.f32.mrf.mxu0
        %v2201 = vadd.f32 0.0, %v2200
        %v2202 = vpop.f32.mrf.mxu0
        %2203 = vmatprep.mubr.f32.mxu0 0.0
        %2204 = vmatmul.mubr.f32.gmra.mxu0 %v817
        %v2205 = vpop.f32.mrf.mxu0
        %v2206 = vadd.f32 0.0, %v2205
        %v2207 = vpop.f32.mrf.mxu0
        %2208 = vmatprep.mubr.f32.mxu0 0.0
        %2209 = vmatmul.mubr.f32.gmra.mxu0 %v819
        %v2210 = vpop.f32.mrf.mxu0
        %v2211 = vadd.f32 0.0, %v2210
        %v2212 = vpop.f32.mrf.mxu0
        %2213 = vmatprep.mubr.f32.mxu0 0.0
        %2214 = vmatmul.mubr.f32.gmra.mxu0 %v821
        %v2215 = vpop.f32.mrf.mxu0
        %v2216 = vadd.f32 0.0, %v2215
        %v2217 = vpop.f32.mrf.mxu0
        %2218 = vmatprep.mubr.f32.mxu0 0.0
        %2219 = vmatmul.mubr.f32.gmra.mxu0 %v823
        %v2220 = vpop.f32.mrf.mxu0
        %v2221 = vadd.f32 0.0, %v2220
        %v2222 = vpop.f32.mrf.mxu0
        %2223 = vmatprep.mubr.f32.mxu0 0.0
        %2224 = vmatmul.mubr.f32.gmra.mxu0 %v825
        %v2225 = vpop.f32.mrf.mxu0
        %v2226 = vadd.f32 0.0, %v2225
        %v2227 = vpop.f32.mrf.mxu0
        %2228 = vmatprep.mubr.f32.mxu0 0.0
        %2229 = vmatmul.mubr.f32.gmra.mxu0 %v827
        %v2230 = vpop.f32.mrf.mxu0
        %v2231 = vadd.f32 0.0, %v2230
        %v2232 = vpop.f32.mrf.mxu0
        %2233 = vmatprep.mubr.f32.mxu0 0.0
        %2234 = vmatmul.mubr.f32.gmra.mxu0 %v829
        %v2235 = vpop.f32.mrf.mxu0
        %v2236 = vadd.f32 0.0, %v2235
        %v2237 = vpop.f32.mrf.mxu0
        %2238 = vmatprep.mubr.f32.mxu0 0.0
        %2239 = vmatmul.mubr.f32.gmra.mxu0 %v831
        %v2240 = vpop.f32.mrf.mxu0
        %v2241 = vadd.f32 0.0, %v2240
        %v2242 = vpop.f32.mrf.mxu0
        %2243 = vmatprep.mubr.f32.mxu0 0.0
        %2244 = vmatmul.mubr.f32.gmra.mxu0 %v833
        %v2245 = vpop.f32.mrf.mxu0
        %v2246 = vadd.f32 0.0, %v2245
        %v2247 = vpop.f32.mrf.mxu0
        %2248 = vmatprep.mubr.f32.mxu0 0.0
        %2249 = vmatmul.mubr.f32.gmra.mxu0 %v835
        %v2250 = vpop.f32.mrf.mxu0
        %v2251 = vadd.f32 0.0, %v2250
        %v2252 = vpop.f32.mrf.mxu0
        %2253 = vmatprep.mubr.f32.mxu0 0.0
        %2254 = vmatmul.mubr.f32.gmra.mxu0 %v837
        %v2255 = vpop.f32.mrf.mxu0
        %v2256 = vadd.f32 0.0, %v2255
        %v2257 = vpop.f32.mrf.mxu0
        %2258 = vmatprep.mubr.f32.mxu0 0.0
        %2259 = vmatmul.mubr.f32.gmra.mxu0 %v839
        %v2260 = vpop.f32.mrf.mxu0
        %v2261 = vadd.f32 0.0, %v2260
        %v2262 = vpop.f32.mrf.mxu0
        %2263 = vmatprep.mubr.f32.mxu0 0.0
        %2264 = vmatmul.mubr.f32.gmra.mxu0 %v841
        %v2265 = vpop.f32.mrf.mxu0
        %v2266 = vadd.f32 0.0, %v2265
        %v2267 = vpop.f32.mrf.mxu0
        %2268 = vmatprep.mubr.f32.mxu0 0.0
        %2269 = vmatmul.mubr.f32.gmra.mxu0 %v2047
        %v2270 = vpop.f32.mrf.mxu0
        %v2271 = vadd.f32 0.0, %v2270
        %v2272 = vpop.f32.mrf.mxu0
        %2273 = vmatprep.mubr.f32.mxu0 0.0
        %2274 = vmatmul.mubr.f32.gmra.mxu0 %v2049
        %v2275 = vpop.f32.mrf.mxu0
        %v2276 = vadd.f32 0.0, %v2275
        %v2277 = vpop.f32.mrf.mxu0
        %2278 = vdwg.mxu0
        %v2279 = vadd.f32 %v2007, %v2121
        %v2280 = vadd.f32 %v2008, %v2126
        %v2281 = vadd.f32 %v2009, %v2131
        %v2282 = vadd.f32 %v2010, %v2136
        %v2283 = vadd.f32 %v2011, %v2141
        %v2284 = vadd.f32 %v2012, %v2146
        %v2285 = vadd.f32 %v2013, %v2151
        %v2286 = vadd.f32 %v2014, %v2156
        %v2287 = vadd.f32 %v2015, %v2161
        %v2288 = vadd.f32 %v2016, %v2166
        %v2289 = vadd.f32 %v2017, %v2171
        %v2290 = vadd.f32 %v2018, %v2176
        %v2291 = vadd.f32 %v2019, %v2181
        %v2292 = vadd.f32 %v2020, %v2186
        %v2293 = vadd.f32 %v2021, %v2191
        %v2294 = vadd.f32 %v2022, %v2196
        %v2295 = vadd.f32 %v2023, %v2201
        %v2296 = vadd.f32 %v2024, %v2206
        %v2297 = vadd.f32 %v2025, %v2211
        %v2298 = vadd.f32 %v2026, %v2216
        %v2299 = vadd.f32 %v2027, %v2221
        %v2300 = vadd.f32 %v2028, %v2226
        %v2301 = vadd.f32 %v2029, %v2231
        %v2302 = vadd.f32 %v2030, %v2236
        %v2303 = vadd.f32 %v2031, %v2241
        %v2304 = vadd.f32 %v2032, %v2246
        %v2305 = vadd.f32 %v2033, %v2251
        %v2306 = vadd.f32 %v2034, %v2256
        %v2307 = vadd.f32 %v2035, %v2261
        %v2308 = vadd.f32 %v2036, %v2266
        %v2309 = vadd.f32 %v2037, %v2271
        %v2310 = vadd.f32 %v2038, %v2276
        %v2311 = vrot.slane %v641, 2
        %v2312 = vrot.slane %v642, 2
        %v2313 = vsel %vm1364, %v2311, %v2312
        %v2314 = vrot.slane %v643, 2
        %v2315 = vsel %vm1364, %v2312, %v2314
        %s2316 = scalar_lea.vmem [#allocation7], 20
        %v2317 = vld [vmem:[%s2316] sm:$0x7]
        %v2318 = vsel %vm504, %v2313, 0
        %v2320 = vsel %vm504, %v2315, 0
        %v2323 = vsel %vm843, %v2317, 0
        %2325 = vmatprep.subr.mxu0 0.0
        %2326 = vmatpush1.msra.mxu0 0.0
        %2327 = vmatprep.subr.mxu0 0.0
        %2328 = vmatpush1.msra.mxu0 0.0
        %2329 = vmatprep.subr.mxu0 0.0
        %2330 = vmatpush1.msra.mxu0 0.0
        %2331 = vmatprep.subr.mxu0 0.0
        %2332 = vmatpush1.msra.mxu0 0.0
        %2333 = vmatprep.subr.mxu0 0.0
        %2334 = vmatpush1.msra.mxu0 0.0
        %2335 = vmatprep.subr.mxu0 0.0
        %2336 = vmatpush1.msra.mxu0 0.0
        %2337 = vmatprep.subr.mxu0 0.0
        %2338 = vmatpush1.msra.mxu0 0.0
        %2339 = vmatprep.subr.mxu0 0.0
        %2340 = vmatpush1.msra.mxu0 0.0
        %2341 = vmatprep.subr.mxu0 0.0
        %2342 = vmatpush1.msra.mxu0 0.0
        %2343 = vmatprep.subr.mxu0 0.0
        %2344 = vmatpush1.msra.mxu0 0.0
        %2345 = vmatprep.subr.mxu0 0.0
        %2346 = vmatpush1.msra.mxu0 0.0
        %2347 = vmatprep.subr.mxu0 0.0
        %2348 = vmatpush1.msra.mxu0 0.0
        %2349 = vmatprep.subr.mxu0 0.0
        %2350 = vmatpush1.msra.mxu0 0.0
        %2351 = vmatprep.subr.mxu0 0.0
        %2352 = vmatpush1.msra.mxu0 0.0
        %2353 = vmatprep.subr.mxu0 0.0
        %2354 = vmatpush1.msra.mxu0 0.0
        %2355 = vmatprep.subr.mxu0 0.0
        %2356 = vmatpush1.msra.mxu0 %v2323
        %2357 = vmatprep.subr.mxu0 0.0
        %2358 = vmatpush2.msra.mxu0 0.0
        %2359 = vmatprep.subr.mxu0 0.0
        %2360 = vmatpush2.msra.mxu0 0.0
        %2361 = vmatprep.subr.mxu0 0.0
        %2362 = vmatpush2.msra.mxu0 0.0
        %2363 = vmatprep.subr.mxu0 0.0
        %2364 = vmatpush2.msra.mxu0 0.0
        %2365 = vmatprep.subr.mxu0 0.0
        %2366 = vmatpush2.msra.mxu0 0.0
        %2367 = vmatprep.subr.mxu0 0.0
        %2368 = vmatpush2.msra.mxu0 0.0
        %2369 = vmatprep.subr.mxu0 0.0
        %2370 = vmatpush2.msra.mxu0 0.0
        %2371 = vmatprep.subr.mxu0 0.0
        %2372 = vmatpush2.msra.mxu0 0.0
        %2373 = vmatprep.subr.mxu0 0.0
        %2374 = vmatpush2.msra.mxu0 0.0
        %2375 = vmatprep.subr.mxu0 0.0
        %2376 = vmatpush2.msra.mxu0 0.0
        %2377 = vmatprep.subr.mxu0 0.0
        %2378 = vmatpush2.msra.mxu0 0.0
        %2379 = vmatprep.subr.mxu0 0.0
        %2380 = vmatpush2.msra.mxu0 0.0
        %2381 = vmatprep.subr.mxu0 0.0
        %2382 = vmatpush2.msra.mxu0 0.0
        %2383 = vmatprep.subr.mxu0 0.0
        %2384 = vmatpush2.msra.mxu0 0.0
        %2385 = vmatprep.subr.mxu0 0.0
        %2386 = vmatpush2.msra.mxu0 0.0
        %2387 = vmatprep.subr.mxu0 0.0
        %2388 = vmatpush2.msra.mxu0 0.0
        %2389 = vmatprep.mubr.f32.mxu0 0.0
        %2390 = vmatmul.mubr.f32.gmra.mxu0 %v1451
        %v2391 = vpop.f32.mrf.mxu0
        %v2392 = vadd.f32 0.0, %v2391
        %v2393 = vpop.f32.mrf.mxu0
        %2394 = vmatprep.mubr.f32.mxu0 0.0
        %2395 = vmatmul.mubr.f32.gmra.mxu0 %v1453
        %v2396 = vpop.f32.mrf.mxu0
        %v2397 = vadd.f32 0.0, %v2396
        %v2398 = vpop.f32.mrf.mxu0
        %2399 = vmatprep.mubr.f32.mxu0 0.0
        %2400 = vmatmul.mubr.f32.gmra.mxu0 %v1455
        %v2401 = vpop.f32.mrf.mxu0
        %v2402 = vadd.f32 0.0, %v2401
        %v2403 = vpop.f32.mrf.mxu0
        %2404 = vmatprep.mubr.f32.mxu0 0.0
        %2405 = vmatmul.mubr.f32.gmra.mxu0 %v1457
        %v2406 = vpop.f32.mrf.mxu0
        %v2407 = vadd.f32 0.0, %v2406
        %v2408 = vpop.f32.mrf.mxu0
        %2409 = vmatprep.mubr.f32.mxu0 0.0
        %2410 = vmatmul.mubr.f32.gmra.mxu0 %v1459
        %v2411 = vpop.f32.mrf.mxu0
        %v2412 = vadd.f32 0.0, %v2411
        %v2413 = vpop.f32.mrf.mxu0
        %2414 = vmatprep.mubr.f32.mxu0 0.0
        %2415 = vmatmul.mubr.f32.gmra.mxu0 %v1461
        %v2416 = vpop.f32.mrf.mxu0
        %v2417 = vadd.f32 0.0, %v2416
        %v2418 = vpop.f32.mrf.mxu0
        %2419 = vmatprep.mubr.f32.mxu0 0.0
        %2420 = vmatmul.mubr.f32.gmra.mxu0 %v1463
        %v2421 = vpop.f32.mrf.mxu0
        %v2422 = vadd.f32 0.0, %v2421
        %v2423 = vpop.f32.mrf.mxu0
        %2424 = vmatprep.mubr.f32.mxu0 0.0
        %2425 = vmatmul.mubr.f32.gmra.mxu0 %v1465
        %v2426 = vpop.f32.mrf.mxu0
        %v2427 = vadd.f32 0.0, %v2426
        %v2428 = vpop.f32.mrf.mxu0
        %2429 = vmatprep.mubr.f32.mxu0 0.0
        %2430 = vmatmul.mubr.f32.gmra.mxu0 %v1467
        %v2431 = vpop.f32.mrf.mxu0
        %v2432 = vadd.f32 0.0, %v2431
        %v2433 = vpop.f32.mrf.mxu0
        %2434 = vmatprep.mubr.f32.mxu0 0.0
        %2435 = vmatmul.mubr.f32.gmra.mxu0 %v1469
        %v2436 = vpop.f32.mrf.mxu0
        %v2437 = vadd.f32 0.0, %v2436
        %v2438 = vpop.f32.mrf.mxu0
        %2439 = vmatprep.mubr.f32.mxu0 0.0
        %2440 = vmatmul.mubr.f32.gmra.mxu0 %v1471
        %v2441 = vpop.f32.mrf.mxu0
        %v2442 = vadd.f32 0.0, %v2441
        %v2443 = vpop.f32.mrf.mxu0
        %2444 = vmatprep.mubr.f32.mxu0 0.0
        %2445 = vmatmul.mubr.f32.gmra.mxu0 %v1473
        %v2446 = vpop.f32.mrf.mxu0
        %v2447 = vadd.f32 0.0, %v2446
        %v2448 = vpop.f32.mrf.mxu0
        %2449 = vmatprep.mubr.f32.mxu0 0.0
        %2450 = vmatmul.mubr.f32.gmra.mxu0 %v1475
        %v2451 = vpop.f32.mrf.mxu0
        %v2452 = vadd.f32 0.0, %v2451
        %v2453 = vpop.f32.mrf.mxu0
        %2454 = vmatprep.mubr.f32.mxu0 0.0
        %2455 = vmatmul.mubr.f32.gmra.mxu0 %v1477
        %v2456 = vpop.f32.mrf.mxu0
        %v2457 = vadd.f32 0.0, %v2456
        %v2458 = vpop.f32.mrf.mxu0
        %2459 = vmatprep.mubr.f32.mxu0 0.0
        %2460 = vmatmul.mubr.f32.gmra.mxu0 %v1479
        %v2461 = vpop.f32.mrf.mxu0
        %v2462 = vadd.f32 0.0, %v2461
        %v2463 = vpop.f32.mrf.mxu0
        %2464 = vmatprep.mubr.f32.mxu0 0.0
        %2465 = vmatmul.mubr.f32.gmra.mxu0 %v1481
        %v2466 = vpop.f32.mrf.mxu0
        %v2467 = vadd.f32 0.0, %v2466
        %v2468 = vpop.f32.mrf.mxu0
        %2469 = vmatprep.mubr.f32.mxu0 0.0
        %2470 = vmatmul.mubr.f32.gmra.mxu0 %v1483
        %v2471 = vpop.f32.mrf.mxu0
        %v2472 = vadd.f32 0.0, %v2471
        %v2473 = vpop.f32.mrf.mxu0
        %2474 = vmatprep.mubr.f32.mxu0 0.0
        %2475 = vmatmul.mubr.f32.gmra.mxu0 %v1485
        %v2476 = vpop.f32.mrf.mxu0
        %v2477 = vadd.f32 0.0, %v2476
        %v2478 = vpop.f32.mrf.mxu0
        %2479 = vmatprep.mubr.f32.mxu0 0.0
        %2480 = vmatmul.mubr.f32.gmra.mxu0 %v1487
        %v2481 = vpop.f32.mrf.mxu0
        %v2482 = vadd.f32 0.0, %v2481
        %v2483 = vpop.f32.mrf.mxu0
        %2484 = vmatprep.mubr.f32.mxu0 0.0
        %2485 = vmatmul.mubr.f32.gmra.mxu0 %v1489
        %v2486 = vpop.f32.mrf.mxu0
        %v2487 = vadd.f32 0.0, %v2486
        %v2488 = vpop.f32.mrf.mxu0
        %2489 = vmatprep.mubr.f32.mxu0 0.0
        %2490 = vmatmul.mubr.f32.gmra.mxu0 %v1491
        %v2491 = vpop.f32.mrf.mxu0
        %v2492 = vadd.f32 0.0, %v2491
        %v2493 = vpop.f32.mrf.mxu0
        %2494 = vmatprep.mubr.f32.mxu0 0.0
        %2495 = vmatmul.mubr.f32.gmra.mxu0 %v1493
        %v2496 = vpop.f32.mrf.mxu0
        %v2497 = vadd.f32 0.0, %v2496
        %v2498 = vpop.f32.mrf.mxu0
        %2499 = vmatprep.mubr.f32.mxu0 0.0
        %2500 = vmatmul.mubr.f32.gmra.mxu0 %v1495
        %v2501 = vpop.f32.mrf.mxu0
        %v2502 = vadd.f32 0.0, %v2501
        %v2503 = vpop.f32.mrf.mxu0
        %2504 = vmatprep.mubr.f32.mxu0 0.0
        %2505 = vmatmul.mubr.f32.gmra.mxu0 %v1497
        %v2506 = vpop.f32.mrf.mxu0
        %v2507 = vadd.f32 0.0, %v2506
        %v2508 = vpop.f32.mrf.mxu0
        %2509 = vmatprep.mubr.f32.mxu0 0.0
        %2510 = vmatmul.mubr.f32.gmra.mxu0 %v1499
        %v2511 = vpop.f32.mrf.mxu0
        %v2512 = vadd.f32 0.0, %v2511
        %v2513 = vpop.f32.mrf.mxu0
        %2514 = vmatprep.mubr.f32.mxu0 0.0
        %2515 = vmatmul.mubr.f32.gmra.mxu0 %v1501
        %v2516 = vpop.f32.mrf.mxu0
        %v2517 = vadd.f32 0.0, %v2516
        %v2518 = vpop.f32.mrf.mxu0
        %2519 = vmatprep.mubr.f32.mxu0 0.0
        %2520 = vmatmul.mubr.f32.gmra.mxu0 %v1503
        %v2521 = vpop.f32.mrf.mxu0
        %v2522 = vadd.f32 0.0, %v2521
        %v2523 = vpop.f32.mrf.mxu0
        %2524 = vmatprep.mubr.f32.mxu0 0.0
        %2525 = vmatmul.mubr.f32.gmra.mxu0 %v1505
        %v2526 = vpop.f32.mrf.mxu0
        %v2527 = vadd.f32 0.0, %v2526
        %v2528 = vpop.f32.mrf.mxu0
        %2529 = vmatprep.mubr.f32.mxu0 0.0
        %2530 = vmatmul.mubr.f32.gmra.mxu0 %v1507
        %v2531 = vpop.f32.mrf.mxu0
        %v2532 = vadd.f32 0.0, %v2531
        %v2533 = vpop.f32.mrf.mxu0
        %2534 = vmatprep.mubr.f32.mxu0 0.0
        %2535 = vmatmul.mubr.f32.gmra.mxu0 %v1509
        %v2536 = vpop.f32.mrf.mxu0
        %v2537 = vadd.f32 0.0, %v2536
        %v2538 = vpop.f32.mrf.mxu0
        %2539 = vmatprep.mubr.f32.mxu0 0.0
        %2540 = vmatmul.mubr.f32.gmra.mxu0 %v2318
        %v2541 = vpop.f32.mrf.mxu0
        %v2542 = vadd.f32 0.0, %v2541
        %v2543 = vpop.f32.mrf.mxu0
        %2544 = vmatprep.mubr.f32.mxu0 0.0
        %2545 = vmatmul.mubr.f32.gmra.mxu0 %v2320
        %v2546 = vpop.f32.mrf.mxu0
        %v2547 = vadd.f32 0.0, %v2546
        %v2548 = vpop.f32.mrf.mxu0
        %2549 = vdwg.mxu0
        %v2550 = vadd.f32 %v2279, %v2392
        %v2551 = vadd.f32 %v2280, %v2397
        %v2552 = vadd.f32 %v2281, %v2402
        %v2553 = vadd.f32 %v2282, %v2407
        %v2554 = vadd.f32 %v2283, %v2412
        %v2555 = vadd.f32 %v2284, %v2417
        %v2556 = vadd.f32 %v2285, %v2422
        %v2557 = vadd.f32 %v2286, %v2427
        %v2558 = vadd.f32 %v2287, %v2432
        %v2559 = vadd.f32 %v2288, %v2437
        %v2560 = vadd.f32 %v2289, %v2442
        %v2561 = vadd.f32 %v2290, %v2447
        %v2562 = vadd.f32 %v2291, %v2452
        %v2563 = vadd.f32 %v2292, %v2457
        %v2564 = vadd.f32 %v2293, %v2462
        %v2565 = vadd.f32 %v2294, %v2467
        %v2566 = vadd.f32 %v2295, %v2472
        %v2567 = vadd.f32 %v2296, %v2477
        %v2568 = vadd.f32 %v2297, %v2482
        %v2569 = vadd.f32 %v2298, %v2487
        %v2570 = vadd.f32 %v2299, %v2492
        %v2571 = vadd.f32 %v2300, %v2497
        %v2572 = vadd.f32 %v2301, %v2502
        %v2573 = vadd.f32 %v2302, %v2507
        %v2574 = vadd.f32 %v2303, %v2512
        %v2575 = vadd.f32 %v2304, %v2517
        %v2576 = vadd.f32 %v2305, %v2522
        %v2577 = vadd.f32 %v2306, %v2527
        %v2578 = vadd.f32 %v2307, %v2532
        %v2579 = vadd.f32 %v2308, %v2537
        %v2580 = vadd.f32 %v2309, %v2542
        %v2581 = vadd.f32 %v2310, %v2547
        %s2582 = scalar_lea.vmem [#allocation7], 24
        %v2583 = vld [vmem:[%s2582] sm:$0x7]
        %v2585 = vsel %vm504, %v644, 0
        %v2588 = vsel %vm504, %v645, 0
        %v2591 = vsel %vm843, %v2583, 0
        %2593 = vmatprep.subr.mxu0 0.0
        %2594 = vmatpush1.msra.mxu0 0.0
        %2595 = vmatprep.subr.mxu0 0.0
        %2596 = vmatpush1.msra.mxu0 0.0
        %2597 = vmatprep.subr.mxu0 0.0
        %2598 = vmatpush1.msra.mxu0 0.0
        %2599 = vmatprep.subr.mxu0 0.0
        %2600 = vmatpush1.msra.mxu0 0.0
        %2601 = vmatprep.subr.mxu0 0.0
        %2602 = vmatpush1.msra.mxu0 0.0
        %2603 = vmatprep.subr.mxu0 0.0
        %2604 = vmatpush1.msra.mxu0 0.0
        %2605 = vmatprep.subr.mxu0 0.0
        %2606 = vmatpush1.msra.mxu0 0.0
        %2607 = vmatprep.subr.mxu0 0.0
        %2608 = vmatpush1.msra.mxu0 0.0
        %2609 = vmatprep.subr.mxu0 0.0
        %2610 = vmatpush1.msra.mxu0 0.0
        %2611 = vmatprep.subr.mxu0 0.0
        %2612 = vmatpush1.msra.mxu0 0.0
        %2613 = vmatprep.subr.mxu0 0.0
        %2614 = vmatpush1.msra.mxu0 0.0
        %2615 = vmatprep.subr.mxu0 0.0
        %2616 = vmatpush1.msra.mxu0 0.0
        %2617 = vmatprep.subr.mxu0 0.0
        %2618 = vmatpush1.msra.mxu0 0.0
        %2619 = vmatprep.subr.mxu0 0.0
        %2620 = vmatpush1.msra.mxu0 0.0
        %2621 = vmatprep.subr.mxu0 0.0
        %2622 = vmatpush1.msra.mxu0 0.0
        %2623 = vmatprep.subr.mxu0 0.0
        %2624 = vmatpush1.msra.mxu0 %v2591
        %2625 = vmatprep.subr.mxu0 0.0
        %2626 = vmatpush2.msra.mxu0 0.0
        %2627 = vmatprep.subr.mxu0 0.0
        %2628 = vmatpush2.msra.mxu0 0.0
        %2629 = vmatprep.subr.mxu0 0.0
        %2630 = vmatpush2.msra.mxu0 0.0
        %2631 = vmatprep.subr.mxu0 0.0
        %2632 = vmatpush2.msra.mxu0 0.0
        %2633 = vmatprep.subr.mxu0 0.0
        %2634 = vmatpush2.msra.mxu0 0.0
        %2635 = vmatprep.subr.mxu0 0.0
        %2636 = vmatpush2.msra.mxu0 0.0
        %2637 = vmatprep.subr.mxu0 0.0
        %2638 = vmatpush2.msra.mxu0 0.0
        %2639 = vmatprep.subr.mxu0 0.0
        %2640 = vmatpush2.msra.mxu0 0.0
        %2641 = vmatprep.subr.mxu0 0.0
        %2642 = vmatpush2.msra.mxu0 0.0
        %2643 = vmatprep.subr.mxu0 0.0
        %2644 = vmatpush2.msra.mxu0 0.0
        %2645 = vmatprep.subr.mxu0 0.0
        %2646 = vmatpush2.msra.mxu0 0.0
        %2647 = vmatprep.subr.mxu0 0.0
        %2648 = vmatpush2.msra.mxu0 0.0
        %2649 = vmatprep.subr.mxu0 0.0
        %2650 = vmatpush2.msra.mxu0 0.0
        %2651 = vmatprep.subr.mxu0 0.0
        %2652 = vmatpush2.msra.mxu0 0.0
        %2653 = vmatprep.subr.mxu0 0.0
        %2654 = vmatpush2.msra.mxu0 0.0
        %2655 = vmatprep.subr.mxu0 0.0
        %2656 = vmatpush2.msra.mxu0 0.0
        %2657 = vmatprep.mubr.f32.mxu0 0.0
        %2658 = vmatmul.mubr.f32.gmra.mxu0 %v1080
        %v2659 = vpop.f32.mrf.mxu0
        %v2660 = vadd.f32 0.0, %v2659
        %v2661 = vpop.f32.mrf.mxu0
        %2662 = vmatprep.mubr.f32.mxu0 0.0
        %2663 = vmatmul.mubr.f32.gmra.mxu0 %v1082
        %v2664 = vpop.f32.mrf.mxu0
        %v2665 = vadd.f32 0.0, %v2664
        %v2666 = vpop.f32.mrf.mxu0
        %2667 = vmatprep.mubr.f32.mxu0 0.0
        %2668 = vmatmul.mubr.f32.gmra.mxu0 %v1084
        %v2669 = vpop.f32.mrf.mxu0
        %v2670 = vadd.f32 0.0, %v2669
        %v2671 = vpop.f32.mrf.mxu0
        %2672 = vmatprep.mubr.f32.mxu0 0.0
        %2673 = vmatmul.mubr.f32.gmra.mxu0 %v1086
        %v2674 = vpop.f32.mrf.mxu0
        %v2675 = vadd.f32 0.0, %v2674
        %v2676 = vpop.f32.mrf.mxu0
        %2677 = vmatprep.mubr.f32.mxu0 0.0
        %2678 = vmatmul.mubr.f32.gmra.mxu0 %v1088
        %v2679 = vpop.f32.mrf.mxu0
        %v2680 = vadd.f32 0.0, %v2679
        %v2681 = vpop.f32.mrf.mxu0
        %2682 = vmatprep.mubr.f32.mxu0 0.0
        %2683 = vmatmul.mubr.f32.gmra.mxu0 %v1090
        %v2684 = vpop.f32.mrf.mxu0
        %v2685 = vadd.f32 0.0, %v2684
        %v2686 = vpop.f32.mrf.mxu0
        %2687 = vmatprep.mubr.f32.mxu0 0.0
        %2688 = vmatmul.mubr.f32.gmra.mxu0 %v1092
        %v2689 = vpop.f32.mrf.mxu0
        %v2690 = vadd.f32 0.0, %v2689
        %v2691 = vpop.f32.mrf.mxu0
        %2692 = vmatprep.mubr.f32.mxu0 0.0
        %2693 = vmatmul.mubr.f32.gmra.mxu0 %v1094
        %v2694 = vpop.f32.mrf.mxu0
        %v2695 = vadd.f32 0.0, %v2694
        %v2696 = vpop.f32.mrf.mxu0
        %2697 = vmatprep.mubr.f32.mxu0 0.0
        %2698 = vmatmul.mubr.f32.gmra.mxu0 %v1096
        %v2699 = vpop.f32.mrf.mxu0
        %v2700 = vadd.f32 0.0, %v2699
        %v2701 = vpop.f32.mrf.mxu0
        %2702 = vmatprep.mubr.f32.mxu0 0.0
        %2703 = vmatmul.mubr.f32.gmra.mxu0 %v1098
        %v2704 = vpop.f32.mrf.mxu0
        %v2705 = vadd.f32 0.0, %v2704
        %v2706 = vpop.f32.mrf.mxu0
        %2707 = vmatprep.mubr.f32.mxu0 0.0
        %2708 = vmatmul.mubr.f32.gmra.mxu0 %v1100
        %v2709 = vpop.f32.mrf.mxu0
        %v2710 = vadd.f32 0.0, %v2709
        %v2711 = vpop.f32.mrf.mxu0
        %2712 = vmatprep.mubr.f32.mxu0 0.0
        %2713 = vmatmul.mubr.f32.gmra.mxu0 %v1102
        %v2714 = vpop.f32.mrf.mxu0
        %v2715 = vadd.f32 0.0, %v2714
        %v2716 = vpop.f32.mrf.mxu0
        %2717 = vmatprep.mubr.f32.mxu0 0.0
        %2718 = vmatmul.mubr.f32.gmra.mxu0 %v1104
        %v2719 = vpop.f32.mrf.mxu0
        %v2720 = vadd.f32 0.0, %v2719
        %v2721 = vpop.f32.mrf.mxu0
        %2722 = vmatprep.mubr.f32.mxu0 0.0
        %2723 = vmatmul.mubr.f32.gmra.mxu0 %v1106
        %v2724 = vpop.f32.mrf.mxu0
        %v2725 = vadd.f32 0.0, %v2724
        %v2726 = vpop.f32.mrf.mxu0
        %2727 = vmatprep.mubr.f32.mxu0 0.0
        %2728 = vmatmul.mubr.f32.gmra.mxu0 %v1108
        %v2729 = vpop.f32.mrf.mxu0
        %v2730 = vadd.f32 0.0, %v2729
        %v2731 = vpop.f32.mrf.mxu0
        %2732 = vmatprep.mubr.f32.mxu0 0.0
        %2733 = vmatmul.mubr.f32.gmra.mxu0 %v1110
        %v2734 = vpop.f32.mrf.mxu0
        %v2735 = vadd.f32 0.0, %v2734
        %v2736 = vpop.f32.mrf.mxu0
        %2737 = vmatprep.mubr.f32.mxu0 0.0
        %2738 = vmatmul.mubr.f32.gmra.mxu0 %v1112
        %v2739 = vpop.f32.mrf.mxu0
        %v2740 = vadd.f32 0.0, %v2739
        %v2741 = vpop.f32.mrf.mxu0
        %2742 = vmatprep.mubr.f32.mxu0 0.0
        %2743 = vmatmul.mubr.f32.gmra.mxu0 %v1114
        %v2744 = vpop.f32.mrf.mxu0
        %v2745 = vadd.f32 0.0, %v2744
        %v2746 = vpop.f32.mrf.mxu0
        %2747 = vmatprep.mubr.f32.mxu0 0.0
        %2748 = vmatmul.mubr.f32.gmra.mxu0 %v1116
        %v2749 = vpop.f32.mrf.mxu0
        %v2750 = vadd.f32 0.0, %v2749
        %v2751 = vpop.f32.mrf.mxu0
        %2752 = vmatprep.mubr.f32.mxu0 0.0
        %2753 = vmatmul.mubr.f32.gmra.mxu0 %v1118
        %v2754 = vpop.f32.mrf.mxu0
        %v2755 = vadd.f32 0.0, %v2754
        %v2756 = vpop.f32.mrf.mxu0
        %2757 = vmatprep.mubr.f32.mxu0 0.0
        %2758 = vmatmul.mubr.f32.gmra.mxu0 %v1120
        %v2759 = vpop.f32.mrf.mxu0
        %v2760 = vadd.f32 0.0, %v2759
        %v2761 = vpop.f32.mrf.mxu0
        %2762 = vmatprep.mubr.f32.mxu0 0.0
        %2763 = vmatmul.mubr.f32.gmra.mxu0 %v1122
        %v2764 = vpop.f32.mrf.mxu0
        %v2765 = vadd.f32 0.0, %v2764
        %v2766 = vpop.f32.mrf.mxu0
        %2767 = vmatprep.mubr.f32.mxu0 0.0
        %2768 = vmatmul.mubr.f32.gmra.mxu0 %v1124
        %v2769 = vpop.f32.mrf.mxu0
        %v2770 = vadd.f32 0.0, %v2769
        %v2771 = vpop.f32.mrf.mxu0
        %2772 = vmatprep.mubr.f32.mxu0 0.0
        %2773 = vmatmul.mubr.f32.gmra.mxu0 %v1126
        %v2774 = vpop.f32.mrf.mxu0
        %v2775 = vadd.f32 0.0, %v2774
        %v2776 = vpop.f32.mrf.mxu0
        %2777 = vmatprep.mubr.f32.mxu0 0.0
        %2778 = vmatmul.mubr.f32.gmra.mxu0 %v1128
        %v2779 = vpop.f32.mrf.mxu0
        %v2780 = vadd.f32 0.0, %v2779
        %v2781 = vpop.f32.mrf.mxu0
        %2782 = vmatprep.mubr.f32.mxu0 0.0
        %2783 = vmatmul.mubr.f32.gmra.mxu0 %v1130
        %v2784 = vpop.f32.mrf.mxu0
        %v2785 = vadd.f32 0.0, %v2784
        %v2786 = vpop.f32.mrf.mxu0
        %2787 = vmatprep.mubr.f32.mxu0 0.0
        %2788 = vmatmul.mubr.f32.gmra.mxu0 %v1132
        %v2789 = vpop.f32.mrf.mxu0
        %v2790 = vadd.f32 0.0, %v2789
        %v2791 = vpop.f32.mrf.mxu0
        %2792 = vmatprep.mubr.f32.mxu0 0.0
        %2793 = vmatmul.mubr.f32.gmra.mxu0 %v1134
        %v2794 = vpop.f32.mrf.mxu0
        %v2795 = vadd.f32 0.0, %v2794
        %v2796 = vpop.f32.mrf.mxu0
        %2797 = vmatprep.mubr.f32.mxu0 0.0
        %2798 = vmatmul.mubr.f32.gmra.mxu0 %v1774
        %v2799 = vpop.f32.mrf.mxu0
        %v2800 = vadd.f32 0.0, %v2799
        %v2801 = vpop.f32.mrf.mxu0
        %2802 = vmatprep.mubr.f32.mxu0 0.0
        %2803 = vmatmul.mubr.f32.gmra.mxu0 %v1777
        %v2804 = vpop.f32.mrf.mxu0
        %v2805 = vadd.f32 0.0, %v2804
        %v2806 = vpop.f32.mrf.mxu0
        %2807 = vmatprep.mubr.f32.mxu0 0.0
        %2808 = vmatmul.mubr.f32.gmra.mxu0 %v2585
        %v2809 = vpop.f32.mrf.mxu0
        %v2810 = vadd.f32 0.0, %v2809
        %v2811 = vpop.f32.mrf.mxu0
        %2812 = vmatprep.mubr.f32.mxu0 0.0
        %2813 = vmatmul.mubr.f32.gmra.mxu0 %v2588
        %v2814 = vpop.f32.mrf.mxu0
        %v2815 = vadd.f32 0.0, %v2814
        %v2816 = vpop.f32.mrf.mxu0
        %2817 = vdwg.mxu0
        %v2818 = vadd.f32 %v2550, %v2660
        %v2819 = vadd.f32 %v2551, %v2665
        %v2820 = vadd.f32 %v2552, %v2670
        %v2821 = vadd.f32 %v2553, %v2675
        %v2822 = vadd.f32 %v2554, %v2680
        %v2823 = vadd.f32 %v2555, %v2685
        %v2824 = vadd.f32 %v2556, %v2690
        %v2825 = vadd.f32 %v2557, %v2695
        %v2826 = vadd.f32 %v2558, %v2700
        %v2827 = vadd.f32 %v2559, %v2705
        %v2828 = vadd.f32 %v2560, %v2710
        %v2829 = vadd.f32 %v2561, %v2715
        %v2830 = vadd.f32 %v2562, %v2720
        %v2831 = vadd.f32 %v2563, %v2725
        %v2832 = vadd.f32 %v2564, %v2730
        %v2833 = vadd.f32 %v2565, %v2735
        %v2834 = vadd.f32 %v2566, %v2740
        %v2835 = vadd.f32 %v2567, %v2745
        %v2836 = vadd.f32 %v2568, %v2750
        %v2837 = vadd.f32 %v2569, %v2755
        %v2838 = vadd.f32 %v2570, %v2760
        %v2839 = vadd.f32 %v2571, %v2765
        %v2840 = vadd.f32 %v2572, %v2770
        %v2841 = vadd.f32 %v2573, %v2775
        %v2842 = vadd.f32 %v2574, %v2780
        %v2843 = vadd.f32 %v2575, %v2785
        %v2844 = vadd.f32 %v2576, %v2790
        %v2845 = vadd.f32 %v2577, %v2795
        %v2846 = vadd.f32 %v2578, %v2800
        %v2847 = vadd.f32 %v2579, %v2805
        %v2848 = vadd.f32 %v2580, %v2810
        %v2849 = vadd.f32 %v2581, %v2815
        %v2851 = vrot.slane %v644, 1
        %v2852 = vrot.slane %v645, 1
        %v2853 = vsel %vm696, %v2851, %v2852
        %v2854 = vrot.slane %v646, 1
        %v2855 = vsel %vm696, %v2852, %v2854
        %s2856 = scalar_lea.vmem [#allocation7], 28
        %v2857 = vld [vmem:[%s2856] sm:$0x7]
        %v2858 = vsel %vm504, %v2853, 0
        %v2860 = vsel %vm504, %v2855, 0
        %v2863 = vsel %vm843, %v2857, 0
        %2865 = vmatprep.subr.mxu0 0.0
        %2866 = vmatpush1.msra.mxu0 0.0
        %2867 = vmatprep.subr.mxu0 0.0
        %2868 = vmatpush1.msra.mxu0 0.0
        %2869 = vmatprep.subr.mxu0 0.0
        %2870 = vmatpush1.msra.mxu0 0.0
        %2871 = vmatprep.subr.mxu0 0.0
        %2872 = vmatpush1.msra.mxu0 0.0
        %2873 = vmatprep.subr.mxu0 0.0
        %2874 = vmatpush1.msra.mxu0 0.0
        %2875 = vmatprep.subr.mxu0 0.0
        %2876 = vmatpush1.msra.mxu0 0.0
        %2877 = vmatprep.subr.mxu0 0.0
        %2878 = vmatpush1.msra.mxu0 0.0
        %2879 = vmatprep.subr.mxu0 0.0
        %2880 = vmatpush1.msra.mxu0 0.0
        %2881 = vmatprep.subr.mxu0 0.0
        %2882 = vmatpush1.msra.mxu0 0.0
        %2883 = vmatprep.subr.mxu0 0.0
        %2884 = vmatpush1.msra.mxu0 0.0
        %2885 = vmatprep.subr.mxu0 0.0
        %2886 = vmatpush1.msra.mxu0 0.0
        %2887 = vmatprep.subr.mxu0 0.0
        %2888 = vmatpush1.msra.mxu0 0.0
        %2889 = vmatprep.subr.mxu0 0.0
        %2890 = vmatpush1.msra.mxu0 0.0
        %2891 = vmatprep.subr.mxu0 0.0
        %2892 = vmatpush1.msra.mxu0 0.0
        %2893 = vmatprep.subr.mxu0 0.0
        %2894 = vmatpush1.msra.mxu0 0.0
        %2895 = vmatprep.subr.mxu0 0.0
        %2896 = vmatpush1.msra.mxu0 %v2863
        %2897 = vmatprep.subr.mxu0 0.0
        %2898 = vmatpush2.msra.mxu0 0.0
        %2899 = vmatprep.subr.mxu0 0.0
        %2900 = vmatpush2.msra.mxu0 0.0
        %2901 = vmatprep.subr.mxu0 0.0
        %2902 = vmatpush2.msra.mxu0 0.0
        %2903 = vmatprep.subr.mxu0 0.0
        %2904 = vmatpush2.msra.mxu0 0.0
        %2905 = vmatprep.subr.mxu0 0.0
        %2906 = vmatpush2.msra.mxu0 0.0
        %2907 = vmatprep.subr.mxu0 0.0
        %2908 = vmatpush2.msra.mxu0 0.0
        %2909 = vmatprep.subr.mxu0 0.0
        %2910 = vmatpush2.msra.mxu0 0.0
        %2911 = vmatprep.subr.mxu0 0.0
        %2912 = vmatpush2.msra.mxu0 0.0
        %2913 = vmatprep.subr.mxu0 0.0
        %2914 = vmatpush2.msra.mxu0 0.0
        %2915 = vmatprep.subr.mxu0 0.0
        %2916 = vmatpush2.msra.mxu0 0.0
        %2917 = vmatprep.subr.mxu0 0.0
        %2918 = vmatpush2.msra.mxu0 0.0
        %2919 = vmatprep.subr.mxu0 0.0
        %2920 = vmatpush2.msra.mxu0 0.0
        %2921 = vmatprep.subr.mxu0 0.0
        %2922 = vmatpush2.msra.mxu0 0.0
        %2923 = vmatprep.subr.mxu0 0.0
        %2924 = vmatpush2.msra.mxu0 0.0
        %2925 = vmatprep.subr.mxu0 0.0
        %2926 = vmatpush2.msra.mxu0 0.0
        %2927 = vmatprep.subr.mxu0 0.0
        %2928 = vmatpush2.msra.mxu0 0.0
        %2929 = vmatprep.mubr.f32.mxu0 0.0
        %2930 = vmatmul.mubr.f32.gmra.mxu0 %v787
        %v2931 = vpop.f32.mrf.mxu0
        %v2932 = vadd.f32 0.0, %v2931
        %v2933 = vpop.f32.mrf.mxu0
        %2934 = vmatprep.mubr.f32.mxu0 0.0
        %2935 = vmatmul.mubr.f32.gmra.mxu0 %v789
        %v2936 = vpop.f32.mrf.mxu0
        %v2937 = vadd.f32 0.0, %v2936
        %v2938 = vpop.f32.mrf.mxu0
        %2939 = vmatprep.mubr.f32.mxu0 0.0
        %2940 = vmatmul.mubr.f32.gmra.mxu0 %v791
        %v2941 = vpop.f32.mrf.mxu0
        %v2942 = vadd.f32 0.0, %v2941
        %v2943 = vpop.f32.mrf.mxu0
        %2944 = vmatprep.mubr.f32.mxu0 0.0
        %2945 = vmatmul.mubr.f32.gmra.mxu0 %v793
        %v2946 = vpop.f32.mrf.mxu0
        %v2947 = vadd.f32 0.0, %v2946
        %v2948 = vpop.f32.mrf.mxu0
        %2949 = vmatprep.mubr.f32.mxu0 0.0
        %2950 = vmatmul.mubr.f32.gmra.mxu0 %v795
        %v2951 = vpop.f32.mrf.mxu0
        %v2952 = vadd.f32 0.0, %v2951
        %v2953 = vpop.f32.mrf.mxu0
        %2954 = vmatprep.mubr.f32.mxu0 0.0
        %2955 = vmatmul.mubr.f32.gmra.mxu0 %v797
        %v2956 = vpop.f32.mrf.mxu0
        %v2957 = vadd.f32 0.0, %v2956
        %v2958 = vpop.f32.mrf.mxu0
        %2959 = vmatprep.mubr.f32.mxu0 0.0
        %2960 = vmatmul.mubr.f32.gmra.mxu0 %v799
        %v2961 = vpop.f32.mrf.mxu0
        %v2962 = vadd.f32 0.0, %v2961
        %v2963 = vpop.f32.mrf.mxu0
        %2964 = vmatprep.mubr.f32.mxu0 0.0
        %2965 = vmatmul.mubr.f32.gmra.mxu0 %v801
        %v2966 = vpop.f32.mrf.mxu0
        %v2967 = vadd.f32 0.0, %v2966
        %v2968 = vpop.f32.mrf.mxu0
        %2969 = vmatprep.mubr.f32.mxu0 0.0
        %2970 = vmatmul.mubr.f32.gmra.mxu0 %v803
        %v2971 = vpop.f32.mrf.mxu0
        %v2972 = vadd.f32 0.0, %v2971
        %v2973 = vpop.f32.mrf.mxu0
        %2974 = vmatprep.mubr.f32.mxu0 0.0
        %2975 = vmatmul.mubr.f32.gmra.mxu0 %v805
        %v2976 = vpop.f32.mrf.mxu0
        %v2977 = vadd.f32 0.0, %v2976
        %v2978 = vpop.f32.mrf.mxu0
        %2979 = vmatprep.mubr.f32.mxu0 0.0
        %2980 = vmatmul.mubr.f32.gmra.mxu0 %v807
        %v2981 = vpop.f32.mrf.mxu0
        %v2982 = vadd.f32 0.0, %v2981
        %v2983 = vpop.f32.mrf.mxu0
        %2984 = vmatprep.mubr.f32.mxu0 0.0
        %2985 = vmatmul.mubr.f32.gmra.mxu0 %v809
        %v2986 = vpop.f32.mrf.mxu0
        %v2987 = vadd.f32 0.0, %v2986
        %v2988 = vpop.f32.mrf.mxu0
        %2989 = vmatprep.mubr.f32.mxu0 0.0
        %2990 = vmatmul.mubr.f32.gmra.mxu0 %v811
        %v2991 = vpop.f32.mrf.mxu0
        %v2992 = vadd.f32 0.0, %v2991
        %v2993 = vpop.f32.mrf.mxu0
        %2994 = vmatprep.mubr.f32.mxu0 0.0
        %2995 = vmatmul.mubr.f32.gmra.mxu0 %v813
        %v2996 = vpop.f32.mrf.mxu0
        %v2997 = vadd.f32 0.0, %v2996
        %v2998 = vpop.f32.mrf.mxu0
        %2999 = vmatprep.mubr.f32.mxu0 0.0
        %3000 = vmatmul.mubr.f32.gmra.mxu0 %v815
        %v3001 = vpop.f32.mrf.mxu0
        %v3002 = vadd.f32 0.0, %v3001
        %v3003 = vpop.f32.mrf.mxu0
        %3004 = vmatprep.mubr.f32.mxu0 0.0
        %3005 = vmatmul.mubr.f32.gmra.mxu0 %v817
        %v3006 = vpop.f32.mrf.mxu0
        %v3007 = vadd.f32 0.0, %v3006
        %v3008 = vpop.f32.mrf.mxu0
        %3009 = vmatprep.mubr.f32.mxu0 0.0
        %3010 = vmatmul.mubr.f32.gmra.mxu0 %v819
        %v3011 = vpop.f32.mrf.mxu0
        %v3012 = vadd.f32 0.0, %v3011
        %v3013 = vpop.f32.mrf.mxu0
        %3014 = vmatprep.mubr.f32.mxu0 0.0
        %3015 = vmatmul.mubr.f32.gmra.mxu0 %v821
        %v3016 = vpop.f32.mrf.mxu0
        %v3017 = vadd.f32 0.0, %v3016
        %v3018 = vpop.f32.mrf.mxu0
        %3019 = vmatprep.mubr.f32.mxu0 0.0
        %3020 = vmatmul.mubr.f32.gmra.mxu0 %v823
        %v3021 = vpop.f32.mrf.mxu0
        %v3022 = vadd.f32 0.0, %v3021
        %v3023 = vpop.f32.mrf.mxu0
        %3024 = vmatprep.mubr.f32.mxu0 0.0
        %3025 = vmatmul.mubr.f32.gmra.mxu0 %v825
        %v3026 = vpop.f32.mrf.mxu0
        %v3027 = vadd.f32 0.0, %v3026
        %v3028 = vpop.f32.mrf.mxu0
        %3029 = vmatprep.mubr.f32.mxu0 0.0
        %3030 = vmatmul.mubr.f32.gmra.mxu0 %v827
        %v3031 = vpop.f32.mrf.mxu0
        %v3032 = vadd.f32 0.0, %v3031
        %v3033 = vpop.f32.mrf.mxu0
        %3034 = vmatprep.mubr.f32.mxu0 0.0
        %3035 = vmatmul.mubr.f32.gmra.mxu0 %v829
        %v3036 = vpop.f32.mrf.mxu0
        %v3037 = vadd.f32 0.0, %v3036
        %v3038 = vpop.f32.mrf.mxu0
        %3039 = vmatprep.mubr.f32.mxu0 0.0
        %3040 = vmatmul.mubr.f32.gmra.mxu0 %v831
        %v3041 = vpop.f32.mrf.mxu0
        %v3042 = vadd.f32 0.0, %v3041
        %v3043 = vpop.f32.mrf.mxu0
        %3044 = vmatprep.mubr.f32.mxu0 0.0
        %3045 = vmatmul.mubr.f32.gmra.mxu0 %v833
        %v3046 = vpop.f32.mrf.mxu0
        %v3047 = vadd.f32 0.0, %v3046
        %v3048 = vpop.f32.mrf.mxu0
        %3049 = vmatprep.mubr.f32.mxu0 0.0
        %3050 = vmatmul.mubr.f32.gmra.mxu0 %v835
        %v3051 = vpop.f32.mrf.mxu0
        %v3052 = vadd.f32 0.0, %v3051
        %v3053 = vpop.f32.mrf.mxu0
        %3054 = vmatprep.mubr.f32.mxu0 0.0
        %3055 = vmatmul.mubr.f32.gmra.mxu0 %v837
        %v3056 = vpop.f32.mrf.mxu0
        %v3057 = vadd.f32 0.0, %v3056
        %v3058 = vpop.f32.mrf.mxu0
        %3059 = vmatprep.mubr.f32.mxu0 0.0
        %3060 = vmatmul.mubr.f32.gmra.mxu0 %v839
        %v3061 = vpop.f32.mrf.mxu0
        %v3062 = vadd.f32 0.0, %v3061
        %v3063 = vpop.f32.mrf.mxu0
        %3064 = vmatprep.mubr.f32.mxu0 0.0
        %3065 = vmatmul.mubr.f32.gmra.mxu0 %v841
        %v3066 = vpop.f32.mrf.mxu0
        %v3067 = vadd.f32 0.0, %v3066
        %v3068 = vpop.f32.mrf.mxu0
        %3069 = vmatprep.mubr.f32.mxu0 0.0
        %3070 = vmatmul.mubr.f32.gmra.mxu0 %v2047
        %v3071 = vpop.f32.mrf.mxu0
        %v3072 = vadd.f32 0.0, %v3071
        %v3073 = vpop.f32.mrf.mxu0
        %3074 = vmatprep.mubr.f32.mxu0 0.0
        %3075 = vmatmul.mubr.f32.gmra.mxu0 %v2049
        %v3076 = vpop.f32.mrf.mxu0
        %v3077 = vadd.f32 0.0, %v3076
        %v3078 = vpop.f32.mrf.mxu0
        %3079 = vmatprep.mubr.f32.mxu0 0.0
        %3080 = vmatmul.mubr.f32.gmra.mxu0 %v2858
        %v3081 = vpop.f32.mrf.mxu0
        %v3082 = vadd.f32 0.0, %v3081
        %v3083 = vpop.f32.mrf.mxu0
        %3084 = vmatprep.mubr.f32.mxu0 0.0
        %3085 = vmatmul.mubr.f32.gmra.mxu0 %v2860
        %v3086 = vpop.f32.mrf.mxu0
        %v3087 = vadd.f32 0.0, %v3086
        %v3088 = vpop.f32.mrf.mxu0
        %3089 = vdwg.mxu0
        %v3090 = vadd.f32 %v2818, %v2932
        %v3091 = vadd.f32 %v2819, %v2937
        %v3092 = vadd.f32 %v2820, %v2942
        %v3093 = vadd.f32 %v2821, %v2947
        %v3094 = vadd.f32 %v2822, %v2952
        %v3095 = vadd.f32 %v2823, %v2957
        %v3096 = vadd.f32 %v2824, %v2962
        %v3097 = vadd.f32 %v2825, %v2967
        %v3098 = vadd.f32 %v2826, %v2972
        %v3099 = vadd.f32 %v2827, %v2977
        %v3100 = vadd.f32 %v2828, %v2982
        %v3101 = vadd.f32 %v2829, %v2987
        %v3102 = vadd.f32 %v2830, %v2992
        %v3103 = vadd.f32 %v2831, %v2997
        %v3104 = vadd.f32 %v2832, %v3002
        %v3105 = vadd.f32 %v2833, %v3007
        %v3106 = vadd.f32 %v2834, %v3012
        %v3107 = vadd.f32 %v2835, %v3017
        %v3108 = vadd.f32 %v2836, %v3022
        %v3109 = vadd.f32 %v2837, %v3027
        %v3110 = vadd.f32 %v2838, %v3032
        %v3111 = vadd.f32 %v2839, %v3037
        %v3112 = vadd.f32 %v2840, %v3042
        %v3113 = vadd.f32 %v2841, %v3047
        %v3114 = vadd.f32 %v2842, %v3052
        %v3115 = vadd.f32 %v2843, %v3057
        %v3116 = vadd.f32 %v2844, %v3062
        %v3117 = vadd.f32 %v2845, %v3067
        %v3118 = vadd.f32 %v2846, %v3072
        %v3119 = vadd.f32 %v2847, %v3077
        %v3120 = vadd.f32 %v2848, %v3082
        %v3121 = vadd.f32 %v2849, %v3087
        %v3122 = vrot.slane %v644, 2
        %v3123 = vrot.slane %v645, 2
        %v3124 = vsel %vm1364, %v3122, %v3123
        %v3125 = vrot.slane %v646, 2
        %v3126 = vsel %vm1364, %v3123, %v3125
        %s3127 = scalar_lea.vmem [#allocation7], 32
        %v3128 = vld [vmem:[%s3127] sm:$0x7]
        %v3129 = vsel %vm504, %v3124, 0
        %v3131 = vsel %vm504, %v3126, 0
        %v3134 = vsel %vm843, %v3128, 0
        %3136 = vmatprep.subr.mxu0 0.0
        %3137 = vmatpush1.msra.mxu0 0.0
        %3138 = vmatprep.subr.mxu0 0.0
        %3139 = vmatpush1.msra.mxu0 0.0
        %3140 = vmatprep.subr.mxu0 0.0
        %3141 = vmatpush1.msra.mxu0 0.0
        %3142 = vmatprep.subr.mxu0 0.0
        %3143 = vmatpush1.msra.mxu0 0.0
        %3144 = vmatprep.subr.mxu0 0.0
        %3145 = vmatpush1.msra.mxu0 0.0
        %3146 = vmatprep.subr.mxu0 0.0
        %3147 = vmatpush1.msra.mxu0 0.0
        %3148 = vmatprep.subr.mxu0 0.0
        %3149 = vmatpush1.msra.mxu0 0.0
        %3150 = vmatprep.subr.mxu0 0.0
        %3151 = vmatpush1.msra.mxu0 0.0
        %3152 = vmatprep.subr.mxu0 0.0
        %3153 = vmatpush1.msra.mxu0 0.0
        %3154 = vmatprep.subr.mxu0 0.0
        %3155 = vmatpush1.msra.mxu0 0.0
        %3156 = vmatprep.subr.mxu0 0.0
        %3157 = vmatpush1.msra.mxu0 0.0
        %3158 = vmatprep.subr.mxu0 0.0
        %3159 = vmatpush1.msra.mxu0 0.0
        %3160 = vmatprep.subr.mxu0 0.0
        %3161 = vmatpush1.msra.mxu0 0.0
        %3162 = vmatprep.subr.mxu0 0.0
        %3163 = vmatpush1.msra.mxu0 0.0
        %3164 = vmatprep.subr.mxu0 0.0
        %3165 = vmatpush1.msra.mxu0 0.0
        %3166 = vmatprep.subr.mxu0 0.0
        %3167 = vmatpush1.msra.mxu0 %v3134
        %3168 = vmatprep.subr.mxu0 0.0
        %3169 = vmatpush2.msra.mxu0 0.0
        %3170 = vmatprep.subr.mxu0 0.0
        %3171 = vmatpush2.msra.mxu0 0.0
        %3172 = vmatprep.subr.mxu0 0.0
        %3173 = vmatpush2.msra.mxu0 0.0
        %3174 = vmatprep.subr.mxu0 0.0
        %3175 = vmatpush2.msra.mxu0 0.0
        %3176 = vmatprep.subr.mxu0 0.0
        %3177 = vmatpush2.msra.mxu0 0.0
        %3178 = vmatprep.subr.mxu0 0.0
        %3179 = vmatpush2.msra.mxu0 0.0
        %3180 = vmatprep.subr.mxu0 0.0
        %3181 = vmatpush2.msra.mxu0 0.0
        %3182 = vmatprep.subr.mxu0 0.0
        %3183 = vmatpush2.msra.mxu0 0.0
        %3184 = vmatprep.subr.mxu0 0.0
        %3185 = vmatpush2.msra.mxu0 0.0
        %3186 = vmatprep.subr.mxu0 0.0
        %3187 = vmatpush2.msra.mxu0 0.0
        %3188 = vmatprep.subr.mxu0 0.0
        %3189 = vmatpush2.msra.mxu0 0.0
        %3190 = vmatprep.subr.mxu0 0.0
        %3191 = vmatpush2.msra.mxu0 0.0
        %3192 = vmatprep.subr.mxu0 0.0
        %3193 = vmatpush2.msra.mxu0 0.0
        %3194 = vmatprep.subr.mxu0 0.0
        %3195 = vmatpush2.msra.mxu0 0.0
        %3196 = vmatprep.subr.mxu0 0.0
        %3197 = vmatpush2.msra.mxu0 0.0
        %3198 = vmatprep.subr.mxu0 0.0
        %3199 = vmatpush2.msra.mxu0 0.0
        %3200 = vmatprep.mubr.f32.mxu0 0.0
        %3201 = vmatmul.mubr.f32.gmra.mxu0 %v1455
        %v3202 = vpop.f32.mrf.mxu0
        %v3203 = vadd.f32 0.0, %v3202
        %v3204 = vpop.f32.mrf.mxu0
        %3205 = vmatprep.mubr.f32.mxu0 0.0
        %3206 = vmatmul.mubr.f32.gmra.mxu0 %v1457
        %v3207 = vpop.f32.mrf.mxu0
        %v3208 = vadd.f32 0.0, %v3207
        %v3209 = vpop.f32.mrf.mxu0
        %3210 = vmatprep.mubr.f32.mxu0 0.0
        %3211 = vmatmul.mubr.f32.gmra.mxu0 %v1459
        %v3212 = vpop.f32.mrf.mxu0
        %v3213 = vadd.f32 0.0, %v3212
        %v3214 = vpop.f32.mrf.mxu0
        %3215 = vmatprep.mubr.f32.mxu0 0.0
        %3216 = vmatmul.mubr.f32.gmra.mxu0 %v1461
        %v3217 = vpop.f32.mrf.mxu0
        %v3218 = vadd.f32 0.0, %v3217
        %v3219 = vpop.f32.mrf.mxu0
        %3220 = vmatprep.mubr.f32.mxu0 0.0
        %3221 = vmatmul.mubr.f32.gmra.mxu0 %v1463
        %v3222 = vpop.f32.mrf.mxu0
        %v3223 = vadd.f32 0.0, %v3222
        %v3224 = vpop.f32.mrf.mxu0
        %3225 = vmatprep.mubr.f32.mxu0 0.0
        %3226 = vmatmul.mubr.f32.gmra.mxu0 %v1465
        %v3227 = vpop.f32.mrf.mxu0
        %v3228 = vadd.f32 0.0, %v3227
        %v3229 = vpop.f32.mrf.mxu0
        %3230 = vmatprep.mubr.f32.mxu0 0.0
        %3231 = vmatmul.mubr.f32.gmra.mxu0 %v1467
        %v3232 = vpop.f32.mrf.mxu0
        %v3233 = vadd.f32 0.0, %v3232
        %v3234 = vpop.f32.mrf.mxu0
        %3235 = vmatprep.mubr.f32.mxu0 0.0
        %3236 = vmatmul.mubr.f32.gmra.mxu0 %v1469
        %v3237 = vpop.f32.mrf.mxu0
        %v3238 = vadd.f32 0.0, %v3237
        %v3239 = vpop.f32.mrf.mxu0
        %3240 = vmatprep.mubr.f32.mxu0 0.0
        %3241 = vmatmul.mubr.f32.gmra.mxu0 %v1471
        %v3242 = vpop.f32.mrf.mxu0
        %v3243 = vadd.f32 0.0, %v3242
        %v3244 = vpop.f32.mrf.mxu0
        %3245 = vmatprep.mubr.f32.mxu0 0.0
        %3246 = vmatmul.mubr.f32.gmra.mxu0 %v1473
        %v3247 = vpop.f32.mrf.mxu0
        %v3248 = vadd.f32 0.0, %v3247
        %v3249 = vpop.f32.mrf.mxu0
        %3250 = vmatprep.mubr.f32.mxu0 0.0
        %3251 = vmatmul.mubr.f32.gmra.mxu0 %v1475
        %v3252 = vpop.f32.mrf.mxu0
        %v3253 = vadd.f32 0.0, %v3252
        %v3254 = vpop.f32.mrf.mxu0
        %3255 = vmatprep.mubr.f32.mxu0 0.0
        %3256 = vmatmul.mubr.f32.gmra.mxu0 %v1477
        %v3257 = vpop.f32.mrf.mxu0
        %v3258 = vadd.f32 0.0, %v3257
        %v3259 = vpop.f32.mrf.mxu0
        %3260 = vmatprep.mubr.f32.mxu0 0.0
        %3261 = vmatmul.mubr.f32.gmra.mxu0 %v1479
        %v3262 = vpop.f32.mrf.mxu0
        %v3263 = vadd.f32 0.0, %v3262
        %v3264 = vpop.f32.mrf.mxu0
        %3265 = vmatprep.mubr.f32.mxu0 0.0
        %3266 = vmatmul.mubr.f32.gmra.mxu0 %v1481
        %v3267 = vpop.f32.mrf.mxu0
        %v3268 = vadd.f32 0.0, %v3267
        %v3269 = vpop.f32.mrf.mxu0
        %3270 = vmatprep.mubr.f32.mxu0 0.0
        %3271 = vmatmul.mubr.f32.gmra.mxu0 %v1483
        %v3272 = vpop.f32.mrf.mxu0
        %v3273 = vadd.f32 0.0, %v3272
        %v3274 = vpop.f32.mrf.mxu0
        %3275 = vmatprep.mubr.f32.mxu0 0.0
        %3276 = vmatmul.mubr.f32.gmra.mxu0 %v1485
        %v3277 = vpop.f32.mrf.mxu0
        %v3278 = vadd.f32 0.0, %v3277
        %v3279 = vpop.f32.mrf.mxu0
        %3280 = vmatprep.mubr.f32.mxu0 0.0
        %3281 = vmatmul.mubr.f32.gmra.mxu0 %v1487
        %v3282 = vpop.f32.mrf.mxu0
        %v3283 = vadd.f32 0.0, %v3282
        %v3284 = vpop.f32.mrf.mxu0
        %3285 = vmatprep.mubr.f32.mxu0 0.0
        %3286 = vmatmul.mubr.f32.gmra.mxu0 %v1489
        %v3287 = vpop.f32.mrf.mxu0
        %v3288 = vadd.f32 0.0, %v3287
        %v3289 = vpop.f32.mrf.mxu0
        %3290 = vmatprep.mubr.f32.mxu0 0.0
        %3291 = vmatmul.mubr.f32.gmra.mxu0 %v1491
        %v3292 = vpop.f32.mrf.mxu0
        %v3293 = vadd.f32 0.0, %v3292
        %v3294 = vpop.f32.mrf.mxu0
        %3295 = vmatprep.mubr.f32.mxu0 0.0
        %3296 = vmatmul.mubr.f32.gmra.mxu0 %v1493
        %v3297 = vpop.f32.mrf.mxu0
        %v3298 = vadd.f32 0.0, %v3297
        %v3299 = vpop.f32.mrf.mxu0
        %3300 = vmatprep.mubr.f32.mxu0 0.0
        %3301 = vmatmul.mubr.f32.gmra.mxu0 %v1495
        %v3302 = vpop.f32.mrf.mxu0
        %v3303 = vadd.f32 0.0, %v3302
        %v3304 = vpop.f32.mrf.mxu0
        %3305 = vmatprep.mubr.f32.mxu0 0.0
        %3306 = vmatmul.mubr.f32.gmra.mxu0 %v1497
        %v3307 = vpop.f32.mrf.mxu0
        %v3308 = vadd.f32 0.0, %v3307
        %v3309 = vpop.f32.mrf.mxu0
        %3310 = vmatprep.mubr.f32.mxu0 0.0
        %3311 = vmatmul.mubr.f32.gmra.mxu0 %v1499
        %v3312 = vpop.f32.mrf.mxu0
        %v3313 = vadd.f32 0.0, %v3312
        %v3314 = vpop.f32.mrf.mxu0
        %3315 = vmatprep.mubr.f32.mxu0 0.0
        %3316 = vmatmul.mubr.f32.gmra.mxu0 %v1501
        %v3317 = vpop.f32.mrf.mxu0
        %v3318 = vadd.f32 0.0, %v3317
        %v3319 = vpop.f32.mrf.mxu0
        %3320 = vmatprep.mubr.f32.mxu0 0.0
        %3321 = vmatmul.mubr.f32.gmra.mxu0 %v1503
        %v3322 = vpop.f32.mrf.mxu0
        %v3323 = vadd.f32 0.0, %v3322
        %v3324 = vpop.f32.mrf.mxu0
        %3325 = vmatprep.mubr.f32.mxu0 0.0
        %3326 = vmatmul.mubr.f32.gmra.mxu0 %v1505
        %v3327 = vpop.f32.mrf.mxu0
        %v3328 = vadd.f32 0.0, %v3327
        %v3329 = vpop.f32.mrf.mxu0
        %3330 = vmatprep.mubr.f32.mxu0 0.0
        %3331 = vmatmul.mubr.f32.gmra.mxu0 %v1507
        %v3332 = vpop.f32.mrf.mxu0
        %v3333 = vadd.f32 0.0, %v3332
        %v3334 = vpop.f32.mrf.mxu0
        %3335 = vmatprep.mubr.f32.mxu0 0.0
        %3336 = vmatmul.mubr.f32.gmra.mxu0 %v1509
        %v3337 = vpop.f32.mrf.mxu0
        %v3338 = vadd.f32 0.0, %v3337
        %v3339 = vpop.f32.mrf.mxu0
        %3340 = vmatprep.mubr.f32.mxu0 0.0
        %3341 = vmatmul.mubr.f32.gmra.mxu0 %v2318
        %v3342 = vpop.f32.mrf.mxu0
        %v3343 = vadd.f32 0.0, %v3342
        %v3344 = vpop.f32.mrf.mxu0
        %3345 = vmatprep.mubr.f32.mxu0 0.0
        %3346 = vmatmul.mubr.f32.gmra.mxu0 %v2320
        %v3347 = vpop.f32.mrf.mxu0
        %v3348 = vadd.f32 0.0, %v3347
        %v3349 = vpop.f32.mrf.mxu0
        %3350 = vmatprep.mubr.f32.mxu0 0.0
        %3351 = vmatmul.mubr.f32.gmra.mxu0 %v3129
        %v3352 = vpop.f32.mrf.mxu0
        %v3353 = vadd.f32 0.0, %v3352
        %v3354 = vpop.f32.mrf.mxu0
        %3355 = vmatprep.mubr.f32.mxu0 0.0
        %3356 = vmatmul.mubr.f32.gmra.mxu0 %v3131
        %v3357 = vpop.f32.mrf.mxu0
        %v3358 = vadd.f32 0.0, %v3357
        %v3359 = vpop.f32.mrf.mxu0
        %3360 = vdwg.mxu0
        %v3361 = vadd.f32 %v3090, %v3203
        %v3362 = vadd.f32 %v3091, %v3208
        %v3363 = vadd.f32 %v3092, %v3213
        %v3364 = vadd.f32 %v3093, %v3218
        %v3365 = vadd.f32 %v3094, %v3223
        %v3366 = vadd.f32 %v3095, %v3228
        %v3367 = vadd.f32 %v3096, %v3233
        %v3368 = vadd.f32 %v3097, %v3238
        %v3369 = vadd.f32 %v3098, %v3243
        %v3370 = vadd.f32 %v3099, %v3248
        %v3371 = vadd.f32 %v3100, %v3253
        %v3372 = vadd.f32 %v3101, %v3258
        %v3373 = vadd.f32 %v3102, %v3263
        %v3374 = vadd.f32 %v3103, %v3268
        %v3375 = vadd.f32 %v3104, %v3273
        %v3376 = vadd.f32 %v3105, %v3278
        %v3377 = vadd.f32 %v3106, %v3283
        %v3378 = vadd.f32 %v3107, %v3288
        %v3379 = vadd.f32 %v3108, %v3293
        %v3380 = vadd.f32 %v3109, %v3298
        %v3381 = vadd.f32 %v3110, %v3303
        %v3382 = vadd.f32 %v3111, %v3308
        %v3383 = vadd.f32 %v3112, %v3313
        %v3384 = vadd.f32 %v3113, %v3318
        %v3385 = vadd.f32 %v3114, %v3323
        %v3386 = vadd.f32 %v3115, %v3328
        %v3387 = vadd.f32 %v3116, %v3333
        %v3388 = vadd.f32 %v3117, %v3338
        %v3389 = vadd.f32 %v3118, %v3343
        %v3390 = vadd.f32 %v3119, %v3348
        %v3391 = vadd.f32 %v3120, %v3353
        %v3392 = vadd.f32 %v3121, %v3358
        %vm3393 = vcmask 261120
        %v3394 = vsel %vm3393, %v3361, 0.0
        %v3395 = vsel %vm3393, %v3362, 0.0
        %v3396 = vadd.f32 %v3394, %v3395
        %v3397 = vsel %vm3393, %v3363, 0.0
        %v3398 = vadd.f32 %v3396, %v3397
        %v3399 = vsel %vm3393, %v3364, 0.0
        %v3400 = vadd.f32 %v3398, %v3399
        %v3401 = vsel %vm3393, %v3365, 0.0
        %v3402 = vadd.f32 %v3400, %v3401
        %v3403 = vsel %vm3393, %v3366, 0.0
        %v3404 = vadd.f32 %v3402, %v3403
        %v3405 = vsel %vm3393, %v3367, 0.0
        %v3406 = vadd.f32 %v3404, %v3405
        %v3407 = vsel %vm3393, %v3368, 0.0
        %v3408 = vadd.f32 %v3406, %v3407
        %v3409 = vsel %vm3393, %v3369, 0.0
        %v3410 = vadd.f32 %v3408, %v3409
        %v3411 = vsel %vm3393, %v3370, 0.0
        %v3412 = vadd.f32 %v3410, %v3411
        %v3413 = vsel %vm3393, %v3371, 0.0
        %v3414 = vadd.f32 %v3412, %v3413
        %v3415 = vsel %vm3393, %v3372, 0.0
        %v3416 = vadd.f32 %v3414, %v3415
        %v3417 = vsel %vm3393, %v3373, 0.0
        %v3418 = vadd.f32 %v3416, %v3417
        %v3419 = vsel %vm3393, %v3374, 0.0
        %v3420 = vadd.f32 %v3418, %v3419
        %v3421 = vsel %vm3393, %v3375, 0.0
        %v3422 = vadd.f32 %v3420, %v3421
        %v3423 = vsel %vm3393, %v3376, 0.0
        %v3424 = vadd.f32 %v3422, %v3423
        %v3425 = vsel %vm3393, %v3377, 0.0
        %v3426 = vadd.f32 %v3424, %v3425
        %v3427 = vsel %vm3393, %v3378, 0.0
        %v3428 = vadd.f32 %v3426, %v3427
        %v3429 = vsel %vm3393, %v3379, 0.0
        %v3430 = vadd.f32 %v3428, %v3429
        %v3431 = vsel %vm3393, %v3380, 0.0
        %v3432 = vadd.f32 %v3430, %v3431
        %v3433 = vsel %vm3393, %v3381, 0.0
        %v3434 = vadd.f32 %v3432, %v3433
        %v3435 = vsel %vm3393, %v3382, 0.0
        %v3436 = vadd.f32 %v3434, %v3435
        %v3437 = vsel %vm3393, %v3383, 0.0
        %v3438 = vadd.f32 %v3436, %v3437
        %v3439 = vsel %vm3393, %v3384, 0.0
        %v3440 = vadd.f32 %v3438, %v3439
        %v3441 = vsel %vm3393, %v3385, 0.0
        %v3442 = vadd.f32 %v3440, %v3441
        %v3443 = vsel %vm3393, %v3386, 0.0
        %v3444 = vadd.f32 %v3442, %v3443
        %v3445 = vsel %vm3393, %v3387, 0.0
        %v3446 = vadd.f32 %v3444, %v3445
        %v3447 = vsel %vm3393, %v3388, 0.0
        %v3448 = vadd.f32 %v3446, %v3447
        %v3449 = vsel %vm3393, %v3389, 0.0
        %v3450 = vadd.f32 %v3448, %v3449
        %v3451 = vsel %vm3393, %v3390, 0.0
        %v3452 = vadd.f32 %v3450, %v3451
        %v3453 = vsel %vm3393, %v3391, 0.0
        %v3454 = vadd.f32 %v3452, %v3453
        %v3455 = vsel %vm3393, %v3392, 0.0
        %v3456 = vadd.f32 %v3454, %v3455
        %v3457 = vrot.slane %v3456, 4
        %v3458 = vadd.f32 %v3456, %v3457
        %v3459 = vrot.slane %v3458, 2
        %v3460 = vadd.f32 %v3458, %v3459
        %v3461 = vrot.slane %v3460, 1
        %v3462 = vadd.f32 %v3460, %v3461
        %v3463 = vrcp.pop 256.0
        %v3464 = vmul.f32 %v3462, %v3463
        %v3465 = vsub.f32 %v3361, %v3464
        %v3466 = vsub.f32 %v3362, %v3464
        %v3467 = vsub.f32 %v3363, %v3464
        %v3468 = vsub.f32 %v3364, %v3464
        %v3469 = vsub.f32 %v3365, %v3464
        %v3470 = vsub.f32 %v3366, %v3464
        %v3471 = vsub.f32 %v3367, %v3464
        %v3472 = vsub.f32 %v3368, %v3464
        %v3473 = vsub.f32 %v3369, %v3464
        %v3474 = vsub.f32 %v3370, %v3464
        %v3475 = vsub.f32 %v3371, %v3464
        %v3476 = vsub.f32 %v3372, %v3464
        %v3477 = vsub.f32 %v3373, %v3464
        %v3478 = vsub.f32 %v3374, %v3464
        %v3479 = vsub.f32 %v3375, %v3464
        %v3480 = vsub.f32 %v3376, %v3464
        %v3481 = vsub.f32 %v3377, %v3464
        %v3482 = vsub.f32 %v3378, %v3464
        %v3483 = vsub.f32 %v3379, %v3464
        %v3484 = vsub.f32 %v3380, %v3464
        %v3485 = vsub.f32 %v3381, %v3464
        %v3486 = vsub.f32 %v3382, %v3464
        %v3487 = vsub.f32 %v3383, %v3464
        %v3488 = vsub.f32 %v3384, %v3464
        %v3489 = vsub.f32 %v3385, %v3464
        %v3490 = vsub.f32 %v3386, %v3464
        %v3491 = vsub.f32 %v3387, %v3464
        %v3492 = vsub.f32 %v3388, %v3464
        %v3493 = vsub.f32 %v3389, %v3464
        %v3494 = vsub.f32 %v3390, %v3464
        %v3495 = vsub.f32 %v3391, %v3464
        %v3496 = vsub.f32 %v3392, %v3464
        %v3497 = vmul.f32 %v3465, %v3465
        %v3498 = vmul.f32 %v3466, %v3466
        %v3499 = vmul.f32 %v3467, %v3467
        %v3500 = vmul.f32 %v3468, %v3468
        %v3501 = vmul.f32 %v3469, %v3469
        %v3502 = vmul.f32 %v3470, %v3470
        %v3503 = vmul.f32 %v3471, %v3471
        %v3504 = vmul.f32 %v3472, %v3472
        %v3505 = vmul.f32 %v3473, %v3473
        %v3506 = vmul.f32 %v3474, %v3474
        %v3507 = vmul.f32 %v3475, %v3475
        %v3508 = vmul.f32 %v3476, %v3476
        %v3509 = vmul.f32 %v3477, %v3477
        %v3510 = vmul.f32 %v3478, %v3478
        %v3511 = vmul.f32 %v3479, %v3479
        %v3512 = vmul.f32 %v3480, %v3480
        %v3513 = vmul.f32 %v3481, %v3481
        %v3514 = vmul.f32 %v3482, %v3482
        %v3515 = vmul.f32 %v3483, %v3483
        %v3516 = vmul.f32 %v3484, %v3484
        %v3517 = vmul.f32 %v3485, %v3485
        %v3518 = vmul.f32 %v3486, %v3486
        %v3519 = vmul.f32 %v3487, %v3487
        %v3520 = vmul.f32 %v3488, %v3488
        %v3521 = vmul.f32 %v3489, %v3489
        %v3522 = vmul.f32 %v3490, %v3490
        %v3523 = vmul.f32 %v3491, %v3491
        %v3524 = vmul.f32 %v3492, %v3492
        %v3525 = vmul.f32 %v3493, %v3493
        %v3526 = vmul.f32 %v3494, %v3494
        %v3527 = vmul.f32 %v3495, %v3495
        %v3528 = vmul.f32 %v3496, %v3496
        %v3529 = vsel %vm3393, %v3497, 0.0
        %v3530 = vsel %vm3393, %v3498, 0.0
        %v3531 = vadd.f32 %v3529, %v3530
        %v3532 = vsel %vm3393, %v3499, 0.0
        %v3533 = vadd.f32 %v3531, %v3532
        %v3534 = vsel %vm3393, %v3500, 0.0
        %v3535 = vadd.f32 %v3533, %v3534
        %v3536 = vsel %vm3393, %v3501, 0.0
        %v3537 = vadd.f32 %v3535, %v3536
        %v3538 = vsel %vm3393, %v3502, 0.0
        %v3539 = vadd.f32 %v3537, %v3538
        %v3540 = vsel %vm3393, %v3503, 0.0
        %v3541 = vadd.f32 %v3539, %v3540
        %v3542 = vsel %vm3393, %v3504, 0.0
        %v3543 = vadd.f32 %v3541, %v3542
        %v3544 = vsel %vm3393, %v3505, 0.0
        %v3545 = vadd.f32 %v3543, %v3544
        %v3546 = vsel %vm3393, %v3506, 0.0
        %v3547 = vadd.f32 %v3545, %v3546
        %v3548 = vsel %vm3393, %v3507, 0.0
        %v3549 = vadd.f32 %v3547, %v3548
        %v3550 = vsel %vm3393, %v3508, 0.0
        %v3551 = vadd.f32 %v3549, %v3550
        %v3552 = vsel %vm3393, %v3509, 0.0
        %v3553 = vadd.f32 %v3551, %v3552
        %v3554 = vsel %vm3393, %v3510, 0.0
        %v3555 = vadd.f32 %v3553, %v3554
        %v3556 = vsel %vm3393, %v3511, 0.0
        %v3557 = vadd.f32 %v3555, %v3556
        %v3558 = vsel %vm3393, %v3512, 0.0
        %v3559 = vadd.f32 %v3557, %v3558
        %v3560 = vsel %vm3393, %v3513, 0.0
        %v3561 = vadd.f32 %v3559, %v3560
        %v3562 = vsel %vm3393, %v3514, 0.0
        %v3563 = vadd.f32 %v3561, %v3562
        %v3564 = vsel %vm3393, %v3515, 0.0
        %v3565 = vadd.f32 %v3563, %v3564
        %v3566 = vsel %vm3393, %v3516, 0.0
        %v3567 = vadd.f32 %v3565, %v3566
        %v3568 = vsel %vm3393, %v3517, 0.0
        %v3569 = vadd.f32 %v3567, %v3568
        %v3570 = vsel %vm3393, %v3518, 0.0
        %v3571 = vadd.f32 %v3569, %v3570
        %v3572 = vsel %vm3393, %v3519, 0.0
        %v3573 = vadd.f32 %v3571, %v3572
        %v3574 = vsel %vm3393, %v3520, 0.0
        %v3575 = vadd.f32 %v3573, %v3574
        %v3576 = vsel %vm3393, %v3521, 0.0
        %v3577 = vadd.f32 %v3575, %v3576
        %v3578 = vsel %vm3393, %v3522, 0.0
        %v3579 = vadd.f32 %v3577, %v3578
        %v3580 = vsel %vm3393, %v3523, 0.0
        %v3581 = vadd.f32 %v3579, %v3580
        %v3582 = vsel %vm3393, %v3524, 0.0
        %v3583 = vadd.f32 %v3581, %v3582
        %v3584 = vsel %vm3393, %v3525, 0.0
        %v3585 = vadd.f32 %v3583, %v3584
        %v3586 = vsel %vm3393, %v3526, 0.0
        %v3587 = vadd.f32 %v3585, %v3586
        %v3588 = vsel %vm3393, %v3527, 0.0
        %v3589 = vadd.f32 %v3587, %v3588
        %v3590 = vsel %vm3393, %v3528, 0.0
        %v3591 = vadd.f32 %v3589, %v3590
        %v3592 = vrot.slane %v3591, 4
        %v3593 = vadd.f32 %v3591, %v3592
        %v3594 = vrot.slane %v3593, 2
        %v3595 = vadd.f32 %v3593, %v3594
        %v3596 = vrot.slane %v3595, 1
        %v3597 = vadd.f32 %v3595, %v3596
        %v3598 = vmul.f32 %v3597, %v3463
        %v3599 = vadd.f32 %v3598, 1e-05
        %v3600 = vrsqrt.pop %v3599
        %v3601 = vmul.f32 %v3465, %v3600
        %v3602 = vmul.f32 %v3466, %v3600
        %v3603 = vmul.f32 %v3467, %v3600
        %v3604 = vmul.f32 %v3468, %v3600
        %v3605 = vmul.f32 %v3469, %v3600
        %v3606 = vmul.f32 %v3470, %v3600
        %v3607 = vmul.f32 %v3471, %v3600
        %v3608 = vmul.f32 %v3472, %v3600
        %v3609 = vmul.f32 %v3473, %v3600
        %v3610 = vmul.f32 %v3474, %v3600
        %v3611 = vmul.f32 %v3475, %v3600
        %v3612 = vmul.f32 %v3476, %v3600
        %v3613 = vmul.f32 %v3477, %v3600
        %v3614 = vmul.f32 %v3478, %v3600
        %v3615 = vmul.f32 %v3479, %v3600
        %v3616 = vmul.f32 %v3480, %v3600
        %v3617 = vmul.f32 %v3481, %v3600
        %v3618 = vmul.f32 %v3482, %v3600
        %v3619 = vmul.f32 %v3483, %v3600
        %v3620 = vmul.f32 %v3484, %v3600
        %v3621 = vmul.f32 %v3485, %v3600
        %v3622 = vmul.f32 %v3486, %v3600
        %v3623 = vmul.f32 %v3487, %v3600
        %v3624 = vmul.f32 %v3488, %v3600
        %v3625 = vmul.f32 %v3489, %v3600
        %v3626 = vmul.f32 %v3490, %v3600
        %v3627 = vmul.f32 %v3491, %v3600
        %v3628 = vmul.f32 %v3492, %v3600
        %v3629 = vmul.f32 %v3493, %v3600
        %v3630 = vmul.f32 %v3494, %v3600
        %v3631 = vmul.f32 %v3495, %v3600
        %v3632 = vmul.f32 %v3496, %v3600
        %vm3633 = vcmp.ge.f32.partialorder %v3601, 0.0
        %vm3634 = vcmp.ge.f32.partialorder %v3602, 0.0
        %vm3635 = vcmp.ge.f32.partialorder %v3603, 0.0
        %vm3636 = vcmp.ge.f32.partialorder %v3604, 0.0
        %vm3637 = vcmp.ge.f32.partialorder %v3605, 0.0
        %vm3638 = vcmp.ge.f32.partialorder %v3606, 0.0
        %vm3639 = vcmp.ge.f32.partialorder %v3607, 0.0
        %vm3640 = vcmp.ge.f32.partialorder %v3608, 0.0
        %vm3641 = vcmp.ge.f32.partialorder %v3609, 0.0
        %vm3642 = vcmp.ge.f32.partialorder %v3610, 0.0
        %vm3643 = vcmp.ge.f32.partialorder %v3611, 0.0
        %vm3644 = vcmp.ge.f32.partialorder %v3612, 0.0
        %vm3645 = vcmp.ge.f32.partialorder %v3613, 0.0
        %vm3646 = vcmp.ge.f32.partialorder %v3614, 0.0
        %vm3647 = vcmp.ge.f32.partialorder %v3615, 0.0
        %vm3648 = vcmp.ge.f32.partialorder %v3616, 0.0
        %vm3649 = vcmp.ge.f32.partialorder %v3617, 0.0
        %vm3650 = vcmp.ge.f32.partialorder %v3618, 0.0
        %vm3651 = vcmp.ge.f32.partialorder %v3619, 0.0
        %vm3652 = vcmp.ge.f32.partialorder %v3620, 0.0
        %vm3653 = vcmp.ge.f32.partialorder %v3621, 0.0
        %vm3654 = vcmp.ge.f32.partialorder %v3622, 0.0
        %vm3655 = vcmp.ge.f32.partialorder %v3623, 0.0
        %vm3656 = vcmp.ge.f32.partialorder %v3624, 0.0
        %vm3657 = vcmp.ge.f32.partialorder %v3625, 0.0
        %vm3658 = vcmp.ge.f32.partialorder %v3626, 0.0
        %vm3659 = vcmp.ge.f32.partialorder %v3627, 0.0
        %vm3660 = vcmp.ge.f32.partialorder %v3628, 0.0
        %vm3661 = vcmp.ge.f32.partialorder %v3629, 0.0
        %vm3662 = vcmp.ge.f32.partialorder %v3630, 0.0
        %vm3663 = vcmp.ge.f32.partialorder %v3631, 0.0
        %vm3664 = vcmp.ge.f32.partialorder %v3632, 0.0
        %v3665 = vmul.f32 %v3601, 0.2
        %v3666 = vmul.f32 %v3602, 0.2
        %v3667 = vmul.f32 %v3603, 0.2
        %v3668 = vmul.f32 %v3604, 0.2
        %v3669 = vmul.f32 %v3605, 0.2
        %v3670 = vmul.f32 %v3606, 0.2
        %v3671 = vmul.f32 %v3607, 0.2
        %v3672 = vmul.f32 %v3608, 0.2
        %v3673 = vmul.f32 %v3609, 0.2
        %v3674 = vmul.f32 %v3610, 0.2
        %v3675 = vmul.f32 %v3611, 0.2
        %v3676 = vmul.f32 %v3612, 0.2
        %v3677 = vmul.f32 %v3613, 0.2
        %v3678 = vmul.f32 %v3614, 0.2
        %v3679 = vmul.f32 %v3615, 0.2
        %v3680 = vmul.f32 %v3616, 0.2
        %v3681 = vmul.f32 %v3617, 0.2
        %v3682 = vmul.f32 %v3618, 0.2
        %v3683 = vmul.f32 %v3619, 0.2
        %v3684 = vmul.f32 %v3620, 0.2
        %v3685 = vmul.f32 %v3621, 0.2
        %v3686 = vmul.f32 %v3622, 0.2
        %v3687 = vmul.f32 %v3623, 0.2
        %v3688 = vmul.f32 %v3624, 0.2
        %v3689 = vmul.f32 %v3625, 0.2
        %v3690 = vmul.f32 %v3626, 0.2
        %v3691 = vmul.f32 %v3627, 0.2
        %v3692 = vmul.f32 %v3628, 0.2
        %v3693 = vmul.f32 %v3629, 0.2
        %v3694 = vmul.f32 %v3630, 0.2
        %v3695 = vmul.f32 %v3631, 0.2
        %v3696 = vmul.f32 %v3632, 0.2
        %v3697 = vsel %vm3633, %v3601, %v3665
        %v3698 = vsel %vm3634, %v3602, %v3666
        %v3699 = vsel %vm3635, %v3603, %v3667
        %v3700 = vsel %vm3636, %v3604, %v3668
        %v3701 = vsel %vm3637, %v3605, %v3669
        %v3702 = vsel %vm3638, %v3606, %v3670
        %v3703 = vsel %vm3639, %v3607, %v3671
        %v3704 = vsel %vm3640, %v3608, %v3672
        %v3705 = vsel %vm3641, %v3609, %v3673
        %v3706 = vsel %vm3642, %v3610, %v3674
        %v3707 = vsel %vm3643, %v3611, %v3675
        %v3708 = vsel %vm3644, %v3612, %v3676
        %v3709 = vsel %vm3645, %v3613, %v3677
        %v3710 = vsel %vm3646, %v3614, %v3678
        %v3711 = vsel %vm3647, %v3615, %v3679
        %v3712 = vsel %vm3648, %v3616, %v3680
        %v3713 = vsel %vm3649, %v3617, %v3681
        %v3714 = vsel %vm3650, %v3618, %v3682
        %v3715 = vsel %vm3651, %v3619, %v3683
        %v3716 = vsel %vm3652, %v3620, %v3684
        %v3717 = vsel %vm3653, %v3621, %v3685
        %v3718 = vsel %vm3654, %v3622, %v3686
        %v3719 = vsel %vm3655, %v3623, %v3687
        %v3720 = vsel %vm3656, %v3624, %v3688
        %v3721 = vsel %vm3657, %v3625, %v3689
        %v3722 = vsel %vm3658, %v3626, %v3690
        %v3723 = vsel %vm3659, %v3627, %v3691
        %v3724 = vsel %vm3660, %v3628, %v3692
        %v3725 = vsel %vm3661, %v3629, %v3693
        %v3726 = vsel %vm3662, %v3630, %v3694
        %v3727 = vsel %vm3663, %v3631, %v3695
        %v3728 = vsel %vm3664, %v3632, %v3696
        %3729 = vst.msk [vmem:[#allocation3] sm:$0xff] %vm3393, 0.0
        %3730 = vst.msk [vmem:[#allocation3 + $0x8] sm:$0xff] %vm3393, 0.0
        %vm3731 = vcmask 254976
        %3732 = vst.msk [vmem:[#allocation3 + $0x10] sm:$0x3] %vm3731, 0.0
        %3733 = vst.msk [vmem:[#allocation3 + $0x18] sm:$0xff] %vm3393, 0.0
        %3734 = vst.msk [vmem:[#allocation3 + $0x20] sm:$0xff] %vm3393, 0.0
        %3735 = vst.msk [vmem:[#allocation3 + $0x28] sm:$0x3] %vm3731, 0.0
        %3736 = vst.msk [vmem:[#allocation3 + $0x30] sm:$0xff] %vm3393, 0.0
        %3737 = vst.msk [vmem:[#allocation3 + $0x38] sm:$0xff] %vm3393, 0.0
        %3738 = vst.msk [vmem:[#allocation3 + $0x40] sm:$0x3] %vm3731, 0.0
        %3739 = vst.msk [vmem:[#allocation3 + $0x48] sm:$0xff] %vm3393, 0.0
        %3740 = vst.msk [vmem:[#allocation3 + $0x50] sm:$0xff] %vm3393, 0.0
        %3741 = vst.msk [vmem:[#allocation3 + $0x58] sm:$0x3] %vm3731, 0.0
        %3742 = vst.msk [vmem:[#allocation3 + $0x60] sm:$0xff] %vm3393, 0.0
        %3743 = vst.msk [vmem:[#allocation3 + $0x68] sm:$0xff] %vm3393, 0.0
        %3744 = vst.msk [vmem:[#allocation3 + $0x70] sm:$0x3] %vm3731, 0.0
        %3745 = vst.msk [vmem:[#allocation3 + $0x78] sm:$0xff] %vm3393, 0.0
        %3746 = vst.msk [vmem:[#allocation3 + $0x80] sm:$0xff] %vm3393, 0.0
        %3747 = vst.msk [vmem:[#allocation3 + $0x88] sm:$0x3] %vm3731, 0.0
        %3748 = vst.msk [vmem:[#allocation3 + $0x90] sm:$0xff] %vm3393, 0.0
        %3749 = vst.msk [vmem:[#allocation3 + $0x98] sm:$0xff] %vm3393, 0.0
        %3750 = vst.msk [vmem:[#allocation3 + $0xa0] sm:$0x3] %vm3731, 0.0
        %3751 = vst.msk [vmem:[#allocation3 + $0xa8] sm:$0xff] %vm3393, 0.0
        %3752 = vst.msk [vmem:[#allocation3 + $0xb0] sm:$0xff] %vm3393, 0.0
        %3753 = vst.msk [vmem:[#allocation3 + $0xb8] sm:$0x3] %vm3731, 0.0
        %3754 = vst.msk [vmem:[#allocation3 + $0xc0] sm:$0xff] %vm3393, 0.0
        %3755 = vst.msk [vmem:[#allocation3 + $0xc8] sm:$0xff] %vm3393, 0.0
        %3756 = vst.msk [vmem:[#allocation3 + $0xd0] sm:$0x3] %vm3731, 0.0
        %3757 = vst.msk [vmem:[#allocation3 + $0xd8] sm:$0xff] %vm3393, 0.0
        %3758 = vst.msk [vmem:[#allocation3 + $0xe0] sm:$0xff] %vm3393, 0.0
        %3759 = vst.msk [vmem:[#allocation3 + $0xe8] sm:$0x3] %vm3731, 0.0
        %3760 = vst.msk [vmem:[#allocation3 + $0xf0] sm:$0xff] %vm3393, 0.0
        %3761 = vst.msk [vmem:[#allocation3 + $0xf8] sm:$0xff] %vm3393, 0.0
        %3762 = vst.msk [vmem:[#allocation3 + $0x100] sm:$0x3] %vm3731, 0.0
        %3763 = vst.msk [vmem:[#allocation3 + $0x108] sm:$0xff] %vm3393, 0.0
        %3764 = vst.msk [vmem:[#allocation3 + $0x110] sm:$0xff] %vm3393, 0.0
        %3765 = vst.msk [vmem:[#allocation3 + $0x118] sm:$0x3] %vm3731, 0.0
        %3766 = vst.msk [vmem:[#allocation3 + $0x120] sm:$0xff] %vm3393, 0.0
        %3767 = vst.msk [vmem:[#allocation3 + $0x128] sm:$0xff] %vm3393, 0.0
        %3768 = vst.msk [vmem:[#allocation3 + $0x130] sm:$0x3] %vm3731, 0.0
        %3769 = vst.msk [vmem:[#allocation3 + $0x138] sm:$0xff] %vm3393, 0.0
        %3770 = vst.msk [vmem:[#allocation3 + $0x140] sm:$0xff] %vm3393, 0.0
        %3771 = vst.msk [vmem:[#allocation3 + $0x148] sm:$0x3] %vm3731, 0.0
        %3772 = vst.msk [vmem:[#allocation3 + $0x150] sm:$0xff] %vm3393, 0.0
        %3773 = vst.msk [vmem:[#allocation3 + $0x158] sm:$0xff] %vm3393, 0.0
        %3774 = vst.msk [vmem:[#allocation3 + $0x160] sm:$0x3] %vm3731, 0.0
        %3775 = vst.msk [vmem:[#allocation3 + $0x168] sm:$0xff] %vm3393, 0.0
        %3776 = vst.msk [vmem:[#allocation3 + $0x170] sm:$0xff] %vm3393, 0.0
        %3777 = vst.msk [vmem:[#allocation3 + $0x178] sm:$0x3] %vm3731, 0.0
        %3778 = vst.msk [vmem:[#allocation3 + $0x180] sm:$0xff] %vm3393, 0.0
        %3779 = vst.msk [vmem:[#allocation3 + $0x188] sm:$0xff] %vm3393, 0.0
        %3780 = vst.msk [vmem:[#allocation3 + $0x190] sm:$0x3] %vm3731, 0.0
        %3781 = vst.msk [vmem:[#allocation3 + $0x198] sm:$0xff] %vm3393, 0.0
        %3782 = vst.msk [vmem:[#allocation3 + $0x1a0] sm:$0xff] %vm3393, 0.0
        %3783 = vst.msk [vmem:[#allocation3 + $0x1a8] sm:$0x3] %vm3731, 0.0
        %s3784 = scalar_lea.vmem [#allocation3], 24
        %3785 = vst.msk [vmem:[%s3784 + $0x1] sm:$0xff] %vm3393, %v3697
        %3786 = vst.msk [vmem:[%s3784 + $0x9] sm:$0xff] %vm3393, %v3698
        %3787 = vst.msk [vmem:[%s3784 + $0x19] sm:$0xff] %vm3393, %v3699
        %3788 = vst.msk [vmem:[%s3784 + $0x21] sm:$0xff] %vm3393, %v3700
        %3789 = vst.msk [vmem:[%s3784 + $0x31] sm:$0xff] %vm3393, %v3701
        %3790 = vst.msk [vmem:[%s3784 + $0x39] sm:$0xff] %vm3393, %v3702
        %3791 = vst.msk [vmem:[%s3784 + $0x49] sm:$0xff] %vm3393, %v3703
        %3792 = vst.msk [vmem:[%s3784 + $0x51] sm:$0xff] %vm3393, %v3704
        %3793 = vst.msk [vmem:[%s3784 + $0x61] sm:$0xff] %vm3393, %v3705
        %3794 = vst.msk [vmem:[%s3784 + $0x69] sm:$0xff] %vm3393, %v3706
        %3795 = vst.msk [vmem:[%s3784 + $0x79] sm:$0xff] %vm3393, %v3707
        %3796 = vst.msk [vmem:[%s3784 + $0x81] sm:$0xff] %vm3393, %v3708
        %3797 = vst.msk [vmem:[%s3784 + $0x91] sm:$0xff] %vm3393, %v3709
        %3798 = vst.msk [vmem:[%s3784 + $0x99] sm:$0xff] %vm3393, %v3710
        %3799 = vst.msk [vmem:[%s3784 + $0xa9] sm:$0xff] %vm3393, %v3711
        %3800 = vst.msk [vmem:[%s3784 + $0xb1] sm:$0xff] %vm3393, %v3712
        %3801 = vst.msk [vmem:[%s3784 + $0xc1] sm:$0xff] %vm3393, %v3713
        %3802 = vst.msk [vmem:[%s3784 + $0xc9] sm:$0xff] %vm3393, %v3714
        %3803 = vst.msk [vmem:[%s3784 + $0xd9] sm:$0xff] %vm3393, %v3715
        %3804 = vst.msk [vmem:[%s3784 + $0xe1] sm:$0xff] %vm3393, %v3716
        %3805 = vst.msk [vmem:[%s3784 + $0xf1] sm:$0xff] %vm3393, %v3717
        %3806 = vst.msk [vmem:[%s3784 + $0xf9] sm:$0xff] %vm3393, %v3718
        %3807 = vst.msk [vmem:[%s3784 + $0x109] sm:$0xff] %vm3393, %v3719
        %3808 = vst.msk [vmem:[%s3784 + $0x111] sm:$0xff] %vm3393, %v3720
        %3809 = vst.msk [vmem:[%s3784 + $0x121] sm:$0xff] %vm3393, %v3721
        %3810 = vst.msk [vmem:[%s3784 + $0x129] sm:$0xff] %vm3393, %v3722
        %3811 = vst.msk [vmem:[%s3784 + $0x139] sm:$0xff] %vm3393, %v3723
        %3812 = vst.msk [vmem:[%s3784 + $0x141] sm:$0xff] %vm3393, %v3724
        %3813 = vst.msk [vmem:[%s3784 + $0x151] sm:$0xff] %vm3393, %v3725
        %3814 = vst.msk [vmem:[%s3784 + $0x159] sm:$0xff] %vm3393, %v3726
        %3815 = vst.msk [vmem:[%s3784 + $0x169] sm:$0xff] %vm3393, %v3727
        %3816 = vst.msk [vmem:[%s3784 + $0x171] sm:$0xff] %vm3393, %v3728
        %v3817 = vld [vmem:[#allocation3] sm:$0xff]
        %v3818 = vld [vmem:[#allocation3 + $0x8] sm:$0xff]
        %v3819 = vld [vmem:[#allocation3 + $0x10] sm:$0x3]
        %v3820 = vld [vmem:[#allocation3 + $0x18] sm:$0xff]
        %v3821 = vld [vmem:[#allocation3 + $0x20] sm:$0xff]
        %v3822 = vld [vmem:[#allocation3 + $0x28] sm:$0x3]
        %v3823 = vld [vmem:[#allocation3 + $0x30] sm:$0xff]
        %v3824 = vld [vmem:[#allocation3 + $0x38] sm:$0xff]
        %v3825 = vld [vmem:[#allocation3 + $0x40] sm:$0x3]
        %v3826 = vld [vmem:[#allocation3 + $0x48] sm:$0xff]
        %v3827 = vld [vmem:[#allocation3 + $0x50] sm:$0xff]
        %v3828 = vld [vmem:[#allocation3 + $0x58] sm:$0x3]
        %v3829 = vld [vmem:[#allocation3 + $0x60] sm:$0xff]
        %v3830 = vld [vmem:[#allocation3 + $0x68] sm:$0xff]
        %v3831 = vld [vmem:[#allocation3 + $0x70] sm:$0x3]
        %v3832 = vld [vmem:[#allocation3 + $0x78] sm:$0xff]
        %v3833 = vld [vmem:[#allocation3 + $0x80] sm:$0xff]
        %v3834 = vld [vmem:[#allocation3 + $0x88] sm:$0x3]
        %v3835 = vld [vmem:[#allocation3 + $0x90] sm:$0xff]
        %v3836 = vld [vmem:[#allocation3 + $0x98] sm:$0xff]
        %v3837 = vld [vmem:[#allocation3 + $0xa0] sm:$0x3]
        %v3838 = vld [vmem:[#allocation3 + $0xa8] sm:$0xff]
        %v3839 = vld [vmem:[#allocation3 + $0xb0] sm:$0xff]
        %v3840 = vld [vmem:[#allocation3 + $0xb8] sm:$0x3]
        %v3841 = vld [vmem:[#allocation3 + $0xc0] sm:$0xff]
        %v3842 = vld [vmem:[#allocation3 + $0xc8] sm:$0xff]
        %v3843 = vld [vmem:[#allocation3 + $0xd0] sm:$0x3]
        %v3844 = vld [vmem:[#allocation3 + $0xd8] sm:$0xff]
        %v3845 = vld [vmem:[#allocation3 + $0xe0] sm:$0xff]
        %v3846 = vld [vmem:[#allocation3 + $0xe8] sm:$0x3]
        %v3847 = vld [vmem:[#allocation3 + $0xf0] sm:$0xff]
        %v3848 = vld [vmem:[#allocation3 + $0xf8] sm:$0xff]
        %v3849 = vld [vmem:[#allocation3 + $0x100] sm:$0x3]
        %v3850 = vld [vmem:[#allocation3 + $0x108] sm:$0xff]
        %v3851 = vld [vmem:[#allocation3 + $0x110] sm:$0xff]
        %v3852 = vld [vmem:[#allocation3 + $0x118] sm:$0x3]
        %v3853 = vld [vmem:[#allocation3 + $0x120] sm:$0xff]
        %v3854 = vld [vmem:[#allocation3 + $0x128] sm:$0xff]
        %v3855 = vld [vmem:[#allocation3 + $0x130] sm:$0x3]
        %v3856 = vld [vmem:[#allocation3 + $0x138] sm:$0xff]
        %v3857 = vld [vmem:[#allocation3 + $0x140] sm:$0xff]
        %v3858 = vld [vmem:[#allocation3 + $0x148] sm:$0x3]
        %v3859 = vld [vmem:[#allocation3 + $0x150] sm:$0xff]
        %v3860 = vld [vmem:[#allocation3 + $0x158] sm:$0xff]
        %v3861 = vld [vmem:[#allocation3 + $0x160] sm:$0x3]
        %v3862 = vld [vmem:[#allocation3 + $0x168] sm:$0xff]
        %v3863 = vld [vmem:[#allocation3 + $0x170] sm:$0xff]
        %v3864 = vld [vmem:[#allocation3 + $0x178] sm:$0x3]
        %v3865 = vld [vmem:[#allocation3 + $0x180] sm:$0xff]
        %v3866 = vld [vmem:[#allocation3 + $0x188] sm:$0xff]
        %v3867 = vld [vmem:[#allocation3 + $0x190] sm:$0x3]
        %v3868 = vld [vmem:[#allocation10] sm:$0xff]
        %v3869 = vld [vmem:[#allocation10 + $0x8] sm:$0xff]
        %v3870 = vld [vmem:[#allocation10 + $0x10] sm:$0xff]
        %v3871 = vld [vmem:[#allocation10 + $0x18] sm:$0xff]
        %v3896 = vrot.slane %v3817, 1
        %v3897 = vrot.slane %v3818, 1
        %v3898 = vsel %vm696, %v3896, %v3897
        %v3899 = vrot.slane %v3819, 1
        %v3900 = vsel %vm696, %v3897, %v3899
        %v3901 = vrot.slane %v3823, 1
        %v3902 = vrot.slane %v3824, 1
        %v3903 = vsel %vm696, %v3901, %v3902
        %v3904 = vrot.slane %v3825, 1
        %v3905 = vsel %vm696, %v3902, %v3904
        %v3906 = vrot.slane %v3829, 1
        %v3907 = vrot.slane %v3830, 1
        %v3908 = vsel %vm696, %v3906, %v3907
        %v3909 = vrot.slane %v3831, 1
        %v3910 = vsel %vm696, %v3907, %v3909
        %v3911 = vrot.slane %v3835, 1
        %v3912 = vrot.slane %v3836, 1
        %v3913 = vsel %vm696, %v3911, %v3912
        %v3914 = vrot.slane %v3837, 1
        %v3915 = vsel %vm696, %v3912, %v3914
        %v3916 = vrot.slane %v3841, 1
        %v3917 = vrot.slane %v3842, 1
        %v3918 = vsel %vm696, %v3916, %v3917
        %v3919 = vrot.slane %v3843, 1
        %v3920 = vsel %vm696, %v3917, %v3919
        %v3921 = vrot.slane %v3847, 1
        %v3922 = vrot.slane %v3848, 1
        %v3923 = vsel %vm696, %v3921, %v3922
        %v3924 = vrot.slane %v3849, 1
        %v3925 = vsel %vm696, %v3922, %v3924
        %v3926 = vrot.slane %v3853, 1
        %v3927 = vrot.slane %v3854, 1
        %v3928 = vsel %vm696, %v3926, %v3927
        %v3929 = vrot.slane %v3855, 1
        %v3930 = vsel %vm696, %v3927, %v3929
        %v3931 = vrot.slane %v3859, 1
        %v3932 = vrot.slane %v3860, 1
        %v3933 = vsel %vm696, %v3931, %v3932
        %v3934 = vrot.slane %v3861, 1
        %v3935 = vsel %vm696, %v3932, %v3934
        %s3936 = scalar_lea.vmem [#allocation10], 32
        %v3937 = vld [vmem:[%s3936] sm:$0xff]
        %v3938 = vld [vmem:[%s3936 + $0x8] sm:$0xff]
        %v3939 = vld [vmem:[%s3936 + $0x10] sm:$0xff]
        %v3940 = vld [vmem:[%s3936 + $0x18] sm:$0xff]
        %v3941 = vsel %vm3393, %v3898, 0
        %v3943 = vsel %vm3393, %v3900, 0
        %v3945 = vsel %vm3393, %v3903, 0
        %v3947 = vsel %vm3393, %v3905, 0
        %v3949 = vsel %vm3393, %v3908, 0
        %v3951 = vsel %vm3393, %v3910, 0
        %v3953 = vsel %vm3393, %v3913, 0
        %v3955 = vsel %vm3393, %v3915, 0
        %v3957 = vsel %vm3393, %v3918, 0
        %v3959 = vsel %vm3393, %v3920, 0
        %v3961 = vsel %vm3393, %v3923, 0
        %v3963 = vsel %vm3393, %v3925, 0
        %v3965 = vsel %vm3393, %v3928, 0
        %v3967 = vsel %vm3393, %v3930, 0
        %v3969 = vsel %vm3393, %v3933, 0
        %v3971 = vsel %vm3393, %v3935, 0
        %3973 = vmatprep.subr.mxu0 0.0
        %3974 = vmatpush1.msra.mxu0 0.0
        %3975 = vmatprep.subr.mxu0 0.0
        %3976 = vmatpush1.msra.mxu0 0.0
        %3977 = vmatprep.subr.mxu0 0.0
        %3978 = vmatpush1.msra.mxu0 0.0
        %3979 = vmatprep.subr.mxu0 0.0
        %3980 = vmatpush1.msra.mxu0 0.0
        %3981 = vmatprep.subr.mxu0 0.0
        %3982 = vmatpush1.msra.mxu0 0.0
        %3983 = vmatprep.subr.mxu0 0.0
        %3984 = vmatpush1.msra.mxu0 0.0
        %3985 = vmatprep.subr.mxu0 0.0
        %3986 = vmatpush1.msra.mxu0 0.0
        %3987 = vmatprep.subr.mxu0 0.0
        %3988 = vmatpush1.msra.mxu0 0.0
        %3989 = vmatprep.subr.mxu0 0.0
        %3990 = vmatpush1.msra.mxu0 0.0
        %3991 = vmatprep.subr.mxu0 0.0
        %3992 = vmatpush1.msra.mxu0 0.0
        %3993 = vmatprep.subr.mxu0 0.0
        %3994 = vmatpush1.msra.mxu0 0.0
        %3995 = vmatprep.subr.mxu0 0.0
        %3996 = vmatpush1.msra.mxu0 0.0
        %3997 = vmatprep.subr.mxu0 0.0
        %3998 = vmatpush1.msra.mxu0 %v3940
        %3999 = vmatprep.subr.mxu0 0.0
        %4000 = vmatpush1.msra.mxu0 %v3939
        %4001 = vmatprep.subr.mxu0 0.0
        %4002 = vmatpush1.msra.mxu0 %v3938
        %4003 = vmatprep.subr.mxu0 0.0
        %4004 = vmatpush1.msra.mxu0 %v3937
        %4005 = vmatprep.subr.mxu0 0.0
        %4006 = vmatpush2.msra.mxu0 0.0
        %4007 = vmatprep.subr.mxu0 0.0
        %4008 = vmatpush2.msra.mxu0 0.0
        %4009 = vmatprep.subr.mxu0 0.0
        %4010 = vmatpush2.msra.mxu0 0.0
        %4011 = vmatprep.subr.mxu0 0.0
        %4012 = vmatpush2.msra.mxu0 0.0
        %4013 = vmatprep.subr.mxu0 0.0
        %4014 = vmatpush2.msra.mxu0 0.0
        %4015 = vmatprep.subr.mxu0 0.0
        %4016 = vmatpush2.msra.mxu0 0.0
        %4017 = vmatprep.subr.mxu0 0.0
        %4018 = vmatpush2.msra.mxu0 0.0
        %4019 = vmatprep.subr.mxu0 0.0
        %4020 = vmatpush2.msra.mxu0 0.0
        %4021 = vmatprep.subr.mxu0 0.0
        %4022 = vmatpush2.msra.mxu0 0.0
        %4023 = vmatprep.subr.mxu0 0.0
        %4024 = vmatpush2.msra.mxu0 0.0
        %4025 = vmatprep.subr.mxu0 0.0
        %4026 = vmatpush2.msra.mxu0 0.0
        %4027 = vmatprep.subr.mxu0 0.0
        %4028 = vmatpush2.msra.mxu0 0.0
        %4029 = vmatprep.subr.mxu0 0.0
        %4030 = vmatpush2.msra.mxu0 0.0
        %4031 = vmatprep.subr.mxu0 0.0
        %4032 = vmatpush2.msra.mxu0 0.0
        %4033 = vmatprep.subr.mxu0 0.0
        %4034 = vmatpush2.msra.mxu0 0.0
        %4035 = vmatprep.subr.mxu0 0.0
        %4036 = vmatpush2.msra.mxu0 0.0
        %4037 = vmatprep.mubr.f32.mxu0 0.0
        %4038 = vmatmul.mubr.f32.gmra.mxu0 %v3941
        %v4039 = vpop.f32.mrf.mxu0
        %v4040 = vadd.f32 0.0, %v4039
        %v4041 = vpop.f32.mrf.mxu0
        %4042 = vmatprep.mubr.f32.mxu0 0.0
        %4043 = vmatmul.mubr.f32.gmra.mxu0 %v3943
        %v4044 = vpop.f32.mrf.mxu0
        %v4045 = vadd.f32 0.0, %v4044
        %v4046 = vpop.f32.mrf.mxu0
        %4047 = vmatprep.mubr.f32.mxu0 0.0
        %4048 = vmatmul.mubr.f32.gmra.mxu0 %v3945
        %v4049 = vpop.f32.mrf.mxu0
        %v4050 = vadd.f32 0.0, %v4049
        %v4051 = vpop.f32.mrf.mxu0
        %4052 = vmatprep.mubr.f32.mxu0 0.0
        %4053 = vmatmul.mubr.f32.gmra.mxu0 %v3947
        %v4054 = vpop.f32.mrf.mxu0
        %v4055 = vadd.f32 0.0, %v4054
        %v4056 = vpop.f32.mrf.mxu0
        %4057 = vmatprep.mubr.f32.mxu0 0.0
        %4058 = vmatmul.mubr.f32.gmra.mxu0 %v3949
        %v4059 = vpop.f32.mrf.mxu0
        %v4060 = vadd.f32 0.0, %v4059
        %v4061 = vpop.f32.mrf.mxu0
        %4062 = vmatprep.mubr.f32.mxu0 0.0
        %4063 = vmatmul.mubr.f32.gmra.mxu0 %v3951
        %v4064 = vpop.f32.mrf.mxu0
        %v4065 = vadd.f32 0.0, %v4064
        %v4066 = vpop.f32.mrf.mxu0
        %4067 = vmatprep.mubr.f32.mxu0 0.0
        %4068 = vmatmul.mubr.f32.gmra.mxu0 %v3953
        %v4069 = vpop.f32.mrf.mxu0
        %v4070 = vadd.f32 0.0, %v4069
        %v4071 = vpop.f32.mrf.mxu0
        %4072 = vmatprep.mubr.f32.mxu0 0.0
        %4073 = vmatmul.mubr.f32.gmra.mxu0 %v3955
        %v4074 = vpop.f32.mrf.mxu0
        %v4075 = vadd.f32 0.0, %v4074
        %v4076 = vpop.f32.mrf.mxu0
        %4077 = vmatprep.mubr.f32.mxu0 0.0
        %4078 = vmatmul.mubr.f32.gmra.mxu0 %v3957
        %v4079 = vpop.f32.mrf.mxu0
        %v4080 = vadd.f32 0.0, %v4079
        %v4081 = vpop.f32.mrf.mxu0
        %4082 = vmatprep.mubr.f32.mxu0 0.0
        %4083 = vmatmul.mubr.f32.gmra.mxu0 %v3959
        %v4084 = vpop.f32.mrf.mxu0
        %v4085 = vadd.f32 0.0, %v4084
        %v4086 = vpop.f32.mrf.mxu0
        %4087 = vmatprep.mubr.f32.mxu0 0.0
        %4088 = vmatmul.mubr.f32.gmra.mxu0 %v3961
        %v4089 = vpop.f32.mrf.mxu0
        %v4090 = vadd.f32 0.0, %v4089
        %v4091 = vpop.f32.mrf.mxu0
        %4092 = vmatprep.mubr.f32.mxu0 0.0
        %4093 = vmatmul.mubr.f32.gmra.mxu0 %v3963
        %v4094 = vpop.f32.mrf.mxu0
        %v4095 = vadd.f32 0.0, %v4094
        %v4096 = vpop.f32.mrf.mxu0
        %4097 = vmatprep.mubr.f32.mxu0 0.0
        %4098 = vmatmul.mubr.f32.gmra.mxu0 %v3965
        %v4099 = vpop.f32.mrf.mxu0
        %v4100 = vadd.f32 0.0, %v4099
        %v4101 = vpop.f32.mrf.mxu0
        %4102 = vmatprep.mubr.f32.mxu0 0.0
        %4103 = vmatmul.mubr.f32.gmra.mxu0 %v3967
        %v4104 = vpop.f32.mrf.mxu0
        %v4105 = vadd.f32 0.0, %v4104
        %v4106 = vpop.f32.mrf.mxu0
        %4107 = vmatprep.mubr.f32.mxu0 0.0
        %4108 = vmatmul.mubr.f32.gmra.mxu0 %v3969
        %v4109 = vpop.f32.mrf.mxu0
        %v4110 = vadd.f32 0.0, %v4109
        %v4111 = vpop.f32.mrf.mxu0
        %4112 = vmatprep.mubr.f32.mxu0 0.0
        %4113 = vmatmul.mubr.f32.gmra.mxu0 %v3971
        %v4114 = vpop.f32.mrf.mxu0
        %v4115 = vadd.f32 0.0, %v4114
        %v4116 = vpop.f32.mrf.mxu0
        %4117 = vdwg.mxu0
        %v4118 = vsel %vm3393, %v3817, 0
        %v4120 = vsel %vm3393, %v3818, 0
        %v4122 = vsel %vm3393, %v3823, 0
        %v4124 = vsel %vm3393, %v3824, 0
        %v4126 = vsel %vm3393, %v3829, 0
        %v4128 = vsel %vm3393, %v3830, 0
        %v4130 = vsel %vm3393, %v3835, 0
        %v4132 = vsel %vm3393, %v3836, 0
        %v4134 = vsel %vm3393, %v3841, 0
        %v4136 = vsel %vm3393, %v3842, 0
        %v4138 = vsel %vm3393, %v3847, 0
        %v4140 = vsel %vm3393, %v3848, 0
        %v4142 = vsel %vm3393, %v3853, 0
        %v4144 = vsel %vm3393, %v3854, 0
        %v4146 = vsel %vm3393, %v3859, 0
        %v4148 = vsel %vm3393, %v3860, 0
        %4150 = vmatprep.subr.mxu0 0.0
        %4151 = vmatpush1.msra.mxu0 0.0
        %4152 = vmatprep.subr.mxu0 0.0
        %4153 = vmatpush1.msra.mxu0 0.0
        %4154 = vmatprep.subr.mxu0 0.0
        %4155 = vmatpush1.msra.mxu0 0.0
        %4156 = vmatprep.subr.mxu0 0.0
        %4157 = vmatpush1.msra.mxu0 0.0
        %4158 = vmatprep.subr.mxu0 0.0
        %4159 = vmatpush1.msra.mxu0 0.0
        %4160 = vmatprep.subr.mxu0 0.0
        %4161 = vmatpush1.msra.mxu0 0.0
        %4162 = vmatprep.subr.mxu0 0.0
        %4163 = vmatpush1.msra.mxu0 0.0
        %4164 = vmatprep.subr.mxu0 0.0
        %4165 = vmatpush1.msra.mxu0 0.0
        %4166 = vmatprep.subr.mxu0 0.0
        %4167 = vmatpush1.msra.mxu0 0.0
        %4168 = vmatprep.subr.mxu0 0.0
        %4169 = vmatpush1.msra.mxu0 0.0
        %4170 = vmatprep.subr.mxu0 0.0
        %4171 = vmatpush1.msra.mxu0 0.0
        %4172 = vmatprep.subr.mxu0 0.0
        %4173 = vmatpush1.msra.mxu0 0.0
        %4174 = vmatprep.subr.mxu0 0.0
        %4175 = vmatpush1.msra.mxu0 %v3871
        %4176 = vmatprep.subr.mxu0 0.0
        %4177 = vmatpush1.msra.mxu0 %v3870
        %4178 = vmatprep.subr.mxu0 0.0
        %4179 = vmatpush1.msra.mxu0 %v3869
        %4180 = vmatprep.subr.mxu0 0.0
        %4181 = vmatpush1.msra.mxu0 %v3868
        %4182 = vmatprep.subr.mxu0 0.0
        %4183 = vmatpush2.msra.mxu0 0.0
        %4184 = vmatprep.subr.mxu0 0.0
        %4185 = vmatpush2.msra.mxu0 0.0
        %4186 = vmatprep.subr.mxu0 0.0
        %4187 = vmatpush2.msra.mxu0 0.0
        %4188 = vmatprep.subr.mxu0 0.0
        %4189 = vmatpush2.msra.mxu0 0.0
        %4190 = vmatprep.subr.mxu0 0.0
        %4191 = vmatpush2.msra.mxu0 0.0
        %4192 = vmatprep.subr.mxu0 0.0
        %4193 = vmatpush2.msra.mxu0 0.0
        %4194 = vmatprep.subr.mxu0 0.0
        %4195 = vmatpush2.msra.mxu0 0.0
        %4196 = vmatprep.subr.mxu0 0.0
        %4197 = vmatpush2.msra.mxu0 0.0
        %4198 = vmatprep.subr.mxu0 0.0
        %4199 = vmatpush2.msra.mxu0 0.0
        %4200 = vmatprep.subr.mxu0 0.0
        %4201 = vmatpush2.msra.mxu0 0.0
        %4202 = vmatprep.subr.mxu0 0.0
        %4203 = vmatpush2.msra.mxu0 0.0
        %4204 = vmatprep.subr.mxu0 0.0
        %4205 = vmatpush2.msra.mxu0 0.0
        %4206 = vmatprep.subr.mxu0 0.0
        %4207 = vmatpush2.msra.mxu0 0.0
        %4208 = vmatprep.subr.mxu0 0.0
        %4209 = vmatpush2.msra.mxu0 0.0
        %4210 = vmatprep.subr.mxu0 0.0
        %4211 = vmatpush2.msra.mxu0 0.0
        %4212 = vmatprep.subr.mxu0 0.0
        %4213 = vmatpush2.msra.mxu0 0.0
        %4214 = vmatprep.mubr.f32.mxu0 0.0
        %4215 = vmatmul.mubr.f32.gmra.mxu0 %v4118
        %v4216 = vpop.f32.mrf.mxu0
        %v4217 = vadd.f32 %v4040, %v4216
        %v4218 = vpop.f32.mrf.mxu0
        %4219 = vmatprep.mubr.f32.mxu0 0.0
        %4220 = vmatmul.mubr.f32.gmra.mxu0 %v4120
        %v4221 = vpop.f32.mrf.mxu0
        %v4222 = vadd.f32 %v4045, %v4221
        %v4223 = vpop.f32.mrf.mxu0
        %4224 = vmatprep.mubr.f32.mxu0 0.0
        %4225 = vmatmul.mubr.f32.gmra.mxu0 %v4122
        %v4226 = vpop.f32.mrf.mxu0
        %v4227 = vadd.f32 %v4050, %v4226
        %v4228 = vpop.f32.mrf.mxu0
        %4229 = vmatprep.mubr.f32.mxu0 0.0
        %4230 = vmatmul.mubr.f32.gmra.mxu0 %v4124
        %v4231 = vpop.f32.mrf.mxu0
        %v4232 = vadd.f32 %v4055, %v4231
        %v4233 = vpop.f32.mrf.mxu0
        %4234 = vmatprep.mubr.f32.mxu0 0.0
        %4235 = vmatmul.mubr.f32.gmra.mxu0 %v4126
        %v4236 = vpop.f32.mrf.mxu0
        %v4237 = vadd.f32 %v4060, %v4236
        %v4238 = vpop.f32.mrf.mxu0
        %4239 = vmatprep.mubr.f32.mxu0 0.0
        %4240 = vmatmul.mubr.f32.gmra.mxu0 %v4128
        %v4241 = vpop.f32.mrf.mxu0
        %v4242 = vadd.f32 %v4065, %v4241
        %v4243 = vpop.f32.mrf.mxu0
        %4244 = vmatprep.mubr.f32.mxu0 0.0
        %4245 = vmatmul.mubr.f32.gmra.mxu0 %v4130
        %v4246 = vpop.f32.mrf.mxu0
        %v4247 = vadd.f32 %v4070, %v4246
        %v4248 = vpop.f32.mrf.mxu0
        %4249 = vmatprep.mubr.f32.mxu0 0.0
        %4250 = vmatmul.mubr.f32.gmra.mxu0 %v4132
        %v4251 = vpop.f32.mrf.mxu0
        %v4252 = vadd.f32 %v4075, %v4251
        %v4253 = vpop.f32.mrf.mxu0
        %4254 = vmatprep.mubr.f32.mxu0 0.0
        %4255 = vmatmul.mubr.f32.gmra.mxu0 %v4134
        %v4256 = vpop.f32.mrf.mxu0
        %v4257 = vadd.f32 %v4080, %v4256
        %v4258 = vpop.f32.mrf.mxu0
        %4259 = vmatprep.mubr.f32.mxu0 0.0
        %4260 = vmatmul.mubr.f32.gmra.mxu0 %v4136
        %v4261 = vpop.f32.mrf.mxu0
        %v4262 = vadd.f32 %v4085, %v4261
        %v4263 = vpop.f32.mrf.mxu0
        %4264 = vmatprep.mubr.f32.mxu0 0.0
        %4265 = vmatmul.mubr.f32.gmra.mxu0 %v4138
        %v4266 = vpop.f32.mrf.mxu0
        %v4267 = vadd.f32 %v4090, %v4266
        %v4268 = vpop.f32.mrf.mxu0
        %4269 = vmatprep.mubr.f32.mxu0 0.0
        %4270 = vmatmul.mubr.f32.gmra.mxu0 %v4140
        %v4271 = vpop.f32.mrf.mxu0
        %v4272 = vadd.f32 %v4095, %v4271
        %v4273 = vpop.f32.mrf.mxu0
        %4274 = vmatprep.mubr.f32.mxu0 0.0
        %4275 = vmatmul.mubr.f32.gmra.mxu0 %v4142
        %v4276 = vpop.f32.mrf.mxu0
        %v4277 = vadd.f32 %v4100, %v4276
        %v4278 = vpop.f32.mrf.mxu0
        %4279 = vmatprep.mubr.f32.mxu0 0.0
        %4280 = vmatmul.mubr.f32.gmra.mxu0 %v4144
        %v4281 = vpop.f32.mrf.mxu0
        %v4282 = vadd.f32 %v4105, %v4281
        %v4283 = vpop.f32.mrf.mxu0
        %4284 = vmatprep.mubr.f32.mxu0 0.0
        %4285 = vmatmul.mubr.f32.gmra.mxu0 %v4146
        %v4286 = vpop.f32.mrf.mxu0
        %v4287 = vadd.f32 %v4110, %v4286
        %v4288 = vpop.f32.mrf.mxu0
        %4289 = vmatprep.mubr.f32.mxu0 0.0
        %4290 = vmatmul.mubr.f32.gmra.mxu0 %v4148
        %v4291 = vpop.f32.mrf.mxu0
        %v4292 = vadd.f32 %v4115, %v4291
        %v4293 = vpop.f32.mrf.mxu0
        %4294 = vdwg.mxu0
        %v4295 = vrot.slane %v3817, 2
        %v4296 = vrot.slane %v3818, 2
        %v4297 = vsel %vm1364, %v4295, %v4296
        %v4298 = vrot.slane %v3819, 2
        %v4299 = vsel %vm1364, %v4296, %v4298
        %v4300 = vrot.slane %v3823, 2
        %v4301 = vrot.slane %v3824, 2
        %v4302 = vsel %vm1364, %v4300, %v4301
        %v4303 = vrot.slane %v3825, 2
        %v4304 = vsel %vm1364, %v4301, %v4303
        %v4305 = vrot.slane %v3829, 2
        %v4306 = vrot.slane %v3830, 2
        %v4307 = vsel %vm1364, %v4305, %v4306
        %v4308 = vrot.slane %v3831, 2
        %v4309 = vsel %vm1364, %v4306, %v4308
        %v4310 = vrot.slane %v3835, 2
        %v4311 = vrot.slane %v3836, 2
        %v4312 = vsel %vm1364, %v4310, %v4311
        %v4313 = vrot.slane %v3837, 2
        %v4314 = vsel %vm1364, %v4311, %v4313
        %v4315 = vrot.slane %v3841, 2
        %v4316 = vrot.slane %v3842, 2
        %v4317 = vsel %vm1364, %v4315, %v4316
        %v4318 = vrot.slane %v3843, 2
        %v4319 = vsel %vm1364, %v4316, %v4318
        %v4320 = vrot.slane %v3847, 2
        %v4321 = vrot.slane %v3848, 2
        %v4322 = vsel %vm1364, %v4320, %v4321
        %v4323 = vrot.slane %v3849, 2
        %v4324 = vsel %vm1364, %v4321, %v4323
        %v4325 = vrot.slane %v3853, 2
        %v4326 = vrot.slane %v3854, 2
        %v4327 = vsel %vm1364, %v4325, %v4326
        %v4328 = vrot.slane %v3855, 2
        %v4329 = vsel %vm1364, %v4326, %v4328
        %v4330 = vrot.slane %v3859, 2
        %v4331 = vrot.slane %v3860, 2
        %v4332 = vsel %vm1364, %v4330, %v4331
        %v4333 = vrot.slane %v3861, 2
        %v4334 = vsel %vm1364, %v4331, %v4333
        %s4335 = scalar_lea.vmem [#allocation10], 64
        %v4336 = vld [vmem:[%s4335] sm:$0xff]
        %v4337 = vld [vmem:[%s4335 + $0x8] sm:$0xff]
        %v4338 = vld [vmem:[%s4335 + $0x10] sm:$0xff]
        %v4339 = vld [vmem:[%s4335 + $0x18] sm:$0xff]
        %v4340 = vsel %vm3393, %v4297, 0
        %v4342 = vsel %vm3393, %v4299, 0
        %v4344 = vsel %vm3393, %v4302, 0
        %v4346 = vsel %vm3393, %v4304, 0
        %v4348 = vsel %vm3393, %v4307, 0
        %v4350 = vsel %vm3393, %v4309, 0
        %v4352 = vsel %vm3393, %v4312, 0
        %v4354 = vsel %vm3393, %v4314, 0
        %v4356 = vsel %vm3393, %v4317, 0
        %v4358 = vsel %vm3393, %v4319, 0
        %v4360 = vsel %vm3393, %v4322, 0
        %v4362 = vsel %vm3393, %v4324, 0
        %v4364 = vsel %vm3393, %v4327, 0
        %v4366 = vsel %vm3393, %v4329, 0
        %v4368 = vsel %vm3393, %v4332, 0
        %v4370 = vsel %vm3393, %v4334, 0
        %4372 = vmatprep.subr.mxu0 0.0
        %4373 = vmatpush1.msra.mxu0 0.0
        %4374 = vmatprep.subr.mxu0 0.0
        %4375 = vmatpush1.msra.mxu0 0.0
        %4376 = vmatprep.subr.mxu0 0.0
        %4377 = vmatpush1.msra.mxu0 0.0
        %4378 = vmatprep.subr.mxu0 0.0
        %4379 = vmatpush1.msra.mxu0 0.0
        %4380 = vmatprep.subr.mxu0 0.0
        %4381 = vmatpush1.msra.mxu0 0.0
        %4382 = vmatprep.subr.mxu0 0.0
        %4383 = vmatpush1.msra.mxu0 0.0
        %4384 = vmatprep.subr.mxu0 0.0
        %4385 = vmatpush1.msra.mxu0 0.0
        %4386 = vmatprep.subr.mxu0 0.0
        %4387 = vmatpush1.msra.mxu0 0.0
        %4388 = vmatprep.subr.mxu0 0.0
        %4389 = vmatpush1.msra.mxu0 0.0
        %4390 = vmatprep.subr.mxu0 0.0
        %4391 = vmatpush1.msra.mxu0 0.0
        %4392 = vmatprep.subr.mxu0 0.0
        %4393 = vmatpush1.msra.mxu0 0.0
        %4394 = vmatprep.subr.mxu0 0.0
        %4395 = vmatpush1.msra.mxu0 0.0
        %4396 = vmatprep.subr.mxu0 0.0
        %4397 = vmatpush1.msra.mxu0 %v4339
        %4398 = vmatprep.subr.mxu0 0.0
        %4399 = vmatpush1.msra.mxu0 %v4338
        %4400 = vmatprep.subr.mxu0 0.0
        %4401 = vmatpush1.msra.mxu0 %v4337
        %4402 = vmatprep.subr.mxu0 0.0
        %4403 = vmatpush1.msra.mxu0 %v4336
        %4404 = vmatprep.subr.mxu0 0.0
        %4405 = vmatpush2.msra.mxu0 0.0
        %4406 = vmatprep.subr.mxu0 0.0
        %4407 = vmatpush2.msra.mxu0 0.0
        %4408 = vmatprep.subr.mxu0 0.0
        %4409 = vmatpush2.msra.mxu0 0.0
        %4410 = vmatprep.subr.mxu0 0.0
        %4411 = vmatpush2.msra.mxu0 0.0
        %4412 = vmatprep.subr.mxu0 0.0
        %4413 = vmatpush2.msra.mxu0 0.0
        %4414 = vmatprep.subr.mxu0 0.0
        %4415 = vmatpush2.msra.mxu0 0.0
        %4416 = vmatprep.subr.mxu0 0.0
        %4417 = vmatpush2.msra.mxu0 0.0
        %4418 = vmatprep.subr.mxu0 0.0
        %4419 = vmatpush2.msra.mxu0 0.0
        %4420 = vmatprep.subr.mxu0 0.0
        %4421 = vmatpush2.msra.mxu0 0.0
        %4422 = vmatprep.subr.mxu0 0.0
        %4423 = vmatpush2.msra.mxu0 0.0
        %4424 = vmatprep.subr.mxu0 0.0
        %4425 = vmatpush2.msra.mxu0 0.0
        %4426 = vmatprep.subr.mxu0 0.0
        %4427 = vmatpush2.msra.mxu0 0.0
        %4428 = vmatprep.subr.mxu0 0.0
        %4429 = vmatpush2.msra.mxu0 0.0
        %4430 = vmatprep.subr.mxu0 0.0
        %4431 = vmatpush2.msra.mxu0 0.0
        %4432 = vmatprep.subr.mxu0 0.0
        %4433 = vmatpush2.msra.mxu0 0.0
        %4434 = vmatprep.subr.mxu0 0.0
        %4435 = vmatpush2.msra.mxu0 0.0
        %4436 = vmatprep.mubr.f32.mxu0 0.0
        %4437 = vmatmul.mubr.f32.gmra.mxu0 %v4340
        %v4438 = vpop.f32.mrf.mxu0
        %v4439 = vadd.f32 0.0, %v4438
        %v4440 = vpop.f32.mrf.mxu0
        %4441 = vmatprep.mubr.f32.mxu0 0.0
        %4442 = vmatmul.mubr.f32.gmra.mxu0 %v4342
        %v4443 = vpop.f32.mrf.mxu0
        %v4444 = vadd.f32 0.0, %v4443
        %v4445 = vpop.f32.mrf.mxu0
        %4446 = vmatprep.mubr.f32.mxu0 0.0
        %4447 = vmatmul.mubr.f32.gmra.mxu0 %v4344
        %v4448 = vpop.f32.mrf.mxu0
        %v4449 = vadd.f32 0.0, %v4448
        %v4450 = vpop.f32.mrf.mxu0
        %4451 = vmatprep.mubr.f32.mxu0 0.0
        %4452 = vmatmul.mubr.f32.gmra.mxu0 %v4346
        %v4453 = vpop.f32.mrf.mxu0
        %v4454 = vadd.f32 0.0, %v4453
        %v4455 = vpop.f32.mrf.mxu0
        %4456 = vmatprep.mubr.f32.mxu0 0.0
        %4457 = vmatmul.mubr.f32.gmra.mxu0 %v4348
        %v4458 = vpop.f32.mrf.mxu0
        %v4459 = vadd.f32 0.0, %v4458
        %v4460 = vpop.f32.mrf.mxu0
        %4461 = vmatprep.mubr.f32.mxu0 0.0
        %4462 = vmatmul.mubr.f32.gmra.mxu0 %v4350
        %v4463 = vpop.f32.mrf.mxu0
        %v4464 = vadd.f32 0.0, %v4463
        %v4465 = vpop.f32.mrf.mxu0
        %4466 = vmatprep.mubr.f32.mxu0 0.0
        %4467 = vmatmul.mubr.f32.gmra.mxu0 %v4352
        %v4468 = vpop.f32.mrf.mxu0
        %v4469 = vadd.f32 0.0, %v4468
        %v4470 = vpop.f32.mrf.mxu0
        %4471 = vmatprep.mubr.f32.mxu0 0.0
        %4472 = vmatmul.mubr.f32.gmra.mxu0 %v4354
        %v4473 = vpop.f32.mrf.mxu0
        %v4474 = vadd.f32 0.0, %v4473
        %v4475 = vpop.f32.mrf.mxu0
        %4476 = vmatprep.mubr.f32.mxu0 0.0
        %4477 = vmatmul.mubr.f32.gmra.mxu0 %v4356
        %v4478 = vpop.f32.mrf.mxu0
        %v4479 = vadd.f32 0.0, %v4478
        %v4480 = vpop.f32.mrf.mxu0
        %4481 = vmatprep.mubr.f32.mxu0 0.0
        %4482 = vmatmul.mubr.f32.gmra.mxu0 %v4358
        %v4483 = vpop.f32.mrf.mxu0
        %v4484 = vadd.f32 0.0, %v4483
        %v4485 = vpop.f32.mrf.mxu0
        %4486 = vmatprep.mubr.f32.mxu0 0.0
        %4487 = vmatmul.mubr.f32.gmra.mxu0 %v4360
        %v4488 = vpop.f32.mrf.mxu0
        %v4489 = vadd.f32 0.0, %v4488
        %v4490 = vpop.f32.mrf.mxu0
        %4491 = vmatprep.mubr.f32.mxu0 0.0
        %4492 = vmatmul.mubr.f32.gmra.mxu0 %v4362
        %v4493 = vpop.f32.mrf.mxu0
        %v4494 = vadd.f32 0.0, %v4493
        %v4495 = vpop.f32.mrf.mxu0
        %4496 = vmatprep.mubr.f32.mxu0 0.0
        %4497 = vmatmul.mubr.f32.gmra.mxu0 %v4364
        %v4498 = vpop.f32.mrf.mxu0
        %v4499 = vadd.f32 0.0, %v4498
        %v4500 = vpop.f32.mrf.mxu0
        %4501 = vmatprep.mubr.f32.mxu0 0.0
        %4502 = vmatmul.mubr.f32.gmra.mxu0 %v4366
        %v4503 = vpop.f32.mrf.mxu0
        %v4504 = vadd.f32 0.0, %v4503
        %v4505 = vpop.f32.mrf.mxu0
        %4506 = vmatprep.mubr.f32.mxu0 0.0
        %4507 = vmatmul.mubr.f32.gmra.mxu0 %v4368
        %v4508 = vpop.f32.mrf.mxu0
        %v4509 = vadd.f32 0.0, %v4508
        %v4510 = vpop.f32.mrf.mxu0
        %4511 = vmatprep.mubr.f32.mxu0 0.0
        %4512 = vmatmul.mubr.f32.gmra.mxu0 %v4370
        %v4513 = vpop.f32.mrf.mxu0
        %v4514 = vadd.f32 0.0, %v4513
        %v4515 = vpop.f32.mrf.mxu0
        %4516 = vdwg.mxu0
        %v4517 = vadd.f32 %v4217, %v4439
        %v4518 = vadd.f32 %v4222, %v4444
        %v4519 = vadd.f32 %v4227, %v4449
        %v4520 = vadd.f32 %v4232, %v4454
        %v4521 = vadd.f32 %v4237, %v4459
        %v4522 = vadd.f32 %v4242, %v4464
        %v4523 = vadd.f32 %v4247, %v4469
        %v4524 = vadd.f32 %v4252, %v4474
        %v4525 = vadd.f32 %v4257, %v4479
        %v4526 = vadd.f32 %v4262, %v4484
        %v4527 = vadd.f32 %v4267, %v4489
        %v4528 = vadd.f32 %v4272, %v4494
        %v4529 = vadd.f32 %v4277, %v4499
        %v4530 = vadd.f32 %v4282, %v4504
        %v4531 = vadd.f32 %v4287, %v4509
        %v4532 = vadd.f32 %v4292, %v4514
        %s4533 = scalar_lea.vmem [#allocation10], 96
        %v4534 = vld [vmem:[%s4533] sm:$0xff]
        %v4535 = vld [vmem:[%s4533 + $0x8] sm:$0xff]
        %v4536 = vld [vmem:[%s4533 + $0x10] sm:$0xff]
        %v4537 = vld [vmem:[%s4533 + $0x18] sm:$0xff]
        %v4539 = vsel %vm3393, %v3820, 0
        %v4542 = vsel %vm3393, %v3821, 0
        %v4545 = vsel %vm3393, %v3826, 0
        %v4548 = vsel %vm3393, %v3827, 0
        %v4551 = vsel %vm3393, %v3832, 0
        %v4554 = vsel %vm3393, %v3833, 0
        %v4557 = vsel %vm3393, %v3838, 0
        %v4560 = vsel %vm3393, %v3839, 0
        %v4563 = vsel %vm3393, %v3844, 0
        %v4566 = vsel %vm3393, %v3845, 0
        %v4569 = vsel %vm3393, %v3850, 0
        %v4572 = vsel %vm3393, %v3851, 0
        %v4575 = vsel %vm3393, %v3856, 0
        %v4578 = vsel %vm3393, %v3857, 0
        %v4581 = vsel %vm3393, %v3862, 0
        %v4584 = vsel %vm3393, %v3863, 0
        %4586 = vmatprep.subr.mxu0 0.0
        %4587 = vmatpush1.msra.mxu0 0.0
        %4588 = vmatprep.subr.mxu0 0.0
        %4589 = vmatpush1.msra.mxu0 0.0
        %4590 = vmatprep.subr.mxu0 0.0
        %4591 = vmatpush1.msra.mxu0 0.0
        %4592 = vmatprep.subr.mxu0 0.0
        %4593 = vmatpush1.msra.mxu0 0.0
        %4594 = vmatprep.subr.mxu0 0.0
        %4595 = vmatpush1.msra.mxu0 0.0
        %4596 = vmatprep.subr.mxu0 0.0
        %4597 = vmatpush1.msra.mxu0 0.0
        %4598 = vmatprep.subr.mxu0 0.0
        %4599 = vmatpush1.msra.mxu0 0.0
        %4600 = vmatprep.subr.mxu0 0.0
        %4601 = vmatpush1.msra.mxu0 0.0
        %4602 = vmatprep.subr.mxu0 0.0
        %4603 = vmatpush1.msra.mxu0 0.0
        %4604 = vmatprep.subr.mxu0 0.0
        %4605 = vmatpush1.msra.mxu0 0.0
        %4606 = vmatprep.subr.mxu0 0.0
        %4607 = vmatpush1.msra.mxu0 0.0
        %4608 = vmatprep.subr.mxu0 0.0
        %4609 = vmatpush1.msra.mxu0 0.0
        %4610 = vmatprep.subr.mxu0 0.0
        %4611 = vmatpush1.msra.mxu0 %v4537
        %4612 = vmatprep.subr.mxu0 0.0
        %4613 = vmatpush1.msra.mxu0 %v4536
        %4614 = vmatprep.subr.mxu0 0.0
        %4615 = vmatpush1.msra.mxu0 %v4535
        %4616 = vmatprep.subr.mxu0 0.0
        %4617 = vmatpush1.msra.mxu0 %v4534
        %4618 = vmatprep.subr.mxu0 0.0
        %4619 = vmatpush2.msra.mxu0 0.0
        %4620 = vmatprep.subr.mxu0 0.0
        %4621 = vmatpush2.msra.mxu0 0.0
        %4622 = vmatprep.subr.mxu0 0.0
        %4623 = vmatpush2.msra.mxu0 0.0
        %4624 = vmatprep.subr.mxu0 0.0
        %4625 = vmatpush2.msra.mxu0 0.0
        %4626 = vmatprep.subr.mxu0 0.0
        %4627 = vmatpush2.msra.mxu0 0.0
        %4628 = vmatprep.subr.mxu0 0.0
        %4629 = vmatpush2.msra.mxu0 0.0
        %4630 = vmatprep.subr.mxu0 0.0
        %4631 = vmatpush2.msra.mxu0 0.0
        %4632 = vmatprep.subr.mxu0 0.0
        %4633 = vmatpush2.msra.mxu0 0.0
        %4634 = vmatprep.subr.mxu0 0.0
        %4635 = vmatpush2.msra.mxu0 0.0
        %4636 = vmatprep.subr.mxu0 0.0
        %4637 = vmatpush2.msra.mxu0 0.0
        %4638 = vmatprep.subr.mxu0 0.0
        %4639 = vmatpush2.msra.mxu0 0.0
        %4640 = vmatprep.subr.mxu0 0.0
        %4641 = vmatpush2.msra.mxu0 0.0
        %4642 = vmatprep.subr.mxu0 0.0
        %4643 = vmatpush2.msra.mxu0 0.0
        %4644 = vmatprep.subr.mxu0 0.0
        %4645 = vmatpush2.msra.mxu0 0.0
        %4646 = vmatprep.subr.mxu0 0.0
        %4647 = vmatpush2.msra.mxu0 0.0
        %4648 = vmatprep.subr.mxu0 0.0
        %4649 = vmatpush2.msra.mxu0 0.0
        %4650 = vmatprep.mubr.f32.mxu0 0.0
        %4651 = vmatmul.mubr.f32.gmra.mxu0 %v4539
        %v4652 = vpop.f32.mrf.mxu0
        %v4653 = vadd.f32 0.0, %v4652
        %v4654 = vpop.f32.mrf.mxu0
        %4655 = vmatprep.mubr.f32.mxu0 0.0
        %4656 = vmatmul.mubr.f32.gmra.mxu0 %v4542
        %v4657 = vpop.f32.mrf.mxu0
        %v4658 = vadd.f32 0.0, %v4657
        %v4659 = vpop.f32.mrf.mxu0
        %4660 = vmatprep.mubr.f32.mxu0 0.0
        %4661 = vmatmul.mubr.f32.gmra.mxu0 %v4545
        %v4662 = vpop.f32.mrf.mxu0
        %v4663 = vadd.f32 0.0, %v4662
        %v4664 = vpop.f32.mrf.mxu0
        %4665 = vmatprep.mubr.f32.mxu0 0.0
        %4666 = vmatmul.mubr.f32.gmra.mxu0 %v4548
        %v4667 = vpop.f32.mrf.mxu0
        %v4668 = vadd.f32 0.0, %v4667
        %v4669 = vpop.f32.mrf.mxu0
        %4670 = vmatprep.mubr.f32.mxu0 0.0
        %4671 = vmatmul.mubr.f32.gmra.mxu0 %v4551
        %v4672 = vpop.f32.mrf.mxu0
        %v4673 = vadd.f32 0.0, %v4672
        %v4674 = vpop.f32.mrf.mxu0
        %4675 = vmatprep.mubr.f32.mxu0 0.0
        %4676 = vmatmul.mubr.f32.gmra.mxu0 %v4554
        %v4677 = vpop.f32.mrf.mxu0
        %v4678 = vadd.f32 0.0, %v4677
        %v4679 = vpop.f32.mrf.mxu0
        %4680 = vmatprep.mubr.f32.mxu0 0.0
        %4681 = vmatmul.mubr.f32.gmra.mxu0 %v4557
        %v4682 = vpop.f32.mrf.mxu0
        %v4683 = vadd.f32 0.0, %v4682
        %v4684 = vpop.f32.mrf.mxu0
        %4685 = vmatprep.mubr.f32.mxu0 0.0
        %4686 = vmatmul.mubr.f32.gmra.mxu0 %v4560
        %v4687 = vpop.f32.mrf.mxu0
        %v4688 = vadd.f32 0.0, %v4687
        %v4689 = vpop.f32.mrf.mxu0
        %4690 = vmatprep.mubr.f32.mxu0 0.0
        %4691 = vmatmul.mubr.f32.gmra.mxu0 %v4563
        %v4692 = vpop.f32.mrf.mxu0
        %v4693 = vadd.f32 0.0, %v4692
        %v4694 = vpop.f32.mrf.mxu0
        %4695 = vmatprep.mubr.f32.mxu0 0.0
        %4696 = vmatmul.mubr.f32.gmra.mxu0 %v4566
        %v4697 = vpop.f32.mrf.mxu0
        %v4698 = vadd.f32 0.0, %v4697
        %v4699 = vpop.f32.mrf.mxu0
        %4700 = vmatprep.mubr.f32.mxu0 0.0
        %4701 = vmatmul.mubr.f32.gmra.mxu0 %v4569
        %v4702 = vpop.f32.mrf.mxu0
        %v4703 = vadd.f32 0.0, %v4702
        %v4704 = vpop.f32.mrf.mxu0
        %4705 = vmatprep.mubr.f32.mxu0 0.0
        %4706 = vmatmul.mubr.f32.gmra.mxu0 %v4572
        %v4707 = vpop.f32.mrf.mxu0
        %v4708 = vadd.f32 0.0, %v4707
        %v4709 = vpop.f32.mrf.mxu0
        %4710 = vmatprep.mubr.f32.mxu0 0.0
        %4711 = vmatmul.mubr.f32.gmra.mxu0 %v4575
        %v4712 = vpop.f32.mrf.mxu0
        %v4713 = vadd.f32 0.0, %v4712
        %v4714 = vpop.f32.mrf.mxu0
        %4715 = vmatprep.mubr.f32.mxu0 0.0
        %4716 = vmatmul.mubr.f32.gmra.mxu0 %v4578
        %v4717 = vpop.f32.mrf.mxu0
        %v4718 = vadd.f32 0.0, %v4717
        %v4719 = vpop.f32.mrf.mxu0
        %4720 = vmatprep.mubr.f32.mxu0 0.0
        %4721 = vmatmul.mubr.f32.gmra.mxu0 %v4581
        %v4722 = vpop.f32.mrf.mxu0
        %v4723 = vadd.f32 0.0, %v4722
        %v4724 = vpop.f32.mrf.mxu0
        %4725 = vmatprep.mubr.f32.mxu0 0.0
        %4726 = vmatmul.mubr.f32.gmra.mxu0 %v4584
        %v4727 = vpop.f32.mrf.mxu0
        %v4728 = vadd.f32 0.0, %v4727
        %v4729 = vpop.f32.mrf.mxu0
        %4730 = vdwg.mxu0
        %v4731 = vadd.f32 %v4517, %v4653
        %v4732 = vadd.f32 %v4518, %v4658
        %v4733 = vadd.f32 %v4519, %v4663
        %v4734 = vadd.f32 %v4520, %v4668
        %v4735 = vadd.f32 %v4521, %v4673
        %v4736 = vadd.f32 %v4522, %v4678
        %v4737 = vadd.f32 %v4523, %v4683
        %v4738 = vadd.f32 %v4524, %v4688
        %v4739 = vadd.f32 %v4525, %v4693
        %v4740 = vadd.f32 %v4526, %v4698
        %v4741 = vadd.f32 %v4527, %v4703
        %v4742 = vadd.f32 %v4528, %v4708
        %v4743 = vadd.f32 %v4529, %v4713
        %v4744 = vadd.f32 %v4530, %v4718
        %v4745 = vadd.f32 %v4531, %v4723
        %v4746 = vadd.f32 %v4532, %v4728
        %v4755 = vrot.slane %v3820, 1
        %v4756 = vrot.slane %v3821, 1
        %v4757 = vsel %vm696, %v4755, %v4756
        %v4758 = vrot.slane %v3822, 1
        %v4759 = vsel %vm696, %v4756, %v4758
        %v4760 = vrot.slane %v3826, 1
        %v4761 = vrot.slane %v3827, 1
        %v4762 = vsel %vm696, %v4760, %v4761
        %v4763 = vrot.slane %v3828, 1
        %v4764 = vsel %vm696, %v4761, %v4763
        %v4765 = vrot.slane %v3832, 1
        %v4766 = vrot.slane %v3833, 1
        %v4767 = vsel %vm696, %v4765, %v4766
        %v4768 = vrot.slane %v3834, 1
        %v4769 = vsel %vm696, %v4766, %v4768
        %v4770 = vrot.slane %v3838, 1
        %v4771 = vrot.slane %v3839, 1
        %v4772 = vsel %vm696, %v4770, %v4771
        %v4773 = vrot.slane %v3840, 1
        %v4774 = vsel %vm696, %v4771, %v4773
        %v4775 = vrot.slane %v3844, 1
        %v4776 = vrot.slane %v3845, 1
        %v4777 = vsel %vm696, %v4775, %v4776
        %v4778 = vrot.slane %v3846, 1
        %v4779 = vsel %vm696, %v4776, %v4778
        %v4780 = vrot.slane %v3850, 1
        %v4781 = vrot.slane %v3851, 1
        %v4782 = vsel %vm696, %v4780, %v4781
        %v4783 = vrot.slane %v3852, 1
        %v4784 = vsel %vm696, %v4781, %v4783
        %v4785 = vrot.slane %v3856, 1
        %v4786 = vrot.slane %v3857, 1
        %v4787 = vsel %vm696, %v4785, %v4786
        %v4788 = vrot.slane %v3858, 1
        %v4789 = vsel %vm696, %v4786, %v4788
        %v4790 = vrot.slane %v3862, 1
        %v4791 = vrot.slane %v3863, 1
        %v4792 = vsel %vm696, %v4790, %v4791
        %v4793 = vrot.slane %v3864, 1
        %v4794 = vsel %vm696, %v4791, %v4793
        %s4795 = scalar_lea.vmem [#allocation10], 128
        %v4796 = vld [vmem:[%s4795] sm:$0xff]
        %v4797 = vld [vmem:[%s4795 + $0x8] sm:$0xff]
        %v4798 = vld [vmem:[%s4795 + $0x10] sm:$0xff]
        %v4799 = vld [vmem:[%s4795 + $0x18] sm:$0xff]
        %v4800 = vsel %vm3393, %v4757, 0
        %v4802 = vsel %vm3393, %v4759, 0
        %v4804 = vsel %vm3393, %v4762, 0
        %v4806 = vsel %vm3393, %v4764, 0
        %v4808 = vsel %vm3393, %v4767, 0
        %v4810 = vsel %vm3393, %v4769, 0
        %v4812 = vsel %vm3393, %v4772, 0
        %v4814 = vsel %vm3393, %v4774, 0
        %v4816 = vsel %vm3393, %v4777, 0
        %v4818 = vsel %vm3393, %v4779, 0
        %v4820 = vsel %vm3393, %v4782, 0
        %v4822 = vsel %vm3393, %v4784, 0
        %v4824 = vsel %vm3393, %v4787, 0
        %v4826 = vsel %vm3393, %v4789, 0
        %v4828 = vsel %vm3393, %v4792, 0
        %v4830 = vsel %vm3393, %v4794, 0
        %4832 = vmatprep.subr.mxu0 0.0
        %4833 = vmatpush1.msra.mxu0 0.0
        %4834 = vmatprep.subr.mxu0 0.0
        %4835 = vmatpush1.msra.mxu0 0.0
        %4836 = vmatprep.subr.mxu0 0.0
        %4837 = vmatpush1.msra.mxu0 0.0
        %4838 = vmatprep.subr.mxu0 0.0
        %4839 = vmatpush1.msra.mxu0 0.0
        %4840 = vmatprep.subr.mxu0 0.0
        %4841 = vmatpush1.msra.mxu0 0.0
        %4842 = vmatprep.subr.mxu0 0.0
        %4843 = vmatpush1.msra.mxu0 0.0
        %4844 = vmatprep.subr.mxu0 0.0
        %4845 = vmatpush1.msra.mxu0 0.0
        %4846 = vmatprep.subr.mxu0 0.0
        %4847 = vmatpush1.msra.mxu0 0.0
        %4848 = vmatprep.subr.mxu0 0.0
        %4849 = vmatpush1.msra.mxu0 0.0
        %4850 = vmatprep.subr.mxu0 0.0
        %4851 = vmatpush1.msra.mxu0 0.0
        %4852 = vmatprep.subr.mxu0 0.0
        %4853 = vmatpush1.msra.mxu0 0.0
        %4854 = vmatprep.subr.mxu0 0.0
        %4855 = vmatpush1.msra.mxu0 0.0
        %4856 = vmatprep.subr.mxu0 0.0
        %4857 = vmatpush1.msra.mxu0 %v4799
        %4858 = vmatprep.subr.mxu0 0.0
        %4859 = vmatpush1.msra.mxu0 %v4798
        %4860 = vmatprep.subr.mxu0 0.0
        %4861 = vmatpush1.msra.mxu0 %v4797
        %4862 = vmatprep.subr.mxu0 0.0
        %4863 = vmatpush1.msra.mxu0 %v4796
        %4864 = vmatprep.subr.mxu0 0.0
        %4865 = vmatpush2.msra.mxu0 0.0
        %4866 = vmatprep.subr.mxu0 0.0
        %4867 = vmatpush2.msra.mxu0 0.0
        %4868 = vmatprep.subr.mxu0 0.0
        %4869 = vmatpush2.msra.mxu0 0.0
        %4870 = vmatprep.subr.mxu0 0.0
        %4871 = vmatpush2.msra.mxu0 0.0
        %4872 = vmatprep.subr.mxu0 0.0
        %4873 = vmatpush2.msra.mxu0 0.0
        %4874 = vmatprep.subr.mxu0 0.0
        %4875 = vmatpush2.msra.mxu0 0.0
        %4876 = vmatprep.subr.mxu0 0.0
        %4877 = vmatpush2.msra.mxu0 0.0
        %4878 = vmatprep.subr.mxu0 0.0
        %4879 = vmatpush2.msra.mxu0 0.0
        %4880 = vmatprep.subr.mxu0 0.0
        %4881 = vmatpush2.msra.mxu0 0.0
        %4882 = vmatprep.subr.mxu0 0.0
        %4883 = vmatpush2.msra.mxu0 0.0
        %4884 = vmatprep.subr.mxu0 0.0
        %4885 = vmatpush2.msra.mxu0 0.0
        %4886 = vmatprep.subr.mxu0 0.0
        %4887 = vmatpush2.msra.mxu0 0.0
        %4888 = vmatprep.subr.mxu0 0.0
        %4889 = vmatpush2.msra.mxu0 0.0
        %4890 = vmatprep.subr.mxu0 0.0
        %4891 = vmatpush2.msra.mxu0 0.0
        %4892 = vmatprep.subr.mxu0 0.0
        %4893 = vmatpush2.msra.mxu0 0.0
        %4894 = vmatprep.subr.mxu0 0.0
        %4895 = vmatpush2.msra.mxu0 0.0
        %4896 = vmatprep.mubr.f32.mxu0 0.0
        %4897 = vmatmul.mubr.f32.gmra.mxu0 %v4800
        %v4898 = vpop.f32.mrf.mxu0
        %v4899 = vadd.f32 0.0, %v4898
        %v4900 = vpop.f32.mrf.mxu0
        %4901 = vmatprep.mubr.f32.mxu0 0.0
        %4902 = vmatmul.mubr.f32.gmra.mxu0 %v4802
        %v4903 = vpop.f32.mrf.mxu0
        %v4904 = vadd.f32 0.0, %v4903
        %v4905 = vpop.f32.mrf.mxu0
        %4906 = vmatprep.mubr.f32.mxu0 0.0
        %4907 = vmatmul.mubr.f32.gmra.mxu0 %v4804
        %v4908 = vpop.f32.mrf.mxu0
        %v4909 = vadd.f32 0.0, %v4908
        %v4910 = vpop.f32.mrf.mxu0
        %4911 = vmatprep.mubr.f32.mxu0 0.0
        %4912 = vmatmul.mubr.f32.gmra.mxu0 %v4806
        %v4913 = vpop.f32.mrf.mxu0
        %v4914 = vadd.f32 0.0, %v4913
        %v4915 = vpop.f32.mrf.mxu0
        %4916 = vmatprep.mubr.f32.mxu0 0.0
        %4917 = vmatmul.mubr.f32.gmra.mxu0 %v4808
        %v4918 = vpop.f32.mrf.mxu0
        %v4919 = vadd.f32 0.0, %v4918
        %v4920 = vpop.f32.mrf.mxu0
        %4921 = vmatprep.mubr.f32.mxu0 0.0
        %4922 = vmatmul.mubr.f32.gmra.mxu0 %v4810
        %v4923 = vpop.f32.mrf.mxu0
        %v4924 = vadd.f32 0.0, %v4923
        %v4925 = vpop.f32.mrf.mxu0
        %4926 = vmatprep.mubr.f32.mxu0 0.0
        %4927 = vmatmul.mubr.f32.gmra.mxu0 %v4812
        %v4928 = vpop.f32.mrf.mxu0
        %v4929 = vadd.f32 0.0, %v4928
        %v4930 = vpop.f32.mrf.mxu0
        %4931 = vmatprep.mubr.f32.mxu0 0.0
        %4932 = vmatmul.mubr.f32.gmra.mxu0 %v4814
        %v4933 = vpop.f32.mrf.mxu0
        %v4934 = vadd.f32 0.0, %v4933
        %v4935 = vpop.f32.mrf.mxu0
        %4936 = vmatprep.mubr.f32.mxu0 0.0
        %4937 = vmatmul.mubr.f32.gmra.mxu0 %v4816
        %v4938 = vpop.f32.mrf.mxu0
        %v4939 = vadd.f32 0.0, %v4938
        %v4940 = vpop.f32.mrf.mxu0
        %4941 = vmatprep.mubr.f32.mxu0 0.0
        %4942 = vmatmul.mubr.f32.gmra.mxu0 %v4818
        %v4943 = vpop.f32.mrf.mxu0
        %v4944 = vadd.f32 0.0, %v4943
        %v4945 = vpop.f32.mrf.mxu0
        %4946 = vmatprep.mubr.f32.mxu0 0.0
        %4947 = vmatmul.mubr.f32.gmra.mxu0 %v4820
        %v4948 = vpop.f32.mrf.mxu0
        %v4949 = vadd.f32 0.0, %v4948
        %v4950 = vpop.f32.mrf.mxu0
        %4951 = vmatprep.mubr.f32.mxu0 0.0
        %4952 = vmatmul.mubr.f32.gmra.mxu0 %v4822
        %v4953 = vpop.f32.mrf.mxu0
        %v4954 = vadd.f32 0.0, %v4953
        %v4955 = vpop.f32.mrf.mxu0
        %4956 = vmatprep.mubr.f32.mxu0 0.0
        %4957 = vmatmul.mubr.f32.gmra.mxu0 %v4824
        %v4958 = vpop.f32.mrf.mxu0
        %v4959 = vadd.f32 0.0, %v4958
        %v4960 = vpop.f32.mrf.mxu0
        %4961 = vmatprep.mubr.f32.mxu0 0.0
        %4962 = vmatmul.mubr.f32.gmra.mxu0 %v4826
        %v4963 = vpop.f32.mrf.mxu0
        %v4964 = vadd.f32 0.0, %v4963
        %v4965 = vpop.f32.mrf.mxu0
        %4966 = vmatprep.mubr.f32.mxu0 0.0
        %4967 = vmatmul.mubr.f32.gmra.mxu0 %v4828
        %v4968 = vpop.f32.mrf.mxu0
        %v4969 = vadd.f32 0.0, %v4968
        %v4970 = vpop.f32.mrf.mxu0
        %4971 = vmatprep.mubr.f32.mxu0 0.0
        %4972 = vmatmul.mubr.f32.gmra.mxu0 %v4830
        %v4973 = vpop.f32.mrf.mxu0
        %v4974 = vadd.f32 0.0, %v4973
        %v4975 = vpop.f32.mrf.mxu0
        %4976 = vdwg.mxu0
        %v4977 = vadd.f32 %v4731, %v4899
        %v4978 = vadd.f32 %v4732, %v4904
        %v4979 = vadd.f32 %v4733, %v4909
        %v4980 = vadd.f32 %v4734, %v4914
        %v4981 = vadd.f32 %v4735, %v4919
        %v4982 = vadd.f32 %v4736, %v4924
        %v4983 = vadd.f32 %v4737, %v4929
        %v4984 = vadd.f32 %v4738, %v4934
        %v4985 = vadd.f32 %v4739, %v4939
        %v4986 = vadd.f32 %v4740, %v4944
        %v4987 = vadd.f32 %v4741, %v4949
        %v4988 = vadd.f32 %v4742, %v4954
        %v4989 = vadd.f32 %v4743, %v4959
        %v4990 = vadd.f32 %v4744, %v4964
        %v4991 = vadd.f32 %v4745, %v4969
        %v4992 = vadd.f32 %v4746, %v4974
        %v4993 = vrot.slane %v3820, 2
        %v4994 = vrot.slane %v3821, 2
        %v4995 = vsel %vm1364, %v4993, %v4994
        %v4996 = vrot.slane %v3822, 2
        %v4997 = vsel %vm1364, %v4994, %v4996
        %v4998 = vrot.slane %v3826, 2
        %v4999 = vrot.slane %v3827, 2
        %v5000 = vsel %vm1364, %v4998, %v4999
        %v5001 = vrot.slane %v3828, 2
        %v5002 = vsel %vm1364, %v4999, %v5001
        %v5003 = vrot.slane %v3832, 2
        %v5004 = vrot.slane %v3833, 2
        %v5005 = vsel %vm1364, %v5003, %v5004
        %v5006 = vrot.slane %v3834, 2
        %v5007 = vsel %vm1364, %v5004, %v5006
        %v5008 = vrot.slane %v3838, 2
        %v5009 = vrot.slane %v3839, 2
        %v5010 = vsel %vm1364, %v5008, %v5009
        %v5011 = vrot.slane %v3840, 2
        %v5012 = vsel %vm1364, %v5009, %v5011
        %v5013 = vrot.slane %v3844, 2
        %v5014 = vrot.slane %v3845, 2
        %v5015 = vsel %vm1364, %v5013, %v5014
        %v5016 = vrot.slane %v3846, 2
        %v5017 = vsel %vm1364, %v5014, %v5016
        %v5018 = vrot.slane %v3850, 2
        %v5019 = vrot.slane %v3851, 2
        %v5020 = vsel %vm1364, %v5018, %v5019
        %v5021 = vrot.slane %v3852, 2
        %v5022 = vsel %vm1364, %v5019, %v5021
        %v5023 = vrot.slane %v3856, 2
        %v5024 = vrot.slane %v3857, 2
        %v5025 = vsel %vm1364, %v5023, %v5024
        %v5026 = vrot.slane %v3858, 2
        %v5027 = vsel %vm1364, %v5024, %v5026
        %v5028 = vrot.slane %v3862, 2
        %v5029 = vrot.slane %v3863, 2
        %v5030 = vsel %vm1364, %v5028, %v5029
        %v5031 = vrot.slane %v3864, 2
        %v5032 = vsel %vm1364, %v5029, %v5031
        %s5033 = scalar_lea.vmem [#allocation10], 160
        %v5034 = vld [vmem:[%s5033] sm:$0xff]
        %v5035 = vld [vmem:[%s5033 + $0x8] sm:$0xff]
        %v5036 = vld [vmem:[%s5033 + $0x10] sm:$0xff]
        %v5037 = vld [vmem:[%s5033 + $0x18] sm:$0xff]
        %v5038 = vsel %vm3393, %v4995, 0
        %v5040 = vsel %vm3393, %v4997, 0
        %v5042 = vsel %vm3393, %v5000, 0
        %v5044 = vsel %vm3393, %v5002, 0
        %v5046 = vsel %vm3393, %v5005, 0
        %v5048 = vsel %vm3393, %v5007, 0
        %v5050 = vsel %vm3393, %v5010, 0
        %v5052 = vsel %vm3393, %v5012, 0
        %v5054 = vsel %vm3393, %v5015, 0
        %v5056 = vsel %vm3393, %v5017, 0
        %v5058 = vsel %vm3393, %v5020, 0
        %v5060 = vsel %vm3393, %v5022, 0
        %v5062 = vsel %vm3393, %v5025, 0
        %v5064 = vsel %vm3393, %v5027, 0
        %v5066 = vsel %vm3393, %v5030, 0
        %v5068 = vsel %vm3393, %v5032, 0
        %5070 = vmatprep.subr.mxu0 0.0
        %5071 = vmatpush1.msra.mxu0 0.0
        %5072 = vmatprep.subr.mxu0 0.0
        %5073 = vmatpush1.msra.mxu0 0.0
        %5074 = vmatprep.subr.mxu0 0.0
        %5075 = vmatpush1.msra.mxu0 0.0
        %5076 = vmatprep.subr.mxu0 0.0
        %5077 = vmatpush1.msra.mxu0 0.0
        %5078 = vmatprep.subr.mxu0 0.0
        %5079 = vmatpush1.msra.mxu0 0.0
        %5080 = vmatprep.subr.mxu0 0.0
        %5081 = vmatpush1.msra.mxu0 0.0
        %5082 = vmatprep.subr.mxu0 0.0
        %5083 = vmatpush1.msra.mxu0 0.0
        %5084 = vmatprep.subr.mxu0 0.0
        %5085 = vmatpush1.msra.mxu0 0.0
        %5086 = vmatprep.subr.mxu0 0.0
        %5087 = vmatpush1.msra.mxu0 0.0
        %5088 = vmatprep.subr.mxu0 0.0
        %5089 = vmatpush1.msra.mxu0 0.0
        %5090 = vmatprep.subr.mxu0 0.0
        %5091 = vmatpush1.msra.mxu0 0.0
        %5092 = vmatprep.subr.mxu0 0.0
        %5093 = vmatpush1.msra.mxu0 0.0
        %5094 = vmatprep.subr.mxu0 0.0
        %5095 = vmatpush1.msra.mxu0 %v5037
        %5096 = vmatprep.subr.mxu0 0.0
        %5097 = vmatpush1.msra.mxu0 %v5036
        %5098 = vmatprep.subr.mxu0 0.0
        %5099 = vmatpush1.msra.mxu0 %v5035
        %5100 = vmatprep.subr.mxu0 0.0
        %5101 = vmatpush1.msra.mxu0 %v5034
        %5102 = vmatprep.subr.mxu0 0.0
        %5103 = vmatpush2.msra.mxu0 0.0
        %5104 = vmatprep.subr.mxu0 0.0
        %5105 = vmatpush2.msra.mxu0 0.0
        %5106 = vmatprep.subr.mxu0 0.0
        %5107 = vmatpush2.msra.mxu0 0.0
        %5108 = vmatprep.subr.mxu0 0.0
        %5109 = vmatpush2.msra.mxu0 0.0
        %5110 = vmatprep.subr.mxu0 0.0
        %5111 = vmatpush2.msra.mxu0 0.0
        %5112 = vmatprep.subr.mxu0 0.0
        %5113 = vmatpush2.msra.mxu0 0.0
        %5114 = vmatprep.subr.mxu0 0.0
        %5115 = vmatpush2.msra.mxu0 0.0
        %5116 = vmatprep.subr.mxu0 0.0
        %5117 = vmatpush2.msra.mxu0 0.0
        %5118 = vmatprep.subr.mxu0 0.0
        %5119 = vmatpush2.msra.mxu0 0.0
        %5120 = vmatprep.subr.mxu0 0.0
        %5121 = vmatpush2.msra.mxu0 0.0
        %5122 = vmatprep.subr.mxu0 0.0
        %5123 = vmatpush2.msra.mxu0 0.0
        %5124 = vmatprep.subr.mxu0 0.0
        %5125 = vmatpush2.msra.mxu0 0.0
        %5126 = vmatprep.subr.mxu0 0.0
        %5127 = vmatpush2.msra.mxu0 0.0
        %5128 = vmatprep.subr.mxu0 0.0
        %5129 = vmatpush2.msra.mxu0 0.0
        %5130 = vmatprep.subr.mxu0 0.0
        %5131 = vmatpush2.msra.mxu0 0.0
        %5132 = vmatprep.subr.mxu0 0.0
        %5133 = vmatpush2.msra.mxu0 0.0
        %5134 = vmatprep.mubr.f32.mxu0 0.0
        %5135 = vmatmul.mubr.f32.gmra.mxu0 %v5038
        %v5136 = vpop.f32.mrf.mxu0
        %v5137 = vadd.f32 0.0, %v5136
        %v5138 = vpop.f32.mrf.mxu0
        %5139 = vmatprep.mubr.f32.mxu0 0.0
        %5140 = vmatmul.mubr.f32.gmra.mxu0 %v5040
        %v5141 = vpop.f32.mrf.mxu0
        %v5142 = vadd.f32 0.0, %v5141
        %v5143 = vpop.f32.mrf.mxu0
        %5144 = vmatprep.mubr.f32.mxu0 0.0
        %5145 = vmatmul.mubr.f32.gmra.mxu0 %v5042
        %v5146 = vpop.f32.mrf.mxu0
        %v5147 = vadd.f32 0.0, %v5146
        %v5148 = vpop.f32.mrf.mxu0
        %5149 = vmatprep.mubr.f32.mxu0 0.0
        %5150 = vmatmul.mubr.f32.gmra.mxu0 %v5044
        %v5151 = vpop.f32.mrf.mxu0
        %v5152 = vadd.f32 0.0, %v5151
        %v5153 = vpop.f32.mrf.mxu0
        %5154 = vmatprep.mubr.f32.mxu0 0.0
        %5155 = vmatmul.mubr.f32.gmra.mxu0 %v5046
        %v5156 = vpop.f32.mrf.mxu0
        %v5157 = vadd.f32 0.0, %v5156
        %v5158 = vpop.f32.mrf.mxu0
        %5159 = vmatprep.mubr.f32.mxu0 0.0
        %5160 = vmatmul.mubr.f32.gmra.mxu0 %v5048
        %v5161 = vpop.f32.mrf.mxu0
        %v5162 = vadd.f32 0.0, %v5161
        %v5163 = vpop.f32.mrf.mxu0
        %5164 = vmatprep.mubr.f32.mxu0 0.0
        %5165 = vmatmul.mubr.f32.gmra.mxu0 %v5050
        %v5166 = vpop.f32.mrf.mxu0
        %v5167 = vadd.f32 0.0, %v5166
        %v5168 = vpop.f32.mrf.mxu0
        %5169 = vmatprep.mubr.f32.mxu0 0.0
        %5170 = vmatmul.mubr.f32.gmra.mxu0 %v5052
        %v5171 = vpop.f32.mrf.mxu0
        %v5172 = vadd.f32 0.0, %v5171
        %v5173 = vpop.f32.mrf.mxu0
        %5174 = vmatprep.mubr.f32.mxu0 0.0
        %5175 = vmatmul.mubr.f32.gmra.mxu0 %v5054
        %v5176 = vpop.f32.mrf.mxu0
        %v5177 = vadd.f32 0.0, %v5176
        %v5178 = vpop.f32.mrf.mxu0
        %5179 = vmatprep.mubr.f32.mxu0 0.0
        %5180 = vmatmul.mubr.f32.gmra.mxu0 %v5056
        %v5181 = vpop.f32.mrf.mxu0
        %v5182 = vadd.f32 0.0, %v5181
        %v5183 = vpop.f32.mrf.mxu0
        %5184 = vmatprep.mubr.f32.mxu0 0.0
        %5185 = vmatmul.mubr.f32.gmra.mxu0 %v5058
        %v5186 = vpop.f32.mrf.mxu0
        %v5187 = vadd.f32 0.0, %v5186
        %v5188 = vpop.f32.mrf.mxu0
        %5189 = vmatprep.mubr.f32.mxu0 0.0
        %5190 = vmatmul.mubr.f32.gmra.mxu0 %v5060
        %v5191 = vpop.f32.mrf.mxu0
        %v5192 = vadd.f32 0.0, %v5191
        %v5193 = vpop.f32.mrf.mxu0
        %5194 = vmatprep.mubr.f32.mxu0 0.0
        %5195 = vmatmul.mubr.f32.gmra.mxu0 %v5062
        %v5196 = vpop.f32.mrf.mxu0
        %v5197 = vadd.f32 0.0, %v5196
        %v5198 = vpop.f32.mrf.mxu0
        %5199 = vmatprep.mubr.f32.mxu0 0.0
        %5200 = vmatmul.mubr.f32.gmra.mxu0 %v5064
        %v5201 = vpop.f32.mrf.mxu0
        %v5202 = vadd.f32 0.0, %v5201
        %v5203 = vpop.f32.mrf.mxu0
        %5204 = vmatprep.mubr.f32.mxu0 0.0
        %5205 = vmatmul.mubr.f32.gmra.mxu0 %v5066
        %v5206 = vpop.f32.mrf.mxu0
        %v5207 = vadd.f32 0.0, %v5206
        %v5208 = vpop.f32.mrf.mxu0
        %5209 = vmatprep.mubr.f32.mxu0 0.0
        %5210 = vmatmul.mubr.f32.gmra.mxu0 %v5068
        %v5211 = vpop.f32.mrf.mxu0
        %v5212 = vadd.f32 0.0, %v5211
        %v5213 = vpop.f32.mrf.mxu0
        %5214 = vdwg.mxu0
        %v5215 = vadd.f32 %v4977, %v5137
        %v5216 = vadd.f32 %v4978, %v5142
        %v5217 = vadd.f32 %v4979, %v5147
        %v5218 = vadd.f32 %v4980, %v5152
        %v5219 = vadd.f32 %v4981, %v5157
        %v5220 = vadd.f32 %v4982, %v5162
        %v5221 = vadd.f32 %v4983, %v5167
        %v5222 = vadd.f32 %v4984, %v5172
        %v5223 = vadd.f32 %v4985, %v5177
        %v5224 = vadd.f32 %v4986, %v5182
        %v5225 = vadd.f32 %v4987, %v5187
        %v5226 = vadd.f32 %v4988, %v5192
        %v5227 = vadd.f32 %v4989, %v5197
        %v5228 = vadd.f32 %v4990, %v5202
        %v5229 = vadd.f32 %v4991, %v5207
        %v5230 = vadd.f32 %v4992, %v5212
        %s5231 = scalar_lea.vmem [#allocation10], 192
        %v5232 = vld [vmem:[%s5231] sm:$0xff]
        %v5233 = vld [vmem:[%s5231 + $0x8] sm:$0xff]
        %v5234 = vld [vmem:[%s5231 + $0x10] sm:$0xff]
        %v5235 = vld [vmem:[%s5231 + $0x18] sm:$0xff]
        %v5237 = vsel %vm3393, %v3865, 0
        %v5240 = vsel %vm3393, %v3866, 0
        %5242 = vmatprep.subr.mxu0 0.0
        %5243 = vmatpush1.msra.mxu0 0.0
        %5244 = vmatprep.subr.mxu0 0.0
        %5245 = vmatpush1.msra.mxu0 0.0
        %5246 = vmatprep.subr.mxu0 0.0
        %5247 = vmatpush1.msra.mxu0 0.0
        %5248 = vmatprep.subr.mxu0 0.0
        %5249 = vmatpush1.msra.mxu0 0.0
        %5250 = vmatprep.subr.mxu0 0.0
        %5251 = vmatpush1.msra.mxu0 0.0
        %5252 = vmatprep.subr.mxu0 0.0
        %5253 = vmatpush1.msra.mxu0 0.0
        %5254 = vmatprep.subr.mxu0 0.0
        %5255 = vmatpush1.msra.mxu0 0.0
        %5256 = vmatprep.subr.mxu0 0.0
        %5257 = vmatpush1.msra.mxu0 0.0
        %5258 = vmatprep.subr.mxu0 0.0
        %5259 = vmatpush1.msra.mxu0 0.0
        %5260 = vmatprep.subr.mxu0 0.0
        %5261 = vmatpush1.msra.mxu0 0.0
        %5262 = vmatprep.subr.mxu0 0.0
        %5263 = vmatpush1.msra.mxu0 0.0
        %5264 = vmatprep.subr.mxu0 0.0
        %5265 = vmatpush1.msra.mxu0 0.0
        %5266 = vmatprep.subr.mxu0 0.0
        %5267 = vmatpush1.msra.mxu0 %v5235
        %5268 = vmatprep.subr.mxu0 0.0
        %5269 = vmatpush1.msra.mxu0 %v5234
        %5270 = vmatprep.subr.mxu0 0.0
        %5271 = vmatpush1.msra.mxu0 %v5233
        %5272 = vmatprep.subr.mxu0 0.0
        %5273 = vmatpush1.msra.mxu0 %v5232
        %5274 = vmatprep.subr.mxu0 0.0
        %5275 = vmatpush2.msra.mxu0 0.0
        %5276 = vmatprep.subr.mxu0 0.0
        %5277 = vmatpush2.msra.mxu0 0.0
        %5278 = vmatprep.subr.mxu0 0.0
        %5279 = vmatpush2.msra.mxu0 0.0
        %5280 = vmatprep.subr.mxu0 0.0
        %5281 = vmatpush2.msra.mxu0 0.0
        %5282 = vmatprep.subr.mxu0 0.0
        %5283 = vmatpush2.msra.mxu0 0.0
        %5284 = vmatprep.subr.mxu0 0.0
        %5285 = vmatpush2.msra.mxu0 0.0
        %5286 = vmatprep.subr.mxu0 0.0
        %5287 = vmatpush2.msra.mxu0 0.0
        %5288 = vmatprep.subr.mxu0 0.0
        %5289 = vmatpush2.msra.mxu0 0.0
        %5290 = vmatprep.subr.mxu0 0.0
        %5291 = vmatpush2.msra.mxu0 0.0
        %5292 = vmatprep.subr.mxu0 0.0
        %5293 = vmatpush2.msra.mxu0 0.0
        %5294 = vmatprep.subr.mxu0 0.0
        %5295 = vmatpush2.msra.mxu0 0.0
        %5296 = vmatprep.subr.mxu0 0.0
        %5297 = vmatpush2.msra.mxu0 0.0
        %5298 = vmatprep.subr.mxu0 0.0
        %5299 = vmatpush2.msra.mxu0 0.0
        %5300 = vmatprep.subr.mxu0 0.0
        %5301 = vmatpush2.msra.mxu0 0.0
        %5302 = vmatprep.subr.mxu0 0.0
        %5303 = vmatpush2.msra.mxu0 0.0
        %5304 = vmatprep.subr.mxu0 0.0
        %5305 = vmatpush2.msra.mxu0 0.0
        %5306 = vmatprep.mubr.f32.mxu0 0.0
        %5307 = vmatmul.mubr.f32.gmra.mxu0 %v4122
        %v5308 = vpop.f32.mrf.mxu0
        %v5309 = vadd.f32 0.0, %v5308
        %v5310 = vpop.f32.mrf.mxu0
        %5311 = vmatprep.mubr.f32.mxu0 0.0
        %5312 = vmatmul.mubr.f32.gmra.mxu0 %v4124
        %v5313 = vpop.f32.mrf.mxu0
        %v5314 = vadd.f32 0.0, %v5313
        %v5315 = vpop.f32.mrf.mxu0
        %5316 = vmatprep.mubr.f32.mxu0 0.0
        %5317 = vmatmul.mubr.f32.gmra.mxu0 %v4126
        %v5318 = vpop.f32.mrf.mxu0
        %v5319 = vadd.f32 0.0, %v5318
        %v5320 = vpop.f32.mrf.mxu0
        %5321 = vmatprep.mubr.f32.mxu0 0.0
        %5322 = vmatmul.mubr.f32.gmra.mxu0 %v4128
        %v5323 = vpop.f32.mrf.mxu0
        %v5324 = vadd.f32 0.0, %v5323
        %v5325 = vpop.f32.mrf.mxu0
        %5326 = vmatprep.mubr.f32.mxu0 0.0
        %5327 = vmatmul.mubr.f32.gmra.mxu0 %v4130
        %v5328 = vpop.f32.mrf.mxu0
        %v5329 = vadd.f32 0.0, %v5328
        %v5330 = vpop.f32.mrf.mxu0
        %5331 = vmatprep.mubr.f32.mxu0 0.0
        %5332 = vmatmul.mubr.f32.gmra.mxu0 %v4132
        %v5333 = vpop.f32.mrf.mxu0
        %v5334 = vadd.f32 0.0, %v5333
        %v5335 = vpop.f32.mrf.mxu0
        %5336 = vmatprep.mubr.f32.mxu0 0.0
        %5337 = vmatmul.mubr.f32.gmra.mxu0 %v4134
        %v5338 = vpop.f32.mrf.mxu0
        %v5339 = vadd.f32 0.0, %v5338
        %v5340 = vpop.f32.mrf.mxu0
        %5341 = vmatprep.mubr.f32.mxu0 0.0
        %5342 = vmatmul.mubr.f32.gmra.mxu0 %v4136
        %v5343 = vpop.f32.mrf.mxu0
        %v5344 = vadd.f32 0.0, %v5343
        %v5345 = vpop.f32.mrf.mxu0
        %5346 = vmatprep.mubr.f32.mxu0 0.0
        %5347 = vmatmul.mubr.f32.gmra.mxu0 %v4138
        %v5348 = vpop.f32.mrf.mxu0
        %v5349 = vadd.f32 0.0, %v5348
        %v5350 = vpop.f32.mrf.mxu0
        %5351 = vmatprep.mubr.f32.mxu0 0.0
        %5352 = vmatmul.mubr.f32.gmra.mxu0 %v4140
        %v5353 = vpop.f32.mrf.mxu0
        %v5354 = vadd.f32 0.0, %v5353
        %v5355 = vpop.f32.mrf.mxu0
        %5356 = vmatprep.mubr.f32.mxu0 0.0
        %5357 = vmatmul.mubr.f32.gmra.mxu0 %v4142
        %v5358 = vpop.f32.mrf.mxu0
        %v5359 = vadd.f32 0.0, %v5358
        %v5360 = vpop.f32.mrf.mxu0
        %5361 = vmatprep.mubr.f32.mxu0 0.0
        %5362 = vmatmul.mubr.f32.gmra.mxu0 %v4144
        %v5363 = vpop.f32.mrf.mxu0
        %v5364 = vadd.f32 0.0, %v5363
        %v5365 = vpop.f32.mrf.mxu0
        %5366 = vmatprep.mubr.f32.mxu0 0.0
        %5367 = vmatmul.mubr.f32.gmra.mxu0 %v4146
        %v5368 = vpop.f32.mrf.mxu0
        %v5369 = vadd.f32 0.0, %v5368
        %v5370 = vpop.f32.mrf.mxu0
        %5371 = vmatprep.mubr.f32.mxu0 0.0
        %5372 = vmatmul.mubr.f32.gmra.mxu0 %v4148
        %v5373 = vpop.f32.mrf.mxu0
        %v5374 = vadd.f32 0.0, %v5373
        %v5375 = vpop.f32.mrf.mxu0
        %5376 = vmatprep.mubr.f32.mxu0 0.0
        %5377 = vmatmul.mubr.f32.gmra.mxu0 %v5237
        %v5378 = vpop.f32.mrf.mxu0
        %v5379 = vadd.f32 0.0, %v5378
        %v5380 = vpop.f32.mrf.mxu0
        %5381 = vmatprep.mubr.f32.mxu0 0.0
        %5382 = vmatmul.mubr.f32.gmra.mxu0 %v5240
        %v5383 = vpop.f32.mrf.mxu0
        %v5384 = vadd.f32 0.0, %v5383
        %v5385 = vpop.f32.mrf.mxu0
        %5386 = vdwg.mxu0
        %v5387 = vadd.f32 %v5215, %v5309
        %v5388 = vadd.f32 %v5216, %v5314
        %v5389 = vadd.f32 %v5217, %v5319
        %v5390 = vadd.f32 %v5218, %v5324
        %v5391 = vadd.f32 %v5219, %v5329
        %v5392 = vadd.f32 %v5220, %v5334
        %v5393 = vadd.f32 %v5221, %v5339
        %v5394 = vadd.f32 %v5222, %v5344
        %v5395 = vadd.f32 %v5223, %v5349
        %v5396 = vadd.f32 %v5224, %v5354
        %v5397 = vadd.f32 %v5225, %v5359
        %v5398 = vadd.f32 %v5226, %v5364
        %v5399 = vadd.f32 %v5227, %v5369
        %v5400 = vadd.f32 %v5228, %v5374
        %v5401 = vadd.f32 %v5229, %v5379
        %v5402 = vadd.f32 %v5230, %v5384
        %v5404 = vrot.slane %v3865, 1
        %v5405 = vrot.slane %v3866, 1
        %v5406 = vsel %vm696, %v5404, %v5405
        %v5407 = vrot.slane %v3867, 1
        %v5408 = vsel %vm696, %v5405, %v5407
        %s5409 = scalar_lea.vmem [#allocation10], 224
        %v5410 = vld [vmem:[%s5409] sm:$0xff]
        %v5411 = vld [vmem:[%s5409 + $0x8] sm:$0xff]
        %v5412 = vld [vmem:[%s5409 + $0x10] sm:$0xff]
        %v5413 = vld [vmem:[%s5409 + $0x18] sm:$0xff]
        %v5414 = vsel %vm3393, %v5406, 0
        %v5416 = vsel %vm3393, %v5408, 0
        %5418 = vmatprep.subr.mxu0 0.0
        %5419 = vmatpush1.msra.mxu0 0.0
        %5420 = vmatprep.subr.mxu0 0.0
        %5421 = vmatpush1.msra.mxu0 0.0
        %5422 = vmatprep.subr.mxu0 0.0
        %5423 = vmatpush1.msra.mxu0 0.0
        %5424 = vmatprep.subr.mxu0 0.0
        %5425 = vmatpush1.msra.mxu0 0.0
        %5426 = vmatprep.subr.mxu0 0.0
        %5427 = vmatpush1.msra.mxu0 0.0
        %5428 = vmatprep.subr.mxu0 0.0
        %5429 = vmatpush1.msra.mxu0 0.0
        %5430 = vmatprep.subr.mxu0 0.0
        %5431 = vmatpush1.msra.mxu0 0.0
        %5432 = vmatprep.subr.mxu0 0.0
        %5433 = vmatpush1.msra.mxu0 0.0
        %5434 = vmatprep.subr.mxu0 0.0
        %5435 = vmatpush1.msra.mxu0 0.0
        %5436 = vmatprep.subr.mxu0 0.0
        %5437 = vmatpush1.msra.mxu0 0.0
        %5438 = vmatprep.subr.mxu0 0.0
        %5439 = vmatpush1.msra.mxu0 0.0
        %5440 = vmatprep.subr.mxu0 0.0
        %5441 = vmatpush1.msra.mxu0 0.0
        %5442 = vmatprep.subr.mxu0 0.0
        %5443 = vmatpush1.msra.mxu0 %v5413
        %5444 = vmatprep.subr.mxu0 0.0
        %5445 = vmatpush1.msra.mxu0 %v5412
        %5446 = vmatprep.subr.mxu0 0.0
        %5447 = vmatpush1.msra.mxu0 %v5411
        %5448 = vmatprep.subr.mxu0 0.0
        %5449 = vmatpush1.msra.mxu0 %v5410
        %5450 = vmatprep.subr.mxu0 0.0
        %5451 = vmatpush2.msra.mxu0 0.0
        %5452 = vmatprep.subr.mxu0 0.0
        %5453 = vmatpush2.msra.mxu0 0.0
        %5454 = vmatprep.subr.mxu0 0.0
        %5455 = vmatpush2.msra.mxu0 0.0
        %5456 = vmatprep.subr.mxu0 0.0
        %5457 = vmatpush2.msra.mxu0 0.0
        %5458 = vmatprep.subr.mxu0 0.0
        %5459 = vmatpush2.msra.mxu0 0.0
        %5460 = vmatprep.subr.mxu0 0.0
        %5461 = vmatpush2.msra.mxu0 0.0
        %5462 = vmatprep.subr.mxu0 0.0
        %5463 = vmatpush2.msra.mxu0 0.0
        %5464 = vmatprep.subr.mxu0 0.0
        %5465 = vmatpush2.msra.mxu0 0.0
        %5466 = vmatprep.subr.mxu0 0.0
        %5467 = vmatpush2.msra.mxu0 0.0
        %5468 = vmatprep.subr.mxu0 0.0
        %5469 = vmatpush2.msra.mxu0 0.0
        %5470 = vmatprep.subr.mxu0 0.0
        %5471 = vmatpush2.msra.mxu0 0.0
        %5472 = vmatprep.subr.mxu0 0.0
        %5473 = vmatpush2.msra.mxu0 0.0
        %5474 = vmatprep.subr.mxu0 0.0
        %5475 = vmatpush2.msra.mxu0 0.0
        %5476 = vmatprep.subr.mxu0 0.0
        %5477 = vmatpush2.msra.mxu0 0.0
        %5478 = vmatprep.subr.mxu0 0.0
        %5479 = vmatpush2.msra.mxu0 0.0
        %5480 = vmatprep.subr.mxu0 0.0
        %5481 = vmatpush2.msra.mxu0 0.0
        %5482 = vmatprep.mubr.f32.mxu0 0.0
        %5483 = vmatmul.mubr.f32.gmra.mxu0 %v3945
        %v5484 = vpop.f32.mrf.mxu0
        %v5485 = vadd.f32 0.0, %v5484
        %v5486 = vpop.f32.mrf.mxu0
        %5487 = vmatprep.mubr.f32.mxu0 0.0
        %5488 = vmatmul.mubr.f32.gmra.mxu0 %v3947
        %v5489 = vpop.f32.mrf.mxu0
        %v5490 = vadd.f32 0.0, %v5489
        %v5491 = vpop.f32.mrf.mxu0
        %5492 = vmatprep.mubr.f32.mxu0 0.0
        %5493 = vmatmul.mubr.f32.gmra.mxu0 %v3949
        %v5494 = vpop.f32.mrf.mxu0
        %v5495 = vadd.f32 0.0, %v5494
        %v5496 = vpop.f32.mrf.mxu0
        %5497 = vmatprep.mubr.f32.mxu0 0.0
        %5498 = vmatmul.mubr.f32.gmra.mxu0 %v3951
        %v5499 = vpop.f32.mrf.mxu0
        %v5500 = vadd.f32 0.0, %v5499
        %v5501 = vpop.f32.mrf.mxu0
        %5502 = vmatprep.mubr.f32.mxu0 0.0
        %5503 = vmatmul.mubr.f32.gmra.mxu0 %v3953
        %v5504 = vpop.f32.mrf.mxu0
        %v5505 = vadd.f32 0.0, %v5504
        %v5506 = vpop.f32.mrf.mxu0
        %5507 = vmatprep.mubr.f32.mxu0 0.0
        %5508 = vmatmul.mubr.f32.gmra.mxu0 %v3955
        %v5509 = vpop.f32.mrf.mxu0
        %v5510 = vadd.f32 0.0, %v5509
        %v5511 = vpop.f32.mrf.mxu0
        %5512 = vmatprep.mubr.f32.mxu0 0.0
        %5513 = vmatmul.mubr.f32.gmra.mxu0 %v3957
        %v5514 = vpop.f32.mrf.mxu0
        %v5515 = vadd.f32 0.0, %v5514
        %v5516 = vpop.f32.mrf.mxu0
        %5517 = vmatprep.mubr.f32.mxu0 0.0
        %5518 = vmatmul.mubr.f32.gmra.mxu0 %v3959
        %v5519 = vpop.f32.mrf.mxu0
        %v5520 = vadd.f32 0.0, %v5519
        %v5521 = vpop.f32.mrf.mxu0
        %5522 = vmatprep.mubr.f32.mxu0 0.0
        %5523 = vmatmul.mubr.f32.gmra.mxu0 %v3961
        %v5524 = vpop.f32.mrf.mxu0
        %v5525 = vadd.f32 0.0, %v5524
        %v5526 = vpop.f32.mrf.mxu0
        %5527 = vmatprep.mubr.f32.mxu0 0.0
        %5528 = vmatmul.mubr.f32.gmra.mxu0 %v3963
        %v5529 = vpop.f32.mrf.mxu0
        %v5530 = vadd.f32 0.0, %v5529
        %v5531 = vpop.f32.mrf.mxu0
        %5532 = vmatprep.mubr.f32.mxu0 0.0
        %5533 = vmatmul.mubr.f32.gmra.mxu0 %v3965
        %v5534 = vpop.f32.mrf.mxu0
        %v5535 = vadd.f32 0.0, %v5534
        %v5536 = vpop.f32.mrf.mxu0
        %5537 = vmatprep.mubr.f32.mxu0 0.0
        %5538 = vmatmul.mubr.f32.gmra.mxu0 %v3967
        %v5539 = vpop.f32.mrf.mxu0
        %v5540 = vadd.f32 0.0, %v5539
        %v5541 = vpop.f32.mrf.mxu0
        %5542 = vmatprep.mubr.f32.mxu0 0.0
        %5543 = vmatmul.mubr.f32.gmra.mxu0 %v3969
        %v5544 = vpop.f32.mrf.mxu0
        %v5545 = vadd.f32 0.0, %v5544
        %v5546 = vpop.f32.mrf.mxu0
        %5547 = vmatprep.mubr.f32.mxu0 0.0
        %5548 = vmatmul.mubr.f32.gmra.mxu0 %v3971
        %v5549 = vpop.f32.mrf.mxu0
        %v5550 = vadd.f32 0.0, %v5549
        %v5551 = vpop.f32.mrf.mxu0
        %5552 = vmatprep.mubr.f32.mxu0 0.0
        %5553 = vmatmul.mubr.f32.gmra.mxu0 %v5414
        %v5554 = vpop.f32.mrf.mxu0
        %v5555 = vadd.f32 0.0, %v5554
        %v5556 = vpop.f32.mrf.mxu0
        %5557 = vmatprep.mubr.f32.mxu0 0.0
        %5558 = vmatmul.mubr.f32.gmra.mxu0 %v5416
        %v5559 = vpop.f32.mrf.mxu0
        %v5560 = vadd.f32 0.0, %v5559
        %v5561 = vpop.f32.mrf.mxu0
        %5562 = vdwg.mxu0
        %v5563 = vadd.f32 %v5387, %v5485
        %v5564 = vadd.f32 %v5388, %v5490
        %v5565 = vadd.f32 %v5389, %v5495
        %v5566 = vadd.f32 %v5390, %v5500
        %v5567 = vadd.f32 %v5391, %v5505
        %v5568 = vadd.f32 %v5392, %v5510
        %v5569 = vadd.f32 %v5393, %v5515
        %v5570 = vadd.f32 %v5394, %v5520
        %v5571 = vadd.f32 %v5395, %v5525
        %v5572 = vadd.f32 %v5396, %v5530
        %v5573 = vadd.f32 %v5397, %v5535
        %v5574 = vadd.f32 %v5398, %v5540
        %v5575 = vadd.f32 %v5399, %v5545
        %v5576 = vadd.f32 %v5400, %v5550
        %v5577 = vadd.f32 %v5401, %v5555
        %v5578 = vadd.f32 %v5402, %v5560
        %v5579 = vrot.slane %v3865, 2
        %v5580 = vrot.slane %v3866, 2
        %v5581 = vsel %vm1364, %v5579, %v5580
        %v5582 = vrot.slane %v3867, 2
        %v5583 = vsel %vm1364, %v5580, %v5582
        %s5584 = scalar_lea.vmem [#allocation10], 256
        %v5585 = vld [vmem:[%s5584] sm:$0xff]
        %v5586 = vld [vmem:[%s5584 + $0x8] sm:$0xff]
        %v5587 = vld [vmem:[%s5584 + $0x10] sm:$0xff]
        %v5588 = vld [vmem:[%s5584 + $0x18] sm:$0xff]
        %v5589 = vsel %vm3393, %v5581, 0
        %v5591 = vsel %vm3393, %v5583, 0
        %5593 = vmatprep.subr.mxu0 0.0
        %5594 = vmatpush1.msra.mxu0 0.0
        %5595 = vmatprep.subr.mxu0 0.0
        %5596 = vmatpush1.msra.mxu0 0.0
        %5597 = vmatprep.subr.mxu0 0.0
        %5598 = vmatpush1.msra.mxu0 0.0
        %5599 = vmatprep.subr.mxu0 0.0
        %5600 = vmatpush1.msra.mxu0 0.0
        %5601 = vmatprep.subr.mxu0 0.0
        %5602 = vmatpush1.msra.mxu0 0.0
        %5603 = vmatprep.subr.mxu0 0.0
        %5604 = vmatpush1.msra.mxu0 0.0
        %5605 = vmatprep.subr.mxu0 0.0
        %5606 = vmatpush1.msra.mxu0 0.0
        %5607 = vmatprep.subr.mxu0 0.0
        %5608 = vmatpush1.msra.mxu0 0.0
        %5609 = vmatprep.subr.mxu0 0.0
        %5610 = vmatpush1.msra.mxu0 0.0
        %5611 = vmatprep.subr.mxu0 0.0
        %5612 = vmatpush1.msra.mxu0 0.0
        %5613 = vmatprep.subr.mxu0 0.0
        %5614 = vmatpush1.msra.mxu0 0.0
        %5615 = vmatprep.subr.mxu0 0.0
        %5616 = vmatpush1.msra.mxu0 0.0
        %5617 = vmatprep.subr.mxu0 0.0
        %5618 = vmatpush1.msra.mxu0 %v5588
        %5619 = vmatprep.subr.mxu0 0.0
        %5620 = vmatpush1.msra.mxu0 %v5587
        %5621 = vmatprep.subr.mxu0 0.0
        %5622 = vmatpush1.msra.mxu0 %v5586
        %5623 = vmatprep.subr.mxu0 0.0
        %5624 = vmatpush1.msra.mxu0 %v5585
        %5625 = vmatprep.subr.mxu0 0.0
        %5626 = vmatpush2.msra.mxu0 0.0
        %5627 = vmatprep.subr.mxu0 0.0
        %5628 = vmatpush2.msra.mxu0 0.0
        %5629 = vmatprep.subr.mxu0 0.0
        %5630 = vmatpush2.msra.mxu0 0.0
        %5631 = vmatprep.subr.mxu0 0.0
        %5632 = vmatpush2.msra.mxu0 0.0
        %5633 = vmatprep.subr.mxu0 0.0
        %5634 = vmatpush2.msra.mxu0 0.0
        %5635 = vmatprep.subr.mxu0 0.0
        %5636 = vmatpush2.msra.mxu0 0.0
        %5637 = vmatprep.subr.mxu0 0.0
        %5638 = vmatpush2.msra.mxu0 0.0
        %5639 = vmatprep.subr.mxu0 0.0
        %5640 = vmatpush2.msra.mxu0 0.0
        %5641 = vmatprep.subr.mxu0 0.0
        %5642 = vmatpush2.msra.mxu0 0.0
        %5643 = vmatprep.subr.mxu0 0.0
        %5644 = vmatpush2.msra.mxu0 0.0
        %5645 = vmatprep.subr.mxu0 0.0
        %5646 = vmatpush2.msra.mxu0 0.0
        %5647 = vmatprep.subr.mxu0 0.0
        %5648 = vmatpush2.msra.mxu0 0.0
        %5649 = vmatprep.subr.mxu0 0.0
        %5650 = vmatpush2.msra.mxu0 0.0
        %5651 = vmatprep.subr.mxu0 0.0
        %5652 = vmatpush2.msra.mxu0 0.0
        %5653 = vmatprep.subr.mxu0 0.0
        %5654 = vmatpush2.msra.mxu0 0.0
        %5655 = vmatprep.subr.mxu0 0.0
        %5656 = vmatpush2.msra.mxu0 0.0
        %5657 = vmatprep.mubr.f32.mxu0 0.0
        %5658 = vmatmul.mubr.f32.gmra.mxu0 %v4344
        %v5659 = vpop.f32.mrf.mxu0
        %v5660 = vadd.f32 0.0, %v5659
        %v5661 = vpop.f32.mrf.mxu0
        %5662 = vmatprep.mubr.f32.mxu0 0.0
        %5663 = vmatmul.mubr.f32.gmra.mxu0 %v4346
        %v5664 = vpop.f32.mrf.mxu0
        %v5665 = vadd.f32 0.0, %v5664
        %v5666 = vpop.f32.mrf.mxu0
        %5667 = vmatprep.mubr.f32.mxu0 0.0
        %5668 = vmatmul.mubr.f32.gmra.mxu0 %v4348
        %v5669 = vpop.f32.mrf.mxu0
        %v5670 = vadd.f32 0.0, %v5669
        %v5671 = vpop.f32.mrf.mxu0
        %5672 = vmatprep.mubr.f32.mxu0 0.0
        %5673 = vmatmul.mubr.f32.gmra.mxu0 %v4350
        %v5674 = vpop.f32.mrf.mxu0
        %v5675 = vadd.f32 0.0, %v5674
        %v5676 = vpop.f32.mrf.mxu0
        %5677 = vmatprep.mubr.f32.mxu0 0.0
        %5678 = vmatmul.mubr.f32.gmra.mxu0 %v4352
        %v5679 = vpop.f32.mrf.mxu0
        %v5680 = vadd.f32 0.0, %v5679
        %v5681 = vpop.f32.mrf.mxu0
        %5682 = vmatprep.mubr.f32.mxu0 0.0
        %5683 = vmatmul.mubr.f32.gmra.mxu0 %v4354
        %v5684 = vpop.f32.mrf.mxu0
        %v5685 = vadd.f32 0.0, %v5684
        %v5686 = vpop.f32.mrf.mxu0
        %5687 = vmatprep.mubr.f32.mxu0 0.0
        %5688 = vmatmul.mubr.f32.gmra.mxu0 %v4356
        %v5689 = vpop.f32.mrf.mxu0
        %v5690 = vadd.f32 0.0, %v5689
        %v5691 = vpop.f32.mrf.mxu0
        %5692 = vmatprep.mubr.f32.mxu0 0.0
        %5693 = vmatmul.mubr.f32.gmra.mxu0 %v4358
        %v5694 = vpop.f32.mrf.mxu0
        %v5695 = vadd.f32 0.0, %v5694
        %v5696 = vpop.f32.mrf.mxu0
        %5697 = vmatprep.mubr.f32.mxu0 0.0
        %5698 = vmatmul.mubr.f32.gmra.mxu0 %v4360
        %v5699 = vpop.f32.mrf.mxu0
        %v5700 = vadd.f32 0.0, %v5699
        %v5701 = vpop.f32.mrf.mxu0
        %5702 = vmatprep.mubr.f32.mxu0 0.0
        %5703 = vmatmul.mubr.f32.gmra.mxu0 %v4362
        %v5704 = vpop.f32.mrf.mxu0
        %v5705 = vadd.f32 0.0, %v5704
        %v5706 = vpop.f32.mrf.mxu0
        %5707 = vmatprep.mubr.f32.mxu0 0.0
        %5708 = vmatmul.mubr.f32.gmra.mxu0 %v4364
        %v5709 = vpop.f32.mrf.mxu0
        %v5710 = vadd.f32 0.0, %v5709
        %v5711 = vpop.f32.mrf.mxu0
        %5712 = vmatprep.mubr.f32.mxu0 0.0
        %5713 = vmatmul.mubr.f32.gmra.mxu0 %v4366
        %v5714 = vpop.f32.mrf.mxu0
        %v5715 = vadd.f32 0.0, %v5714
        %v5716 = vpop.f32.mrf.mxu0
        %5717 = vmatprep.mubr.f32.mxu0 0.0
        %5718 = vmatmul.mubr.f32.gmra.mxu0 %v4368
        %v5719 = vpop.f32.mrf.mxu0
        %v5720 = vadd.f32 0.0, %v5719
        %v5721 = vpop.f32.mrf.mxu0
        %5722 = vmatprep.mubr.f32.mxu0 0.0
        %5723 = vmatmul.mubr.f32.gmra.mxu0 %v4370
        %v5724 = vpop.f32.mrf.mxu0
        %v5725 = vadd.f32 0.0, %v5724
        %v5726 = vpop.f32.mrf.mxu0
        %5727 = vmatprep.mubr.f32.mxu0 0.0
        %5728 = vmatmul.mubr.f32.gmra.mxu0 %v5589
        %v5729 = vpop.f32.mrf.mxu0
        %v5730 = vadd.f32 0.0, %v5729
        %v5731 = vpop.f32.mrf.mxu0
        %5732 = vmatprep.mubr.f32.mxu0 0.0
        %5733 = vmatmul.mubr.f32.gmra.mxu0 %v5591
        %v5734 = vpop.f32.mrf.mxu0
        %v5735 = vadd.f32 0.0, %v5734
        %v5736 = vpop.f32.mrf.mxu0
        %5737 = vdwg.mxu0
        %v5738 = vadd.f32 %v5563, %v5660
        %v5739 = vadd.f32 %v5564, %v5665
        %v5740 = vadd.f32 %v5565, %v5670
        %v5741 = vadd.f32 %v5566, %v5675
        %v5742 = vadd.f32 %v5567, %v5680
        %v5743 = vadd.f32 %v5568, %v5685
        %v5744 = vadd.f32 %v5569, %v5690
        %v5745 = vadd.f32 %v5570, %v5695
        %v5746 = vadd.f32 %v5571, %v5700
        %v5747 = vadd.f32 %v5572, %v5705
        %v5748 = vadd.f32 %v5573, %v5710
        %v5749 = vadd.f32 %v5574, %v5715
        %v5750 = vadd.f32 %v5575, %v5720
        %v5751 = vadd.f32 %v5576, %v5725
        %v5752 = vadd.f32 %v5577, %v5730
        %v5753 = vadd.f32 %v5578, %v5735
        %v5754 = vld [vmem:[#allocation15] sm:$0xff]
        %v5755 = vld [vmem:[#allocation15 + $0x8] sm:$0xff]
        %v5756 = vld [vmem:[#allocation15 + $0x10] sm:$0xff]
        %v5757 = vld [vmem:[#allocation15 + $0x18] sm:$0xff]
        %v5758 = vld [vmem:[#allocation15 + $0x20] sm:$0xff]
        %v5759 = vld [vmem:[#allocation15 + $0x28] sm:$0xff]
        %v5760 = vld [vmem:[#allocation15 + $0x30] sm:$0xff]
        %v5761 = vld [vmem:[#allocation15 + $0x38] sm:$0xff]
        %5762 = vmatprep.subr.mxu0 0.0
        %5763 = vmatpush1.msra.mxu0 %v5753
        %5764 = vmatprep.subr.mxu0 0.0
        %5765 = vmatpush1.msra.mxu0 %v5752
        %5766 = vmatprep.subr.mxu0 0.0
        %5767 = vmatpush1.msra.mxu0 %v5751
        %5768 = vmatprep.subr.mxu0 0.0
        %5769 = vmatpush1.msra.mxu0 %v5750
        %5770 = vmatprep.subr.mxu0 0.0
        %5771 = vmatpush1.msra.mxu0 %v5749
        %5772 = vmatprep.subr.mxu0 0.0
        %5773 = vmatpush1.msra.mxu0 %v5748
        %5774 = vmatprep.subr.mxu0 0.0
        %5775 = vmatpush1.msra.mxu0 %v5747
        %5776 = vmatprep.subr.mxu0 0.0
        %5777 = vmatpush1.msra.mxu0 %v5746
        %5778 = vmatprep.subr.mxu0 0.0
        %5779 = vmatpush1.msra.mxu0 %v5745
        %5780 = vmatprep.subr.mxu0 0.0
        %5781 = vmatpush1.msra.mxu0 %v5744
        %5782 = vmatprep.subr.mxu0 0.0
        %5783 = vmatpush1.msra.mxu0 %v5743
        %5784 = vmatprep.subr.mxu0 0.0
        %5785 = vmatpush1.msra.mxu0 %v5742
        %5786 = vmatprep.subr.mxu0 0.0
        %5787 = vmatpush1.msra.mxu0 %v5741
        %5788 = vmatprep.subr.mxu0 0.0
        %5789 = vmatpush1.msra.mxu0 %v5740
        %5790 = vmatprep.subr.mxu0 0.0
        %5791 = vmatpush1.msra.mxu0 %v5739
        %5792 = vmatprep.subr.mxu0 0.0
        %5793 = vmatpush1.msra.mxu0 %v5738
        %5794 = vmatprep.subr.mxu0 0.0
        %5795 = vmatpush2.msra.mxu0 0.0
        %5796 = vmatprep.subr.mxu0 0.0
        %5797 = vmatpush2.msra.mxu0 0.0
        %5798 = vmatprep.subr.mxu0 0.0
        %5799 = vmatpush2.msra.mxu0 0.0
        %5800 = vmatprep.subr.mxu0 0.0
        %5801 = vmatpush2.msra.mxu0 0.0
        %5802 = vmatprep.subr.mxu0 0.0
        %5803 = vmatpush2.msra.mxu0 0.0
        %5804 = vmatprep.subr.mxu0 0.0
        %5805 = vmatpush2.msra.mxu0 0.0
        %5806 = vmatprep.subr.mxu0 0.0
        %5807 = vmatpush2.msra.mxu0 0.0
        %5808 = vmatprep.subr.mxu0 0.0
        %5809 = vmatpush2.msra.mxu0 0.0
        %5810 = vmatprep.subr.mxu0 0.0
        %5811 = vmatpush2.msra.mxu0 0.0
        %5812 = vmatprep.subr.mxu0 0.0
        %5813 = vmatpush2.msra.mxu0 0.0
        %5814 = vmatprep.subr.mxu0 0.0
        %5815 = vmatpush2.msra.mxu0 0.0
        %5816 = vmatprep.subr.mxu0 0.0
        %5817 = vmatpush2.msra.mxu0 0.0
        %5818 = vmatprep.subr.mxu0 0.0
        %5819 = vmatpush2.msra.mxu0 0.0
        %5820 = vmatprep.subr.mxu0 0.0
        %5821 = vmatpush2.msra.mxu0 0.0
        %5822 = vmatprep.subr.mxu0 0.0
        %5823 = vmatpush2.msra.mxu0 0.0
        %5824 = vmatprep.subr.mxu0 0.0
        %5825 = vmatpush2.msra.mxu0 0.0
        %5826 = vmatprep.mubr.f32.mxu0 0.0
        %5827 = vmatmul.mubr.f32.gmra.mxu0 %v5754
        %v5828 = vpop.f32.mrf.mxu0
        %v5829 = vadd.f32 0.0, %v5828
        %v5830 = vpop.f32.mrf.mxu0
        %5831 = vmatprep.mubr.f32.mxu0 0.0
        %5832 = vmatmul.mubr.f32.gmra.mxu0 %v5755
        %v5833 = vpop.f32.mrf.mxu0
        %v5834 = vadd.f32 0.0, %v5833
        %v5835 = vpop.f32.mrf.mxu0
        %5836 = vmatprep.mubr.f32.mxu0 0.0
        %5837 = vmatmul.mubr.f32.gmra.mxu0 %v5756
        %v5838 = vpop.f32.mrf.mxu0
        %v5839 = vadd.f32 0.0, %v5838
        %v5840 = vpop.f32.mrf.mxu0
        %5841 = vmatprep.mubr.f32.mxu0 0.0
        %5842 = vmatmul.mubr.f32.gmra.mxu0 %v5757
        %v5843 = vpop.f32.mrf.mxu0
        %v5844 = vadd.f32 0.0, %v5843
        %v5845 = vpop.f32.mrf.mxu0
        %5846 = vmatprep.mubr.f32.mxu0 0.0
        %5847 = vmatmul.mubr.f32.gmra.mxu0 %v5758
        %v5848 = vpop.f32.mrf.mxu0
        %v5849 = vadd.f32 0.0, %v5848
        %v5850 = vpop.f32.mrf.mxu0
        %5851 = vmatprep.mubr.f32.mxu0 0.0
        %5852 = vmatmul.mubr.f32.gmra.mxu0 %v5759
        %v5853 = vpop.f32.mrf.mxu0
        %v5854 = vadd.f32 0.0, %v5853
        %v5855 = vpop.f32.mrf.mxu0
        %5856 = vmatprep.mubr.f32.mxu0 0.0
        %5857 = vmatmul.mubr.f32.gmra.mxu0 %v5760
        %v5858 = vpop.f32.mrf.mxu0
        %v5859 = vadd.f32 0.0, %v5858
        %v5860 = vpop.f32.mrf.mxu0
        %5861 = vmatprep.mubr.f32.mxu0 0.0
        %5862 = vmatmul.mubr.f32.gmra.mxu0 %v5761
        %v5863 = vpop.f32.mrf.mxu0
        %v5864 = vadd.f32 0.0, %v5863
        %v5865 = vpop.f32.mrf.mxu0
        %5866 = vdwg.mxu0
        %vm5867 = vcmask 523264
        %v5868 = vsel %vm5867, %v5829, 0.0
        %v5869 = vsel %vm5867, %v5834, 0.0
        %v5870 = vadd.f32 %v5868, %v5869
        %v5871 = vsel %vm5867, %v5839, 0.0
        %v5872 = vadd.f32 %v5870, %v5871
        %v5873 = vsel %vm5867, %v5844, 0.0
        %v5874 = vadd.f32 %v5872, %v5873
        %v5875 = vsel %vm5867, %v5849, 0.0
        %v5876 = vadd.f32 %v5874, %v5875
        %v5877 = vsel %vm5867, %v5854, 0.0
        %v5878 = vadd.f32 %v5876, %v5877
        %v5879 = vsel %vm5867, %v5859, 0.0
        %v5880 = vadd.f32 %v5878, %v5879
        %v5881 = vsel %vm5867, %v5864, 0.0
        %v5882 = vadd.f32 %v5880, %v5881
        %v5883 = vrot.slane %v5882, 4
        %v5884 = vadd.f32 %v5882, %v5883
        %v5885 = vrot.slane %v5884, 2
        %v5886 = vadd.f32 %v5884, %v5885
        %v5887 = vrot.slane %v5886, 1
        %v5888 = vadd.f32 %v5886, %v5887
        %v5889 = vrcp.pop 64.0
        %v5890 = vmul.f32 %v5888, %v5889
        %v5891 = vsub.f32 %v5829, %v5890
        %v5892 = vsub.f32 %v5834, %v5890
        %v5893 = vsub.f32 %v5839, %v5890
        %v5894 = vsub.f32 %v5844, %v5890
        %v5895 = vsub.f32 %v5849, %v5890
        %v5896 = vsub.f32 %v5854, %v5890
        %v5897 = vsub.f32 %v5859, %v5890
        %v5898 = vsub.f32 %v5864, %v5890
        %v5899 = vmul.f32 %v5891, %v5891
        %v5900 = vmul.f32 %v5892, %v5892
        %v5901 = vmul.f32 %v5893, %v5893
        %v5902 = vmul.f32 %v5894, %v5894
        %v5903 = vmul.f32 %v5895, %v5895
        %v5904 = vmul.f32 %v5896, %v5896
        %v5905 = vmul.f32 %v5897, %v5897
        %v5906 = vmul.f32 %v5898, %v5898
        %v5907 = vsel %vm5867, %v5899, 0.0
        %v5908 = vsel %vm5867, %v5900, 0.0
        %v5909 = vadd.f32 %v5907, %v5908
        %v5910 = vsel %vm5867, %v5901, 0.0
        %v5911 = vadd.f32 %v5909, %v5910
        %v5912 = vsel %vm5867, %v5902, 0.0
        %v5913 = vadd.f32 %v5911, %v5912
        %v5914 = vsel %vm5867, %v5903, 0.0
        %v5915 = vadd.f32 %v5913, %v5914
        %v5916 = vsel %vm5867, %v5904, 0.0
        %v5917 = vadd.f32 %v5915, %v5916
        %v5918 = vsel %vm5867, %v5905, 0.0
        %v5919 = vadd.f32 %v5917, %v5918
        %v5920 = vsel %vm5867, %v5906, 0.0
        %v5921 = vadd.f32 %v5919, %v5920
        %v5922 = vrot.slane %v5921, 4
        %v5923 = vadd.f32 %v5921, %v5922
        %v5924 = vrot.slane %v5923, 2
        %v5925 = vadd.f32 %v5923, %v5924
        %v5926 = vrot.slane %v5925, 1
        %v5927 = vadd.f32 %v5925, %v5926
        %v5928 = vmul.f32 %v5927, %v5889
        %v5929 = vadd.f32 %v5928, 1e-05
        %v5930 = vrsqrt.pop %v5929
        %v5931 = vmul.f32 %v5891, %v5930
        %v5932 = vmul.f32 %v5892, %v5930
        %v5933 = vmul.f32 %v5893, %v5930
        %v5934 = vmul.f32 %v5894, %v5930
        %v5935 = vmul.f32 %v5895, %v5930
        %v5936 = vmul.f32 %v5896, %v5930
        %v5937 = vmul.f32 %v5897, %v5930
        %v5938 = vmul.f32 %v5898, %v5930
        %vm5939 = vcmp.ge.f32.partialorder %v5931, 0.0
        %vm5940 = vcmp.ge.f32.partialorder %v5932, 0.0
        %vm5941 = vcmp.ge.f32.partialorder %v5933, 0.0
        %vm5942 = vcmp.ge.f32.partialorder %v5934, 0.0
        %vm5943 = vcmp.ge.f32.partialorder %v5935, 0.0
        %vm5944 = vcmp.ge.f32.partialorder %v5936, 0.0
        %vm5945 = vcmp.ge.f32.partialorder %v5937, 0.0
        %vm5946 = vcmp.ge.f32.partialorder %v5938, 0.0
        %v5947 = vmul.f32 %v5931, 0.2
        %v5948 = vmul.f32 %v5932, 0.2
        %v5949 = vmul.f32 %v5933, 0.2
        %v5950 = vmul.f32 %v5934, 0.2
        %v5951 = vmul.f32 %v5935, 0.2
        %v5952 = vmul.f32 %v5936, 0.2
        %v5953 = vmul.f32 %v5937, 0.2
        %v5954 = vmul.f32 %v5938, 0.2
        %v5955 = vsel %vm5939, %v5931, %v5947
        %v5956 = vsel %vm5940, %v5932, %v5948
        %v5957 = vsel %vm5941, %v5933, %v5949
        %v5958 = vsel %vm5942, %v5934, %v5950
        %v5959 = vsel %vm5943, %v5935, %v5951
        %v5960 = vsel %vm5944, %v5936, %v5952
        %v5961 = vsel %vm5945, %v5937, %v5953
        %v5962 = vsel %vm5946, %v5938, %v5954
        %5963 = vst.msk [vmem:[#allocation4] sm:$0xff] %vm5867, 0.0
        %vm5964 = vcmask 517120
        %5965 = vst.msk [vmem:[#allocation4 + $0x8] sm:$0x3] %vm5964, 0.0
        %5966 = vst.msk [vmem:[#allocation4 + $0x10] sm:$0xff] %vm5867, 0.0
        %5967 = vst.msk [vmem:[#allocation4 + $0x18] sm:$0x3] %vm5964, 0.0
        %5968 = vst.msk [vmem:[#allocation4 + $0x20] sm:$0xff] %vm5867, 0.0
        %5969 = vst.msk [vmem:[#allocation4 + $0x28] sm:$0x3] %vm5964, 0.0
        %5970 = vst.msk [vmem:[#allocation4 + $0x30] sm:$0xff] %vm5867, 0.0
        %5971 = vst.msk [vmem:[#allocation4 + $0x38] sm:$0x3] %vm5964, 0.0
        %5972 = vst.msk [vmem:[#allocation4 + $0x40] sm:$0xff] %vm5867, 0.0
        %5973 = vst.msk [vmem:[#allocation4 + $0x48] sm:$0x3] %vm5964, 0.0
        %5974 = vst.msk [vmem:[#allocation4 + $0x50] sm:$0xff] %vm5867, 0.0
        %5975 = vst.msk [vmem:[#allocation4 + $0x58] sm:$0x3] %vm5964, 0.0
        %5976 = vst.msk [vmem:[#allocation4 + $0x60] sm:$0xff] %vm5867, 0.0
        %5977 = vst.msk [vmem:[#allocation4 + $0x68] sm:$0x3] %vm5964, 0.0
        %5978 = vst.msk [vmem:[#allocation4 + $0x70] sm:$0xff] %vm5867, 0.0
        %5979 = vst.msk [vmem:[#allocation4 + $0x78] sm:$0x3] %vm5964, 0.0
        %5980 = vst.msk [vmem:[#allocation4 + $0x80] sm:$0xff] %vm5867, 0.0
        %5981 = vst.msk [vmem:[#allocation4 + $0x88] sm:$0x3] %vm5964, 0.0
        %5982 = vst.msk [vmem:[#allocation4 + $0x90] sm:$0xff] %vm5867, 0.0
        %5983 = vst.msk [vmem:[#allocation4 + $0x98] sm:$0x3] %vm5964, 0.0
        %s5984 = scalar_lea.vmem [#allocation4], 16
        %5985 = vst.msk [vmem:[%s5984 + $0x1] sm:$0xff] %vm5867, %v5955
        %5986 = vst.msk [vmem:[%s5984 + $0x11] sm:$0xff] %vm5867, %v5956
        %5987 = vst.msk [vmem:[%s5984 + $0x21] sm:$0xff] %vm5867, %v5957
        %5988 = vst.msk [vmem:[%s5984 + $0x31] sm:$0xff] %vm5867, %v5958
        %5989 = vst.msk [vmem:[%s5984 + $0x41] sm:$0xff] %vm5867, %v5959
        %5990 = vst.msk [vmem:[%s5984 + $0x51] sm:$0xff] %vm5867, %v5960
        %5991 = vst.msk [vmem:[%s5984 + $0x61] sm:$0xff] %vm5867, %v5961
        %5992 = vst.msk [vmem:[%s5984 + $0x71] sm:$0xff] %vm5867, %v5962
        %v5993 = vld [vmem:[#allocation4] sm:$0xff]
        %v5994 = vld [vmem:[#allocation4 + $0x8] sm:$0x3]
        %v5995 = vld [vmem:[#allocation4 + $0x10] sm:$0xff]
        %v5996 = vld [vmem:[#allocation4 + $0x18] sm:$0x3]
        %v5997 = vld [vmem:[#allocation4 + $0x20] sm:$0xff]
        %v5998 = vld [vmem:[#allocation4 + $0x28] sm:$0x3]
        %v5999 = vld [vmem:[#allocation4 + $0x30] sm:$0xff]
        %v6000 = vld [vmem:[#allocation4 + $0x38] sm:$0x3]
        %v6001 = vld [vmem:[#allocation4 + $0x40] sm:$0xff]
        %v6002 = vld [vmem:[#allocation4 + $0x48] sm:$0x3]
        %v6003 = vld [vmem:[#allocation4 + $0x50] sm:$0xff]
        %v6004 = vld [vmem:[#allocation4 + $0x58] sm:$0x3]
        %v6005 = vld [vmem:[#allocation4 + $0x60] sm:$0xff]
        %v6006 = vld [vmem:[#allocation4 + $0x68] sm:$0x3]
        %v6007 = vld [vmem:[#allocation4 + $0x70] sm:$0xff]
        %v6008 = vld [vmem:[#allocation4 + $0x78] sm:$0x3]
        %v6009 = vld [vmem:[#allocation4 + $0x80] sm:$0xff]
        %v6010 = vld [vmem:[#allocation4 + $0x88] sm:$0x3]
        %v6011 = vld [vmem:[#allocation12] sm:$0xff]
        %v6012 = vld [vmem:[#allocation12 + $0x8] sm:$0xff]
        %v6013 = vld [vmem:[#allocation12 + $0x10] sm:$0xff]
        %v6014 = vld [vmem:[#allocation12 + $0x18] sm:$0xff]
        %v6015 = vld [vmem:[#allocation12 + $0x20] sm:$0xff]
        %v6016 = vld [vmem:[#allocation12 + $0x28] sm:$0xff]
        %v6017 = vld [vmem:[#allocation12 + $0x30] sm:$0xff]
        %v6018 = vld [vmem:[#allocation12 + $0x38] sm:$0xff]
        %v6027 = vrot.slane %v5993, 1
        %v6028 = vrot.slane %v5994, 1
        %v6029 = vsel %vm696, %v6027, %v6028
        %v6030 = vrot.slane %v5997, 1
        %v6031 = vrot.slane %v5998, 1
        %v6032 = vsel %vm696, %v6030, %v6031
        %v6033 = vrot.slane %v6001, 1
        %v6034 = vrot.slane %v6002, 1
        %v6035 = vsel %vm696, %v6033, %v6034
        %v6036 = vrot.slane %v6005, 1
        %v6037 = vrot.slane %v6006, 1
        %v6038 = vsel %vm696, %v6036, %v6037
        %s6039 = scalar_lea.vmem [#allocation12], 64
        %v6040 = vld [vmem:[%s6039] sm:$0xff]
        %v6041 = vld [vmem:[%s6039 + $0x8] sm:$0xff]
        %v6042 = vld [vmem:[%s6039 + $0x10] sm:$0xff]
        %v6043 = vld [vmem:[%s6039 + $0x18] sm:$0xff]
        %v6044 = vld [vmem:[%s6039 + $0x20] sm:$0xff]
        %v6045 = vld [vmem:[%s6039 + $0x28] sm:$0xff]
        %v6046 = vld [vmem:[%s6039 + $0x30] sm:$0xff]
        %v6047 = vld [vmem:[%s6039 + $0x38] sm:$0xff]
        %v6048 = vsel %vm5867, %v6029, 0
        %v6050 = vsel %vm5867, %v6032, 0
        %v6052 = vsel %vm5867, %v6035, 0
        %v6054 = vsel %vm5867, %v6038, 0
        %6056 = vmatprep.subr.mxu0 0.0
        %6057 = vmatpush1.msra.mxu0 0.0
        %6058 = vmatprep.subr.mxu0 0.0
        %6059 = vmatpush1.msra.mxu0 0.0
        %6060 = vmatprep.subr.mxu0 0.0
        %6061 = vmatpush1.msra.mxu0 0.0
        %6062 = vmatprep.subr.mxu0 0.0
        %6063 = vmatpush1.msra.mxu0 0.0
        %6064 = vmatprep.subr.mxu0 0.0
        %6065 = vmatpush1.msra.mxu0 0.0
        %6066 = vmatprep.subr.mxu0 0.0
        %6067 = vmatpush1.msra.mxu0 0.0
        %6068 = vmatprep.subr.mxu0 0.0
        %6069 = vmatpush1.msra.mxu0 0.0
        %6070 = vmatprep.subr.mxu0 0.0
        %6071 = vmatpush1.msra.mxu0 0.0
        %6072 = vmatprep.subr.mxu0 0.0
        %6073 = vmatpush1.msra.mxu0 %v6047
        %6074 = vmatprep.subr.mxu0 0.0
        %6075 = vmatpush1.msra.mxu0 %v6046
        %6076 = vmatprep.subr.mxu0 0.0
        %6077 = vmatpush1.msra.mxu0 %v6045
        %6078 = vmatprep.subr.mxu0 0.0
        %6079 = vmatpush1.msra.mxu0 %v6044
        %6080 = vmatprep.subr.mxu0 0.0
        %6081 = vmatpush1.msra.mxu0 %v6043
        %6082 = vmatprep.subr.mxu0 0.0
        %6083 = vmatpush1.msra.mxu0 %v6042
        %6084 = vmatprep.subr.mxu0 0.0
        %6085 = vmatpush1.msra.mxu0 %v6041
        %6086 = vmatprep.subr.mxu0 0.0
        %6087 = vmatpush1.msra.mxu0 %v6040
        %6088 = vmatprep.subr.mxu0 0.0
        %6089 = vmatpush2.msra.mxu0 0.0
        %6090 = vmatprep.subr.mxu0 0.0
        %6091 = vmatpush2.msra.mxu0 0.0
        %6092 = vmatprep.subr.mxu0 0.0
        %6093 = vmatpush2.msra.mxu0 0.0
        %6094 = vmatprep.subr.mxu0 0.0
        %6095 = vmatpush2.msra.mxu0 0.0
        %6096 = vmatprep.subr.mxu0 0.0
        %6097 = vmatpush2.msra.mxu0 0.0
        %6098 = vmatprep.subr.mxu0 0.0
        %6099 = vmatpush2.msra.mxu0 0.0
        %6100 = vmatprep.subr.mxu0 0.0
        %6101 = vmatpush2.msra.mxu0 0.0
        %6102 = vmatprep.subr.mxu0 0.0
        %6103 = vmatpush2.msra.mxu0 0.0
        %6104 = vmatprep.subr.mxu0 0.0
        %6105 = vmatpush2.msra.mxu0 0.0
        %6106 = vmatprep.subr.mxu0 0.0
        %6107 = vmatpush2.msra.mxu0 0.0
        %6108 = vmatprep.subr.mxu0 0.0
        %6109 = vmatpush2.msra.mxu0 0.0
        %6110 = vmatprep.subr.mxu0 0.0
        %6111 = vmatpush2.msra.mxu0 0.0
        %6112 = vmatprep.subr.mxu0 0.0
        %6113 = vmatpush2.msra.mxu0 0.0
        %6114 = vmatprep.subr.mxu0 0.0
        %6115 = vmatpush2.msra.mxu0 0.0
        %6116 = vmatprep.subr.mxu0 0.0
        %6117 = vmatpush2.msra.mxu0 0.0
        %6118 = vmatprep.subr.mxu0 0.0
        %6119 = vmatpush2.msra.mxu0 0.0
        %6120 = vmatprep.mubr.f32.mxu0 0.0
        %6121 = vmatmul.mubr.f32.gmra.mxu0 %v6048
        %v6122 = vpop.f32.mrf.mxu0
        %v6123 = vadd.f32 0.0, %v6122
        %v6124 = vpop.f32.mrf.mxu0
        %6125 = vmatprep.mubr.f32.mxu0 0.0
        %6126 = vmatmul.mubr.f32.gmra.mxu0 %v6050
        %v6127 = vpop.f32.mrf.mxu0
        %v6128 = vadd.f32 0.0, %v6127
        %v6129 = vpop.f32.mrf.mxu0
        %6130 = vmatprep.mubr.f32.mxu0 0.0
        %6131 = vmatmul.mubr.f32.gmra.mxu0 %v6052
        %v6132 = vpop.f32.mrf.mxu0
        %v6133 = vadd.f32 0.0, %v6132
        %v6134 = vpop.f32.mrf.mxu0
        %6135 = vmatprep.mubr.f32.mxu0 0.0
        %6136 = vmatmul.mubr.f32.gmra.mxu0 %v6054
        %v6137 = vpop.f32.mrf.mxu0
        %v6138 = vadd.f32 0.0, %v6137
        %v6139 = vpop.f32.mrf.mxu0
        %6140 = vdwg.mxu0
        %v6141 = vsel %vm5867, %v5993, 0
        %v6143 = vsel %vm5867, %v5997, 0
        %v6145 = vsel %vm5867, %v6001, 0
        %v6147 = vsel %vm5867, %v6005, 0
        %6149 = vmatprep.subr.mxu0 0.0
        %6150 = vmatpush1.msra.mxu0 0.0
        %6151 = vmatprep.subr.mxu0 0.0
        %6152 = vmatpush1.msra.mxu0 0.0
        %6153 = vmatprep.subr.mxu0 0.0
        %6154 = vmatpush1.msra.mxu0 0.0
        %6155 = vmatprep.subr.mxu0 0.0
        %6156 = vmatpush1.msra.mxu0 0.0
        %6157 = vmatprep.subr.mxu0 0.0
        %6158 = vmatpush1.msra.mxu0 0.0
        %6159 = vmatprep.subr.mxu0 0.0
        %6160 = vmatpush1.msra.mxu0 0.0
        %6161 = vmatprep.subr.mxu0 0.0
        %6162 = vmatpush1.msra.mxu0 0.0
        %6163 = vmatprep.subr.mxu0 0.0
        %6164 = vmatpush1.msra.mxu0 0.0
        %6165 = vmatprep.subr.mxu0 0.0
        %6166 = vmatpush1.msra.mxu0 %v6018
        %6167 = vmatprep.subr.mxu0 0.0
        %6168 = vmatpush1.msra.mxu0 %v6017
        %6169 = vmatprep.subr.mxu0 0.0
        %6170 = vmatpush1.msra.mxu0 %v6016
        %6171 = vmatprep.subr.mxu0 0.0
        %6172 = vmatpush1.msra.mxu0 %v6015
        %6173 = vmatprep.subr.mxu0 0.0
        %6174 = vmatpush1.msra.mxu0 %v6014
        %6175 = vmatprep.subr.mxu0 0.0
        %6176 = vmatpush1.msra.mxu0 %v6013
        %6177 = vmatprep.subr.mxu0 0.0
        %6178 = vmatpush1.msra.mxu0 %v6012
        %6179 = vmatprep.subr.mxu0 0.0
        %6180 = vmatpush1.msra.mxu0 %v6011
        %6181 = vmatprep.subr.mxu0 0.0
        %6182 = vmatpush2.msra.mxu0 0.0
        %6183 = vmatprep.subr.mxu0 0.0
        %6184 = vmatpush2.msra.mxu0 0.0
        %6185 = vmatprep.subr.mxu0 0.0
        %6186 = vmatpush2.msra.mxu0 0.0
        %6187 = vmatprep.subr.mxu0 0.0
        %6188 = vmatpush2.msra.mxu0 0.0
        %6189 = vmatprep.subr.mxu0 0.0
        %6190 = vmatpush2.msra.mxu0 0.0
        %6191 = vmatprep.subr.mxu0 0.0
        %6192 = vmatpush2.msra.mxu0 0.0
        %6193 = vmatprep.subr.mxu0 0.0
        %6194 = vmatpush2.msra.mxu0 0.0
        %6195 = vmatprep.subr.mxu0 0.0
        %6196 = vmatpush2.msra.mxu0 0.0
        %6197 = vmatprep.subr.mxu0 0.0
        %6198 = vmatpush2.msra.mxu0 0.0
        %6199 = vmatprep.subr.mxu0 0.0
        %6200 = vmatpush2.msra.mxu0 0.0
        %6201 = vmatprep.subr.mxu0 0.0
        %6202 = vmatpush2.msra.mxu0 0.0
        %6203 = vmatprep.subr.mxu0 0.0
        %6204 = vmatpush2.msra.mxu0 0.0
        %6205 = vmatprep.subr.mxu0 0.0
        %6206 = vmatpush2.msra.mxu0 0.0
        %6207 = vmatprep.subr.mxu0 0.0
        %6208 = vmatpush2.msra.mxu0 0.0
        %6209 = vmatprep.subr.mxu0 0.0
        %6210 = vmatpush2.msra.mxu0 0.0
        %6211 = vmatprep.subr.mxu0 0.0
        %6212 = vmatpush2.msra.mxu0 0.0
        %6213 = vmatprep.mubr.f32.mxu0 0.0
        %6214 = vmatmul.mubr.f32.gmra.mxu0 %v6141
        %v6215 = vpop.f32.mrf.mxu0
        %v6216 = vadd.f32 %v6123, %v6215
        %v6217 = vpop.f32.mrf.mxu0
        %6218 = vmatprep.mubr.f32.mxu0 0.0
        %6219 = vmatmul.mubr.f32.gmra.mxu0 %v6143
        %v6220 = vpop.f32.mrf.mxu0
        %v6221 = vadd.f32 %v6128, %v6220
        %v6222 = vpop.f32.mrf.mxu0
        %6223 = vmatprep.mubr.f32.mxu0 0.0
        %6224 = vmatmul.mubr.f32.gmra.mxu0 %v6145
        %v6225 = vpop.f32.mrf.mxu0
        %v6226 = vadd.f32 %v6133, %v6225
        %v6227 = vpop.f32.mrf.mxu0
        %6228 = vmatprep.mubr.f32.mxu0 0.0
        %6229 = vmatmul.mubr.f32.gmra.mxu0 %v6147
        %v6230 = vpop.f32.mrf.mxu0
        %v6231 = vadd.f32 %v6138, %v6230
        %v6232 = vpop.f32.mrf.mxu0
        %6233 = vdwg.mxu0
        %v6234 = vrot.slane %v5993, 2
        %v6235 = vrot.slane %v5994, 2
        %v6236 = vsel %vm1364, %v6234, %v6235
        %v6237 = vrot.slane %v5997, 2
        %v6238 = vrot.slane %v5998, 2
        %v6239 = vsel %vm1364, %v6237, %v6238
        %v6240 = vrot.slane %v6001, 2
        %v6241 = vrot.slane %v6002, 2
        %v6242 = vsel %vm1364, %v6240, %v6241
        %v6243 = vrot.slane %v6005, 2
        %v6244 = vrot.slane %v6006, 2
        %v6245 = vsel %vm1364, %v6243, %v6244
        %s6246 = scalar_lea.vmem [#allocation12], 128
        %v6247 = vld [vmem:[%s6246] sm:$0xff]
        %v6248 = vld [vmem:[%s6246 + $0x8] sm:$0xff]
        %v6249 = vld [vmem:[%s6246 + $0x10] sm:$0xff]
        %v6250 = vld [vmem:[%s6246 + $0x18] sm:$0xff]
        %v6251 = vld [vmem:[%s6246 + $0x20] sm:$0xff]
        %v6252 = vld [vmem:[%s6246 + $0x28] sm:$0xff]
        %v6253 = vld [vmem:[%s6246 + $0x30] sm:$0xff]
        %v6254 = vld [vmem:[%s6246 + $0x38] sm:$0xff]
        %v6255 = vsel %vm5867, %v6236, 0
        %v6257 = vsel %vm5867, %v6239, 0
        %v6259 = vsel %vm5867, %v6242, 0
        %v6261 = vsel %vm5867, %v6245, 0
        %6263 = vmatprep.subr.mxu0 0.0
        %6264 = vmatpush1.msra.mxu0 0.0
        %6265 = vmatprep.subr.mxu0 0.0
        %6266 = vmatpush1.msra.mxu0 0.0
        %6267 = vmatprep.subr.mxu0 0.0
        %6268 = vmatpush1.msra.mxu0 0.0
        %6269 = vmatprep.subr.mxu0 0.0
        %6270 = vmatpush1.msra.mxu0 0.0
        %6271 = vmatprep.subr.mxu0 0.0
        %6272 = vmatpush1.msra.mxu0 0.0
        %6273 = vmatprep.subr.mxu0 0.0
        %6274 = vmatpush1.msra.mxu0 0.0
        %6275 = vmatprep.subr.mxu0 0.0
        %6276 = vmatpush1.msra.mxu0 0.0
        %6277 = vmatprep.subr.mxu0 0.0
        %6278 = vmatpush1.msra.mxu0 0.0
        %6279 = vmatprep.subr.mxu0 0.0
        %6280 = vmatpush1.msra.mxu0 %v6254
        %6281 = vmatprep.subr.mxu0 0.0
        %6282 = vmatpush1.msra.mxu0 %v6253
        %6283 = vmatprep.subr.mxu0 0.0
        %6284 = vmatpush1.msra.mxu0 %v6252
        %6285 = vmatprep.subr.mxu0 0.0
        %6286 = vmatpush1.msra.mxu0 %v6251
        %6287 = vmatprep.subr.mxu0 0.0
        %6288 = vmatpush1.msra.mxu0 %v6250
        %6289 = vmatprep.subr.mxu0 0.0
        %6290 = vmatpush1.msra.mxu0 %v6249
        %6291 = vmatprep.subr.mxu0 0.0
        %6292 = vmatpush1.msra.mxu0 %v6248
        %6293 = vmatprep.subr.mxu0 0.0
        %6294 = vmatpush1.msra.mxu0 %v6247
        %6295 = vmatprep.subr.mxu0 0.0
        %6296 = vmatpush2.msra.mxu0 0.0
        %6297 = vmatprep.subr.mxu0 0.0
        %6298 = vmatpush2.msra.mxu0 0.0
        %6299 = vmatprep.subr.mxu0 0.0
        %6300 = vmatpush2.msra.mxu0 0.0
        %6301 = vmatprep.subr.mxu0 0.0
        %6302 = vmatpush2.msra.mxu0 0.0
        %6303 = vmatprep.subr.mxu0 0.0
        %6304 = vmatpush2.msra.mxu0 0.0
        %6305 = vmatprep.subr.mxu0 0.0
        %6306 = vmatpush2.msra.mxu0 0.0
        %6307 = vmatprep.subr.mxu0 0.0
        %6308 = vmatpush2.msra.mxu0 0.0
        %6309 = vmatprep.subr.mxu0 0.0
        %6310 = vmatpush2.msra.mxu0 0.0
        %6311 = vmatprep.subr.mxu0 0.0
        %6312 = vmatpush2.msra.mxu0 0.0
        %6313 = vmatprep.subr.mxu0 0.0
        %6314 = vmatpush2.msra.mxu0 0.0
        %6315 = vmatprep.subr.mxu0 0.0
        %6316 = vmatpush2.msra.mxu0 0.0
        %6317 = vmatprep.subr.mxu0 0.0
        %6318 = vmatpush2.msra.mxu0 0.0
        %6319 = vmatprep.subr.mxu0 0.0
        %6320 = vmatpush2.msra.mxu0 0.0
        %6321 = vmatprep.subr.mxu0 0.0
        %6322 = vmatpush2.msra.mxu0 0.0
        %6323 = vmatprep.subr.mxu0 0.0
        %6324 = vmatpush2.msra.mxu0 0.0
        %6325 = vmatprep.subr.mxu0 0.0
        %6326 = vmatpush2.msra.mxu0 0.0
        %6327 = vmatprep.mubr.f32.mxu0 0.0
        %6328 = vmatmul.mubr.f32.gmra.mxu0 %v6255
        %v6329 = vpop.f32.mrf.mxu0
        %v6330 = vadd.f32 0.0, %v6329
        %v6331 = vpop.f32.mrf.mxu0
        %6332 = vmatprep.mubr.f32.mxu0 0.0
        %6333 = vmatmul.mubr.f32.gmra.mxu0 %v6257
        %v6334 = vpop.f32.mrf.mxu0
        %v6335 = vadd.f32 0.0, %v6334
        %v6336 = vpop.f32.mrf.mxu0
        %6337 = vmatprep.mubr.f32.mxu0 0.0
        %6338 = vmatmul.mubr.f32.gmra.mxu0 %v6259
        %v6339 = vpop.f32.mrf.mxu0
        %v6340 = vadd.f32 0.0, %v6339
        %v6341 = vpop.f32.mrf.mxu0
        %6342 = vmatprep.mubr.f32.mxu0 0.0
        %6343 = vmatmul.mubr.f32.gmra.mxu0 %v6261
        %v6344 = vpop.f32.mrf.mxu0
        %v6345 = vadd.f32 0.0, %v6344
        %v6346 = vpop.f32.mrf.mxu0
        %6347 = vdwg.mxu0
        %v6348 = vadd.f32 %v6216, %v6330
        %v6349 = vadd.f32 %v6221, %v6335
        %v6350 = vadd.f32 %v6226, %v6340
        %v6351 = vadd.f32 %v6231, %v6345
        %s6352 = scalar_lea.vmem [#allocation12], 192
        %v6353 = vld [vmem:[%s6352] sm:$0xff]
        %v6354 = vld [vmem:[%s6352 + $0x8] sm:$0xff]
        %v6355 = vld [vmem:[%s6352 + $0x10] sm:$0xff]
        %v6356 = vld [vmem:[%s6352 + $0x18] sm:$0xff]
        %v6357 = vld [vmem:[%s6352 + $0x20] sm:$0xff]
        %v6358 = vld [vmem:[%s6352 + $0x28] sm:$0xff]
        %v6359 = vld [vmem:[%s6352 + $0x30] sm:$0xff]
        %v6360 = vld [vmem:[%s6352 + $0x38] sm:$0xff]
        %v6362 = vsel %vm5867, %v5995, 0
        %v6365 = vsel %vm5867, %v5999, 0
        %v6368 = vsel %vm5867, %v6003, 0
        %v6371 = vsel %vm5867, %v6007, 0
        %6373 = vmatprep.subr.mxu0 0.0
        %6374 = vmatpush1.msra.mxu0 0.0
        %6375 = vmatprep.subr.mxu0 0.0
        %6376 = vmatpush1.msra.mxu0 0.0
        %6377 = vmatprep.subr.mxu0 0.0
        %6378 = vmatpush1.msra.mxu0 0.0
        %6379 = vmatprep.subr.mxu0 0.0
        %6380 = vmatpush1.msra.mxu0 0.0
        %6381 = vmatprep.subr.mxu0 0.0
        %6382 = vmatpush1.msra.mxu0 0.0
        %6383 = vmatprep.subr.mxu0 0.0
        %6384 = vmatpush1.msra.mxu0 0.0
        %6385 = vmatprep.subr.mxu0 0.0
        %6386 = vmatpush1.msra.mxu0 0.0
        %6387 = vmatprep.subr.mxu0 0.0
        %6388 = vmatpush1.msra.mxu0 0.0
        %6389 = vmatprep.subr.mxu0 0.0
        %6390 = vmatpush1.msra.mxu0 %v6360
        %6391 = vmatprep.subr.mxu0 0.0
        %6392 = vmatpush1.msra.mxu0 %v6359
        %6393 = vmatprep.subr.mxu0 0.0
        %6394 = vmatpush1.msra.mxu0 %v6358
        %6395 = vmatprep.subr.mxu0 0.0
        %6396 = vmatpush1.msra.mxu0 %v6357
        %6397 = vmatprep.subr.mxu0 0.0
        %6398 = vmatpush1.msra.mxu0 %v6356
        %6399 = vmatprep.subr.mxu0 0.0
        %6400 = vmatpush1.msra.mxu0 %v6355
        %6401 = vmatprep.subr.mxu0 0.0
        %6402 = vmatpush1.msra.mxu0 %v6354
        %6403 = vmatprep.subr.mxu0 0.0
        %6404 = vmatpush1.msra.mxu0 %v6353
        %6405 = vmatprep.subr.mxu0 0.0
        %6406 = vmatpush2.msra.mxu0 0.0
        %6407 = vmatprep.subr.mxu0 0.0
        %6408 = vmatpush2.msra.mxu0 0.0
        %6409 = vmatprep.subr.mxu0 0.0
        %6410 = vmatpush2.msra.mxu0 0.0
        %6411 = vmatprep.subr.mxu0 0.0
        %6412 = vmatpush2.msra.mxu0 0.0
        %6413 = vmatprep.subr.mxu0 0.0
        %6414 = vmatpush2.msra.mxu0 0.0
        %6415 = vmatprep.subr.mxu0 0.0
        %6416 = vmatpush2.msra.mxu0 0.0
        %6417 = vmatprep.subr.mxu0 0.0
        %6418 = vmatpush2.msra.mxu0 0.0
        %6419 = vmatprep.subr.mxu0 0.0
        %6420 = vmatpush2.msra.mxu0 0.0
        %6421 = vmatprep.subr.mxu0 0.0
        %6422 = vmatpush2.msra.mxu0 0.0
        %6423 = vmatprep.subr.mxu0 0.0
        %6424 = vmatpush2.msra.mxu0 0.0
        %6425 = vmatprep.subr.mxu0 0.0
        %6426 = vmatpush2.msra.mxu0 0.0
        %6427 = vmatprep.subr.mxu0 0.0
        %6428 = vmatpush2.msra.mxu0 0.0
        %6429 = vmatprep.subr.mxu0 0.0
        %6430 = vmatpush2.msra.mxu0 0.0
        %6431 = vmatprep.subr.mxu0 0.0
        %6432 = vmatpush2.msra.mxu0 0.0
        %6433 = vmatprep.subr.mxu0 0.0
        %6434 = vmatpush2.msra.mxu0 0.0
        %6435 = vmatprep.subr.mxu0 0.0
        %6436 = vmatpush2.msra.mxu0 0.0
        %6437 = vmatprep.mubr.f32.mxu0 0.0
        %6438 = vmatmul.mubr.f32.gmra.mxu0 %v6362
        %v6439 = vpop.f32.mrf.mxu0
        %v6440 = vadd.f32 0.0, %v6439
        %v6441 = vpop.f32.mrf.mxu0
        %6442 = vmatprep.mubr.f32.mxu0 0.0
        %6443 = vmatmul.mubr.f32.gmra.mxu0 %v6365
        %v6444 = vpop.f32.mrf.mxu0
        %v6445 = vadd.f32 0.0, %v6444
        %v6446 = vpop.f32.mrf.mxu0
        %6447 = vmatprep.mubr.f32.mxu0 0.0
        %6448 = vmatmul.mubr.f32.gmra.mxu0 %v6368
        %v6449 = vpop.f32.mrf.mxu0
        %v6450 = vadd.f32 0.0, %v6449
        %v6451 = vpop.f32.mrf.mxu0
        %6452 = vmatprep.mubr.f32.mxu0 0.0
        %6453 = vmatmul.mubr.f32.gmra.mxu0 %v6371
        %v6454 = vpop.f32.mrf.mxu0
        %v6455 = vadd.f32 0.0, %v6454
        %v6456 = vpop.f32.mrf.mxu0
        %6457 = vdwg.mxu0
        %v6458 = vadd.f32 %v6348, %v6440
        %v6459 = vadd.f32 %v6349, %v6445
        %v6460 = vadd.f32 %v6350, %v6450
        %v6461 = vadd.f32 %v6351, %v6455
        %v6466 = vrot.slane %v5995, 1
        %v6467 = vrot.slane %v5996, 1
        %v6468 = vsel %vm696, %v6466, %v6467
        %v6469 = vrot.slane %v5999, 1
        %v6470 = vrot.slane %v6000, 1
        %v6471 = vsel %vm696, %v6469, %v6470
        %v6472 = vrot.slane %v6003, 1
        %v6473 = vrot.slane %v6004, 1
        %v6474 = vsel %vm696, %v6472, %v6473
        %v6475 = vrot.slane %v6007, 1
        %v6476 = vrot.slane %v6008, 1
        %v6477 = vsel %vm696, %v6475, %v6476
        %s6478 = scalar_lea.vmem [#allocation12], 256
        %v6479 = vld [vmem:[%s6478] sm:$0xff]
        %v6480 = vld [vmem:[%s6478 + $0x8] sm:$0xff]
        %v6481 = vld [vmem:[%s6478 + $0x10] sm:$0xff]
        %v6482 = vld [vmem:[%s6478 + $0x18] sm:$0xff]
        %v6483 = vld [vmem:[%s6478 + $0x20] sm:$0xff]
        %v6484 = vld [vmem:[%s6478 + $0x28] sm:$0xff]
        %v6485 = vld [vmem:[%s6478 + $0x30] sm:$0xff]
        %v6486 = vld [vmem:[%s6478 + $0x38] sm:$0xff]
        %v6487 = vsel %vm5867, %v6468, 0
        %v6489 = vsel %vm5867, %v6471, 0
        %v6491 = vsel %vm5867, %v6474, 0
        %v6493 = vsel %vm5867, %v6477, 0
        %6495 = vmatprep.subr.mxu0 0.0
        %6496 = vmatpush1.msra.mxu0 0.0
        %6497 = vmatprep.subr.mxu0 0.0
        %6498 = vmatpush1.msra.mxu0 0.0
        %6499 = vmatprep.subr.mxu0 0.0
        %6500 = vmatpush1.msra.mxu0 0.0
        %6501 = vmatprep.subr.mxu0 0.0
        %6502 = vmatpush1.msra.mxu0 0.0
        %6503 = vmatprep.subr.mxu0 0.0
        %6504 = vmatpush1.msra.mxu0 0.0
        %6505 = vmatprep.subr.mxu0 0.0
        %6506 = vmatpush1.msra.mxu0 0.0
        %6507 = vmatprep.subr.mxu0 0.0
        %6508 = vmatpush1.msra.mxu0 0.0
        %6509 = vmatprep.subr.mxu0 0.0
        %6510 = vmatpush1.msra.mxu0 0.0
        %6511 = vmatprep.subr.mxu0 0.0
        %6512 = vmatpush1.msra.mxu0 %v6486
        %6513 = vmatprep.subr.mxu0 0.0
        %6514 = vmatpush1.msra.mxu0 %v6485
        %6515 = vmatprep.subr.mxu0 0.0
        %6516 = vmatpush1.msra.mxu0 %v6484
        %6517 = vmatprep.subr.mxu0 0.0
        %6518 = vmatpush1.msra.mxu0 %v6483
        %6519 = vmatprep.subr.mxu0 0.0
        %6520 = vmatpush1.msra.mxu0 %v6482
        %6521 = vmatprep.subr.mxu0 0.0
        %6522 = vmatpush1.msra.mxu0 %v6481
        %6523 = vmatprep.subr.mxu0 0.0
        %6524 = vmatpush1.msra.mxu0 %v6480
        %6525 = vmatprep.subr.mxu0 0.0
        %6526 = vmatpush1.msra.mxu0 %v6479
        %6527 = vmatprep.subr.mxu0 0.0
        %6528 = vmatpush2.msra.mxu0 0.0
        %6529 = vmatprep.subr.mxu0 0.0
        %6530 = vmatpush2.msra.mxu0 0.0
        %6531 = vmatprep.subr.mxu0 0.0
        %6532 = vmatpush2.msra.mxu0 0.0
        %6533 = vmatprep.subr.mxu0 0.0
        %6534 = vmatpush2.msra.mxu0 0.0
        %6535 = vmatprep.subr.mxu0 0.0
        %6536 = vmatpush2.msra.mxu0 0.0
        %6537 = vmatprep.subr.mxu0 0.0
        %6538 = vmatpush2.msra.mxu0 0.0
        %6539 = vmatprep.subr.mxu0 0.0
        %6540 = vmatpush2.msra.mxu0 0.0
        %6541 = vmatprep.subr.mxu0 0.0
        %6542 = vmatpush2.msra.mxu0 0.0
        %6543 = vmatprep.subr.mxu0 0.0
        %6544 = vmatpush2.msra.mxu0 0.0
        %6545 = vmatprep.subr.mxu0 0.0
        %6546 = vmatpush2.msra.mxu0 0.0
        %6547 = vmatprep.subr.mxu0 0.0
        %6548 = vmatpush2.msra.mxu0 0.0
        %6549 = vmatprep.subr.mxu0 0.0
        %6550 = vmatpush2.msra.mxu0 0.0
        %6551 = vmatprep.subr.mxu0 0.0
        %6552 = vmatpush2.msra.mxu0 0.0
        %6553 = vmatprep.subr.mxu0 0.0
        %6554 = vmatpush2.msra.mxu0 0.0
        %6555 = vmatprep.subr.mxu0 0.0
        %6556 = vmatpush2.msra.mxu0 0.0
        %6557 = vmatprep.subr.mxu0 0.0
        %6558 = vmatpush2.msra.mxu0 0.0
        %6559 = vmatprep.mubr.f32.mxu0 0.0
        %6560 = vmatmul.mubr.f32.gmra.mxu0 %v6487
        %v6561 = vpop.f32.mrf.mxu0
        %v6562 = vadd.f32 0.0, %v6561
        %v6563 = vpop.f32.mrf.mxu0
        %6564 = vmatprep.mubr.f32.mxu0 0.0
        %6565 = vmatmul.mubr.f32.gmra.mxu0 %v6489
        %v6566 = vpop.f32.mrf.mxu0
        %v6567 = vadd.f32 0.0, %v6566
        %v6568 = vpop.f32.mrf.mxu0
        %6569 = vmatprep.mubr.f32.mxu0 0.0
        %6570 = vmatmul.mubr.f32.gmra.mxu0 %v6491
        %v6571 = vpop.f32.mrf.mxu0
        %v6572 = vadd.f32 0.0, %v6571
        %v6573 = vpop.f32.mrf.mxu0
        %6574 = vmatprep.mubr.f32.mxu0 0.0
        %6575 = vmatmul.mubr.f32.gmra.mxu0 %v6493
        %v6576 = vpop.f32.mrf.mxu0
        %v6577 = vadd.f32 0.0, %v6576
        %v6578 = vpop.f32.mrf.mxu0
        %6579 = vdwg.mxu0
        %v6580 = vadd.f32 %v6458, %v6562
        %v6581 = vadd.f32 %v6459, %v6567
        %v6582 = vadd.f32 %v6460, %v6572
        %v6583 = vadd.f32 %v6461, %v6577
        %v6584 = vrot.slane %v5995, 2
        %v6585 = vrot.slane %v5996, 2
        %v6586 = vsel %vm1364, %v6584, %v6585
        %v6587 = vrot.slane %v5999, 2
        %v6588 = vrot.slane %v6000, 2
        %v6589 = vsel %vm1364, %v6587, %v6588
        %v6590 = vrot.slane %v6003, 2
        %v6591 = vrot.slane %v6004, 2
        %v6592 = vsel %vm1364, %v6590, %v6591
        %v6593 = vrot.slane %v6007, 2
        %v6594 = vrot.slane %v6008, 2
        %v6595 = vsel %vm1364, %v6593, %v6594
        %s6596 = scalar_lea.vmem [#allocation12], 320
        %v6597 = vld [vmem:[%s6596] sm:$0xff]
        %v6598 = vld [vmem:[%s6596 + $0x8] sm:$0xff]
        %v6599 = vld [vmem:[%s6596 + $0x10] sm:$0xff]
        %v6600 = vld [vmem:[%s6596 + $0x18] sm:$0xff]
        %v6601 = vld [vmem:[%s6596 + $0x20] sm:$0xff]
        %v6602 = vld [vmem:[%s6596 + $0x28] sm:$0xff]
        %v6603 = vld [vmem:[%s6596 + $0x30] sm:$0xff]
        %v6604 = vld [vmem:[%s6596 + $0x38] sm:$0xff]
        %v6605 = vsel %vm5867, %v6586, 0
        %v6607 = vsel %vm5867, %v6589, 0
        %v6609 = vsel %vm5867, %v6592, 0
        %v6611 = vsel %vm5867, %v6595, 0
        %6613 = vmatprep.subr.mxu0 0.0
        %6614 = vmatpush1.msra.mxu0 0.0
        %6615 = vmatprep.subr.mxu0 0.0
        %6616 = vmatpush1.msra.mxu0 0.0
        %6617 = vmatprep.subr.mxu0 0.0
        %6618 = vmatpush1.msra.mxu0 0.0
        %6619 = vmatprep.subr.mxu0 0.0
        %6620 = vmatpush1.msra.mxu0 0.0
        %6621 = vmatprep.subr.mxu0 0.0
        %6622 = vmatpush1.msra.mxu0 0.0
        %6623 = vmatprep.subr.mxu0 0.0
        %6624 = vmatpush1.msra.mxu0 0.0
        %6625 = vmatprep.subr.mxu0 0.0
        %6626 = vmatpush1.msra.mxu0 0.0
        %6627 = vmatprep.subr.mxu0 0.0
        %6628 = vmatpush1.msra.mxu0 0.0
        %6629 = vmatprep.subr.mxu0 0.0
        %6630 = vmatpush1.msra.mxu0 %v6604
        %6631 = vmatprep.subr.mxu0 0.0
        %6632 = vmatpush1.msra.mxu0 %v6603
        %6633 = vmatprep.subr.mxu0 0.0
        %6634 = vmatpush1.msra.mxu0 %v6602
        %6635 = vmatprep.subr.mxu0 0.0
        %6636 = vmatpush1.msra.mxu0 %v6601
        %6637 = vmatprep.subr.mxu0 0.0
        %6638 = vmatpush1.msra.mxu0 %v6600
        %6639 = vmatprep.subr.mxu0 0.0
        %6640 = vmatpush1.msra.mxu0 %v6599
        %6641 = vmatprep.subr.mxu0 0.0
        %6642 = vmatpush1.msra.mxu0 %v6598
        %6643 = vmatprep.subr.mxu0 0.0
        %6644 = vmatpush1.msra.mxu0 %v6597
        %6645 = vmatprep.subr.mxu0 0.0
        %6646 = vmatpush2.msra.mxu0 0.0
        %6647 = vmatprep.subr.mxu0 0.0
        %6648 = vmatpush2.msra.mxu0 0.0
        %6649 = vmatprep.subr.mxu0 0.0
        %6650 = vmatpush2.msra.mxu0 0.0
        %6651 = vmatprep.subr.mxu0 0.0
        %6652 = vmatpush2.msra.mxu0 0.0
        %6653 = vmatprep.subr.mxu0 0.0
        %6654 = vmatpush2.msra.mxu0 0.0
        %6655 = vmatprep.subr.mxu0 0.0
        %6656 = vmatpush2.msra.mxu0 0.0
        %6657 = vmatprep.subr.mxu0 0.0
        %6658 = vmatpush2.msra.mxu0 0.0
        %6659 = vmatprep.subr.mxu0 0.0
        %6660 = vmatpush2.msra.mxu0 0.0
        %6661 = vmatprep.subr.mxu0 0.0
        %6662 = vmatpush2.msra.mxu0 0.0
        %6663 = vmatprep.subr.mxu0 0.0
        %6664 = vmatpush2.msra.mxu0 0.0
        %6665 = vmatprep.subr.mxu0 0.0
        %6666 = vmatpush2.msra.mxu0 0.0
        %6667 = vmatprep.subr.mxu0 0.0
        %6668 = vmatpush2.msra.mxu0 0.0
        %6669 = vmatprep.subr.mxu0 0.0
        %6670 = vmatpush2.msra.mxu0 0.0
        %6671 = vmatprep.subr.mxu0 0.0
        %6672 = vmatpush2.msra.mxu0 0.0
        %6673 = vmatprep.subr.mxu0 0.0
        %6674 = vmatpush2.msra.mxu0 0.0
        %6675 = vmatprep.subr.mxu0 0.0
        %6676 = vmatpush2.msra.mxu0 0.0
        %6677 = vmatprep.mubr.f32.mxu0 0.0
        %6678 = vmatmul.mubr.f32.gmra.mxu0 %v6605
        %v6679 = vpop.f32.mrf.mxu0
        %v6680 = vadd.f32 0.0, %v6679
        %v6681 = vpop.f32.mrf.mxu0
        %6682 = vmatprep.mubr.f32.mxu0 0.0
        %6683 = vmatmul.mubr.f32.gmra.mxu0 %v6607
        %v6684 = vpop.f32.mrf.mxu0
        %v6685 = vadd.f32 0.0, %v6684
        %v6686 = vpop.f32.mrf.mxu0
        %6687 = vmatprep.mubr.f32.mxu0 0.0
        %6688 = vmatmul.mubr.f32.gmra.mxu0 %v6609
        %v6689 = vpop.f32.mrf.mxu0
        %v6690 = vadd.f32 0.0, %v6689
        %v6691 = vpop.f32.mrf.mxu0
        %6692 = vmatprep.mubr.f32.mxu0 0.0
        %6693 = vmatmul.mubr.f32.gmra.mxu0 %v6611
        %v6694 = vpop.f32.mrf.mxu0
        %v6695 = vadd.f32 0.0, %v6694
        %v6696 = vpop.f32.mrf.mxu0
        %6697 = vdwg.mxu0
        %v6698 = vadd.f32 %v6580, %v6680
        %v6699 = vadd.f32 %v6581, %v6685
        %v6700 = vadd.f32 %v6582, %v6690
        %v6701 = vadd.f32 %v6583, %v6695
        %s6702 = scalar_lea.vmem [#allocation12], 384
        %v6703 = vld [vmem:[%s6702] sm:$0xff]
        %v6704 = vld [vmem:[%s6702 + $0x8] sm:$0xff]
        %v6705 = vld [vmem:[%s6702 + $0x10] sm:$0xff]
        %v6706 = vld [vmem:[%s6702 + $0x18] sm:$0xff]
        %v6707 = vld [vmem:[%s6702 + $0x20] sm:$0xff]
        %v6708 = vld [vmem:[%s6702 + $0x28] sm:$0xff]
        %v6709 = vld [vmem:[%s6702 + $0x30] sm:$0xff]
        %v6710 = vld [vmem:[%s6702 + $0x38] sm:$0xff]
        %v6712 = vsel %vm5867, %v6009, 0
        %6714 = vmatprep.subr.mxu0 0.0
        %6715 = vmatpush1.msra.mxu0 0.0
        %6716 = vmatprep.subr.mxu0 0.0
        %6717 = vmatpush1.msra.mxu0 0.0
        %6718 = vmatprep.subr.mxu0 0.0
        %6719 = vmatpush1.msra.mxu0 0.0
        %6720 = vmatprep.subr.mxu0 0.0
        %6721 = vmatpush1.msra.mxu0 0.0
        %6722 = vmatprep.subr.mxu0 0.0
        %6723 = vmatpush1.msra.mxu0 0.0
        %6724 = vmatprep.subr.mxu0 0.0
        %6725 = vmatpush1.msra.mxu0 0.0
        %6726 = vmatprep.subr.mxu0 0.0
        %6727 = vmatpush1.msra.mxu0 0.0
        %6728 = vmatprep.subr.mxu0 0.0
        %6729 = vmatpush1.msra.mxu0 0.0
        %6730 = vmatprep.subr.mxu0 0.0
        %6731 = vmatpush1.msra.mxu0 %v6710
        %6732 = vmatprep.subr.mxu0 0.0
        %6733 = vmatpush1.msra.mxu0 %v6709
        %6734 = vmatprep.subr.mxu0 0.0
        %6735 = vmatpush1.msra.mxu0 %v6708
        %6736 = vmatprep.subr.mxu0 0.0
        %6737 = vmatpush1.msra.mxu0 %v6707
        %6738 = vmatprep.subr.mxu0 0.0
        %6739 = vmatpush1.msra.mxu0 %v6706
        %6740 = vmatprep.subr.mxu0 0.0
        %6741 = vmatpush1.msra.mxu0 %v6705
        %6742 = vmatprep.subr.mxu0 0.0
        %6743 = vmatpush1.msra.mxu0 %v6704
        %6744 = vmatprep.subr.mxu0 0.0
        %6745 = vmatpush1.msra.mxu0 %v6703
        %6746 = vmatprep.subr.mxu0 0.0
        %6747 = vmatpush2.msra.mxu0 0.0
        %6748 = vmatprep.subr.mxu0 0.0
        %6749 = vmatpush2.msra.mxu0 0.0
        %6750 = vmatprep.subr.mxu0 0.0
        %6751 = vmatpush2.msra.mxu0 0.0
        %6752 = vmatprep.subr.mxu0 0.0
        %6753 = vmatpush2.msra.mxu0 0.0
        %6754 = vmatprep.subr.mxu0 0.0
        %6755 = vmatpush2.msra.mxu0 0.0
        %6756 = vmatprep.subr.mxu0 0.0
        %6757 = vmatpush2.msra.mxu0 0.0
        %6758 = vmatprep.subr.mxu0 0.0
        %6759 = vmatpush2.msra.mxu0 0.0
        %6760 = vmatprep.subr.mxu0 0.0
        %6761 = vmatpush2.msra.mxu0 0.0
        %6762 = vmatprep.subr.mxu0 0.0
        %6763 = vmatpush2.msra.mxu0 0.0
        %6764 = vmatprep.subr.mxu0 0.0
        %6765 = vmatpush2.msra.mxu0 0.0
        %6766 = vmatprep.subr.mxu0 0.0
        %6767 = vmatpush2.msra.mxu0 0.0
        %6768 = vmatprep.subr.mxu0 0.0
        %6769 = vmatpush2.msra.mxu0 0.0
        %6770 = vmatprep.subr.mxu0 0.0
        %6771 = vmatpush2.msra.mxu0 0.0
        %6772 = vmatprep.subr.mxu0 0.0
        %6773 = vmatpush2.msra.mxu0 0.0
        %6774 = vmatprep.subr.mxu0 0.0
        %6775 = vmatpush2.msra.mxu0 0.0
        %6776 = vmatprep.subr.mxu0 0.0
        %6777 = vmatpush2.msra.mxu0 0.0
        %6778 = vmatprep.mubr.f32.mxu0 0.0
        %6779 = vmatmul.mubr.f32.gmra.mxu0 %v6143
        %v6780 = vpop.f32.mrf.mxu0
        %v6781 = vadd.f32 0.0, %v6780
        %v6782 = vpop.f32.mrf.mxu0
        %6783 = vmatprep.mubr.f32.mxu0 0.0
        %6784 = vmatmul.mubr.f32.gmra.mxu0 %v6145
        %v6785 = vpop.f32.mrf.mxu0
        %v6786 = vadd.f32 0.0, %v6785
        %v6787 = vpop.f32.mrf.mxu0
        %6788 = vmatprep.mubr.f32.mxu0 0.0
        %6789 = vmatmul.mubr.f32.gmra.mxu0 %v6147
        %v6790 = vpop.f32.mrf.mxu0
        %v6791 = vadd.f32 0.0, %v6790
        %v6792 = vpop.f32.mrf.mxu0
        %6793 = vmatprep.mubr.f32.mxu0 0.0
        %6794 = vmatmul.mubr.f32.gmra.mxu0 %v6712
        %v6795 = vpop.f32.mrf.mxu0
        %v6796 = vadd.f32 0.0, %v6795
        %v6797 = vpop.f32.mrf.mxu0
        %6798 = vdwg.mxu0
        %v6799 = vadd.f32 %v6698, %v6781
        %v6800 = vadd.f32 %v6699, %v6786
        %v6801 = vadd.f32 %v6700, %v6791
        %v6802 = vadd.f32 %v6701, %v6796
        %v6804 = vrot.slane %v6009, 1
        %v6805 = vrot.slane %v6010, 1
        %v6806 = vsel %vm696, %v6804, %v6805
        %s6807 = scalar_lea.vmem [#allocation12], 448
        %v6808 = vld [vmem:[%s6807] sm:$0xff]
        %v6809 = vld [vmem:[%s6807 + $0x8] sm:$0xff]
        %v6810 = vld [vmem:[%s6807 + $0x10] sm:$0xff]
        %v6811 = vld [vmem:[%s6807 + $0x18] sm:$0xff]
        %v6812 = vld [vmem:[%s6807 + $0x20] sm:$0xff]
        %v6813 = vld [vmem:[%s6807 + $0x28] sm:$0xff]
        %v6814 = vld [vmem:[%s6807 + $0x30] sm:$0xff]
        %v6815 = vld [vmem:[%s6807 + $0x38] sm:$0xff]
        %v6816 = vsel %vm5867, %v6806, 0
        %6818 = vmatprep.subr.mxu0 0.0
        %6819 = vmatpush1.msra.mxu0 0.0
        %6820 = vmatprep.subr.mxu0 0.0
        %6821 = vmatpush1.msra.mxu0 0.0
        %6822 = vmatprep.subr.mxu0 0.0
        %6823 = vmatpush1.msra.mxu0 0.0
        %6824 = vmatprep.subr.mxu0 0.0
        %6825 = vmatpush1.msra.mxu0 0.0
        %6826 = vmatprep.subr.mxu0 0.0
        %6827 = vmatpush1.msra.mxu0 0.0
        %6828 = vmatprep.subr.mxu0 0.0
        %6829 = vmatpush1.msra.mxu0 0.0
        %6830 = vmatprep.subr.mxu0 0.0
        %6831 = vmatpush1.msra.mxu0 0.0
        %6832 = vmatprep.subr.mxu0 0.0
        %6833 = vmatpush1.msra.mxu0 0.0
        %6834 = vmatprep.subr.mxu0 0.0
        %6835 = vmatpush1.msra.mxu0 %v6815
        %6836 = vmatprep.subr.mxu0 0.0
        %6837 = vmatpush1.msra.mxu0 %v6814
        %6838 = vmatprep.subr.mxu0 0.0
        %6839 = vmatpush1.msra.mxu0 %v6813
        %6840 = vmatprep.subr.mxu0 0.0
        %6841 = vmatpush1.msra.mxu0 %v6812
        %6842 = vmatprep.subr.mxu0 0.0
        %6843 = vmatpush1.msra.mxu0 %v6811
        %6844 = vmatprep.subr.mxu0 0.0
        %6845 = vmatpush1.msra.mxu0 %v6810
        %6846 = vmatprep.subr.mxu0 0.0
        %6847 = vmatpush1.msra.mxu0 %v6809
        %6848 = vmatprep.subr.mxu0 0.0
        %6849 = vmatpush1.msra.mxu0 %v6808
        %6850 = vmatprep.subr.mxu0 0.0
        %6851 = vmatpush2.msra.mxu0 0.0
        %6852 = vmatprep.subr.mxu0 0.0
        %6853 = vmatpush2.msra.mxu0 0.0
        %6854 = vmatprep.subr.mxu0 0.0
        %6855 = vmatpush2.msra.mxu0 0.0
        %6856 = vmatprep.subr.mxu0 0.0
        %6857 = vmatpush2.msra.mxu0 0.0
        %6858 = vmatprep.subr.mxu0 0.0
        %6859 = vmatpush2.msra.mxu0 0.0
        %6860 = vmatprep.subr.mxu0 0.0
        %6861 = vmatpush2.msra.mxu0 0.0
        %6862 = vmatprep.subr.mxu0 0.0
        %6863 = vmatpush2.msra.mxu0 0.0
        %6864 = vmatprep.subr.mxu0 0.0
        %6865 = vmatpush2.msra.mxu0 0.0
        %6866 = vmatprep.subr.mxu0 0.0
        %6867 = vmatpush2.msra.mxu0 0.0
        %6868 = vmatprep.subr.mxu0 0.0
        %6869 = vmatpush2.msra.mxu0 0.0
        %6870 = vmatprep.subr.mxu0 0.0
        %6871 = vmatpush2.msra.mxu0 0.0
        %6872 = vmatprep.subr.mxu0 0.0
        %6873 = vmatpush2.msra.mxu0 0.0
        %6874 = vmatprep.subr.mxu0 0.0
        %6875 = vmatpush2.msra.mxu0 0.0
        %6876 = vmatprep.subr.mxu0 0.0
        %6877 = vmatpush2.msra.mxu0 0.0
        %6878 = vmatprep.subr.mxu0 0.0
        %6879 = vmatpush2.msra.mxu0 0.0
        %6880 = vmatprep.subr.mxu0 0.0
        %6881 = vmatpush2.msra.mxu0 0.0
        %6882 = vmatprep.mubr.f32.mxu0 0.0
        %6883 = vmatmul.mubr.f32.gmra.mxu0 %v6050
        %v6884 = vpop.f32.mrf.mxu0
        %v6885 = vadd.f32 0.0, %v6884
        %v6886 = vpop.f32.mrf.mxu0
        %6887 = vmatprep.mubr.f32.mxu0 0.0
        %6888 = vmatmul.mubr.f32.gmra.mxu0 %v6052
        %v6889 = vpop.f32.mrf.mxu0
        %v6890 = vadd.f32 0.0, %v6889
        %v6891 = vpop.f32.mrf.mxu0
        %6892 = vmatprep.mubr.f32.mxu0 0.0
        %6893 = vmatmul.mubr.f32.gmra.mxu0 %v6054
        %v6894 = vpop.f32.mrf.mxu0
        %v6895 = vadd.f32 0.0, %v6894
        %v6896 = vpop.f32.mrf.mxu0
        %6897 = vmatprep.mubr.f32.mxu0 0.0
        %6898 = vmatmul.mubr.f32.gmra.mxu0 %v6816
        %v6899 = vpop.f32.mrf.mxu0
        %v6900 = vadd.f32 0.0, %v6899
        %v6901 = vpop.f32.mrf.mxu0
        %6902 = vdwg.mxu0
        %v6903 = vadd.f32 %v6799, %v6885
        %v6904 = vadd.f32 %v6800, %v6890
        %v6905 = vadd.f32 %v6801, %v6895
        %v6906 = vadd.f32 %v6802, %v6900
        %v6907 = vrot.slane %v6009, 2
        %v6908 = vrot.slane %v6010, 2
        %v6909 = vsel %vm1364, %v6907, %v6908
        %s6910 = scalar_lea.vmem [#allocation12], 512
        %v6911 = vld [vmem:[%s6910] sm:$0xff]
        %v6912 = vld [vmem:[%s6910 + $0x8] sm:$0xff]
        %v6913 = vld [vmem:[%s6910 + $0x10] sm:$0xff]
        %v6914 = vld [vmem:[%s6910 + $0x18] sm:$0xff]
        %v6915 = vld [vmem:[%s6910 + $0x20] sm:$0xff]
        %v6916 = vld [vmem:[%s6910 + $0x28] sm:$0xff]
        %v6917 = vld [vmem:[%s6910 + $0x30] sm:$0xff]
        %v6918 = vld [vmem:[%s6910 + $0x38] sm:$0xff]
        %v6919 = vsel %vm5867, %v6909, 0
        %6921 = vmatprep.subr.mxu0 0.0
        %6922 = vmatpush1.msra.mxu0 0.0
        %6923 = vmatprep.subr.mxu0 0.0
        %6924 = vmatpush1.msra.mxu0 0.0
        %6925 = vmatprep.subr.mxu0 0.0
        %6926 = vmatpush1.msra.mxu0 0.0
        %6927 = vmatprep.subr.mxu0 0.0
        %6928 = vmatpush1.msra.mxu0 0.0
        %6929 = vmatprep.subr.mxu0 0.0
        %6930 = vmatpush1.msra.mxu0 0.0
        %6931 = vmatprep.subr.mxu0 0.0
        %6932 = vmatpush1.msra.mxu0 0.0
        %6933 = vmatprep.subr.mxu0 0.0
        %6934 = vmatpush1.msra.mxu0 0.0
        %6935 = vmatprep.subr.mxu0 0.0
        %6936 = vmatpush1.msra.mxu0 0.0
        %6937 = vmatprep.subr.mxu0 0.0
        %6938 = vmatpush1.msra.mxu0 %v6918
        %6939 = vmatprep.subr.mxu0 0.0
        %6940 = vmatpush1.msra.mxu0 %v6917
        %6941 = vmatprep.subr.mxu0 0.0
        %6942 = vmatpush1.msra.mxu0 %v6916
        %6943 = vmatprep.subr.mxu0 0.0
        %6944 = vmatpush1.msra.mxu0 %v6915
        %6945 = vmatprep.subr.mxu0 0.0
        %6946 = vmatpush1.msra.mxu0 %v6914
        %6947 = vmatprep.subr.mxu0 0.0
        %6948 = vmatpush1.msra.mxu0 %v6913
        %6949 = vmatprep.subr.mxu0 0.0
        %6950 = vmatpush1.msra.mxu0 %v6912
        %6951 = vmatprep.subr.mxu0 0.0
        %6952 = vmatpush1.msra.mxu0 %v6911
        %6953 = vmatprep.subr.mxu0 0.0
        %6954 = vmatpush2.msra.mxu0 0.0
        %6955 = vmatprep.subr.mxu0 0.0
        %6956 = vmatpush2.msra.mxu0 0.0
        %6957 = vmatprep.subr.mxu0 0.0
        %6958 = vmatpush2.msra.mxu0 0.0
        %6959 = vmatprep.subr.mxu0 0.0
        %6960 = vmatpush2.msra.mxu0 0.0
        %6961 = vmatprep.subr.mxu0 0.0
        %6962 = vmatpush2.msra.mxu0 0.0
        %6963 = vmatprep.subr.mxu0 0.0
        %6964 = vmatpush2.msra.mxu0 0.0
        %6965 = vmatprep.subr.mxu0 0.0
        %6966 = vmatpush2.msra.mxu0 0.0
        %6967 = vmatprep.subr.mxu0 0.0
        %6968 = vmatpush2.msra.mxu0 0.0
        %6969 = vmatprep.subr.mxu0 0.0
        %6970 = vmatpush2.msra.mxu0 0.0
        %6971 = vmatprep.subr.mxu0 0.0
        %6972 = vmatpush2.msra.mxu0 0.0
        %6973 = vmatprep.subr.mxu0 0.0
        %6974 = vmatpush2.msra.mxu0 0.0
        %6975 = vmatprep.subr.mxu0 0.0
        %6976 = vmatpush2.msra.mxu0 0.0
        %6977 = vmatprep.subr.mxu0 0.0
        %6978 = vmatpush2.msra.mxu0 0.0
        %6979 = vmatprep.subr.mxu0 0.0
        %6980 = vmatpush2.msra.mxu0 0.0
        %6981 = vmatprep.subr.mxu0 0.0
        %6982 = vmatpush2.msra.mxu0 0.0
        %6983 = vmatprep.subr.mxu0 0.0
        %6984 = vmatpush2.msra.mxu0 0.0
        %6985 = vmatprep.mubr.f32.mxu0 0.0
        %6986 = vmatmul.mubr.f32.gmra.mxu0 %v6257
        %v6987 = vpop.f32.mrf.mxu0
        %v6988 = vadd.f32 0.0, %v6987
        %v6989 = vpop.f32.mrf.mxu0
        %6990 = vmatprep.mubr.f32.mxu0 0.0
        %6991 = vmatmul.mubr.f32.gmra.mxu0 %v6259
        %v6992 = vpop.f32.mrf.mxu0
        %v6993 = vadd.f32 0.0, %v6992
        %v6994 = vpop.f32.mrf.mxu0
        %6995 = vmatprep.mubr.f32.mxu0 0.0
        %6996 = vmatmul.mubr.f32.gmra.mxu0 %v6261
        %v6997 = vpop.f32.mrf.mxu0
        %v6998 = vadd.f32 0.0, %v6997
        %v6999 = vpop.f32.mrf.mxu0
        %7000 = vmatprep.mubr.f32.mxu0 0.0
        %7001 = vmatmul.mubr.f32.gmra.mxu0 %v6919
        %v7002 = vpop.f32.mrf.mxu0
        %v7003 = vadd.f32 0.0, %v7002
        %v7004 = vpop.f32.mrf.mxu0
        %7005 = vdwg.mxu0
        %v7006 = vadd.f32 %v6903, %v6988
        %v7007 = vadd.f32 %v6904, %v6993
        %v7008 = vadd.f32 %v6905, %v6998
        %v7009 = vadd.f32 %v6906, %v7003
        %v7010 = vld [vmem:[#allocation16] sm:$0xff]
        %v7011 = vld [vmem:[#allocation16 + $0x8] sm:$0xff]
        %v7013 = vsel %vm3393, %v7010, 0
        %v7016 = vsel %vm3393, %v7011, 0
        %7018 = vmatprep.subr.mxu0 0.0
        %7019 = vmatpush1.msra.mxu0 0.0
        %7020 = vmatprep.subr.mxu0 0.0
        %7021 = vmatpush1.msra.mxu0 0.0
        %7022 = vmatprep.subr.mxu0 0.0
        %7023 = vmatpush1.msra.mxu0 0.0
        %7024 = vmatprep.subr.mxu0 0.0
        %7025 = vmatpush1.msra.mxu0 0.0
        %7026 = vmatprep.subr.mxu0 0.0
        %7027 = vmatpush1.msra.mxu0 0.0
        %7028 = vmatprep.subr.mxu0 0.0
        %7029 = vmatpush1.msra.mxu0 0.0
        %7030 = vmatprep.subr.mxu0 0.0
        %7031 = vmatpush1.msra.mxu0 0.0
        %7032 = vmatprep.subr.mxu0 0.0
        %7033 = vmatpush1.msra.mxu0 0.0
        %7034 = vmatprep.subr.mxu0 0.0
        %7035 = vmatpush1.msra.mxu0 0.0
        %7036 = vmatprep.subr.mxu0 0.0
        %7037 = vmatpush1.msra.mxu0 0.0
        %7038 = vmatprep.subr.mxu0 0.0
        %7039 = vmatpush1.msra.mxu0 0.0
        %7040 = vmatprep.subr.mxu0 0.0
        %7041 = vmatpush1.msra.mxu0 0.0
        %7042 = vmatprep.subr.mxu0 0.0
        %7043 = vmatpush1.msra.mxu0 %v7009
        %7044 = vmatprep.subr.mxu0 0.0
        %7045 = vmatpush1.msra.mxu0 %v7008
        %7046 = vmatprep.subr.mxu0 0.0
        %7047 = vmatpush1.msra.mxu0 %v7007
        %7048 = vmatprep.subr.mxu0 0.0
        %7049 = vmatpush1.msra.mxu0 %v7006
        %7050 = vmatprep.subr.mxu0 0.0
        %7051 = vmatpush2.msra.mxu0 0.0
        %7052 = vmatprep.subr.mxu0 0.0
        %7053 = vmatpush2.msra.mxu0 0.0
        %7054 = vmatprep.subr.mxu0 0.0
        %7055 = vmatpush2.msra.mxu0 0.0
        %7056 = vmatprep.subr.mxu0 0.0
        %7057 = vmatpush2.msra.mxu0 0.0
        %7058 = vmatprep.subr.mxu0 0.0
        %7059 = vmatpush2.msra.mxu0 0.0
        %7060 = vmatprep.subr.mxu0 0.0
        %7061 = vmatpush2.msra.mxu0 0.0
        %7062 = vmatprep.subr.mxu0 0.0
        %7063 = vmatpush2.msra.mxu0 0.0
        %7064 = vmatprep.subr.mxu0 0.0
        %7065 = vmatpush2.msra.mxu0 0.0
        %7066 = vmatprep.subr.mxu0 0.0
        %7067 = vmatpush2.msra.mxu0 0.0
        %7068 = vmatprep.subr.mxu0 0.0
        %7069 = vmatpush2.msra.mxu0 0.0
        %7070 = vmatprep.subr.mxu0 0.0
        %7071 = vmatpush2.msra.mxu0 0.0
        %7072 = vmatprep.subr.mxu0 0.0
        %7073 = vmatpush2.msra.mxu0 0.0
        %7074 = vmatprep.subr.mxu0 0.0
        %7075 = vmatpush2.msra.mxu0 0.0
        %7076 = vmatprep.subr.mxu0 0.0
        %7077 = vmatpush2.msra.mxu0 0.0
        %7078 = vmatprep.subr.mxu0 0.0
        %7079 = vmatpush2.msra.mxu0 0.0
        %7080 = vmatprep.subr.mxu0 0.0
        %7081 = vmatpush2.msra.mxu0 0.0
        %7082 = vmatprep.mubr.f32.mxu0 0.0
        %7083 = vmatmul.mubr.f32.gmra.mxu0 %v7013
        %v7084 = vpop.f32.mrf.mxu0
        %v7085 = vadd.f32 0.0, %v7084
        %v7086 = vpop.f32.mrf.mxu0
        %7087 = vmatprep.mubr.f32.mxu0 0.0
        %7088 = vmatmul.mubr.f32.gmra.mxu0 %v7016
        %v7089 = vpop.f32.mrf.mxu0
        %v7090 = vadd.f32 0.0, %v7089
        %v7091 = vpop.f32.mrf.mxu0
        %7092 = vdwg.mxu0
        %v7093 = vadd.f32 %v7085, %v7090
        %v7094 = vrot.slane %v7093, 4
        %v7095 = vadd.f32 %v7093, %v7094
        %v7096 = vrot.slane %v7095, 2
        %v7097 = vadd.f32 %v7095, %v7096
        %v7098 = vrot.slane %v7097, 1
        %v7099 = vadd.f32 %v7097, %v7098
        %v7100 = vrcp.pop 16.0
        %v7101 = vmul.f32 %v7099, %v7100
        %v7102 = vsub.f32 %v7085, %v7101
        %v7103 = vsub.f32 %v7090, %v7101
        %v7104 = vmul.f32 %v7102, %v7102
        %v7105 = vmul.f32 %v7103, %v7103
        %v7106 = vadd.f32 %v7104, %v7105
        %v7107 = vrot.slane %v7106, 4
        %v7108 = vadd.f32 %v7106, %v7107
        %v7109 = vrot.slane %v7108, 2
        %v7110 = vadd.f32 %v7108, %v7109
        %v7111 = vrot.slane %v7110, 1
        %v7112 = vadd.f32 %v7110, %v7111
        %v7113 = vmul.f32 %v7112, %v7100
        %v7114 = vadd.f32 %v7113, 1e-05
        %v7115 = vrsqrt.pop %v7114
        %v7116 = vmul.f32 %v7102, %v7115
        %v7117 = vmul.f32 %v7103, %v7115
        %vm7118 = vcmp.ge.f32.partialorder %v7116, 0.0
        %vm7119 = vcmp.ge.f32.partialorder %v7117, 0.0
        %v7120 = vmul.f32 %v7116, 0.2
        %v7121 = vmul.f32 %v7117, 0.2
        %v7122 = vsel %vm7118, %v7116, %v7120
        %v7123 = vsel %vm7119, %v7117, %v7121
        %v7126 = vcombine.high %v7122, %v7122
        %v7127 = vcombine.high %v7123, %v7123
        %7130 = vst [vmem:[#allocation5] sm:$0x3f] 0.0
        %7131 = vst [vmem:[#allocation5 + $0x8] sm:$0x3f] 0.0
        %7132 = vst [vmem:[#allocation5 + $0x10] sm:$0x3f] 0.0
        %7133 = vst [vmem:[#allocation5 + $0x18] sm:$0x3f] 0.0
        %7134 = vst [vmem:[#allocation5 + $0x20] sm:$0x3f] 0.0
        %7135 = vst [vmem:[#allocation5 + $0x28] sm:$0x3f] 0.0
        %s7136 = scalar_lea.vmem [#allocation5], 8
        %7137 = vst [vmem:[%s7136 + $0x1] sm:$0xf] %v7122
        %7138 = vst [vmem:[%s7136 + $0x9] sm:$0xf] %v7126
        %7139 = vst [vmem:[%s7136 + $0x11] sm:$0xf] %v7123
        %7140 = vst [vmem:[%s7136 + $0x19] sm:$0xf] %v7127
        %v7141 = vld [vmem:[#allocation5] sm:$0x3f]
        %v7142 = vld [vmem:[#allocation5 + $0x8] sm:$0x3f]
        %v7143 = vld [vmem:[#allocation5 + $0x10] sm:$0x3f]
        %v7144 = vld [vmem:[#allocation5 + $0x18] sm:$0x3f]
        %v7145 = vld [vmem:[#allocation5 + $0x20] sm:$0x3f]
        %v7146 = vld [vmem:[#allocation13] sm:$0xff]
        %v7147 = vld [vmem:[#allocation13 + $0x8] sm:$0xff]
        %v7148 = vld [vmem:[#allocation13 + $0x10] sm:$0xff]
        %v7149 = vld [vmem:[#allocation13 + $0x18] sm:$0xff]
        %v7150 = vld [vmem:[#allocation13 + $0x20] sm:$0xff]
        %v7151 = vld [vmem:[#allocation13 + $0x28] sm:$0xff]
        %v7152 = vld [vmem:[#allocation13 + $0x30] sm:$0xff]
        %v7153 = vld [vmem:[#allocation13 + $0x38] sm:$0xff]
        %v7154 = vld [vmem:[#allocation13 + $0x40] sm:$0xff]
        %v7155 = vld [vmem:[#allocation13 + $0x48] sm:$0xff]
        %v7156 = vld [vmem:[#allocation13 + $0x50] sm:$0xff]
        %v7157 = vld [vmem:[#allocation13 + $0x58] sm:$0xff]
        %v7158 = vld [vmem:[#allocation13 + $0x60] sm:$0xff]
        %v7159 = vld [vmem:[#allocation13 + $0x68] sm:$0xff]
        %v7160 = vld [vmem:[#allocation13 + $0x70] sm:$0xff]
        %v7161 = vld [vmem:[#allocation13 + $0x78] sm:$0xff]
        %v7162 = vld [vmem:[#allocation13 + $0x80] sm:$0xff]
        %v7163 = vld [vmem:[#allocation13 + $0x88] sm:$0xff]
        %v7164 = vld [vmem:[#allocation13 + $0x90] sm:$0xff]
        %v7165 = vld [vmem:[#allocation13 + $0x98] sm:$0xff]
        %v7166 = vld [vmem:[#allocation13 + $0xa0] sm:$0xff]
        %v7167 = vld [vmem:[#allocation13 + $0xa8] sm:$0xff]
        %v7168 = vld [vmem:[#allocation13 + $0xb0] sm:$0xff]
        %v7169 = vld [vmem:[#allocation13 + $0xb8] sm:$0xff]
        %v7170 = vld [vmem:[#allocation13 + $0xc0] sm:$0xff]
        %v7171 = vld [vmem:[#allocation13 + $0xc8] sm:$0xff]
        %v7172 = vld [vmem:[#allocation13 + $0xd0] sm:$0xff]
        %v7173 = vld [vmem:[#allocation13 + $0xd8] sm:$0xff]
        %v7174 = vld [vmem:[#allocation13 + $0xe0] sm:$0xff]
        %v7175 = vld [vmem:[#allocation13 + $0xe8] sm:$0xff]
        %v7176 = vld [vmem:[#allocation13 + $0xf0] sm:$0xff]
        %v7177 = vld [vmem:[#allocation13 + $0xf8] sm:$0xff]
        %v7180 = vcombine.high %v7141, %v7141
        %v7181 = vcombine.high %v7143, %v7143
        %vm7182 = vcmask 1046532
        %vm7183 = vmor %vm843, %vm7182
        %v7184 = vrot.slane %v7141, 5
        %v7185 = vrot.slane %v7184, 4
        %v7186 = vrot.slane %v7180, 5
        %v7187 = vsel %vm7183, %v7185, %v7186
        %v7188 = vrot.slane %v7143, 5
        %v7189 = vrot.slane %v7188, 4
        %v7190 = vrot.slane %v7181, 5
        %v7191 = vsel %vm7183, %v7189, %v7190
        %s7192 = scalar_lea.vmem [#allocation13], 256
        %v7193 = vld [vmem:[%s7192] sm:$0xff]
        %v7194 = vld [vmem:[%s7192 + $0x8] sm:$0xff]
        %v7195 = vld [vmem:[%s7192 + $0x10] sm:$0xff]
        %v7196 = vld [vmem:[%s7192 + $0x18] sm:$0xff]
        %v7197 = vld [vmem:[%s7192 + $0x20] sm:$0xff]
        %v7198 = vld [vmem:[%s7192 + $0x28] sm:$0xff]
        %v7199 = vld [vmem:[%s7192 + $0x30] sm:$0xff]
        %v7200 = vld [vmem:[%s7192 + $0x38] sm:$0xff]
        %v7201 = vld [vmem:[%s7192 + $0x40] sm:$0xff]
        %v7202 = vld [vmem:[%s7192 + $0x48] sm:$0xff]
        %v7203 = vld [vmem:[%s7192 + $0x50] sm:$0xff]
        %v7204 = vld [vmem:[%s7192 + $0x58] sm:$0xff]
        %v7205 = vld [vmem:[%s7192 + $0x60] sm:$0xff]
        %v7206 = vld [vmem:[%s7192 + $0x68] sm:$0xff]
        %v7207 = vld [vmem:[%s7192 + $0x70] sm:$0xff]
        %v7208 = vld [vmem:[%s7192 + $0x78] sm:$0xff]
        %v7209 = vld [vmem:[%s7192 + $0x80] sm:$0xff]
        %v7210 = vld [vmem:[%s7192 + $0x88] sm:$0xff]
        %v7211 = vld [vmem:[%s7192 + $0x90] sm:$0xff]
        %v7212 = vld [vmem:[%s7192 + $0x98] sm:$0xff]
        %v7213 = vld [vmem:[%s7192 + $0xa0] sm:$0xff]
        %v7214 = vld [vmem:[%s7192 + $0xa8] sm:$0xff]
        %v7215 = vld [vmem:[%s7192 + $0xb0] sm:$0xff]
        %v7216 = vld [vmem:[%s7192 + $0xb8] sm:$0xff]
        %v7217 = vld [vmem:[%s7192 + $0xc0] sm:$0xff]
        %v7218 = vld [vmem:[%s7192 + $0xc8] sm:$0xff]
        %v7219 = vld [vmem:[%s7192 + $0xd0] sm:$0xff]
        %v7220 = vld [vmem:[%s7192 + $0xd8] sm:$0xff]
        %v7221 = vld [vmem:[%s7192 + $0xe0] sm:$0xff]
        %v7222 = vld [vmem:[%s7192 + $0xe8] sm:$0xff]
        %v7223 = vld [vmem:[%s7192 + $0xf0] sm:$0xff]
        %v7224 = vld [vmem:[%s7192 + $0xf8] sm:$0xff]
        %v7225 = vcombine.low %v7187, %v7191
        %7227 = vmatprep.subr.mxu0 %v7224
        %7228 = vmatpush1.msra.mxu0 %v7223
        %7229 = vmatprep.subr.mxu0 %v7222
        %7230 = vmatpush1.msra.mxu0 %v7221
        %7231 = vmatprep.subr.mxu0 %v7220
        %7232 = vmatpush1.msra.mxu0 %v7219
        %7233 = vmatprep.subr.mxu0 %v7218
        %7234 = vmatpush1.msra.mxu0 %v7217
        %7235 = vmatprep.subr.mxu0 %v7216
        %7236 = vmatpush1.msra.mxu0 %v7215
        %7237 = vmatprep.subr.mxu0 %v7214
        %7238 = vmatpush1.msra.mxu0 %v7213
        %7239 = vmatprep.subr.mxu0 %v7212
        %7240 = vmatpush1.msra.mxu0 %v7211
        %7241 = vmatprep.subr.mxu0 %v7210
        %7242 = vmatpush1.msra.mxu0 %v7209
        %7243 = vmatprep.subr.mxu0 %v7208
        %7244 = vmatpush1.msra.mxu0 %v7207
        %7245 = vmatprep.subr.mxu0 %v7206
        %7246 = vmatpush1.msra.mxu0 %v7205
        %7247 = vmatprep.subr.mxu0 %v7204
        %7248 = vmatpush1.msra.mxu0 %v7203
        %7249 = vmatprep.subr.mxu0 %v7202
        %7250 = vmatpush1.msra.mxu0 %v7201
        %7251 = vmatprep.subr.mxu0 %v7200
        %7252 = vmatpush1.msra.mxu0 %v7199
        %7253 = vmatprep.subr.mxu0 %v7198
        %7254 = vmatpush1.msra.mxu0 %v7197
        %7255 = vmatprep.subr.mxu0 %v7196
        %7256 = vmatpush1.msra.mxu0 %v7195
        %7257 = vmatprep.subr.mxu0 %v7194
        %7258 = vmatpush1.msra.mxu0 %v7193
        %7259 = vmatprep.subr.mxu0 0.0
        %7260 = vmatpush2.msra.mxu0 0.0
        %7261 = vmatprep.subr.mxu0 0.0
        %7262 = vmatpush2.msra.mxu0 0.0
        %7263 = vmatprep.subr.mxu0 0.0
        %7264 = vmatpush2.msra.mxu0 0.0
        %7265 = vmatprep.subr.mxu0 0.0
        %7266 = vmatpush2.msra.mxu0 0.0
        %7267 = vmatprep.subr.mxu0 0.0
        %7268 = vmatpush2.msra.mxu0 0.0
        %7269 = vmatprep.subr.mxu0 0.0
        %7270 = vmatpush2.msra.mxu0 0.0
        %7271 = vmatprep.subr.mxu0 0.0
        %7272 = vmatpush2.msra.mxu0 0.0
        %7273 = vmatprep.subr.mxu0 0.0
        %7274 = vmatpush2.msra.mxu0 0.0
        %7275 = vmatprep.subr.mxu0 0.0
        %7276 = vmatpush2.msra.mxu0 0.0
        %7277 = vmatprep.subr.mxu0 0.0
        %7278 = vmatpush2.msra.mxu0 0.0
        %7279 = vmatprep.subr.mxu0 0.0
        %7280 = vmatpush2.msra.mxu0 0.0
        %7281 = vmatprep.subr.mxu0 0.0
        %7282 = vmatpush2.msra.mxu0 0.0
        %7283 = vmatprep.subr.mxu0 0.0
        %7284 = vmatpush2.msra.mxu0 0.0
        %7285 = vmatprep.subr.mxu0 0.0
        %7286 = vmatpush2.msra.mxu0 0.0
        %7287 = vmatprep.subr.mxu0 0.0
        %7288 = vmatpush2.msra.mxu0 0.0
        %7289 = vmatprep.subr.mxu0 0.0
        %7290 = vmatpush2.msra.mxu0 0.0
        %7291 = vmatprep.mubr.f32.mxu0 0.0
        %7292 = vmatmul.mubr.f32.gmra.mxu0 %v7225
        %v7293 = vpop.f32.mrf.mxu0
        %v7294 = vadd.f32 0.0, %v7293
        %v7295 = vpop.f32.mrf.mxu0
        %v7296 = vadd.f32 0.0, %v7295
        %7297 = vdwg.mxu0
        %v7298 = vcombine.low %v7141, %v7143
        %7300 = vmatprep.subr.mxu0 %v7177
        %7301 = vmatpush1.msra.mxu0 %v7176
        %7302 = vmatprep.subr.mxu0 %v7175
        %7303 = vmatpush1.msra.mxu0 %v7174
        %7304 = vmatprep.subr.mxu0 %v7173
        %7305 = vmatpush1.msra.mxu0 %v7172
        %7306 = vmatprep.subr.mxu0 %v7171
        %7307 = vmatpush1.msra.mxu0 %v7170
        %7308 = vmatprep.subr.mxu0 %v7169
        %7309 = vmatpush1.msra.mxu0 %v7168
        %7310 = vmatprep.subr.mxu0 %v7167
        %7311 = vmatpush1.msra.mxu0 %v7166
        %7312 = vmatprep.subr.mxu0 %v7165
        %7313 = vmatpush1.msra.mxu0 %v7164
        %7314 = vmatprep.subr.mxu0 %v7163
        %7315 = vmatpush1.msra.mxu0 %v7162
        %7316 = vmatprep.subr.mxu0 %v7161
        %7317 = vmatpush1.msra.mxu0 %v7160
        %7318 = vmatprep.subr.mxu0 %v7159
        %7319 = vmatpush1.msra.mxu0 %v7158
        %7320 = vmatprep.subr.mxu0 %v7157
        %7321 = vmatpush1.msra.mxu0 %v7156
        %7322 = vmatprep.subr.mxu0 %v7155
        %7323 = vmatpush1.msra.mxu0 %v7154
        %7324 = vmatprep.subr.mxu0 %v7153
        %7325 = vmatpush1.msra.mxu0 %v7152
        %7326 = vmatprep.subr.mxu0 %v7151
        %7327 = vmatpush1.msra.mxu0 %v7150
        %7328 = vmatprep.subr.mxu0 %v7149
        %7329 = vmatpush1.msra.mxu0 %v7148
        %7330 = vmatprep.subr.mxu0 %v7147
        %7331 = vmatpush1.msra.mxu0 %v7146
        %7332 = vmatprep.subr.mxu0 0.0
        %7333 = vmatpush2.msra.mxu0 0.0
        %7334 = vmatprep.subr.mxu0 0.0
        %7335 = vmatpush2.msra.mxu0 0.0
        %7336 = vmatprep.subr.mxu0 0.0
        %7337 = vmatpush2.msra.mxu0 0.0
        %7338 = vmatprep.subr.mxu0 0.0
        %7339 = vmatpush2.msra.mxu0 0.0
        %7340 = vmatprep.subr.mxu0 0.0
        %7341 = vmatpush2.msra.mxu0 0.0
        %7342 = vmatprep.subr.mxu0 0.0
        %7343 = vmatpush2.msra.mxu0 0.0
        %7344 = vmatprep.subr.mxu0 0.0
        %7345 = vmatpush2.msra.mxu0 0.0
        %7346 = vmatprep.subr.mxu0 0.0
        %7347 = vmatpush2.msra.mxu0 0.0
        %7348 = vmatprep.subr.mxu0 0.0
        %7349 = vmatpush2.msra.mxu0 0.0
        %7350 = vmatprep.subr.mxu0 0.0
        %7351 = vmatpush2.msra.mxu0 0.0
        %7352 = vmatprep.subr.mxu0 0.0
        %7353 = vmatpush2.msra.mxu0 0.0
        %7354 = vmatprep.subr.mxu0 0.0
        %7355 = vmatpush2.msra.mxu0 0.0
        %7356 = vmatprep.subr.mxu0 0.0
        %7357 = vmatpush2.msra.mxu0 0.0
        %7358 = vmatprep.subr.mxu0 0.0
        %7359 = vmatpush2.msra.mxu0 0.0
        %7360 = vmatprep.subr.mxu0 0.0
        %7361 = vmatpush2.msra.mxu0 0.0
        %7362 = vmatprep.subr.mxu0 0.0
        %7363 = vmatpush2.msra.mxu0 0.0
        %7364 = vmatprep.mubr.f32.mxu0 0.0
        %7365 = vmatmul.mubr.f32.gmra.mxu0 %v7298
        %v7366 = vpop.f32.mrf.mxu0
        %v7367 = vadd.f32 %v7294, %v7366
        %v7368 = vpop.f32.mrf.mxu0
        %v7369 = vadd.f32 %v7296, %v7368
        %7370 = vdwg.mxu0
        %vm7371 = vcmask 1041408
        %vm7372 = vcmask 1045508
        %vm7373 = vmor %vm7371, %vm7372
        %v7374 = vrot.slane %v7141, 6
        %v7375 = vrot.slane %v7374, 4
        %v7376 = vrot.slane %v7180, 6
        %v7377 = vsel %vm7373, %v7375, %v7376
        %v7378 = vrot.slane %v7143, 6
        %v7379 = vrot.slane %v7378, 4
        %v7380 = vrot.slane %v7181, 6
        %v7381 = vsel %vm7373, %v7379, %v7380
        %s7382 = scalar_lea.vmem [#allocation13], 512
        %v7383 = vld [vmem:[%s7382] sm:$0xff]
        %v7384 = vld [vmem:[%s7382 + $0x8] sm:$0xff]
        %v7385 = vld [vmem:[%s7382 + $0x10] sm:$0xff]
        %v7386 = vld [vmem:[%s7382 + $0x18] sm:$0xff]
        %v7387 = vld [vmem:[%s7382 + $0x20] sm:$0xff]
        %v7388 = vld [vmem:[%s7382 + $0x28] sm:$0xff]
        %v7389 = vld [vmem:[%s7382 + $0x30] sm:$0xff]
        %v7390 = vld [vmem:[%s7382 + $0x38] sm:$0xff]
        %v7391 = vld [vmem:[%s7382 + $0x40] sm:$0xff]
        %v7392 = vld [vmem:[%s7382 + $0x48] sm:$0xff]
        %v7393 = vld [vmem:[%s7382 + $0x50] sm:$0xff]
        %v7394 = vld [vmem:[%s7382 + $0x58] sm:$0xff]
        %v7395 = vld [vmem:[%s7382 + $0x60] sm:$0xff]
        %v7396 = vld [vmem:[%s7382 + $0x68] sm:$0xff]
        %v7397 = vld [vmem:[%s7382 + $0x70] sm:$0xff]
        %v7398 = vld [vmem:[%s7382 + $0x78] sm:$0xff]
        %v7399 = vld [vmem:[%s7382 + $0x80] sm:$0xff]
        %v7400 = vld [vmem:[%s7382 + $0x88] sm:$0xff]
        %v7401 = vld [vmem:[%s7382 + $0x90] sm:$0xff]
        %v7402 = vld [vmem:[%s7382 + $0x98] sm:$0xff]
        %v7403 = vld [vmem:[%s7382 + $0xa0] sm:$0xff]
        %v7404 = vld [vmem:[%s7382 + $0xa8] sm:$0xff]
        %v7405 = vld [vmem:[%s7382 + $0xb0] sm:$0xff]
        %v7406 = vld [vmem:[%s7382 + $0xb8] sm:$0xff]
        %v7407 = vld [vmem:[%s7382 + $0xc0] sm:$0xff]
        %v7408 = vld [vmem:[%s7382 + $0xc8] sm:$0xff]
        %v7409 = vld [vmem:[%s7382 + $0xd0] sm:$0xff]
        %v7410 = vld [vmem:[%s7382 + $0xd8] sm:$0xff]
        %v7411 = vld [vmem:[%s7382 + $0xe0] sm:$0xff]
        %v7412 = vld [vmem:[%s7382 + $0xe8] sm:$0xff]
        %v7413 = vld [vmem:[%s7382 + $0xf0] sm:$0xff]
        %v7414 = vld [vmem:[%s7382 + $0xf8] sm:$0xff]
        %v7415 = vcombine.low %v7377, %v7381
        %7417 = vmatprep.subr.mxu0 %v7414
        %7418 = vmatpush1.msra.mxu0 %v7413
        %7419 = vmatprep.subr.mxu0 %v7412
        %7420 = vmatpush1.msra.mxu0 %v7411
        %7421 = vmatprep.subr.mxu0 %v7410
        %7422 = vmatpush1.msra.mxu0 %v7409
        %7423 = vmatprep.subr.mxu0 %v7408
        %7424 = vmatpush1.msra.mxu0 %v7407
        %7425 = vmatprep.subr.mxu0 %v7406
        %7426 = vmatpush1.msra.mxu0 %v7405
        %7427 = vmatprep.subr.mxu0 %v7404
        %7428 = vmatpush1.msra.mxu0 %v7403
        %7429 = vmatprep.subr.mxu0 %v7402
        %7430 = vmatpush1.msra.mxu0 %v7401
        %7431 = vmatprep.subr.mxu0 %v7400
        %7432 = vmatpush1.msra.mxu0 %v7399
        %7433 = vmatprep.subr.mxu0 %v7398
        %7434 = vmatpush1.msra.mxu0 %v7397
        %7435 = vmatprep.subr.mxu0 %v7396
        %7436 = vmatpush1.msra.mxu0 %v7395
        %7437 = vmatprep.subr.mxu0 %v7394
        %7438 = vmatpush1.msra.mxu0 %v7393
        %7439 = vmatprep.subr.mxu0 %v7392
        %7440 = vmatpush1.msra.mxu0 %v7391
        %7441 = vmatprep.subr.mxu0 %v7390
        %7442 = vmatpush1.msra.mxu0 %v7389
        %7443 = vmatprep.subr.mxu0 %v7388
        %7444 = vmatpush1.msra.mxu0 %v7387
        %7445 = vmatprep.subr.mxu0 %v7386
        %7446 = vmatpush1.msra.mxu0 %v7385
        %7447 = vmatprep.subr.mxu0 %v7384
        %7448 = vmatpush1.msra.mxu0 %v7383
        %7449 = vmatprep.subr.mxu0 0.0
        %7450 = vmatpush2.msra.mxu0 0.0
        %7451 = vmatprep.subr.mxu0 0.0
        %7452 = vmatpush2.msra.mxu0 0.0
        %7453 = vmatprep.subr.mxu0 0.0
        %7454 = vmatpush2.msra.mxu0 0.0
        %7455 = vmatprep.subr.mxu0 0.0
        %7456 = vmatpush2.msra.mxu0 0.0
        %7457 = vmatprep.subr.mxu0 0.0
        %7458 = vmatpush2.msra.mxu0 0.0
        %7459 = vmatprep.subr.mxu0 0.0
        %7460 = vmatpush2.msra.mxu0 0.0
        %7461 = vmatprep.subr.mxu0 0.0
        %7462 = vmatpush2.msra.mxu0 0.0
        %7463 = vmatprep.subr.mxu0 0.0
        %7464 = vmatpush2.msra.mxu0 0.0
        %7465 = vmatprep.subr.mxu0 0.0
        %7466 = vmatpush2.msra.mxu0 0.0
        %7467 = vmatprep.subr.mxu0 0.0
        %7468 = vmatpush2.msra.mxu0 0.0
        %7469 = vmatprep.subr.mxu0 0.0
        %7470 = vmatpush2.msra.mxu0 0.0
        %7471 = vmatprep.subr.mxu0 0.0
        %7472 = vmatpush2.msra.mxu0 0.0
        %7473 = vmatprep.subr.mxu0 0.0
        %7474 = vmatpush2.msra.mxu0 0.0
        %7475 = vmatprep.subr.mxu0 0.0
        %7476 = vmatpush2.msra.mxu0 0.0
        %7477 = vmatprep.subr.mxu0 0.0
        %7478 = vmatpush2.msra.mxu0 0.0
        %7479 = vmatprep.subr.mxu0 0.0
        %7480 = vmatpush2.msra.mxu0 0.0
        %7481 = vmatprep.mubr.f32.mxu0 0.0
        %7482 = vmatmul.mubr.f32.gmra.mxu0 %v7415
        %v7483 = vpop.f32.mrf.mxu0
        %v7484 = vadd.f32 0.0, %v7483
        %v7485 = vpop.f32.mrf.mxu0
        %v7486 = vadd.f32 0.0, %v7485
        %7487 = vdwg.mxu0
        %v7488 = vadd.f32 %v7367, %v7484
        %v7489 = vadd.f32 %v7369, %v7486
        %s7490 = scalar_lea.vmem [#allocation13], 768
        %v7491 = vld [vmem:[%s7490] sm:$0xff]
        %v7492 = vld [vmem:[%s7490 + $0x8] sm:$0xff]
        %v7493 = vld [vmem:[%s7490 + $0x10] sm:$0xff]
        %v7494 = vld [vmem:[%s7490 + $0x18] sm:$0xff]
        %v7495 = vld [vmem:[%s7490 + $0x20] sm:$0xff]
        %v7496 = vld [vmem:[%s7490 + $0x28] sm:$0xff]
        %v7497 = vld [vmem:[%s7490 + $0x30] sm:$0xff]
        %v7498 = vld [vmem:[%s7490 + $0x38] sm:$0xff]
        %v7499 = vld [vmem:[%s7490 + $0x40] sm:$0xff]
        %v7500 = vld [vmem:[%s7490 + $0x48] sm:$0xff]
        %v7501 = vld [vmem:[%s7490 + $0x50] sm:$0xff]
        %v7502 = vld [vmem:[%s7490 + $0x58] sm:$0xff]
        %v7503 = vld [vmem:[%s7490 + $0x60] sm:$0xff]
        %v7504 = vld [vmem:[%s7490 + $0x68] sm:$0xff]
        %v7505 = vld [vmem:[%s7490 + $0x70] sm:$0xff]
        %v7506 = vld [vmem:[%s7490 + $0x78] sm:$0xff]
        %v7507 = vld [vmem:[%s7490 + $0x80] sm:$0xff]
        %v7508 = vld [vmem:[%s7490 + $0x88] sm:$0xff]
        %v7509 = vld [vmem:[%s7490 + $0x90] sm:$0xff]
        %v7510 = vld [vmem:[%s7490 + $0x98] sm:$0xff]
        %v7511 = vld [vmem:[%s7490 + $0xa0] sm:$0xff]
        %v7512 = vld [vmem:[%s7490 + $0xa8] sm:$0xff]
        %v7513 = vld [vmem:[%s7490 + $0xb0] sm:$0xff]
        %v7514 = vld [vmem:[%s7490 + $0xb8] sm:$0xff]
        %v7515 = vld [vmem:[%s7490 + $0xc0] sm:$0xff]
        %v7516 = vld [vmem:[%s7490 + $0xc8] sm:$0xff]
        %v7517 = vld [vmem:[%s7490 + $0xd0] sm:$0xff]
        %v7518 = vld [vmem:[%s7490 + $0xd8] sm:$0xff]
        %v7519 = vld [vmem:[%s7490 + $0xe0] sm:$0xff]
        %v7520 = vld [vmem:[%s7490 + $0xe8] sm:$0xff]
        %v7521 = vld [vmem:[%s7490 + $0xf0] sm:$0xff]
        %v7522 = vld [vmem:[%s7490 + $0xf8] sm:$0xff]
        %v7525 = vcombine.low %v7142, %v7144
        %7527 = vmatprep.subr.mxu0 %v7522
        %7528 = vmatpush1.msra.mxu0 %v7521
        %7529 = vmatprep.subr.mxu0 %v7520
        %7530 = vmatpush1.msra.mxu0 %v7519
        %7531 = vmatprep.subr.mxu0 %v7518
        %7532 = vmatpush1.msra.mxu0 %v7517
        %7533 = vmatprep.subr.mxu0 %v7516
        %7534 = vmatpush1.msra.mxu0 %v7515
        %7535 = vmatprep.subr.mxu0 %v7514
        %7536 = vmatpush1.msra.mxu0 %v7513
        %7537 = vmatprep.subr.mxu0 %v7512
        %7538 = vmatpush1.msra.mxu0 %v7511
        %7539 = vmatprep.subr.mxu0 %v7510
        %7540 = vmatpush1.msra.mxu0 %v7509
        %7541 = vmatprep.subr.mxu0 %v7508
        %7542 = vmatpush1.msra.mxu0 %v7507
        %7543 = vmatprep.subr.mxu0 %v7506
        %7544 = vmatpush1.msra.mxu0 %v7505
        %7545 = vmatprep.subr.mxu0 %v7504
        %7546 = vmatpush1.msra.mxu0 %v7503
        %7547 = vmatprep.subr.mxu0 %v7502
        %7548 = vmatpush1.msra.mxu0 %v7501
        %7549 = vmatprep.subr.mxu0 %v7500
        %7550 = vmatpush1.msra.mxu0 %v7499
        %7551 = vmatprep.subr.mxu0 %v7498
        %7552 = vmatpush1.msra.mxu0 %v7497
        %7553 = vmatprep.subr.mxu0 %v7496
        %7554 = vmatpush1.msra.mxu0 %v7495
        %7555 = vmatprep.subr.mxu0 %v7494
        %7556 = vmatpush1.msra.mxu0 %v7493
        %7557 = vmatprep.subr.mxu0 %v7492
        %7558 = vmatpush1.msra.mxu0 %v7491
        %7559 = vmatprep.subr.mxu0 0.0
        %7560 = vmatpush2.msra.mxu0 0.0
        %7561 = vmatprep.subr.mxu0 0.0
        %7562 = vmatpush2.msra.mxu0 0.0
        %7563 = vmatprep.subr.mxu0 0.0
        %7564 = vmatpush2.msra.mxu0 0.0
        %7565 = vmatprep.subr.mxu0 0.0
        %7566 = vmatpush2.msra.mxu0 0.0
        %7567 = vmatprep.subr.mxu0 0.0
        %7568 = vmatpush2.msra.mxu0 0.0
        %7569 = vmatprep.subr.mxu0 0.0
        %7570 = vmatpush2.msra.mxu0 0.0
        %7571 = vmatprep.subr.mxu0 0.0
        %7572 = vmatpush2.msra.mxu0 0.0
        %7573 = vmatprep.subr.mxu0 0.0
        %7574 = vmatpush2.msra.mxu0 0.0
        %7575 = vmatprep.subr.mxu0 0.0
        %7576 = vmatpush2.msra.mxu0 0.0
        %7577 = vmatprep.subr.mxu0 0.0
        %7578 = vmatpush2.msra.mxu0 0.0
        %7579 = vmatprep.subr.mxu0 0.0
        %7580 = vmatpush2.msra.mxu0 0.0
        %7581 = vmatprep.subr.mxu0 0.0
        %7582 = vmatpush2.msra.mxu0 0.0
        %7583 = vmatprep.subr.mxu0 0.0
        %7584 = vmatpush2.msra.mxu0 0.0
        %7585 = vmatprep.subr.mxu0 0.0
        %7586 = vmatpush2.msra.mxu0 0.0
        %7587 = vmatprep.subr.mxu0 0.0
        %7588 = vmatpush2.msra.mxu0 0.0
        %7589 = vmatprep.subr.mxu0 0.0
        %7590 = vmatpush2.msra.mxu0 0.0
        %7591 = vmatprep.mubr.f32.mxu0 0.0
        %7592 = vmatmul.mubr.f32.gmra.mxu0 %v7525
        %v7593 = vpop.f32.mrf.mxu0
        %v7594 = vadd.f32 0.0, %v7593
        %v7595 = vpop.f32.mrf.mxu0
        %v7596 = vadd.f32 0.0, %v7595
        %7597 = vdwg.mxu0
        %v7598 = vadd.f32 %v7488, %v7594
        %v7599 = vadd.f32 %v7489, %v7596
        %v7600 = vcombine.high %v7142, %v7142
        %v7601 = vcombine.high %v7144, %v7144
        %v7602 = vrot.slane %v7142, 5
        %v7603 = vrot.slane %v7602, 4
        %v7604 = vrot.slane %v7600, 5
        %v7605 = vsel %vm7183, %v7603, %v7604
        %v7606 = vrot.slane %v7144, 5
        %v7607 = vrot.slane %v7606, 4
        %v7608 = vrot.slane %v7601, 5
        %v7609 = vsel %vm7183, %v7607, %v7608
        %s7610 = scalar_lea.vmem [#allocation13], 1024
        %v7611 = vld [vmem:[%s7610] sm:$0xff]
        %v7612 = vld [vmem:[%s7610 + $0x8] sm:$0xff]
        %v7613 = vld [vmem:[%s7610 + $0x10] sm:$0xff]
        %v7614 = vld [vmem:[%s7610 + $0x18] sm:$0xff]
        %v7615 = vld [vmem:[%s7610 + $0x20] sm:$0xff]
        %v7616 = vld [vmem:[%s7610 + $0x28] sm:$0xff]
        %v7617 = vld [vmem:[%s7610 + $0x30] sm:$0xff]
        %v7618 = vld [vmem:[%s7610 + $0x38] sm:$0xff]
        %v7619 = vld [vmem:[%s7610 + $0x40] sm:$0xff]
        %v7620 = vld [vmem:[%s7610 + $0x48] sm:$0xff]
        %v7621 = vld [vmem:[%s7610 + $0x50] sm:$0xff]
        %v7622 = vld [vmem:[%s7610 + $0x58] sm:$0xff]
        %v7623 = vld [vmem:[%s7610 + $0x60] sm:$0xff]
        %v7624 = vld [vmem:[%s7610 + $0x68] sm:$0xff]
        %v7625 = vld [vmem:[%s7610 + $0x70] sm:$0xff]
        %v7626 = vld [vmem:[%s7610 + $0x78] sm:$0xff]
        %v7627 = vld [vmem:[%s7610 + $0x80] sm:$0xff]
        %v7628 = vld [vmem:[%s7610 + $0x88] sm:$0xff]
        %v7629 = vld [vmem:[%s7610 + $0x90] sm:$0xff]
        %v7630 = vld [vmem:[%s7610 + $0x98] sm:$0xff]
        %v7631 = vld [vmem:[%s7610 + $0xa0] sm:$0xff]
        %v7632 = vld [vmem:[%s7610 + $0xa8] sm:$0xff]
        %v7633 = vld [vmem:[%s7610 + $0xb0] sm:$0xff]
        %v7634 = vld [vmem:[%s7610 + $0xb8] sm:$0xff]
        %v7635 = vld [vmem:[%s7610 + $0xc0] sm:$0xff]
        %v7636 = vld [vmem:[%s7610 + $0xc8] sm:$0xff]
        %v7637 = vld [vmem:[%s7610 + $0xd0] sm:$0xff]
        %v7638 = vld [vmem:[%s7610 + $0xd8] sm:$0xff]
        %v7639 = vld [vmem:[%s7610 + $0xe0] sm:$0xff]
        %v7640 = vld [vmem:[%s7610 + $0xe8] sm:$0xff]
        %v7641 = vld [vmem:[%s7610 + $0xf0] sm:$0xff]
        %v7642 = vld [vmem:[%s7610 + $0xf8] sm:$0xff]
        %v7643 = vcombine.low %v7605, %v7609
        %7645 = vmatprep.subr.mxu0 %v7642
        %7646 = vmatpush1.msra.mxu0 %v7641
        %7647 = vmatprep.subr.mxu0 %v7640
        %7648 = vmatpush1.msra.mxu0 %v7639
        %7649 = vmatprep.subr.mxu0 %v7638
        %7650 = vmatpush1.msra.mxu0 %v7637
        %7651 = vmatprep.subr.mxu0 %v7636
        %7652 = vmatpush1.msra.mxu0 %v7635
        %7653 = vmatprep.subr.mxu0 %v7634
        %7654 = vmatpush1.msra.mxu0 %v7633
        %7655 = vmatprep.subr.mxu0 %v7632
        %7656 = vmatpush1.msra.mxu0 %v7631
        %7657 = vmatprep.subr.mxu0 %v7630
        %7658 = vmatpush1.msra.mxu0 %v7629
        %7659 = vmatprep.subr.mxu0 %v7628
        %7660 = vmatpush1.msra.mxu0 %v7627
        %7661 = vmatprep.subr.mxu0 %v7626
        %7662 = vmatpush1.msra.mxu0 %v7625
        %7663 = vmatprep.subr.mxu0 %v7624
        %7664 = vmatpush1.msra.mxu0 %v7623
        %7665 = vmatprep.subr.mxu0 %v7622
        %7666 = vmatpush1.msra.mxu0 %v7621
        %7667 = vmatprep.subr.mxu0 %v7620
        %7668 = vmatpush1.msra.mxu0 %v7619
        %7669 = vmatprep.subr.mxu0 %v7618
        %7670 = vmatpush1.msra.mxu0 %v7617
        %7671 = vmatprep.subr.mxu0 %v7616
        %7672 = vmatpush1.msra.mxu0 %v7615
        %7673 = vmatprep.subr.mxu0 %v7614
        %7674 = vmatpush1.msra.mxu0 %v7613
        %7675 = vmatprep.subr.mxu0 %v7612
        %7676 = vmatpush1.msra.mxu0 %v7611
        %7677 = vmatprep.subr.mxu0 0.0
        %7678 = vmatpush2.msra.mxu0 0.0
        %7679 = vmatprep.subr.mxu0 0.0
        %7680 = vmatpush2.msra.mxu0 0.0
        %7681 = vmatprep.subr.mxu0 0.0
        %7682 = vmatpush2.msra.mxu0 0.0
        %7683 = vmatprep.subr.mxu0 0.0
        %7684 = vmatpush2.msra.mxu0 0.0
        %7685 = vmatprep.subr.mxu0 0.0
        %7686 = vmatpush2.msra.mxu0 0.0
        %7687 = vmatprep.subr.mxu0 0.0
        %7688 = vmatpush2.msra.mxu0 0.0
        %7689 = vmatprep.subr.mxu0 0.0
        %7690 = vmatpush2.msra.mxu0 0.0
        %7691 = vmatprep.subr.mxu0 0.0
        %7692 = vmatpush2.msra.mxu0 0.0
        %7693 = vmatprep.subr.mxu0 0.0
        %7694 = vmatpush2.msra.mxu0 0.0
        %7695 = vmatprep.subr.mxu0 0.0
        %7696 = vmatpush2.msra.mxu0 0.0
        %7697 = vmatprep.subr.mxu0 0.0
        %7698 = vmatpush2.msra.mxu0 0.0
        %7699 = vmatprep.subr.mxu0 0.0
        %7700 = vmatpush2.msra.mxu0 0.0
        %7701 = vmatprep.subr.mxu0 0.0
        %7702 = vmatpush2.msra.mxu0 0.0
        %7703 = vmatprep.subr.mxu0 0.0
        %7704 = vmatpush2.msra.mxu0 0.0
        %7705 = vmatprep.subr.mxu0 0.0
        %7706 = vmatpush2.msra.mxu0 0.0
        %7707 = vmatprep.subr.mxu0 0.0
        %7708 = vmatpush2.msra.mxu0 0.0
        %7709 = vmatprep.mubr.f32.mxu0 0.0
        %7710 = vmatmul.mubr.f32.gmra.mxu0 %v7643
        %v7711 = vpop.f32.mrf.mxu0
        %v7712 = vadd.f32 0.0, %v7711
        %v7713 = vpop.f32.mrf.mxu0
        %v7714 = vadd.f32 0.0, %v7713
        %7715 = vdwg.mxu0
        %v7716 = vadd.f32 %v7598, %v7712
        %v7717 = vadd.f32 %v7599, %v7714
        %v7718 = vrot.slane %v7142, 6
        %v7719 = vrot.slane %v7718, 4
        %v7720 = vrot.slane %v7600, 6
        %v7721 = vsel %vm7373, %v7719, %v7720
        %v7722 = vrot.slane %v7144, 6
        %v7723 = vrot.slane %v7722, 4
        %v7724 = vrot.slane %v7601, 6
        %v7725 = vsel %vm7373, %v7723, %v7724
        %s7726 = scalar_lea.vmem [#allocation13], 1280
        %v7727 = vld [vmem:[%s7726] sm:$0xff]
        %v7728 = vld [vmem:[%s7726 + $0x8] sm:$0xff]
        %v7729 = vld [vmem:[%s7726 + $0x10] sm:$0xff]
        %v7730 = vld [vmem:[%s7726 + $0x18] sm:$0xff]
        %v7731 = vld [vmem:[%s7726 + $0x20] sm:$0xff]
        %v7732 = vld [vmem:[%s7726 + $0x28] sm:$0xff]
        %v7733 = vld [vmem:[%s7726 + $0x30] sm:$0xff]
        %v7734 = vld [vmem:[%s7726 + $0x38] sm:$0xff]
        %v7735 = vld [vmem:[%s7726 + $0x40] sm:$0xff]
        %v7736 = vld [vmem:[%s7726 + $0x48] sm:$0xff]
        %v7737 = vld [vmem:[%s7726 + $0x50] sm:$0xff]
        %v7738 = vld [vmem:[%s7726 + $0x58] sm:$0xff]
        %v7739 = vld [vmem:[%s7726 + $0x60] sm:$0xff]
        %v7740 = vld [vmem:[%s7726 + $0x68] sm:$0xff]
        %v7741 = vld [vmem:[%s7726 + $0x70] sm:$0xff]
        %v7742 = vld [vmem:[%s7726 + $0x78] sm:$0xff]
        %v7743 = vld [vmem:[%s7726 + $0x80] sm:$0xff]
        %v7744 = vld [vmem:[%s7726 + $0x88] sm:$0xff]
        %v7745 = vld [vmem:[%s7726 + $0x90] sm:$0xff]
        %v7746 = vld [vmem:[%s7726 + $0x98] sm:$0xff]
        %v7747 = vld [vmem:[%s7726 + $0xa0] sm:$0xff]
        %v7748 = vld [vmem:[%s7726 + $0xa8] sm:$0xff]
        %v7749 = vld [vmem:[%s7726 + $0xb0] sm:$0xff]
        %v7750 = vld [vmem:[%s7726 + $0xb8] sm:$0xff]
        %v7751 = vld [vmem:[%s7726 + $0xc0] sm:$0xff]
        %v7752 = vld [vmem:[%s7726 + $0xc8] sm:$0xff]
        %v7753 = vld [vmem:[%s7726 + $0xd0] sm:$0xff]
        %v7754 = vld [vmem:[%s7726 + $0xd8] sm:$0xff]
        %v7755 = vld [vmem:[%s7726 + $0xe0] sm:$0xff]
        %v7756 = vld [vmem:[%s7726 + $0xe8] sm:$0xff]
        %v7757 = vld [vmem:[%s7726 + $0xf0] sm:$0xff]
        %v7758 = vld [vmem:[%s7726 + $0xf8] sm:$0xff]
        %v7759 = vcombine.low %v7721, %v7725
        %7761 = vmatprep.subr.mxu0 %v7758
        %7762 = vmatpush1.msra.mxu0 %v7757
        %7763 = vmatprep.subr.mxu0 %v7756
        %7764 = vmatpush1.msra.mxu0 %v7755
        %7765 = vmatprep.subr.mxu0 %v7754
        %7766 = vmatpush1.msra.mxu0 %v7753
        %7767 = vmatprep.subr.mxu0 %v7752
        %7768 = vmatpush1.msra.mxu0 %v7751
        %7769 = vmatprep.subr.mxu0 %v7750
        %7770 = vmatpush1.msra.mxu0 %v7749
        %7771 = vmatprep.subr.mxu0 %v7748
        %7772 = vmatpush1.msra.mxu0 %v7747
        %7773 = vmatprep.subr.mxu0 %v7746
        %7774 = vmatpush1.msra.mxu0 %v7745
        %7775 = vmatprep.subr.mxu0 %v7744
        %7776 = vmatpush1.msra.mxu0 %v7743
        %7777 = vmatprep.subr.mxu0 %v7742
        %7778 = vmatpush1.msra.mxu0 %v7741
        %7779 = vmatprep.subr.mxu0 %v7740
        %7780 = vmatpush1.msra.mxu0 %v7739
        %7781 = vmatprep.subr.mxu0 %v7738
        %7782 = vmatpush1.msra.mxu0 %v7737
        %7783 = vmatprep.subr.mxu0 %v7736
        %7784 = vmatpush1.msra.mxu0 %v7735
        %7785 = vmatprep.subr.mxu0 %v7734
        %7786 = vmatpush1.msra.mxu0 %v7733
        %7787 = vmatprep.subr.mxu0 %v7732
        %7788 = vmatpush1.msra.mxu0 %v7731
        %7789 = vmatprep.subr.mxu0 %v7730
        %7790 = vmatpush1.msra.mxu0 %v7729
        %7791 = vmatprep.subr.mxu0 %v7728
        %7792 = vmatpush1.msra.mxu0 %v7727
        %7793 = vmatprep.subr.mxu0 0.0
        %7794 = vmatpush2.msra.mxu0 0.0
        %7795 = vmatprep.subr.mxu0 0.0
        %7796 = vmatpush2.msra.mxu0 0.0
        %7797 = vmatprep.subr.mxu0 0.0
        %7798 = vmatpush2.msra.mxu0 0.0
        %7799 = vmatprep.subr.mxu0 0.0
        %7800 = vmatpush2.msra.mxu0 0.0
        %7801 = vmatprep.subr.mxu0 0.0
        %7802 = vmatpush2.msra.mxu0 0.0
        %7803 = vmatprep.subr.mxu0 0.0
        %7804 = vmatpush2.msra.mxu0 0.0
        %7805 = vmatprep.subr.mxu0 0.0
        %7806 = vmatpush2.msra.mxu0 0.0
        %7807 = vmatprep.subr.mxu0 0.0
        %7808 = vmatpush2.msra.mxu0 0.0
        %7809 = vmatprep.subr.mxu0 0.0
        %7810 = vmatpush2.msra.mxu0 0.0
        %7811 = vmatprep.subr.mxu0 0.0
        %7812 = vmatpush2.msra.mxu0 0.0
        %7813 = vmatprep.subr.mxu0 0.0
        %7814 = vmatpush2.msra.mxu0 0.0
        %7815 = vmatprep.subr.mxu0 0.0
        %7816 = vmatpush2.msra.mxu0 0.0
        %7817 = vmatprep.subr.mxu0 0.0
        %7818 = vmatpush2.msra.mxu0 0.0
        %7819 = vmatprep.subr.mxu0 0.0
        %7820 = vmatpush2.msra.mxu0 0.0
        %7821 = vmatprep.subr.mxu0 0.0
        %7822 = vmatpush2.msra.mxu0 0.0
        %7823 = vmatprep.subr.mxu0 0.0
        %7824 = vmatpush2.msra.mxu0 0.0
        %7825 = vmatprep.mubr.f32.mxu0 0.0
        %7826 = vmatmul.mubr.f32.gmra.mxu0 %v7759
        %v7827 = vpop.f32.mrf.mxu0
        %v7828 = vadd.f32 0.0, %v7827
        %v7829 = vpop.f32.mrf.mxu0
        %v7830 = vadd.f32 0.0, %v7829
        %7831 = vdwg.mxu0
        %v7832 = vadd.f32 %v7716, %v7828
        %v7833 = vadd.f32 %v7717, %v7830
        %s7834 = scalar_lea.vmem [#allocation13], 1536
        %v7835 = vld [vmem:[%s7834] sm:$0xff]
        %v7836 = vld [vmem:[%s7834 + $0x8] sm:$0xff]
        %v7837 = vld [vmem:[%s7834 + $0x10] sm:$0xff]
        %v7838 = vld [vmem:[%s7834 + $0x18] sm:$0xff]
        %v7839 = vld [vmem:[%s7834 + $0x20] sm:$0xff]
        %v7840 = vld [vmem:[%s7834 + $0x28] sm:$0xff]
        %v7841 = vld [vmem:[%s7834 + $0x30] sm:$0xff]
        %v7842 = vld [vmem:[%s7834 + $0x38] sm:$0xff]
        %v7843 = vld [vmem:[%s7834 + $0x40] sm:$0xff]
        %v7844 = vld [vmem:[%s7834 + $0x48] sm:$0xff]
        %v7845 = vld [vmem:[%s7834 + $0x50] sm:$0xff]
        %v7846 = vld [vmem:[%s7834 + $0x58] sm:$0xff]
        %v7847 = vld [vmem:[%s7834 + $0x60] sm:$0xff]
        %v7848 = vld [vmem:[%s7834 + $0x68] sm:$0xff]
        %v7849 = vld [vmem:[%s7834 + $0x70] sm:$0xff]
        %v7850 = vld [vmem:[%s7834 + $0x78] sm:$0xff]
        %v7851 = vld [vmem:[%s7834 + $0x80] sm:$0xff]
        %v7852 = vld [vmem:[%s7834 + $0x88] sm:$0xff]
        %v7853 = vld [vmem:[%s7834 + $0x90] sm:$0xff]
        %v7854 = vld [vmem:[%s7834 + $0x98] sm:$0xff]
        %v7855 = vld [vmem:[%s7834 + $0xa0] sm:$0xff]
        %v7856 = vld [vmem:[%s7834 + $0xa8] sm:$0xff]
        %v7857 = vld [vmem:[%s7834 + $0xb0] sm:$0xff]
        %v7858 = vld [vmem:[%s7834 + $0xb8] sm:$0xff]
        %v7859 = vld [vmem:[%s7834 + $0xc0] sm:$0xff]
        %v7860 = vld [vmem:[%s7834 + $0xc8] sm:$0xff]
        %v7861 = vld [vmem:[%s7834 + $0xd0] sm:$0xff]
        %v7862 = vld [vmem:[%s7834 + $0xd8] sm:$0xff]
        %v7863 = vld [vmem:[%s7834 + $0xe0] sm:$0xff]
        %v7864 = vld [vmem:[%s7834 + $0xe8] sm:$0xff]
        %v7865 = vld [vmem:[%s7834 + $0xf0] sm:$0xff]
        %v7866 = vld [vmem:[%s7834 + $0xf8] sm:$0xff]
        %v7868 = vcombine.low %v7143, %v7145
        %7870 = vmatprep.subr.mxu0 %v7866
        %7871 = vmatpush1.msra.mxu0 %v7865
        %7872 = vmatprep.subr.mxu0 %v7864
        %7873 = vmatpush1.msra.mxu0 %v7863
        %7874 = vmatprep.subr.mxu0 %v7862
        %7875 = vmatpush1.msra.mxu0 %v7861
        %7876 = vmatprep.subr.mxu0 %v7860
        %7877 = vmatpush1.msra.mxu0 %v7859
        %7878 = vmatprep.subr.mxu0 %v7858
        %7879 = vmatpush1.msra.mxu0 %v7857
        %7880 = vmatprep.subr.mxu0 %v7856
        %7881 = vmatpush1.msra.mxu0 %v7855
        %7882 = vmatprep.subr.mxu0 %v7854
        %7883 = vmatpush1.msra.mxu0 %v7853
        %7884 = vmatprep.subr.mxu0 %v7852
        %7885 = vmatpush1.msra.mxu0 %v7851
        %7886 = vmatprep.subr.mxu0 %v7850
        %7887 = vmatpush1.msra.mxu0 %v7849
        %7888 = vmatprep.subr.mxu0 %v7848
        %7889 = vmatpush1.msra.mxu0 %v7847
        %7890 = vmatprep.subr.mxu0 %v7846
        %7891 = vmatpush1.msra.mxu0 %v7845
        %7892 = vmatprep.subr.mxu0 %v7844
        %7893 = vmatpush1.msra.mxu0 %v7843
        %7894 = vmatprep.subr.mxu0 %v7842
        %7895 = vmatpush1.msra.mxu0 %v7841
        %7896 = vmatprep.subr.mxu0 %v7840
        %7897 = vmatpush1.msra.mxu0 %v7839
        %7898 = vmatprep.subr.mxu0 %v7838
        %7899 = vmatpush1.msra.mxu0 %v7837
        %7900 = vmatprep.subr.mxu0 %v7836
        %7901 = vmatpush1.msra.mxu0 %v7835
        %7902 = vmatprep.subr.mxu0 0.0
        %7903 = vmatpush2.msra.mxu0 0.0
        %7904 = vmatprep.subr.mxu0 0.0
        %7905 = vmatpush2.msra.mxu0 0.0
        %7906 = vmatprep.subr.mxu0 0.0
        %7907 = vmatpush2.msra.mxu0 0.0
        %7908 = vmatprep.subr.mxu0 0.0
        %7909 = vmatpush2.msra.mxu0 0.0
        %7910 = vmatprep.subr.mxu0 0.0
        %7911 = vmatpush2.msra.mxu0 0.0
        %7912 = vmatprep.subr.mxu0 0.0
        %7913 = vmatpush2.msra.mxu0 0.0
        %7914 = vmatprep.subr.mxu0 0.0
        %7915 = vmatpush2.msra.mxu0 0.0
        %7916 = vmatprep.subr.mxu0 0.0
        %7917 = vmatpush2.msra.mxu0 0.0
        %7918 = vmatprep.subr.mxu0 0.0
        %7919 = vmatpush2.msra.mxu0 0.0
        %7920 = vmatprep.subr.mxu0 0.0
        %7921 = vmatpush2.msra.mxu0 0.0
        %7922 = vmatprep.subr.mxu0 0.0
        %7923 = vmatpush2.msra.mxu0 0.0
        %7924 = vmatprep.subr.mxu0 0.0
        %7925 = vmatpush2.msra.mxu0 0.0
        %7926 = vmatprep.subr.mxu0 0.0
        %7927 = vmatpush2.msra.mxu0 0.0
        %7928 = vmatprep.subr.mxu0 0.0
        %7929 = vmatpush2.msra.mxu0 0.0
        %7930 = vmatprep.subr.mxu0 0.0
        %7931 = vmatpush2.msra.mxu0 0.0
        %7932 = vmatprep.subr.mxu0 0.0
        %7933 = vmatpush2.msra.mxu0 0.0
        %7934 = vmatprep.mubr.f32.mxu0 0.0
        %7935 = vmatmul.mubr.f32.gmra.mxu0 %v7868
        %v7936 = vpop.f32.mrf.mxu0
        %v7937 = vadd.f32 0.0, %v7936
        %v7938 = vpop.f32.mrf.mxu0
        %v7939 = vadd.f32 0.0, %v7938
        %7940 = vdwg.mxu0
        %v7941 = vadd.f32 %v7832, %v7937
        %v7942 = vadd.f32 %v7833, %v7939
        %v7943 = vcombine.high %v7145, %v7145
        %v7944 = vrot.slane %v7145, 5
        %v7945 = vrot.slane %v7944, 4
        %v7946 = vrot.slane %v7943, 5
        %v7947 = vsel %vm7183, %v7945, %v7946
        %s7948 = scalar_lea.vmem [#allocation13], 1792
        %v7949 = vld [vmem:[%s7948] sm:$0xff]
        %v7950 = vld [vmem:[%s7948 + $0x8] sm:$0xff]
        %v7951 = vld [vmem:[%s7948 + $0x10] sm:$0xff]
        %v7952 = vld [vmem:[%s7948 + $0x18] sm:$0xff]
        %v7953 = vld [vmem:[%s7948 + $0x20] sm:$0xff]
        %v7954 = vld [vmem:[%s7948 + $0x28] sm:$0xff]
        %v7955 = vld [vmem:[%s7948 + $0x30] sm:$0xff]
        %v7956 = vld [vmem:[%s7948 + $0x38] sm:$0xff]
        %v7957 = vld [vmem:[%s7948 + $0x40] sm:$0xff]
        %v7958 = vld [vmem:[%s7948 + $0x48] sm:$0xff]
        %v7959 = vld [vmem:[%s7948 + $0x50] sm:$0xff]
        %v7960 = vld [vmem:[%s7948 + $0x58] sm:$0xff]
        %v7961 = vld [vmem:[%s7948 + $0x60] sm:$0xff]
        %v7962 = vld [vmem:[%s7948 + $0x68] sm:$0xff]
        %v7963 = vld [vmem:[%s7948 + $0x70] sm:$0xff]
        %v7964 = vld [vmem:[%s7948 + $0x78] sm:$0xff]
        %v7965 = vld [vmem:[%s7948 + $0x80] sm:$0xff]
        %v7966 = vld [vmem:[%s7948 + $0x88] sm:$0xff]
        %v7967 = vld [vmem:[%s7948 + $0x90] sm:$0xff]
        %v7968 = vld [vmem:[%s7948 + $0x98] sm:$0xff]
        %v7969 = vld [vmem:[%s7948 + $0xa0] sm:$0xff]
        %v7970 = vld [vmem:[%s7948 + $0xa8] sm:$0xff]
        %v7971 = vld [vmem:[%s7948 + $0xb0] sm:$0xff]
        %v7972 = vld [vmem:[%s7948 + $0xb8] sm:$0xff]
        %v7973 = vld [vmem:[%s7948 + $0xc0] sm:$0xff]
        %v7974 = vld [vmem:[%s7948 + $0xc8] sm:$0xff]
        %v7975 = vld [vmem:[%s7948 + $0xd0] sm:$0xff]
        %v7976 = vld [vmem:[%s7948 + $0xd8] sm:$0xff]
        %v7977 = vld [vmem:[%s7948 + $0xe0] sm:$0xff]
        %v7978 = vld [vmem:[%s7948 + $0xe8] sm:$0xff]
        %v7979 = vld [vmem:[%s7948 + $0xf0] sm:$0xff]
        %v7980 = vld [vmem:[%s7948 + $0xf8] sm:$0xff]
        %v7981 = vcombine.low %v7191, %v7947
        %7983 = vmatprep.subr.mxu0 %v7980
        %7984 = vmatpush1.msra.mxu0 %v7979
        %7985 = vmatprep.subr.mxu0 %v7978
        %7986 = vmatpush1.msra.mxu0 %v7977
        %7987 = vmatprep.subr.mxu0 %v7976
        %7988 = vmatpush1.msra.mxu0 %v7975
        %7989 = vmatprep.subr.mxu0 %v7974
        %7990 = vmatpush1.msra.mxu0 %v7973
        %7991 = vmatprep.subr.mxu0 %v7972
        %7992 = vmatpush1.msra.mxu0 %v7971
        %7993 = vmatprep.subr.mxu0 %v7970
        %7994 = vmatpush1.msra.mxu0 %v7969
        %7995 = vmatprep.subr.mxu0 %v7968
        %7996 = vmatpush1.msra.mxu0 %v7967
        %7997 = vmatprep.subr.mxu0 %v7966
        %7998 = vmatpush1.msra.mxu0 %v7965
        %7999 = vmatprep.subr.mxu0 %v7964
        %8000 = vmatpush1.msra.mxu0 %v7963
        %8001 = vmatprep.subr.mxu0 %v7962
        %8002 = vmatpush1.msra.mxu0 %v7961
        %8003 = vmatprep.subr.mxu0 %v7960
        %8004 = vmatpush1.msra.mxu0 %v7959
        %8005 = vmatprep.subr.mxu0 %v7958
        %8006 = vmatpush1.msra.mxu0 %v7957
        %8007 = vmatprep.subr.mxu0 %v7956
        %8008 = vmatpush1.msra.mxu0 %v7955
        %8009 = vmatprep.subr.mxu0 %v7954
        %8010 = vmatpush1.msra.mxu0 %v7953
        %8011 = vmatprep.subr.mxu0 %v7952
        %8012 = vmatpush1.msra.mxu0 %v7951
        %8013 = vmatprep.subr.mxu0 %v7950
        %8014 = vmatpush1.msra.mxu0 %v7949
        %8015 = vmatprep.subr.mxu0 0.0
        %8016 = vmatpush2.msra.mxu0 0.0
        %8017 = vmatprep.subr.mxu0 0.0
        %8018 = vmatpush2.msra.mxu0 0.0
        %8019 = vmatprep.subr.mxu0 0.0
        %8020 = vmatpush2.msra.mxu0 0.0
        %8021 = vmatprep.subr.mxu0 0.0
        %8022 = vmatpush2.msra.mxu0 0.0
        %8023 = vmatprep.subr.mxu0 0.0
        %8024 = vmatpush2.msra.mxu0 0.0
        %8025 = vmatprep.subr.mxu0 0.0
        %8026 = vmatpush2.msra.mxu0 0.0
        %8027 = vmatprep.subr.mxu0 0.0
        %8028 = vmatpush2.msra.mxu0 0.0
        %8029 = vmatprep.subr.mxu0 0.0
        %8030 = vmatpush2.msra.mxu0 0.0
        %8031 = vmatprep.subr.mxu0 0.0
        %8032 = vmatpush2.msra.mxu0 0.0
        %8033 = vmatprep.subr.mxu0 0.0
        %8034 = vmatpush2.msra.mxu0 0.0
        %8035 = vmatprep.subr.mxu0 0.0
        %8036 = vmatpush2.msra.mxu0 0.0
        %8037 = vmatprep.subr.mxu0 0.0
        %8038 = vmatpush2.msra.mxu0 0.0
        %8039 = vmatprep.subr.mxu0 0.0
        %8040 = vmatpush2.msra.mxu0 0.0
        %8041 = vmatprep.subr.mxu0 0.0
        %8042 = vmatpush2.msra.mxu0 0.0
        %8043 = vmatprep.subr.mxu0 0.0
        %8044 = vmatpush2.msra.mxu0 0.0
        %8045 = vmatprep.subr.mxu0 0.0
        %8046 = vmatpush2.msra.mxu0 0.0
        %8047 = vmatprep.mubr.f32.mxu0 0.0
        %8048 = vmatmul.mubr.f32.gmra.mxu0 %v7981
        %v8049 = vpop.f32.mrf.mxu0
        %v8050 = vadd.f32 0.0, %v8049
        %v8051 = vpop.f32.mrf.mxu0
        %v8052 = vadd.f32 0.0, %v8051
        %8053 = vdwg.mxu0
        %v8054 = vadd.f32 %v7941, %v8050
        %v8055 = vadd.f32 %v7942, %v8052
        %v8056 = vrot.slane %v7145, 6
        %v8057 = vrot.slane %v8056, 4
        %v8058 = vrot.slane %v7943, 6
        %v8059 = vsel %vm7373, %v8057, %v8058
        %s8060 = scalar_lea.vmem [#allocation13], 2048
        %v8061 = vld [vmem:[%s8060] sm:$0xff]
        %v8062 = vld [vmem:[%s8060 + $0x8] sm:$0xff]
        %v8063 = vld [vmem:[%s8060 + $0x10] sm:$0xff]
        %v8064 = vld [vmem:[%s8060 + $0x18] sm:$0xff]
        %v8065 = vld [vmem:[%s8060 + $0x20] sm:$0xff]
        %v8066 = vld [vmem:[%s8060 + $0x28] sm:$0xff]
        %v8067 = vld [vmem:[%s8060 + $0x30] sm:$0xff]
        %v8068 = vld [vmem:[%s8060 + $0x38] sm:$0xff]
        %v8069 = vld [vmem:[%s8060 + $0x40] sm:$0xff]
        %v8070 = vld [vmem:[%s8060 + $0x48] sm:$0xff]
        %v8071 = vld [vmem:[%s8060 + $0x50] sm:$0xff]
        %v8072 = vld [vmem:[%s8060 + $0x58] sm:$0xff]
        %v8073 = vld [vmem:[%s8060 + $0x60] sm:$0xff]
        %v8074 = vld [vmem:[%s8060 + $0x68] sm:$0xff]
        %v8075 = vld [vmem:[%s8060 + $0x70] sm:$0xff]
        %v8076 = vld [vmem:[%s8060 + $0x78] sm:$0xff]
        %v8077 = vld [vmem:[%s8060 + $0x80] sm:$0xff]
        %v8078 = vld [vmem:[%s8060 + $0x88] sm:$0xff]
        %v8079 = vld [vmem:[%s8060 + $0x90] sm:$0xff]
        %v8080 = vld [vmem:[%s8060 + $0x98] sm:$0xff]
        %v8081 = vld [vmem:[%s8060 + $0xa0] sm:$0xff]
        %v8082 = vld [vmem:[%s8060 + $0xa8] sm:$0xff]
        %v8083 = vld [vmem:[%s8060 + $0xb0] sm:$0xff]
        %v8084 = vld [vmem:[%s8060 + $0xb8] sm:$0xff]
        %v8085 = vld [vmem:[%s8060 + $0xc0] sm:$0xff]
        %v8086 = vld [vmem:[%s8060 + $0xc8] sm:$0xff]
        %v8087 = vld [vmem:[%s8060 + $0xd0] sm:$0xff]
        %v8088 = vld [vmem:[%s8060 + $0xd8] sm:$0xff]
        %v8089 = vld [vmem:[%s8060 + $0xe0] sm:$0xff]
        %v8090 = vld [vmem:[%s8060 + $0xe8] sm:$0xff]
        %v8091 = vld [vmem:[%s8060 + $0xf0] sm:$0xff]
        %v8092 = vld [vmem:[%s8060 + $0xf8] sm:$0xff]
        %v8093 = vcombine.low %v7381, %v8059
        %8095 = vmatprep.subr.mxu0 %v8092
        %8096 = vmatpush1.msra.mxu0 %v8091
        %8097 = vmatprep.subr.mxu0 %v8090
        %8098 = vmatpush1.msra.mxu0 %v8089
        %8099 = vmatprep.subr.mxu0 %v8088
        %8100 = vmatpush1.msra.mxu0 %v8087
        %8101 = vmatprep.subr.mxu0 %v8086
        %8102 = vmatpush1.msra.mxu0 %v8085
        %8103 = vmatprep.subr.mxu0 %v8084
        %8104 = vmatpush1.msra.mxu0 %v8083
        %8105 = vmatprep.subr.mxu0 %v8082
        %8106 = vmatpush1.msra.mxu0 %v8081
        %8107 = vmatprep.subr.mxu0 %v8080
        %8108 = vmatpush1.msra.mxu0 %v8079
        %8109 = vmatprep.subr.mxu0 %v8078
        %8110 = vmatpush1.msra.mxu0 %v8077
        %8111 = vmatprep.subr.mxu0 %v8076
        %8112 = vmatpush1.msra.mxu0 %v8075
        %8113 = vmatprep.subr.mxu0 %v8074
        %8114 = vmatpush1.msra.mxu0 %v8073
        %8115 = vmatprep.subr.mxu0 %v8072
        %8116 = vmatpush1.msra.mxu0 %v8071
        %8117 = vmatprep.subr.mxu0 %v8070
        %8118 = vmatpush1.msra.mxu0 %v8069
        %8119 = vmatprep.subr.mxu0 %v8068
        %8120 = vmatpush1.msra.mxu0 %v8067
        %8121 = vmatprep.subr.mxu0 %v8066
        %8122 = vmatpush1.msra.mxu0 %v8065
        %8123 = vmatprep.subr.mxu0 %v8064
        %8124 = vmatpush1.msra.mxu0 %v8063
        %8125 = vmatprep.subr.mxu0 %v8062
        %8126 = vmatpush1.msra.mxu0 %v8061
        %8127 = vmatprep.subr.mxu0 0.0
        %8128 = vmatpush2.msra.mxu0 0.0
        %8129 = vmatprep.subr.mxu0 0.0
        %8130 = vmatpush2.msra.mxu0 0.0
        %8131 = vmatprep.subr.mxu0 0.0
        %8132 = vmatpush2.msra.mxu0 0.0
        %8133 = vmatprep.subr.mxu0 0.0
        %8134 = vmatpush2.msra.mxu0 0.0
        %8135 = vmatprep.subr.mxu0 0.0
        %8136 = vmatpush2.msra.mxu0 0.0
        %8137 = vmatprep.subr.mxu0 0.0
        %8138 = vmatpush2.msra.mxu0 0.0
        %8139 = vmatprep.subr.mxu0 0.0
        %8140 = vmatpush2.msra.mxu0 0.0
        %8141 = vmatprep.subr.mxu0 0.0
        %8142 = vmatpush2.msra.mxu0 0.0
        %8143 = vmatprep.subr.mxu0 0.0
        %8144 = vmatpush2.msra.mxu0 0.0
        %8145 = vmatprep.subr.mxu0 0.0
        %8146 = vmatpush2.msra.mxu0 0.0
        %8147 = vmatprep.subr.mxu0 0.0
        %8148 = vmatpush2.msra.mxu0 0.0
        %8149 = vmatprep.subr.mxu0 0.0
        %8150 = vmatpush2.msra.mxu0 0.0
        %8151 = vmatprep.subr.mxu0 0.0
        %8152 = vmatpush2.msra.mxu0 0.0
        %8153 = vmatprep.subr.mxu0 0.0
        %8154 = vmatpush2.msra.mxu0 0.0
        %8155 = vmatprep.subr.mxu0 0.0
        %8156 = vmatpush2.msra.mxu0 0.0
        %8157 = vmatprep.subr.mxu0 0.0
        %8158 = vmatpush2.msra.mxu0 0.0
        %8159 = vmatprep.mubr.f32.mxu0 0.0
        %8160 = vmatmul.mubr.f32.gmra.mxu0 %v8093
        %v8161 = vpop.f32.mrf.mxu0
        %v8162 = vadd.f32 0.0, %v8161
        %v8163 = vpop.f32.mrf.mxu0
        %v8164 = vadd.f32 0.0, %v8163
        %8165 = vdwg.mxu0
        %v8166 = vadd.f32 %v8054, %v8162
        %v8167 = vadd.f32 %v8055, %v8164
        %v8168 = vld [vmem:[#allocation18] sm:$0xf]
        %vm8169 = vcmask 64512
        %v8171 = vsel %vm8169, %v8168, 0
        %8173 = vmatprep.subr.mxu0 0.0
        %8174 = vmatpush1.msra.mxu0 0.0
        %8175 = vmatprep.subr.mxu0 0.0
        %8176 = vmatpush1.msra.mxu0 0.0
        %8177 = vmatprep.subr.mxu0 0.0
        %8178 = vmatpush1.msra.mxu0 0.0
        %8179 = vmatprep.subr.mxu0 0.0
        %8180 = vmatpush1.msra.mxu0 0.0
        %8181 = vmatprep.subr.mxu0 0.0
        %8182 = vmatpush1.msra.mxu0 0.0
        %8183 = vmatprep.subr.mxu0 0.0
        %8184 = vmatpush1.msra.mxu0 0.0
        %8185 = vmatprep.subr.mxu0 0.0
        %8186 = vmatpush1.msra.mxu0 0.0
        %8187 = vmatprep.subr.mxu0 0.0
        %8188 = vmatpush1.msra.mxu0 0.0
        %8189 = vmatprep.subr.mxu0 0.0
        %8190 = vmatpush1.msra.mxu0 0.0
        %8191 = vmatprep.subr.mxu0 0.0
        %8192 = vmatpush1.msra.mxu0 0.0
        %8193 = vmatprep.subr.mxu0 0.0
        %8194 = vmatpush1.msra.mxu0 0.0
        %8195 = vmatprep.subr.mxu0 0.0
        %8196 = vmatpush1.msra.mxu0 0.0
        %8197 = vmatprep.subr.mxu0 0.0
        %8198 = vmatpush1.msra.mxu0 0.0
        %8199 = vmatprep.subr.mxu0 0.0
        %8200 = vmatpush1.msra.mxu0 0.0
        %8201 = vmatprep.subr.mxu0 0.0
        %8202 = vmatpush1.msra.mxu0 0.0
        %8203 = vmatprep.subr.mxu0 %v8167
        %8204 = vmatpush1.msra.mxu0 %v8166
        %8205 = vmatprep.subr.mxu0 0.0
        %8206 = vmatpush2.msra.mxu0 0.0
        %8207 = vmatprep.subr.mxu0 0.0
        %8208 = vmatpush2.msra.mxu0 0.0
        %8209 = vmatprep.subr.mxu0 0.0
        %8210 = vmatpush2.msra.mxu0 0.0
        %8211 = vmatprep.subr.mxu0 0.0
        %8212 = vmatpush2.msra.mxu0 0.0
        %8213 = vmatprep.subr.mxu0 0.0
        %8214 = vmatpush2.msra.mxu0 0.0
        %8215 = vmatprep.subr.mxu0 0.0
        %8216 = vmatpush2.msra.mxu0 0.0
        %8217 = vmatprep.subr.mxu0 0.0
        %8218 = vmatpush2.msra.mxu0 0.0
        %8219 = vmatprep.subr.mxu0 0.0
        %8220 = vmatpush2.msra.mxu0 0.0
        %8221 = vmatprep.subr.mxu0 0.0
        %8222 = vmatpush2.msra.mxu0 0.0
        %8223 = vmatprep.subr.mxu0 0.0
        %8224 = vmatpush2.msra.mxu0 0.0
        %8225 = vmatprep.subr.mxu0 0.0
        %8226 = vmatpush2.msra.mxu0 0.0
        %8227 = vmatprep.subr.mxu0 0.0
        %8228 = vmatpush2.msra.mxu0 0.0
        %8229 = vmatprep.subr.mxu0 0.0
        %8230 = vmatpush2.msra.mxu0 0.0
        %8231 = vmatprep.subr.mxu0 0.0
        %8232 = vmatpush2.msra.mxu0 0.0
        %8233 = vmatprep.subr.mxu0 0.0
        %8234 = vmatpush2.msra.mxu0 0.0
        %8235 = vmatprep.subr.mxu0 0.0
        %8236 = vmatpush2.msra.mxu0 0.0
        %8237 = vmatprep.mubr.f32.mxu0 0.0
        %8238 = vmatmul.mubr.f32.gmra.mxu0 %v8171
        %v8239 = vpop.f32.mrf.mxu0
        %v8240 = vadd.f32 0.0, %v8239
        %v8241 = vpop.f32.mrf.mxu0
        %v8242 = vadd.f32 0.0, %v8241
        %8243 = vdwg.mxu0
        %vm8244 = vcmask 1043456
        %v8245 = vsel %vm8244, %v8240, 0.0
        %v8246 = vrot.slane %v8245, 4
        %v8247 = vadd.f32 %v8245, %v8246
        %v8248 = vrot.slane %v8247, 2
        %v8249 = vadd.f32 %v8247, %v8248
        %v8250 = vrot.slane %v8249, 1
        %v8251 = vadd.f32 %v8249, %v8250
        %v8252 = vsel %vm8244, %v8242, 0.0
        %v8253 = vrot.slane %v8252, 4
        %v8254 = vadd.f32 %v8252, %v8253
        %v8255 = vrot.slane %v8254, 2
        %v8256 = vadd.f32 %v8254, %v8255
        %v8257 = vrot.slane %v8256, 1
        %v8258 = vadd.f32 %v8256, %v8257
        %v8259 = vrcp.pop 4.0
        %v8260 = vmul.f32 %v8251, %v8259
        %v8261 = vmul.f32 %v8258, %v8259
        %v8262 = vsub.f32 %v8240, %v8260
        %v8263 = vsub.f32 %v8242, %v8261
        %v8264 = vmul.f32 %v8262, %v8262
        %v8265 = vmul.f32 %v8263, %v8263
        %v8266 = vsel %vm8244, %v8264, 0.0
        %v8267 = vrot.slane %v8266, 4
        %v8268 = vadd.f32 %v8266, %v8267
        %v8269 = vrot.slane %v8268, 2
        %v8270 = vadd.f32 %v8268, %v8269
        %v8271 = vrot.slane %v8270, 1
        %v8272 = vadd.f32 %v8270, %v8271
        %v8273 = vsel %vm8244, %v8265, 0.0
        %v8274 = vrot.slane %v8273, 4
        %v8275 = vadd.f32 %v8273, %v8274
        %v8276 = vrot.slane %v8275, 2
        %v8277 = vadd.f32 %v8275, %v8276
        %v8278 = vrot.slane %v8277, 1
        %v8279 = vadd.f32 %v8277, %v8278
        %v8280 = vmul.f32 %v8272, %v8259
        %v8281 = vmul.f32 %v8279, %v8259
        %v8282 = vadd.f32 %v8280, 1e-05
        %v8283 = vadd.f32 %v8281, 1e-05
        %v8284 = vrsqrt.pop %v8282
        %v8285 = vrsqrt.pop %v8283
        %v8286 = vmul.f32 %v8262, %v8284
        %v8287 = vmul.f32 %v8263, %v8285
        %vm8288 = vcmp.ge.f32.partialorder %v8286, 0.0
        %vm8289 = vcmp.ge.f32.partialorder %v8287, 0.0
        %v8290 = vmul.f32 %v8286, 0.2
        %v8291 = vmul.f32 %v8287, 0.2
        %v8292 = vsel %vm8288, %v8286, %v8290
        %v8293 = vsel %vm8289, %v8287, %v8291
        %v8294 = vld [vmem:[#allocation19] sm:$0xff]
        %v8296 = vcombine.high %v8294, %v8294
        %v8298 = vmul.f32 %v8292, %v8294
        %v8299 = vmul.f32 %v8293, %v8296
        %v8300 = vsel %vm8244, %v8298, 0.0
        %v8301 = vsel %vm8244, %v8299, 0.0
        %v8302 = vadd.f32 %v8300, %v8301
        %8303 = vadd.xlane.f32.xlu0 %v8302
        %v8304 = vpop.xlane.xlu0 %8303
        %v8305 = vsel %vm8244, %v8304, 0.0
        %v8306 = vrot.slane %v8305, 4
        %v8307 = vadd.f32 %v8305, %v8306
        %v8308 = vrot.slane %v8307, 2
        %v8309 = vadd.f32 %v8307, %v8308
        %v8310 = vrot.slane %v8309, 1
        %v8311 = vadd.f32 %v8309, %v8310
        %v8312 = vld [vmem:[#allocation6] sm:$0x1]
        %v8313 = vadd.f32 %v8311, %v8312
        %8315 = vset.pattern.permute.xlu0 0
        %8316 = vperm.xlu0 %8315, %v8313
        %v8317 = vpop.permute.xlu0 %8316
        %v8319 = vlaneseq
        %v8320 = vshrl.u32 %v8319, 7
        %v8321 = vsub.s32 0, %v8320
        %v8322 = vrot.slane %v8317, %v8321
        %8323 = vst [vmem:[%s466] sm:$0x1] %v8322
        %s8324 = sand.u32 %s254, 1
        %s8325 = scalar_lea.sflag [#allocation9], %s8324
        %s8326 = sand.u32 %s254, 1
        %s8327 = scalar_lea.vmem [#allocation21], %s8326
        // Predicated region
        $region93: #{tpu_custom_call.1} parent=59 // pred_check
          %p8328 = pneg %p264
        $region94: #{tpu_custom_call.1} parent=59 // pred_check_branch
          %8330 = sbr.rel (%p8328) target = $region96
        $region95: #{tpu_custom_call.1} parent=59 // pred_region
          %s8332 = ssub.s32 16, 16
          %8333 = vsyncadd %s8325, %s8332
          %s8334 = smul.addr %s31, 16
          %s8335 = scalar_lea.hbm %s10, %s8334
          %s8337 = sshll.u32 %s8327, 4
          %s8338 = int_to_ptr.vmem [resolvable:$true] %s8337
          %8340 = dma.vmem_to_hbm [thread:$0]  %s8338, 16, %s8335, %s8325
        $region96: #{tpu_custom_call.1} parent=59 // pred_fallthru
          _
      $region60: #{tpu_custom_call.1} parent=5 // pred_fallthru
        _
      %p8341 = scmp.le.s32.totalorder 2, %s26
      // Predicated region
      $region97: #{tpu_custom_call.1} parent=5 // pred_check
        %p8342 = pneg %p8341
      $region98: #{tpu_custom_call.1} parent=5 // pred_check_branch
        %8344 = sbr.rel (%p8342) target = $region100
      $region99: #{tpu_custom_call.1} parent=5 // pred_region
        %s8345 = ssub.s32 %s26, 2
        // Predicated region
        $region101: #{tpu_custom_call.1} parent=99 // pred_check
          %p8346 = pneg %p270
        $region102: #{tpu_custom_call.1} parent=99 // pred_check_branch
          %8348 = sbr.rel (%p8346) target = $region104
        $region103: #{tpu_custom_call.1} parent=99 // pred_region
          %s8349 = sand.u32 %s255, 1
          %s8350 = scalar_lea.sflag [#allocation9], %s8349
          %s8351 = sand.u32 %s255, 1
          %s8352 = scalar_lea.vmem [#allocation21], %s8351
          %8353 = dma.done %s8350, 16
        $region104: #{tpu_custom_call.1} parent=99 // pred_fallthru
          _
      $region100: #{tpu_custom_call.1} parent=5 // pred_fallthru
        _
    $region6: #{tpu_custom_call.1} parent=1 // loop_footer
      %s30 = sadd.s32 1, %s26
    $region7: #{tpu_custom_call.1} parent=1 // loop_footer_branch
      %25 = sbr.rel target = $region3
    $region8: #{tpu_custom_call.1} parent=1 // loop_exit
      _
    %8354 = vsyncpa [#allocation8], 1
    %s8355 = scalar_lea.sflag [#allocation8], 1
    %8356 = vsyncpa %s8355, 1
    %8357 = vsyncpa [#allocation11], 1
    %8358 = vsyncpa [#allocation14], 1
    %8359 = vsyncpa [#allocation17], 1
    %8360 = vsyncpa [#allocation20], 1
    %8361 = vsyncpa [#allocation9], 1
    %s8362 = scalar_lea.sflag [#allocation9], 1
    %8363 = vsyncpa %s8362, 1

</llo_original>
